<compile_context>
chip_gen: v7x
topology: tpu7x:2x2x1
jax: 0.10.0
libtpu: 0.0.40
codegen_flags: <defaults>
</compile_context>

<pallas_src>
import functools

import jax
import jax.numpy as jnp
from jax import lax
from jax.experimental import pallas as pl
from jax.experimental.pallas import tpu as pltpu


def _residue_block_kernel(*refs, H, W, cin, cmid, cout, dimension_inc):
    if dimension_inc:
        (x_ref, w1_ref, s1_ref, t1_ref, w2_ref, s2_ref, t2_ref, wp_ref,
         out_ref, h1pad_ref) = refs
    else:
        (x_ref, w1_ref, s1_ref, t1_ref, w2_ref, s2_ref, t2_ref,
         out_ref, h1pad_ref) = refs
        wp_ref = None

    Wp = W + 2                 # padded row width
    M = H * Wp                 # extended output rows (each image row + 2 junk cols)
    OFF = Wp + 1               # flat offset of interior pixel (1, 1)
    Npad = h1pad_ref.shape[0]  # (H + 3) * Wp

    # ---- conv1: 9 taps, each a contiguous flat row-offset slice (zero-copy LHS) ----
    acc1 = None
    for ky in range(3):
        for kx in range(3):
            off = ky * Wp + kx
            c = jnp.dot(x_ref[off:off + M, :], w1_ref[ky * 3 + kx],
                        preferred_element_type=jnp.float32)
            acc1 = c if acc1 is None else acc1 + c
    # folded BatchNorm1 + ReLU in f32
    h1 = jnp.maximum(acc1 * s1_ref[...] + t1_ref[...], 0.0)

    # Zero the 2 junk columns of every extended row.  After the bulk store below those
    # positions land exactly on the left/right zero-padding columns conv2 requires.
    col = lax.broadcasted_iota(jnp.int32, (M, 1), 0) % Wp
    h1 = jnp.where(col < W, h1, 0.0).astype(jnp.bfloat16)

    # ---- stage conv1 output into the padded scratch (border strips only) ----
    h1pad_ref[0:OFF, :] = jnp.zeros((OFF, cmid), jnp.bfloat16)
    h1pad_ref[OFF + M:, :] = jnp.zeros((Npad - OFF - M, cmid), jnp.bfloat16)
    h1pad_ref[OFF:OFF + M, :] = h1

    # ---- conv2: same zero-copy tap formulation ----
    acc2 = None
    for ky in range(3):
        for kx in range(3):
            off = ky * Wp + kx
            c = jnp.dot(h1pad_ref[off:off + M, :], w2_ref[ky * 3 + kx],
                        preferred_element_type=jnp.float32)
            acc2 = c if acc2 is None else acc2 + c
    # folded BatchNorm2 + ReLU in f32
    h2 = jnp.maximum(acc2 * s2_ref[...] + t2_ref[...], 0.0)

    # ---- shortcut (1x1 projection only when the channel count changes) ----
    xc = x_ref[OFF:OFF + M, :]
    if dimension_inc:
        sc = jnp.dot(xc, wp_ref[...], preferred_element_type=jnp.float32)
    else:
        sc = xc.astype(jnp.float32)

    out_ref[...] = jnp.maximum(h2 + sc, 0.0)


def residue_block(x_nchw, params, *, eps=1e-5):
    """residueBlock forward. x_nchw: (B, Cin, H, W) float32 -> (B, Cout, H, W) float32."""
    (w1, g1, b1, m1, v1, w2, g2, b2, m2, v2, wp) = params
    B, cin, H, W = x_nchw.shape
    cmid = w1.shape[0]
    cout = w2.shape[0]
    dimension_inc = (cin != cout)

    Wp = W + 2
    M = H * Wp
    Npad = (H + 3) * Wp   # (H+2) padded rows + 1 spare row so the last tap slice is in bounds

    # One fused wrapper pass over x: NCHW -> NHWC, 1-px zero halo (+1 spare bottom row),
    # bf16 cast, flatten spatial to ((H+3)*(W+2), Cin).
    x_nhwc = jnp.transpose(x_nchw, (0, 2, 3, 1)).astype(jnp.bfloat16)
    x_flat = jnp.pad(x_nhwc, ((0, 0), (1, 2), (1, 1), (0, 0))).reshape(B, Npad, cin)

    # Conv weights OIHW -> tap-major (9, in, out), bf16 MXU operands.
    w1_t = jnp.transpose(w1, (2, 3, 1, 0)).reshape(9, cin, cmid).astype(jnp.bfloat16)
    w2_t = jnp.transpose(w2, (2, 3, 1, 0)).reshape(9, cmid, cout).astype(jnp.bfloat16)

    # Fold inference-mode BatchNorm into per-channel scale/shift (kept in f32).
    inv1 = g1 / jnp.sqrt(v1 + eps)
    inv2 = g2 / jnp.sqrt(v2 + eps)
    s1 = inv1.reshape(1, cmid)
    t1 = (b1 - m1 * inv1).reshape(1, cmid)
    s2 = inv2.reshape(1, cout)
    t2 = (b2 - m2 * inv2).reshape(1, cout)

    inputs = [x_flat, w1_t, s1, t1, w2_t, s2, t2]
    in_specs = [
        pl.BlockSpec((None, Npad, cin), lambda b: (b, 0, 0)),
        pl.BlockSpec((9, cin, cmid), lambda b: (0, 0, 0)),
        pl.BlockSpec((1, cmid), lambda b: (0, 0)),
        pl.BlockSpec((1, cmid), lambda b: (0, 0)),
        pl.BlockSpec((9, cmid, cout), lambda b: (0, 0, 0)),
        pl.BlockSpec((1, cout), lambda b: (0, 0)),
        pl.BlockSpec((1, cout), lambda b: (0, 0)),
    ]
    if dimension_inc:
        wp_t = jnp.transpose(wp, (2, 3, 1, 0)).reshape(cin, cout).astype(jnp.bfloat16)
        inputs.append(wp_t)
        in_specs.append(pl.BlockSpec((cin, cout), lambda b: (0, 0)))

    kernel = functools.partial(
        _residue_block_kernel,
        H=H, W=W, cin=cin, cmid=cmid, cout=cout, dimension_inc=dimension_inc)

    # VMEM budget: double-buffered input/output blocks + (double-buffered) weights + scratch,
    # capped from the actual hardware capacity (v7x TCs only have 64 MiB physical VMEM).
    w_bytes = 2 * (9 * cin * cmid + 9 * cmid * cout
                   + (cin * cout if dimension_inc else 0)) + 4 * 2 * (cmid + cout)
    blk_bytes = 2 * Npad * cin + 4 * M * cout
    scratch_bytes = 2 * Npad * cmid
    need = 2 * (blk_bytes + w_bytes) + scratch_bytes + (4 << 20)
    try:
        phys = pltpu.get_tpu_info().vmem_capacity_bytes
    except Exception:
        phys = 64 << 20
    vmem_limit = int(min(max(need, 16 << 20), phys // 2))

    flops = 2 * B * H * W * (9 * cin * cmid + 9 * cmid * cout
                             + (cin * cout if dimension_inc else 0))
    bytes_accessed = 2 * B * Npad * cin + 4 * B * M * cout + w_bytes

    out = pl.pallas_call(
        kernel,
        out_shape=jax.ShapeDtypeStruct((B, M, cout), jnp.float32),
        grid=(B,),
        in_specs=in_specs,
        out_specs=pl.BlockSpec((None, M, cout), lambda b: (b, 0, 0)),
        scratch_shapes=[pltpu.VMEM((Npad, cmid), jnp.bfloat16)],
        compiler_params=pltpu.CompilerParams(
            dimension_semantics=("parallel",),
            vmem_limit_bytes=vmem_limit),
        cost_estimate=pl.CostEstimate(flops=flops, transcendentals=0,
                                      bytes_accessed=bytes_accessed),
    )(*inputs)

    # (B, H*(W+2), Cout) -> drop the 2 junk columns per row -> NCHW.
    out = out.reshape(B, H, Wp, cout)[:, :, :W, :]
    return jnp.transpose(out, (0, 3, 1, 2))


def init_params(key, inplane, outplane):
    """Deterministic synthetic params in PyTorch layouts (conv weights OIHW)."""
    cmid = outplane // 2
    ks = jax.random.split(key, 11)
    sd = 0.05
    w1 = sd * jax.random.normal(ks[0], (cmid, inplane, 3, 3), jnp.float32)
    g1 = 1.0 + 0.1 * jax.random.normal(ks[1], (cmid,), jnp.float32)
    b1 = 0.1 * jax.random.normal(ks[2], (cmid,), jnp.float32)
    m1 = 0.1 * jax.random.normal(ks[3], (cmid,), jnp.float32)
    v1 = jnp.abs(jax.random.normal(ks[4], (cmid,), jnp.float32)) + 0.5
    w2 = sd * jax.random.normal(ks[5], (outplane, cmid, 3, 3), jnp.float32)
    g2 = 1.0 + 0.1 * jax.random.normal(ks[6], (outplane,), jnp.float32)
    b2 = 0.1 * jax.random.normal(ks[7], (outplane,), jnp.float32)
    m2 = 0.1 * jax.random.normal(ks[8], (outplane,), jnp.float32)
    v2 = jnp.abs(jax.random.normal(ks[9], (outplane,), jnp.float32)) + 0.5
    wp = sd * jax.random.normal(ks[10], (outplane, inplane, 1, 1), jnp.float32)
    return (w1, g1, b1, m1, v1, w2, g2, b2, m2, v2, wp)


def _reference(x_nchw, params, eps=1e-5):
    """Pure-JAX reference mirroring the PyTorch forward (inference-mode BN)."""
    (w1, g1, b1, m1, v1, w2, g2, b2, m2, v2, wp) = params
    cin = x_nchw.shape[1]
    cout = w2.shape[0]

    def conv(x, w, pad):
        return lax.conv_general_dilated(
            x, w, window_strides=(1, 1), padding=((pad, pad), (pad, pad)),
            dimension_numbers=("NCHW", "OIHW", "NCHW"),
            precision=lax.Precision.HIGHEST)

    def bn(x, g, b, m, v):
        inv = (g / jnp.sqrt(v + eps))[None, :, None, None]
        return (x - m[None, :, None, None]) * inv + b[None, :, None, None]

    h = jax.nn.relu(bn(conv(x_nchw, w1, 1), g1, b1, m1, v1))
    h = jax.nn.relu(bn(conv(h, w2, 1), g2, b2, m2, v2))
    shortcut = conv(x_nchw, wp, 0) if cin != cout else x_nchw
    return jax.nn.relu(h + shortcut)


if __name__ == "__main__":
    key = jax.random.PRNGKey(0)
    k_x, k_p, k_x2, k_p2 = jax.random.split(key, 4)

    # Case 1: inplane != outplane -> projection-shortcut path.
    B, INPLANE, OUTPLANE, H, W = 2, 16, 32, 16, 16
    x = jax.random.normal(k_x, (B, INPLANE, H, W), jnp.float32)
    params = init_params(k_p, INPLANE, OUTPLANE)

    out = residue_block(x, params)
    jax.block_until_ready(out)
    ref = _reference(x, params)
    assert out.shape == ref.shape
    # bf16 MXU operands vs f32 HIGHEST-precision reference -> loose-ish tolerance;
    # logic errors would be orders of magnitude larger.
    assert jnp.allclose(out, ref, atol=3e-2, rtol=3e-2), \
        float(jnp.max(jnp.abs(out - ref)))

    # Case 2: inplane == outplane -> identity shortcut (no wp input is built/DMA'd).
    x2 = jax.random.normal(k_x2, (B, INPLANE, H, W), jnp.float32)
    params2 = init_params(k_p2, INPLANE, INPLANE)
    out2 = residue_block(x2, params2)
    jax.block_until_ready(out2)
    ref2 = _reference(x2, params2)
    assert out2.shape == ref2.shape
    assert jnp.allclose(out2, ref2, atol=3e-2, rtol=3e-2), \
        float(jnp.max(jnp.abs(out2 - ref2)))

    print("KERNEL_OK")
</pallas_src>

<mosaic_0001>
module attributes {stable_mosaic.version = 11 : i64} {
  func.func @_residue_block_kernel(%arg0: i32, %arg1: memref<1x342x16xbf16, #tpu.memory_space<vmem>>, %arg2: memref<9x16x16xbf16, #tpu.memory_space<vmem>>, %arg3: memref<1x16xf32, #tpu.memory_space<vmem>>, %arg4: memref<1x16xf32, #tpu.memory_space<vmem>>, %arg5: memref<9x16x32xbf16, #tpu.memory_space<vmem>>, %arg6: memref<1x32xf32, #tpu.memory_space<vmem>>, %arg7: memref<1x32xf32, #tpu.memory_space<vmem>>, %arg8: memref<16x32xbf16, #tpu.memory_space<vmem>>, %arg9: memref<1x288x32xf32, #tpu.memory_space<vmem>>, %arg10: memref<342x16xbf16, #tpu.memory_space<vmem>>) attributes {dimension_semantics = [#tpu.dimension_semantics<parallel>], iteration_bounds = array<i64: 2>, scalar_prefetch = 0 : i64, scratch_operands = 1 : i64, tpu.core_type = #tpu.core_type<tc>, window_params = [{transform_indices = @transform_0, window_bounds = array<i64: 1, 342, 16>}, {pipeline_mode = #tpu.pipeline_mode<synchronous>, transform_indices = @transform_1, window_bounds = array<i64: 9, 16, 16>}, {pipeline_mode = #tpu.pipeline_mode<synchronous>, transform_indices = @transform_2, window_bounds = array<i64: 1, 16>}, {pipeline_mode = #tpu.pipeline_mode<synchronous>, transform_indices = @transform_3, window_bounds = array<i64: 1, 16>}, {pipeline_mode = #tpu.pipeline_mode<synchronous>, transform_indices = @transform_4, window_bounds = array<i64: 9, 16, 32>}, {pipeline_mode = #tpu.pipeline_mode<synchronous>, transform_indices = @transform_5, window_bounds = array<i64: 1, 32>}, {pipeline_mode = #tpu.pipeline_mode<synchronous>, transform_indices = @transform_6, window_bounds = array<i64: 1, 32>}, {pipeline_mode = #tpu.pipeline_mode<synchronous>, transform_indices = @transform_7, window_bounds = array<i64: 16, 32>}, {transform_indices = @transform_8, window_bounds = array<i64: 1, 288, 32>}]} {
    %c0 = arith.constant 0 : index
    %c0_0 = arith.constant 0 : index
    %c0_1 = arith.constant 0 : index
    %0 = vector.load %arg1[%c0, %c0_0, %c0_1] : memref<1x342x16xbf16, #tpu.memory_space<vmem>>, vector<1x288x16xbf16>
    %1 = vector.shape_cast %0 : vector<1x288x16xbf16> to vector<288x16xbf16>
    %c0_2 = arith.constant 0 : index
    %c0_3 = arith.constant 0 : index
    %c0_4 = arith.constant 0 : index
    %2 = vector.load %arg2[%c0_2, %c0_3, %c0_4] : memref<9x16x16xbf16, #tpu.memory_space<vmem>>, vector<1x16x16xbf16>
    %3 = vector.shape_cast %2 : vector<1x16x16xbf16> to vector<16x16xbf16>
    %cst = arith.constant dense<0.000000e+00> : vector<288x16xf32>
    %4 = tpu.matmul %1, %3, %cst {dimension_numbers = #tpu.dot_dimension_numbers<[1], [0], [0], [1], [0, 0, 1, 1], [], []>} : vector<288x16xbf16>, vector<16x16xbf16>, vector<288x16xf32> -> vector<288x16xf32>
    %c0_5 = arith.constant 0 : index
    %c1 = arith.constant 1 : index
    %c0_6 = arith.constant 0 : index
    %5 = vector.load %arg1[%c0_5, %c1, %c0_6] : memref<1x342x16xbf16, #tpu.memory_space<vmem>>, vector<1x288x16xbf16>
    %6 = vector.shape_cast %5 : vector<1x288x16xbf16> to vector<288x16xbf16>
    %c1_7 = arith.constant 1 : index
    %c0_8 = arith.constant 0 : index
    %c0_9 = arith.constant 0 : index
    %7 = vector.load %arg2[%c1_7, %c0_8, %c0_9] : memref<9x16x16xbf16, #tpu.memory_space<vmem>>, vector<1x16x16xbf16>
    %8 = vector.shape_cast %7 : vector<1x16x16xbf16> to vector<16x16xbf16>
    %cst_10 = arith.constant dense<0.000000e+00> : vector<288x16xf32>
    %9 = tpu.matmul %6, %8, %cst_10 {dimension_numbers = #tpu.dot_dimension_numbers<[1], [0], [0], [1], [0, 0, 1, 1], [], []>} : vector<288x16xbf16>, vector<16x16xbf16>, vector<288x16xf32> -> vector<288x16xf32>
    %10 = arith.addf %4, %9 : vector<288x16xf32>
    %c0_11 = arith.constant 0 : index
    %c2 = arith.constant 2 : index
    %c0_12 = arith.constant 0 : index
    %11 = vector.load %arg1[%c0_11, %c2, %c0_12] : memref<1x342x16xbf16, #tpu.memory_space<vmem>>, vector<1x288x16xbf16>
    %12 = vector.shape_cast %11 : vector<1x288x16xbf16> to vector<288x16xbf16>
    %c2_13 = arith.constant 2 : index
    %c0_14 = arith.constant 0 : index
    %c0_15 = arith.constant 0 : index
    %13 = vector.load %arg2[%c2_13, %c0_14, %c0_15] : memref<9x16x16xbf16, #tpu.memory_space<vmem>>, vector<1x16x16xbf16>
    %14 = vector.shape_cast %13 : vector<1x16x16xbf16> to vector<16x16xbf16>
    %cst_16 = arith.constant dense<0.000000e+00> : vector<288x16xf32>
    %15 = tpu.matmul %12, %14, %cst_16 {dimension_numbers = #tpu.dot_dimension_numbers<[1], [0], [0], [1], [0, 0, 1, 1], [], []>} : vector<288x16xbf16>, vector<16x16xbf16>, vector<288x16xf32> -> vector<288x16xf32>
    %16 = arith.addf %10, %15 : vector<288x16xf32>
    %c0_17 = arith.constant 0 : index
    %c18 = arith.constant 18 : index
    %c0_18 = arith.constant 0 : index
    %17 = vector.load %arg1[%c0_17, %c18, %c0_18] : memref<1x342x16xbf16, #tpu.memory_space<vmem>>, vector<1x288x16xbf16>
    %18 = vector.shape_cast %17 : vector<1x288x16xbf16> to vector<288x16xbf16>
    %c3 = arith.constant 3 : index
    %c0_19 = arith.constant 0 : index
    %c0_20 = arith.constant 0 : index
    %19 = vector.load %arg2[%c3, %c0_19, %c0_20] : memref<9x16x16xbf16, #tpu.memory_space<vmem>>, vector<1x16x16xbf16>
    %20 = vector.shape_cast %19 : vector<1x16x16xbf16> to vector<16x16xbf16>
    %cst_21 = arith.constant dense<0.000000e+00> : vector<288x16xf32>
    %21 = tpu.matmul %18, %20, %cst_21 {dimension_numbers = #tpu.dot_dimension_numbers<[1], [0], [0], [1], [0, 0, 1, 1], [], []>} : vector<288x16xbf16>, vector<16x16xbf16>, vector<288x16xf32> -> vector<288x16xf32>
    %22 = arith.addf %16, %21 : vector<288x16xf32>
    %c0_22 = arith.constant 0 : index
    %c19 = arith.constant 19 : index
    %c0_23 = arith.constant 0 : index
    %23 = vector.load %arg1[%c0_22, %c19, %c0_23] : memref<1x342x16xbf16, #tpu.memory_space<vmem>>, vector<1x288x16xbf16>
    %24 = vector.shape_cast %23 : vector<1x288x16xbf16> to vector<288x16xbf16>
    %c4 = arith.constant 4 : index
    %c0_24 = arith.constant 0 : index
    %c0_25 = arith.constant 0 : index
    %25 = vector.load %arg2[%c4, %c0_24, %c0_25] : memref<9x16x16xbf16, #tpu.memory_space<vmem>>, vector<1x16x16xbf16>
    %26 = vector.shape_cast %25 : vector<1x16x16xbf16> to vector<16x16xbf16>
    %cst_26 = arith.constant dense<0.000000e+00> : vector<288x16xf32>
    %27 = tpu.matmul %24, %26, %cst_26 {dimension_numbers = #tpu.dot_dimension_numbers<[1], [0], [0], [1], [0, 0, 1, 1], [], []>} : vector<288x16xbf16>, vector<16x16xbf16>, vector<288x16xf32> -> vector<288x16xf32>
    %28 = arith.addf %22, %27 : vector<288x16xf32>
    %c0_27 = arith.constant 0 : index
    %c20 = arith.constant 20 : index
    %c0_28 = arith.constant 0 : index
    %29 = vector.load %arg1[%c0_27, %c20, %c0_28] : memref<1x342x16xbf16, #tpu.memory_space<vmem>>, vector<1x288x16xbf16>
    %30 = vector.shape_cast %29 : vector<1x288x16xbf16> to vector<288x16xbf16>
    %c5 = arith.constant 5 : index
    %c0_29 = arith.constant 0 : index
    %c0_30 = arith.constant 0 : index
    %31 = vector.load %arg2[%c5, %c0_29, %c0_30] : memref<9x16x16xbf16, #tpu.memory_space<vmem>>, vector<1x16x16xbf16>
    %32 = vector.shape_cast %31 : vector<1x16x16xbf16> to vector<16x16xbf16>
    %cst_31 = arith.constant dense<0.000000e+00> : vector<288x16xf32>
    %33 = tpu.matmul %30, %32, %cst_31 {dimension_numbers = #tpu.dot_dimension_numbers<[1], [0], [0], [1], [0, 0, 1, 1], [], []>} : vector<288x16xbf16>, vector<16x16xbf16>, vector<288x16xf32> -> vector<288x16xf32>
    %34 = arith.addf %28, %33 : vector<288x16xf32>
    %c0_32 = arith.constant 0 : index
    %c36 = arith.constant 36 : index
    %c0_33 = arith.constant 0 : index
    %35 = vector.load %arg1[%c0_32, %c36, %c0_33] : memref<1x342x16xbf16, #tpu.memory_space<vmem>>, vector<1x288x16xbf16>
    %36 = vector.shape_cast %35 : vector<1x288x16xbf16> to vector<288x16xbf16>
    %c6 = arith.constant 6 : index
    %c0_34 = arith.constant 0 : index
    %c0_35 = arith.constant 0 : index
    %37 = vector.load %arg2[%c6, %c0_34, %c0_35] : memref<9x16x16xbf16, #tpu.memory_space<vmem>>, vector<1x16x16xbf16>
    %38 = vector.shape_cast %37 : vector<1x16x16xbf16> to vector<16x16xbf16>
    %cst_36 = arith.constant dense<0.000000e+00> : vector<288x16xf32>
    %39 = tpu.matmul %36, %38, %cst_36 {dimension_numbers = #tpu.dot_dimension_numbers<[1], [0], [0], [1], [0, 0, 1, 1], [], []>} : vector<288x16xbf16>, vector<16x16xbf16>, vector<288x16xf32> -> vector<288x16xf32>
    %40 = arith.addf %34, %39 : vector<288x16xf32>
    %c0_37 = arith.constant 0 : index
    %c37 = arith.constant 37 : index
    %c0_38 = arith.constant 0 : index
    %41 = vector.load %arg1[%c0_37, %c37, %c0_38] : memref<1x342x16xbf16, #tpu.memory_space<vmem>>, vector<1x288x16xbf16>
    %42 = vector.shape_cast %41 : vector<1x288x16xbf16> to vector<288x16xbf16>
    %c7 = arith.constant 7 : index
    %c0_39 = arith.constant 0 : index
    %c0_40 = arith.constant 0 : index
    %43 = vector.load %arg2[%c7, %c0_39, %c0_40] : memref<9x16x16xbf16, #tpu.memory_space<vmem>>, vector<1x16x16xbf16>
    %44 = vector.shape_cast %43 : vector<1x16x16xbf16> to vector<16x16xbf16>
    %cst_41 = arith.constant dense<0.000000e+00> : vector<288x16xf32>
    %45 = tpu.matmul %42, %44, %cst_41 {dimension_numbers = #tpu.dot_dimension_numbers<[1], [0], [0], [1], [0, 0, 1, 1], [], []>} : vector<288x16xbf16>, vector<16x16xbf16>, vector<288x16xf32> -> vector<288x16xf32>
    %46 = arith.addf %40, %45 : vector<288x16xf32>
    %c0_42 = arith.constant 0 : index
    %c38 = arith.constant 38 : index
    %c0_43 = arith.constant 0 : index
    %47 = vector.load %arg1[%c0_42, %c38, %c0_43] : memref<1x342x16xbf16, #tpu.memory_space<vmem>>, vector<1x288x16xbf16>
    %48 = vector.shape_cast %47 : vector<1x288x16xbf16> to vector<288x16xbf16>
    %c8 = arith.constant 8 : index
    %c0_44 = arith.constant 0 : index
    %c0_45 = arith.constant 0 : index
    %49 = vector.load %arg2[%c8, %c0_44, %c0_45] : memref<9x16x16xbf16, #tpu.memory_space<vmem>>, vector<1x16x16xbf16>
    %50 = vector.shape_cast %49 : vector<1x16x16xbf16> to vector<16x16xbf16>
    %cst_46 = arith.constant dense<0.000000e+00> : vector<288x16xf32>
    %51 = tpu.matmul %48, %50, %cst_46 {dimension_numbers = #tpu.dot_dimension_numbers<[1], [0], [0], [1], [0, 0, 1, 1], [], []>} : vector<288x16xbf16>, vector<16x16xbf16>, vector<288x16xf32> -> vector<288x16xf32>
    %52 = arith.addf %46, %51 : vector<288x16xf32>
    %c0_47 = arith.constant 0 : index
    %c0_48 = arith.constant 0 : index
    %53 = vector.load %arg3[%c0_47, %c0_48] : memref<1x16xf32, #tpu.memory_space<vmem>>, vector<1x16xf32>
    %54 = vector.broadcast %53 : vector<1x16xf32> to vector<288x16xf32>
    %55 = arith.mulf %52, %54 : vector<288x16xf32>
    %c0_49 = arith.constant 0 : index
    %c0_50 = arith.constant 0 : index
    %56 = vector.load %arg4[%c0_49, %c0_50] : memref<1x16xf32, #tpu.memory_space<vmem>>, vector<1x16xf32>
    %57 = vector.broadcast %56 : vector<1x16xf32> to vector<288x16xf32>
    %58 = arith.addf %55, %57 : vector<288x16xf32>
    %cst_51 = arith.constant 0.000000e+00 : f32
    %59 = vector.broadcast %cst_51 : f32 to vector<288x16xf32>
    %60 = arith.maximumf %58, %59 : vector<288x16xf32>
    %61 = tpu.iota {dimensions = array<i32: 0>} : vector<288x1xi32>
    %c18_i32 = arith.constant 18 : i32
    %c0_i32 = arith.constant 0 : i32
    %62 = arith.cmpi eq, %c18_i32, %c0_i32 : i32
    %c1_i32 = arith.constant 1 : i32
    %63 = arith.select %62, %c1_i32, %c18_i32 : i32
    %64 = vector.broadcast %63 : i32 to vector<288x1xi32>
    %65 = arith.remsi %61, %64 : vector<288x1xi32>
    %c0_i32_52 = arith.constant 0 : i32
    %66 = vector.broadcast %c0_i32_52 : i32 to vector<288x1xi32>
    %67 = arith.cmpi ne, %65, %66 : vector<288x1xi32>
    %c0_i32_53 = arith.constant 0 : i32
    %68 = vector.broadcast %c0_i32_53 : i32 to vector<288x1xi32>
    %69 = arith.cmpi slt, %65, %68 : vector<288x1xi32>
    %c0_i32_54 = arith.constant 0 : i32
    %70 = arith.cmpi slt, %63, %c0_i32_54 : i32
    %71 = vector.broadcast %70 : i1 to vector<288x1xi1>
    %72 = vector.broadcast %71 : vector<288x1xi1> to vector<288x1xi1>
    %73 = arith.xori %69, %72 : vector<288x1xi1>
    %74 = arith.andi %73, %67 : vector<288x1xi1>
    %75 = vector.broadcast %63 : i32 to vector<288x1xi32>
    %76 = arith.addi %65, %75 : vector<288x1xi32>
    %77 = arith.select %74, %76, %65 : vector<288x1xi1>, vector<288x1xi32>
    %c16_i32 = arith.constant 16 : i32
    %78 = vector.broadcast %c16_i32 : i32 to vector<288x1xi32>
    %79 = arith.cmpi slt, %77, %78 : vector<288x1xi32>
    %cst_55 = arith.constant 0.000000e+00 : f32
    %80 = vector.shape_cast %79 : vector<288x1xi1> to vector<288x1xi1>
    %81 = vector.broadcast %80 : vector<288x1xi1> to vector<288x16xi1>
    %82 = vector.broadcast %cst_55 : f32 to vector<288x16xf32>
    %83 = arith.select %81, %60, %82 : vector<288x16xi1>, vector<288x16xf32>
    %84 = arith.truncf %83 : vector<288x16xf32> to vector<288x16xbf16>
    %cst_56 = arith.constant 0.000000e+00 : bf16
    %85 = vector.broadcast %cst_56 : bf16 to vector<19x16xbf16>
    %c0_57 = arith.constant 0 : index
    %c0_58 = arith.constant 0 : index
    %86 = vector.load %arg10[%c0_57, %c0_58] : memref<342x16xbf16, #tpu.memory_space<vmem>>, vector<19x16xbf16>
    tpu.vector_store %arg10[%c0_57, %c0_58], %85 {strides = array<i32>} : memref<342x16xbf16, #tpu.memory_space<vmem>>, vector<19x16xbf16>,
    %cst_59 = arith.constant 0.000000e+00 : bf16
    %87 = vector.broadcast %cst_59 : bf16 to vector<35x16xbf16>
    %c307 = arith.constant 307 : index
    %c0_60 = arith.constant 0 : index
    %88 = vector.load %arg10[%c307, %c0_60] : memref<342x16xbf16, #tpu.memory_space<vmem>>, vector<35x16xbf16>
    tpu.vector_store %arg10[%c307, %c0_60], %87 {strides = array<i32>} : memref<342x16xbf16, #tpu.memory_space<vmem>>, vector<35x16xbf16>,
    %c19_61 = arith.constant 19 : index
    %c0_62 = arith.constant 0 : index
    %89 = vector.load %arg10[%c19_61, %c0_62] : memref<342x16xbf16, #tpu.memory_space<vmem>>, vector<288x16xbf16>
    tpu.vector_store %arg10[%c19_61, %c0_62], %84 {strides = array<i32>} : memref<342x16xbf16, #tpu.memory_space<vmem>>, vector<288x16xbf16>,
    %c0_63 = arith.constant 0 : index
    %c0_64 = arith.constant 0 : index
    %90 = vector.load %arg10[%c0_63, %c0_64] : memref<342x16xbf16, #tpu.memory_space<vmem>>, vector<288x16xbf16>
    %c0_65 = arith.constant 0 : index
    %c0_66 = arith.constant 0 : index
    %c0_67 = arith.constant 0 : index
    %91 = vector.load %arg5[%c0_65, %c0_66, %c0_67] : memref<9x16x32xbf16, #tpu.memory_space<vmem>>, vector<1x16x32xbf16>
    %92 = vector.shape_cast %91 : vector<1x16x32xbf16> to vector<16x32xbf16>
    %cst_68 = arith.constant dense<0.000000e+00> : vector<288x32xf32>
    %93 = tpu.matmul %90, %92, %cst_68 {dimension_numbers = #tpu.dot_dimension_numbers<[1], [0], [0], [1], [0, 0, 1, 1], [], []>} : vector<288x16xbf16>, vector<16x32xbf16>, vector<288x32xf32> -> vector<288x32xf32>
    %c1_69 = arith.constant 1 : index
    %c0_70 = arith.constant 0 : index
    %94 = vector.load %arg10[%c1_69, %c0_70] : memref<342x16xbf16, #tpu.memory_space<vmem>>, vector<288x16xbf16>
    %c1_71 = arith.constant 1 : index
    %c0_72 = arith.constant 0 : index
    %c0_73 = arith.constant 0 : index
    %95 = vector.load %arg5[%c1_71, %c0_72, %c0_73] : memref<9x16x32xbf16, #tpu.memory_space<vmem>>, vector<1x16x32xbf16>
    %96 = vector.shape_cast %95 : vector<1x16x32xbf16> to vector<16x32xbf16>
    %cst_74 = arith.constant dense<0.000000e+00> : vector<288x32xf32>
    %97 = tpu.matmul %94, %96, %cst_74 {dimension_numbers = #tpu.dot_dimension_numbers<[1], [0], [0], [1], [0, 0, 1, 1], [], []>} : vector<288x16xbf16>, vector<16x32xbf16>, vector<288x32xf32> -> vector<288x32xf32>
    %98 = arith.addf %93, %97 : vector<288x32xf32>
    %c2_75 = arith.constant 2 : index
    %c0_76 = arith.constant 0 : index
    %99 = vector.load %arg10[%c2_75, %c0_76] : memref<342x16xbf16, #tpu.memory_space<vmem>>, vector<288x16xbf16>
    %c2_77 = arith.constant 2 : index
    %c0_78 = arith.constant 0 : index
    %c0_79 = arith.constant 0 : index
    %100 = vector.load %arg5[%c2_77, %c0_78, %c0_79] : memref<9x16x32xbf16, #tpu.memory_space<vmem>>, vector<1x16x32xbf16>
    %101 = vector.shape_cast %100 : vector<1x16x32xbf16> to vector<16x32xbf16>
    %cst_80 = arith.constant dense<0.000000e+00> : vector<288x32xf32>
    %102 = tpu.matmul %99, %101, %cst_80 {dimension_numbers = #tpu.dot_dimension_numbers<[1], [0], [0], [1], [0, 0, 1, 1], [], []>} : vector<288x16xbf16>, vector<16x32xbf16>, vector<288x32xf32> -> vector<288x32xf32>
    %103 = arith.addf %98, %102 : vector<288x32xf32>
    %c18_81 = arith.constant 18 : index
    %c0_82 = arith.constant 0 : index
    %104 = vector.load %arg10[%c18_81, %c0_82] : memref<342x16xbf16, #tpu.memory_space<vmem>>, vector<288x16xbf16>
    %c3_83 = arith.constant 3 : index
    %c0_84 = arith.constant 0 : index
    %c0_85 = arith.constant 0 : index
    %105 = vector.load %arg5[%c3_83, %c0_84, %c0_85] : memref<9x16x32xbf16, #tpu.memory_space<vmem>>, vector<1x16x32xbf16>
    %106 = vector.shape_cast %105 : vector<1x16x32xbf16> to vector<16x32xbf16>
    %cst_86 = arith.constant dense<0.000000e+00> : vector<288x32xf32>
    %107 = tpu.matmul %104, %106, %cst_86 {dimension_numbers = #tpu.dot_dimension_numbers<[1], [0], [0], [1], [0, 0, 1, 1], [], []>} : vector<288x16xbf16>, vector<16x32xbf16>, vector<288x32xf32> -> vector<288x32xf32>
    %108 = arith.addf %103, %107 : vector<288x32xf32>
    %c19_87 = arith.constant 19 : index
    %c0_88 = arith.constant 0 : index
    %109 = vector.load %arg10[%c19_87, %c0_88] : memref<342x16xbf16, #tpu.memory_space<vmem>>, vector<288x16xbf16>
    %c4_89 = arith.constant 4 : index
    %c0_90 = arith.constant 0 : index
    %c0_91 = arith.constant 0 : index
    %110 = vector.load %arg5[%c4_89, %c0_90, %c0_91] : memref<9x16x32xbf16, #tpu.memory_space<vmem>>, vector<1x16x32xbf16>
    %111 = vector.shape_cast %110 : vector<1x16x32xbf16> to vector<16x32xbf16>
    %cst_92 = arith.constant dense<0.000000e+00> : vector<288x32xf32>
    %112 = tpu.matmul %109, %111, %cst_92 {dimension_numbers = #tpu.dot_dimension_numbers<[1], [0], [0], [1], [0, 0, 1, 1], [], []>} : vector<288x16xbf16>, vector<16x32xbf16>, vector<288x32xf32> -> vector<288x32xf32>
    %113 = arith.addf %108, %112 : vector<288x32xf32>
    %c20_93 = arith.constant 20 : index
    %c0_94 = arith.constant 0 : index
    %114 = vector.load %arg10[%c20_93, %c0_94] : memref<342x16xbf16, #tpu.memory_space<vmem>>, vector<288x16xbf16>
    %c5_95 = arith.constant 5 : index
    %c0_96 = arith.constant 0 : index
    %c0_97 = arith.constant 0 : index
    %115 = vector.load %arg5[%c5_95, %c0_96, %c0_97] : memref<9x16x32xbf16, #tpu.memory_space<vmem>>, vector<1x16x32xbf16>
    %116 = vector.shape_cast %115 : vector<1x16x32xbf16> to vector<16x32xbf16>
    %cst_98 = arith.constant dense<0.000000e+00> : vector<288x32xf32>
    %117 = tpu.matmul %114, %116, %cst_98 {dimension_numbers = #tpu.dot_dimension_numbers<[1], [0], [0], [1], [0, 0, 1, 1], [], []>} : vector<288x16xbf16>, vector<16x32xbf16>, vector<288x32xf32> -> vector<288x32xf32>
    %118 = arith.addf %113, %117 : vector<288x32xf32>
    %c36_99 = arith.constant 36 : index
    %c0_100 = arith.constant 0 : index
    %119 = vector.load %arg10[%c36_99, %c0_100] : memref<342x16xbf16, #tpu.memory_space<vmem>>, vector<288x16xbf16>
    %c6_101 = arith.constant 6 : index
    %c0_102 = arith.constant 0 : index
    %c0_103 = arith.constant 0 : index
    %120 = vector.load %arg5[%c6_101, %c0_102, %c0_103] : memref<9x16x32xbf16, #tpu.memory_space<vmem>>, vector<1x16x32xbf16>
    %121 = vector.shape_cast %120 : vector<1x16x32xbf16> to vector<16x32xbf16>
    %cst_104 = arith.constant dense<0.000000e+00> : vector<288x32xf32>
    %122 = tpu.matmul %119, %121, %cst_104 {dimension_numbers = #tpu.dot_dimension_numbers<[1], [0], [0], [1], [0, 0, 1, 1], [], []>} : vector<288x16xbf16>, vector<16x32xbf16>, vector<288x32xf32> -> vector<288x32xf32>
    %123 = arith.addf %118, %122 : vector<288x32xf32>
    %c37_105 = arith.constant 37 : index
    %c0_106 = arith.constant 0 : index
    %124 = vector.load %arg10[%c37_105, %c0_106] : memref<342x16xbf16, #tpu.memory_space<vmem>>, vector<288x16xbf16>
    %c7_107 = arith.constant 7 : index
    %c0_108 = arith.constant 0 : index
    %c0_109 = arith.constant 0 : index
    %125 = vector.load %arg5[%c7_107, %c0_108, %c0_109] : memref<9x16x32xbf16, #tpu.memory_space<vmem>>, vector<1x16x32xbf16>
    %126 = vector.shape_cast %125 : vector<1x16x32xbf16> to vector<16x32xbf16>
    %cst_110 = arith.constant dense<0.000000e+00> : vector<288x32xf32>
    %127 = tpu.matmul %124, %126, %cst_110 {dimension_numbers = #tpu.dot_dimension_numbers<[1], [0], [0], [1], [0, 0, 1, 1], [], []>} : vector<288x16xbf16>, vector<16x32xbf16>, vector<288x32xf32> -> vector<288x32xf32>
    %128 = arith.addf %123, %127 : vector<288x32xf32>
    %c38_111 = arith.constant 38 : index
    %c0_112 = arith.constant 0 : index
    %129 = vector.load %arg10[%c38_111, %c0_112] : memref<342x16xbf16, #tpu.memory_space<vmem>>, vector<288x16xbf16>
    %c8_113 = arith.constant 8 : index
    %c0_114 = arith.constant 0 : index
    %c0_115 = arith.constant 0 : index
    %130 = vector.load %arg5[%c8_113, %c0_114, %c0_115] : memref<9x16x32xbf16, #tpu.memory_space<vmem>>, vector<1x16x32xbf16>
    %131 = vector.shape_cast %130 : vector<1x16x32xbf16> to vector<16x32xbf16>
    %cst_116 = arith.constant dense<0.000000e+00> : vector<288x32xf32>
    %132 = tpu.matmul %129, %131, %cst_116 {dimension_numbers = #tpu.dot_dimension_numbers<[1], [0], [0], [1], [0, 0, 1, 1], [], []>} : vector<288x16xbf16>, vector<16x32xbf16>, vector<288x32xf32> -> vector<288x32xf32>
    %133 = arith.addf %128, %132 : vector<288x32xf32>
    %c0_117 = arith.constant 0 : index
    %c0_118 = arith.constant 0 : index
    %134 = vector.load %arg6[%c0_117, %c0_118] : memref<1x32xf32, #tpu.memory_space<vmem>>, vector<1x32xf32>
    %135 = vector.broadcast %134 : vector<1x32xf32> to vector<288x32xf32>
    %136 = arith.mulf %133, %135 : vector<288x32xf32>
    %c0_119 = arith.constant 0 : index
    %c0_120 = arith.constant 0 : index
    %137 = vector.load %arg7[%c0_119, %c0_120] : memref<1x32xf32, #tpu.memory_space<vmem>>, vector<1x32xf32>
    %138 = vector.broadcast %137 : vector<1x32xf32> to vector<288x32xf32>
    %139 = arith.addf %136, %138 : vector<288x32xf32>
    %cst_121 = arith.constant 0.000000e+00 : f32
    %140 = vector.broadcast %cst_121 : f32 to vector<288x32xf32>
    %141 = arith.maximumf %139, %140 : vector<288x32xf32>
    %c0_122 = arith.constant 0 : index
    %c19_123 = arith.constant 19 : index
    %c0_124 = arith.constant 0 : index
    %142 = vector.load %arg1[%c0_122, %c19_123, %c0_124] : memref<1x342x16xbf16, #tpu.memory_space<vmem>>, vector<1x288x16xbf16>
    %143 = vector.shape_cast %142 : vector<1x288x16xbf16> to vector<288x16xbf16>
    %c0_125 = arith.constant 0 : index
    %c0_126 = arith.constant 0 : index
    %144 = vector.load %arg8[%c0_125, %c0_126] : memref<16x32xbf16, #tpu.memory_space<vmem>>, vector<16x32xbf16>
    %cst_127 = arith.constant dense<0.000000e+00> : vector<288x32xf32>
    %145 = tpu.matmul %143, %144, %cst_127 {dimension_numbers = #tpu.dot_dimension_numbers<[1], [0], [0], [1], [0, 0, 1, 1], [], []>} : vector<288x16xbf16>, vector<16x32xbf16>, vector<288x32xf32> -> vector<288x32xf32>
    %146 = arith.addf %141, %145 : vector<288x32xf32>
    %cst_128 = arith.constant 0.000000e+00 : f32
    %147 = vector.broadcast %cst_128 : f32 to vector<288x32xf32>
    %148 = arith.maximumf %146, %147 : vector<288x32xf32>
    %c0_129 = arith.constant 0 : index
    %c0_130 = arith.constant 0 : index
    %c0_131 = arith.constant 0 : index
    %149 = vector.load %arg9[%c0_129, %c0_130, %c0_131] : memref<1x288x32xf32, #tpu.memory_space<vmem>>, vector<1x288x32xf32>
    %150 = vector.shape_cast %149 : vector<1x288x32xf32> to vector<288x32xf32>
    %151 = vector.shape_cast %148 : vector<288x32xf32> to vector<1x288x32xf32>
    tpu.vector_store %arg9[%c0_129, %c0_130, %c0_131], %151 {strides = array<i32>} : memref<1x288x32xf32, #tpu.memory_space<vmem>>, vector<1x288x32xf32>,
    return
  }
  func.func @transform_0(%arg0: i32) -> (i32, i32, i32) {
    %c0_i32 = arith.constant 0 : i32
    %c0_i32_0 = arith.constant 0 : i32
    %c0_i32_1 = arith.constant 0 : i32
    return %arg0, %c0_i32, %c0_i32_0 : i32, i32, i32
  }
  func.func @transform_1(%arg0: i32) -> (i32, i32, i32) {
    %c0_i32 = arith.constant 0 : i32
    %c0_i32_0 = arith.constant 0 : i32
    %c0_i32_1 = arith.constant 0 : i32
    %c0_i32_2 = arith.constant 0 : i32
    return %c0_i32, %c0_i32_0, %c0_i32_1 : i32, i32, i32
  }
  func.func @transform_2(%arg0: i32) -> (i32, i32) {
    %c0_i32 = arith.constant 0 : i32
    %c0_i32_0 = arith.constant 0 : i32
    %c0_i32_1 = arith.constant 0 : i32
    return %c0_i32, %c0_i32_0 : i32, i32
  }
  func.func @transform_3(%arg0: i32) -> (i32, i32) {
    %c0_i32 = arith.constant 0 : i32
    %c0_i32_0 = arith.constant 0 : i32
    %c0_i32_1 = arith.constant 0 : i32
    return %c0_i32, %c0_i32_0 : i32, i32
  }
  func.func @transform_4(%arg0: i32) -> (i32, i32, i32) {
    %c0_i32 = arith.constant 0 : i32
    %c0_i32_0 = arith.constant 0 : i32
    %c0_i32_1 = arith.constant 0 : i32
    %c0_i32_2 = arith.constant 0 : i32
    return %c0_i32, %c0_i32_0, %c0_i32_1 : i32, i32, i32
  }
  func.func @transform_5(%arg0: i32) -> (i32, i32) {
    %c0_i32 = arith.constant 0 : i32
    %c0_i32_0 = arith.constant 0 : i32
    %c0_i32_1 = arith.constant 0 : i32
    return %c0_i32, %c0_i32_0 : i32, i32
  }
  func.func @transform_6(%arg0: i32) -> (i32, i32) {
    %c0_i32 = arith.constant 0 : i32
    %c0_i32_0 = arith.constant 0 : i32
    %c0_i32_1 = arith.constant 0 : i32
    return %c0_i32, %c0_i32_0 : i32, i32
  }
  func.func @transform_7(%arg0: i32) -> (i32, i32) {
    %c0_i32 = arith.constant 0 : i32
    %c0_i32_0 = arith.constant 0 : i32
    %c0_i32_1 = arith.constant 0 : i32
    return %c0_i32, %c0_i32_0 : i32, i32
  }
  func.func @transform_8(%arg0: i32) -> (i32, i32, i32) {
    %c0_i32 = arith.constant 0 : i32
    %c0_i32_0 = arith.constant 0 : i32
    %c0_i32_1 = arith.constant 0 : i32
    return %arg0, %c0_i32, %c0_i32_0 : i32, i32, i32
  }
}

</mosaic_0001>

<llo_original>
// kernel: tpu_custom_call.1
$region0: #{tpu_custom_call.1}
  #allocation0 [shape = 'u32[]', space=smem, size = 0x4, offset = 0x4, fixed_abs, tag = 'smem constant byte address 0x4 - core index']
  #allocation1 [shape = 'u32[144,128]{1,0:T(1,128)}', space=vmem, size = 0x12000, scoped, tag = 'internal scratch']
  #allocation2 [shape = 'bf16[342,16]{1,0:T(8,128)(2,1)}', space=vmem, size = 0x15800, scoped, tag = 'scratch operand']
  %s0 = inlined_call_operand.vmem [shape: bf16[2,342,16], index: 0, kind: input, shape index: {}]
  %s1 = inlined_call_operand.vmem [shape: bf16[9,16,16], index: 1, kind: input, shape index: {}]
  %s2 = inlined_call_operand.vmem [shape: f32[1,16], index: 2, kind: input, shape index: {}]
  %s3 = inlined_call_operand.vmem [shape: f32[1,16], index: 3, kind: input, shape index: {}]
  %s4 = inlined_call_operand.vmem [shape: bf16[9,16,32], index: 4, kind: input, shape index: {}]
  %s5 = inlined_call_operand.vmem [shape: f32[1,32], index: 5, kind: input, shape index: {}]
  %s6 = inlined_call_operand.vmem [shape: f32[1,32], index: 6, kind: input, shape index: {}]
  %s7 = inlined_call_operand.vmem [shape: bf16[16,32], index: 7, kind: input, shape index: {}]
  %s8 = inlined_call_operand.vmem [shape: f32[2,288,32], index: 8, kind: output, shape index: {}]
  %s9 = sld [smem:[#allocation0]]
  $region65: #{tpu_custom_call.1} parent=0
    _
  %s11 = ssub.s32 1, %s9
  %s12 = scalar_select 0, %s11, %s9
  loop: start=0, step=1, limit=4
  $region2: #{tpu_custom_call.1} parent=0 // loop_pre_header
    _
  $region3: #{tpu_custom_call.1} parent=0 // loop_header
    %s14 = sphi 0, %s18
    %p15 = scmp.ge.s32.totalorder %s14, 4
    %s24 = sphi 0, %s26
    %s27 = sphi 0, %s24
    %s28 = sphi 0, %s27
    %s44 = sphi 0, %s28
    %s48 = sphi 0, %s48
    %s50 = sphi 0, %s48
    %s51 = sphi 0, %s50
    %s65 = sphi 0, %s51
    %s69 = sphi 0, %s69
    %s71 = sphi 0, %s69
    %s72 = sphi 0, %s71
    %s86 = sphi 0, %s72
    %s90 = sphi 0, %s90
    %s92 = sphi 0, %s90
    %s93 = sphi 0, %s92
    %s107 = sphi 0, %s93
    %s111 = sphi 0, %s111
    %s113 = sphi 0, %s111
    %s114 = sphi 0, %s113
    %s128 = sphi 0, %s114
    %s132 = sphi 0, %s132
    %s134 = sphi 0, %s132
    %s135 = sphi 0, %s134
    %s149 = sphi 0, %s135
    %s153 = sphi 0, %s153
    %s155 = sphi 0, %s153
    %s156 = sphi 0, %s155
    %s170 = sphi 0, %s156
    %s174 = sphi 0, %s174
    %s176 = sphi 0, %s174
    %s177 = sphi 0, %s176
    %s191 = sphi 0, %s177
    %s197 = sphi 0, %s199
    %s200 = sphi 0, %s197
    %s201 = sphi 0, %s200
    %s217 = sphi 0, %s201
  $region4: #{tpu_custom_call.1} parent=0 // loop_header_branch
    %17 = sbr.rel (%p15) target = $region8
  $region5: #{tpu_custom_call.1} parent=0 // loop_body
    %s19 = ssub.s32 %s14, 1
    %s20 = ssub.s32 %s14, 2
    %s21 = sadd.s32 %s14, 1
    %s22 = ssub.s32 %s14, %s21
    %p23 = scmp.eq.s32.totalorder %s22, 0
    %s25 = sadd.s32 %s24, 1
    %s26 = scalar_select %p23, %s24, %s25
    %p29 = pneg %p23
    %p30 = scmp.eq.s32.totalorder %s14, 1
    %p31 = por %p29, %p30
    %p32 = scmp.ne.s32.totalorder %s24, %s27
    %p33 = scmp.eq.s32.totalorder %s14, 0
    %p34 = por %p32, %p33
    %p35 = scmp.ne.s32.totalorder %s24, %s27
    %p36 = scmp.eq.s32.totalorder %s19, 1
    %p37 = por %p35, %p36
    %p38 = scmp.ne.s32.totalorder %s27, %s28
    %p39 = scmp.eq.s32.totalorder %s19, 0
    %p40 = por %p38, %p39
    %p41 = scmp.ne.s32.totalorder %s27, %s28
    %p42 = scmp.eq.s32.totalorder %s20, 1
    %p43 = por %p41, %p42
    %p45 = scmp.ne.s32.totalorder %s28, %s44
    %p46 = scmp.eq.s32.totalorder %s20, 0
    %p47 = por %p45, %p46
    %s49 = sadd.s32 %s48, 1
    %p52 = scmp.eq.s32.totalorder %s14, 1
    %p53 = scmp.ne.s32.totalorder %s48, %s50
    %p54 = scmp.eq.s32.totalorder %s14, 0
    %p55 = por %p53, %p54
    %p56 = scmp.ne.s32.totalorder %s48, %s50
    %p57 = scmp.eq.s32.totalorder %s19, 1
    %p58 = por %p56, %p57
    %p59 = scmp.ne.s32.totalorder %s50, %s51
    %p60 = scmp.eq.s32.totalorder %s19, 0
    %p61 = por %p59, %p60
    %p62 = scmp.ne.s32.totalorder %s50, %s51
    %p63 = scmp.eq.s32.totalorder %s20, 1
    %p64 = por %p62, %p63
    %p66 = scmp.ne.s32.totalorder %s51, %s65
    %p67 = scmp.eq.s32.totalorder %s20, 0
    %p68 = por %p66, %p67
    %s70 = sadd.s32 %s69, 1
    %p73 = scmp.eq.s32.totalorder %s14, 1
    %p74 = scmp.ne.s32.totalorder %s69, %s71
    %p75 = scmp.eq.s32.totalorder %s14, 0
    %p76 = por %p74, %p75
    %p77 = scmp.ne.s32.totalorder %s69, %s71
    %p78 = scmp.eq.s32.totalorder %s19, 1
    %p79 = por %p77, %p78
    %p80 = scmp.ne.s32.totalorder %s71, %s72
    %p81 = scmp.eq.s32.totalorder %s19, 0
    %p82 = por %p80, %p81
    %p83 = scmp.ne.s32.totalorder %s71, %s72
    %p84 = scmp.eq.s32.totalorder %s20, 1
    %p85 = por %p83, %p84
    %p87 = scmp.ne.s32.totalorder %s72, %s86
    %p88 = scmp.eq.s32.totalorder %s20, 0
    %p89 = por %p87, %p88
    %s91 = sadd.s32 %s90, 1
    %p94 = scmp.eq.s32.totalorder %s14, 1
    %p95 = scmp.ne.s32.totalorder %s90, %s92
    %p96 = scmp.eq.s32.totalorder %s14, 0
    %p97 = por %p95, %p96
    %p98 = scmp.ne.s32.totalorder %s90, %s92
    %p99 = scmp.eq.s32.totalorder %s19, 1
    %p100 = por %p98, %p99
    %p101 = scmp.ne.s32.totalorder %s92, %s93
    %p102 = scmp.eq.s32.totalorder %s19, 0
    %p103 = por %p101, %p102
    %p104 = scmp.ne.s32.totalorder %s92, %s93
    %p105 = scmp.eq.s32.totalorder %s20, 1
    %p106 = por %p104, %p105
    %p108 = scmp.ne.s32.totalorder %s93, %s107
    %p109 = scmp.eq.s32.totalorder %s20, 0
    %p110 = por %p108, %p109
    %s112 = sadd.s32 %s111, 1
    %p115 = scmp.eq.s32.totalorder %s14, 1
    %p116 = scmp.ne.s32.totalorder %s111, %s113
    %p117 = scmp.eq.s32.totalorder %s14, 0
    %p118 = por %p116, %p117
    %p119 = scmp.ne.s32.totalorder %s111, %s113
    %p120 = scmp.eq.s32.totalorder %s19, 1
    %p121 = por %p119, %p120
    %p122 = scmp.ne.s32.totalorder %s113, %s114
    %p123 = scmp.eq.s32.totalorder %s19, 0
    %p124 = por %p122, %p123
    %p125 = scmp.ne.s32.totalorder %s113, %s114
    %p126 = scmp.eq.s32.totalorder %s20, 1
    %p127 = por %p125, %p126
    %p129 = scmp.ne.s32.totalorder %s114, %s128
    %p130 = scmp.eq.s32.totalorder %s20, 0
    %p131 = por %p129, %p130
    %s133 = sadd.s32 %s132, 1
    %p136 = scmp.eq.s32.totalorder %s14, 1
    %p137 = scmp.ne.s32.totalorder %s132, %s134
    %p138 = scmp.eq.s32.totalorder %s14, 0
    %p139 = por %p137, %p138
    %p140 = scmp.ne.s32.totalorder %s132, %s134
    %p141 = scmp.eq.s32.totalorder %s19, 1
    %p142 = por %p140, %p141
    %p143 = scmp.ne.s32.totalorder %s134, %s135
    %p144 = scmp.eq.s32.totalorder %s19, 0
    %p145 = por %p143, %p144
    %p146 = scmp.ne.s32.totalorder %s134, %s135
    %p147 = scmp.eq.s32.totalorder %s20, 1
    %p148 = por %p146, %p147
    %p150 = scmp.ne.s32.totalorder %s135, %s149
    %p151 = scmp.eq.s32.totalorder %s20, 0
    %p152 = por %p150, %p151
    %s154 = sadd.s32 %s153, 1
    %p157 = scmp.eq.s32.totalorder %s14, 1
    %p158 = scmp.ne.s32.totalorder %s153, %s155
    %p159 = scmp.eq.s32.totalorder %s14, 0
    %p160 = por %p158, %p159
    %p161 = scmp.ne.s32.totalorder %s153, %s155
    %p162 = scmp.eq.s32.totalorder %s19, 1
    %p163 = por %p161, %p162
    %p164 = scmp.ne.s32.totalorder %s155, %s156
    %p165 = scmp.eq.s32.totalorder %s19, 0
    %p166 = por %p164, %p165
    %p167 = scmp.ne.s32.totalorder %s155, %s156
    %p168 = scmp.eq.s32.totalorder %s20, 1
    %p169 = por %p167, %p168
    %p171 = scmp.ne.s32.totalorder %s156, %s170
    %p172 = scmp.eq.s32.totalorder %s20, 0
    %p173 = por %p171, %p172
    %s175 = sadd.s32 %s174, 1
    %p178 = scmp.eq.s32.totalorder %s14, 1
    %p179 = scmp.ne.s32.totalorder %s174, %s176
    %p180 = scmp.eq.s32.totalorder %s14, 0
    %p181 = por %p179, %p180
    %p182 = scmp.ne.s32.totalorder %s174, %s176
    %p183 = scmp.eq.s32.totalorder %s19, 1
    %p184 = por %p182, %p183
    %p185 = scmp.ne.s32.totalorder %s176, %s177
    %p186 = scmp.eq.s32.totalorder %s19, 0
    %p187 = por %p185, %p186
    %p188 = scmp.ne.s32.totalorder %s176, %s177
    %p189 = scmp.eq.s32.totalorder %s20, 1
    %p190 = por %p188, %p189
    %p192 = scmp.ne.s32.totalorder %s177, %s191
    %p193 = scmp.eq.s32.totalorder %s20, 0
    %p194 = por %p192, %p193
    %s195 = ssub.s32 %s14, %s21
    %p196 = scmp.eq.s32.totalorder %s195, 0
    %s198 = sadd.s32 %s197, 1
    %s199 = scalar_select %p196, %s197, %s198
    %p202 = pneg %p196
    %p203 = scmp.eq.s32.totalorder %s14, 1
    %p204 = por %p202, %p203
    %p205 = scmp.ne.s32.totalorder %s197, %s200
    %p206 = scmp.eq.s32.totalorder %s14, 0
    %p207 = por %p205, %p206
    %p208 = scmp.ne.s32.totalorder %s197, %s200
    %p209 = scmp.eq.s32.totalorder %s19, 1
    %p210 = por %p208, %p209
    %p211 = scmp.ne.s32.totalorder %s200, %s201
    %p212 = scmp.eq.s32.totalorder %s19, 0
    %p213 = por %p211, %p212
    %p214 = scmp.ne.s32.totalorder %s200, %s201
    %p215 = scmp.eq.s32.totalorder %s20, 1
    %p216 = por %p214, %p215
    %p218 = scmp.ne.s32.totalorder %s201, %s217
    %p219 = scmp.eq.s32.totalorder %s20, 0
    %p220 = por %p218, %p219
    %p221 = scmp.le.s32.totalorder 1, %s14
    %p222 = scmp.lt.s32.totalorder %s14, 3
    %p223 = pnand %p221, %p222
    %p224 = pneg %p223
    // Predicated region
    $region9: #{tpu_custom_call.1} parent=5 // pred_check
      _
    $region10: #{tpu_custom_call.1} parent=5 // pred_check_branch
      %226 = sbr.rel (%p223) target = $region12
    $region11: #{tpu_custom_call.1} parent=5 // pred_region
      %s227 = ssub.s32 %s14, 1
      // Predicated region
      $region13: #{tpu_custom_call.1} parent=11 // pred_check
        %p228 = pneg %p61
      $region14: #{tpu_custom_call.1} parent=11 // pred_check_branch
        %230 = sbr.rel (%p228) target = $region16
      $region15: #{tpu_custom_call.1} parent=11 // pred_region
        _
      $region16: #{tpu_custom_call.1} parent=11 // pred_fallthru
        _
      // Predicated region
      $region17: #{tpu_custom_call.1} parent=11 // pred_check
        %p231 = pneg %p82
      $region18: #{tpu_custom_call.1} parent=11 // pred_check_branch
        %233 = sbr.rel (%p231) target = $region20
      $region19: #{tpu_custom_call.1} parent=11 // pred_region
        _
      $region20: #{tpu_custom_call.1} parent=11 // pred_fallthru
        _
      // Predicated region
      $region21: #{tpu_custom_call.1} parent=11 // pred_check
        %p234 = pneg %p103
      $region22: #{tpu_custom_call.1} parent=11 // pred_check_branch
        %236 = sbr.rel (%p234) target = $region24
      $region23: #{tpu_custom_call.1} parent=11 // pred_region
        _
      $region24: #{tpu_custom_call.1} parent=11 // pred_fallthru
        _
      // Predicated region
      $region25: #{tpu_custom_call.1} parent=11 // pred_check
        %p237 = pneg %p124
      $region26: #{tpu_custom_call.1} parent=11 // pred_check_branch
        %239 = sbr.rel (%p237) target = $region28
      $region27: #{tpu_custom_call.1} parent=11 // pred_region
        _
      $region28: #{tpu_custom_call.1} parent=11 // pred_fallthru
        _
      // Predicated region
      $region29: #{tpu_custom_call.1} parent=11 // pred_check
        %p240 = pneg %p145
      $region30: #{tpu_custom_call.1} parent=11 // pred_check_branch
        %242 = sbr.rel (%p240) target = $region32
      $region31: #{tpu_custom_call.1} parent=11 // pred_region
        _
      $region32: #{tpu_custom_call.1} parent=11 // pred_fallthru
        _
      // Predicated region
      $region33: #{tpu_custom_call.1} parent=11 // pred_check
        %p243 = pneg %p166
      $region34: #{tpu_custom_call.1} parent=11 // pred_check_branch
        %245 = sbr.rel (%p243) target = $region36
      $region35: #{tpu_custom_call.1} parent=11 // pred_region
        _
      $region36: #{tpu_custom_call.1} parent=11 // pred_fallthru
        _
      // Predicated region
      $region37: #{tpu_custom_call.1} parent=11 // pred_check
        %p246 = pneg %p187
      $region38: #{tpu_custom_call.1} parent=11 // pred_check_branch
        %248 = sbr.rel (%p246) target = $region40
      $region39: #{tpu_custom_call.1} parent=11 // pred_region
        _
      $region40: #{tpu_custom_call.1} parent=11 // pred_fallthru
        _
    $region12: #{tpu_custom_call.1} parent=5 // pred_fallthru
      _
    %p249 = scmp.lt.s32.totalorder %s14, 2
    // Predicated region
    $region41: #{tpu_custom_call.1} parent=5 // pred_check
      %p250 = pneg %p249
    $region42: #{tpu_custom_call.1} parent=5 // pred_check_branch
      %252 = sbr.rel (%p250) target = $region44
    $region43: #{tpu_custom_call.1} parent=5 // pred_region
      // Predicated region
      $region45: #{tpu_custom_call.1} parent=43 // pred_check
        %p253 = pneg %p34
      $region46: #{tpu_custom_call.1} parent=43 // pred_check_branch
        %255 = sbr.rel (%p253) target = $region48
      $region47: #{tpu_custom_call.1} parent=43 // pred_region
        %p256 = scmp.lt.s32.totalorder %s14, 1
        %s257 = scalar_select %p256, %s14, 1
        %s258 = smul.addr %s257, 43
        %s259 = smul.addr %s258, 4
        %s260 = scalar_lea.vmem %s0, %s259
      $region48: #{tpu_custom_call.1} parent=43 // pred_fallthru
        _
    $region44: #{tpu_custom_call.1} parent=5 // pred_fallthru
      _
    %p261 = scmp.le.s32.totalorder 1, %s14
    %p262 = scmp.lt.s32.totalorder %s14, 3
    %p263 = pnand %p261, %p262
    %p264 = pneg %p263
    // Predicated region
    $region49: #{tpu_custom_call.1} parent=5 // pred_check
      _
    $region50: #{tpu_custom_call.1} parent=5 // pred_check_branch
      %266 = sbr.rel (%p263) target = $region52
    $region51: #{tpu_custom_call.1} parent=5 // pred_region
      %s267 = ssub.s32 %s14, 1
      %p268 = scmp.lt.s32.totalorder %s19, 1
      %s269 = scalar_select %p268, %s19, 1
      %s270 = smul.addr %s269, 43
      %s271 = smul.addr %s270, 4
      %s272 = scalar_lea.vmem %s0, %s271
      %p273 = pneg %p40
      %p274 = pneg %p37
      %p275 = pneg %p61
      %p276 = pneg %p58
      %p277 = pneg %p82
      %p278 = pneg %p79
      %p279 = pneg %p103
      %p280 = pneg %p100
      %p281 = pneg %p124
      %p282 = pneg %p121
      %p283 = pneg %p145
      %p284 = pneg %p142
      %p285 = pneg %p166
      %p286 = pneg %p163
      %p287 = pneg %p187
      %p288 = pneg %p184
      %p289 = pneg %p213
      %p290 = pneg %p210
      %p291 = scmp.lt.s32.totalorder %s19, 1
      %s292 = scalar_select %p291, %s19, 1
      %s293 = smul.addr %s292, 36
      %s294 = smul.addr %s293, 8
      %s295 = scalar_lea.vmem %s8, %s294
      %p296 = scmp.lt.s32.totalorder %s19, 1
      %s297 = scalar_select %p296, %s19, 1
      %s298 = smul.addr %s297, 43
      %s299 = smul.addr %s298, 4
      %s300 = scalar_lea.vmem %s0, %s299
      %p301 = scmp.lt.s32.totalorder %s19, 1
      %s302 = scalar_select %p301, %s19, 1
      %s303 = smul.addr %s302, 36
      %s304 = smul.addr %s303, 8
      %s305 = scalar_lea.vmem %s8, %s304
      %v307 = vld [vmem:[%s300] sm:$0xf]
      %v308 = vld [vmem:[%s300 + $0x4] sm:$0xf]
      %v309 = vld [vmem:[%s300 + $0x8] sm:$0xf]
      %v310 = vld [vmem:[%s300 + $0xc] sm:$0xf]
      %v311 = vld [vmem:[%s300 + $0x10] sm:$0xf]
      %v312 = vld [vmem:[%s300 + $0x14] sm:$0xf]
      %v313 = vld [vmem:[%s300 + $0x18] sm:$0xf]
      %v314 = vld [vmem:[%s300 + $0x1c] sm:$0xf]
      %v315 = vld [vmem:[%s300 + $0x20] sm:$0xf]
      %v316 = vld [vmem:[%s300 + $0x24] sm:$0xf]
      %v317 = vld [vmem:[%s300 + $0x28] sm:$0xf]
      %v318 = vld [vmem:[%s300 + $0x2c] sm:$0xf]
      %v319 = vld [vmem:[%s300 + $0x30] sm:$0xf]
      %v320 = vld [vmem:[%s300 + $0x34] sm:$0xf]
      %v321 = vld [vmem:[%s300 + $0x38] sm:$0xf]
      %v322 = vld [vmem:[%s300 + $0x3c] sm:$0xf]
      %v323 = vld [vmem:[%s300 + $0x40] sm:$0xf]
      %v324 = vld [vmem:[%s300 + $0x44] sm:$0xf]
      %v325 = vld [vmem:[%s300 + $0x48] sm:$0xf]
      %v326 = vld [vmem:[%s300 + $0x4c] sm:$0xf]
      %v327 = vld [vmem:[%s300 + $0x50] sm:$0xf]
      %v328 = vld [vmem:[%s300 + $0x54] sm:$0xf]
      %v329 = vld [vmem:[%s300 + $0x58] sm:$0xf]
      %v330 = vld [vmem:[%s300 + $0x5c] sm:$0xf]
      %v331 = vld [vmem:[%s300 + $0x60] sm:$0xf]
      %v332 = vld [vmem:[%s300 + $0x64] sm:$0xf]
      %v333 = vld [vmem:[%s300 + $0x68] sm:$0xf]
      %v334 = vld [vmem:[%s300 + $0x6c] sm:$0xf]
      %v335 = vld [vmem:[%s300 + $0x70] sm:$0xf]
      %v336 = vld [vmem:[%s300 + $0x74] sm:$0xf]
      %v337 = vld [vmem:[%s300 + $0x78] sm:$0xf]
      %v338 = vld [vmem:[%s300 + $0x7c] sm:$0xf]
      %v339 = vld [vmem:[%s300 + $0x80] sm:$0xf]
      %v340 = vld [vmem:[%s300 + $0x84] sm:$0xf]
      %v341 = vld [vmem:[%s300 + $0x88] sm:$0xf]
      %v342 = vld [vmem:[%s300 + $0x8c] sm:$0xf]
      %v343 = vld [vmem:[%s1] sm:$0xf]
      %v344 = vld [vmem:[%s1 + $0x4] sm:$0xf]
      %v345 = vld [vmem:[%s300 + $0x90] sm:$0x1]
      %s346 = scalar_lea.vmem %s1, 8
      %v347 = vld [vmem:[%s346] sm:$0xf]
      %v348 = vld [vmem:[%s346 + $0x4] sm:$0xf]
      %v386 = vunpack.c.l.b16 %v307
      %v387 = vunpack.c.l.b16 %v308
      %v388 = vunpack.c.l.b16 %v309
      %v389 = vunpack.c.l.b16 %v310
      %v390 = vunpack.c.l.b16 %v311
      %v391 = vunpack.c.l.b16 %v312
      %v392 = vunpack.c.l.b16 %v313
      %v393 = vunpack.c.l.b16 %v314
      %v394 = vunpack.c.l.b16 %v315
      %v395 = vunpack.c.l.b16 %v316
      %v396 = vunpack.c.l.b16 %v317
      %v397 = vunpack.c.l.b16 %v318
      %v398 = vunpack.c.l.b16 %v319
      %v399 = vunpack.c.l.b16 %v320
      %v400 = vunpack.c.l.b16 %v321
      %v401 = vunpack.c.l.b16 %v322
      %v402 = vunpack.c.l.b16 %v323
      %v403 = vunpack.c.l.b16 %v324
      %v404 = vunpack.c.l.b16 %v325
      %v405 = vunpack.c.l.b16 %v326
      %v406 = vunpack.c.l.b16 %v327
      %v407 = vunpack.c.l.b16 %v328
      %v408 = vunpack.c.l.b16 %v329
      %v409 = vunpack.c.l.b16 %v330
      %v410 = vunpack.c.l.b16 %v331
      %v411 = vunpack.c.l.b16 %v332
      %v412 = vunpack.c.l.b16 %v333
      %v413 = vunpack.c.l.b16 %v334
      %v414 = vunpack.c.l.b16 %v335
      %v415 = vunpack.c.l.b16 %v336
      %v416 = vunpack.c.l.b16 %v337
      %v417 = vunpack.c.l.b16 %v338
      %v418 = vunpack.c.l.b16 %v339
      %v419 = vunpack.c.l.b16 %v340
      %v420 = vunpack.c.l.b16 %v341
      %v421 = vunpack.c.l.b16 %v342
      %v422 = vunpack.c.l.b16 %v345
      %v423 = vpack.c.b16 %v387, %v386
      %v424 = vpack.c.b16 %v389, %v388
      %v425 = vpack.c.b16 %v391, %v390
      %v426 = vpack.c.b16 %v393, %v392
      %v427 = vpack.c.b16 %v395, %v394
      %v428 = vpack.c.b16 %v397, %v396
      %v429 = vpack.c.b16 %v399, %v398
      %v430 = vpack.c.b16 %v401, %v400
      %v431 = vpack.c.b16 %v403, %v402
      %v432 = vpack.c.b16 %v405, %v404
      %v433 = vpack.c.b16 %v407, %v406
      %v434 = vpack.c.b16 %v409, %v408
      %v435 = vpack.c.b16 %v411, %v410
      %v436 = vpack.c.b16 %v413, %v412
      %v437 = vpack.c.b16 %v415, %v414
      %v438 = vpack.c.b16 %v417, %v416
      %v439 = vpack.c.b16 %v419, %v418
      %v440 = vpack.c.b16 %v421, %v420
      %v441 = vpack.c.b16 %v422, %v422
      %vm442 = vsmask.f32 7424
      %v444 = vshrl.u32 %v423, 16
      %v446 = vshll.u32 %v423, 16
      %v448 = vrot.slane %v446, 1
      %v449 = vor.u32 %v444, %v448
      %v451 = vshll.u32 %v424, 16
      %v453 = vrot.slane %v451, 1
      %v454 = vsel %vm442, %v449, %v453
      %v455 = vshrl.u32 %v424, 16
      %v457 = vor.u32 %v455, %v453
      %v459 = vshll.u32 %v425, 16
      %v461 = vrot.slane %v459, 1
      %v462 = vsel %vm442, %v457, %v461
      %v463 = vshrl.u32 %v425, 16
      %v465 = vor.u32 %v463, %v461
      %v467 = vshll.u32 %v426, 16
      %v469 = vrot.slane %v467, 1
      %v470 = vsel %vm442, %v465, %v469
      %v471 = vshrl.u32 %v426, 16
      %v473 = vor.u32 %v471, %v469
      %v475 = vshll.u32 %v427, 16
      %v477 = vrot.slane %v475, 1
      %v478 = vsel %vm442, %v473, %v477
      %v479 = vshrl.u32 %v427, 16
      %v481 = vor.u32 %v479, %v477
      %v483 = vshll.u32 %v428, 16
      %v485 = vrot.slane %v483, 1
      %v486 = vsel %vm442, %v481, %v485
      %v487 = vshrl.u32 %v428, 16
      %v489 = vor.u32 %v487, %v485
      %v491 = vshll.u32 %v429, 16
      %v493 = vrot.slane %v491, 1
      %v494 = vsel %vm442, %v489, %v493
      %v495 = vshrl.u32 %v429, 16
      %v497 = vor.u32 %v495, %v493
      %v499 = vshll.u32 %v430, 16
      %v501 = vrot.slane %v499, 1
      %v502 = vsel %vm442, %v497, %v501
      %v503 = vshrl.u32 %v430, 16
      %v505 = vor.u32 %v503, %v501
      %v507 = vshll.u32 %v431, 16
      %v509 = vrot.slane %v507, 1
      %v510 = vsel %vm442, %v505, %v509
      %v511 = vshrl.u32 %v431, 16
      %v513 = vor.u32 %v511, %v509
      %v515 = vshll.u32 %v432, 16
      %v517 = vrot.slane %v515, 1
      %v518 = vsel %vm442, %v513, %v517
      %v519 = vshrl.u32 %v432, 16
      %v521 = vor.u32 %v519, %v517
      %v523 = vshll.u32 %v433, 16
      %v525 = vrot.slane %v523, 1
      %v526 = vsel %vm442, %v521, %v525
      %v527 = vshrl.u32 %v433, 16
      %v529 = vor.u32 %v527, %v525
      %v531 = vshll.u32 %v434, 16
      %v533 = vrot.slane %v531, 1
      %v534 = vsel %vm442, %v529, %v533
      %v535 = vshrl.u32 %v434, 16
      %v537 = vor.u32 %v535, %v533
      %v539 = vshll.u32 %v435, 16
      %v541 = vrot.slane %v539, 1
      %v542 = vsel %vm442, %v537, %v541
      %v543 = vshrl.u32 %v435, 16
      %v545 = vor.u32 %v543, %v541
      %v547 = vshll.u32 %v436, 16
      %v549 = vrot.slane %v547, 1
      %v550 = vsel %vm442, %v545, %v549
      %v551 = vshrl.u32 %v436, 16
      %v553 = vor.u32 %v551, %v549
      %v555 = vshll.u32 %v437, 16
      %v557 = vrot.slane %v555, 1
      %v558 = vsel %vm442, %v553, %v557
      %v559 = vshrl.u32 %v437, 16
      %v561 = vor.u32 %v559, %v557
      %v563 = vshll.u32 %v438, 16
      %v565 = vrot.slane %v563, 1
      %v566 = vsel %vm442, %v561, %v565
      %v567 = vshrl.u32 %v438, 16
      %v569 = vor.u32 %v567, %v565
      %v571 = vshll.u32 %v439, 16
      %v573 = vrot.slane %v571, 1
      %v574 = vsel %vm442, %v569, %v573
      %v575 = vshrl.u32 %v439, 16
      %v577 = vor.u32 %v575, %v573
      %v579 = vshll.u32 %v440, 16
      %v581 = vrot.slane %v579, 1
      %v582 = vsel %vm442, %v577, %v581
      %v583 = vshrl.u32 %v440, 16
      %v585 = vor.u32 %v583, %v581
      %v587 = vshll.u32 %v441, 16
      %v589 = vrot.slane %v587, 1
      %v590 = vsel %vm442, %v585, %v589
      %v593 = vunpack.c.l.b16 %v347
      %v594 = vunpack.c.l.b16 %v348
      %v595 = vpack.c.b16 %v594, %v593
      %vm597 = vcmask 130048
      %v599 = vsel %vm597, %v454, 0
      %v602 = vsel %vm597, %v462, 0
      %v605 = vsel %vm597, %v470, 0
      %v608 = vsel %vm597, %v478, 0
      %v611 = vsel %vm597, %v486, 0
      %v614 = vsel %vm597, %v494, 0
      %v617 = vsel %vm597, %v502, 0
      %v620 = vsel %vm597, %v510, 0
      %v623 = vsel %vm597, %v518, 0
      %v626 = vsel %vm597, %v526, 0
      %v629 = vsel %vm597, %v534, 0
      %v632 = vsel %vm597, %v542, 0
      %v635 = vsel %vm597, %v550, 0
      %v638 = vsel %vm597, %v558, 0
      %v641 = vsel %vm597, %v566, 0
      %v644 = vsel %vm597, %v574, 0
      %v647 = vsel %vm597, %v582, 0
      %v650 = vsel %vm597, %v590, 0
      %652 = vmatprep.subr.bf16.mxu0 0
      %653 = vmatpush1.bf16.msra.mxu0 %v595
      %654 = vmatprep.subr.bf16.mxu0 0
      %655 = vmatpush1.bf16.msra.mxu0 0
      %656 = vmatprep.subr.bf16.mxu0 0
      %657 = vmatpush1.bf16.msra.mxu0 0
      %658 = vmatprep.subr.bf16.mxu0 0
      %659 = vmatpush1.bf16.msra.mxu0 0
      %660 = vmatprep.subr.bf16.mxu0 0
      %661 = vmatpush1.bf16.msra.mxu0 0
      %662 = vmatprep.subr.bf16.mxu0 0
      %663 = vmatpush1.bf16.msra.mxu0 0
      %664 = vmatprep.subr.bf16.mxu0 0
      %665 = vmatpush1.bf16.msra.mxu0 0
      %666 = vmatprep.subr.bf16.mxu0 0
      %667 = vmatpush1.bf16.msra.mxu0 0
      %668 = vmatprep.subr.bf16.mxu0 0
      %669 = vmatpush1.bf16.msra.mxu0 0
      %670 = vmatprep.subr.bf16.mxu0 0
      %671 = vmatpush1.bf16.msra.mxu0 0
      %672 = vmatprep.subr.bf16.mxu0 0
      %673 = vmatpush1.bf16.msra.mxu0 0
      %674 = vmatprep.subr.bf16.mxu0 0
      %675 = vmatpush1.bf16.msra.mxu0 0
      %676 = vmatprep.subr.bf16.mxu0 0
      %677 = vmatpush1.bf16.msra.mxu0 0
      %678 = vmatprep.subr.bf16.mxu0 0
      %679 = vmatpush1.bf16.msra.mxu0 0
      %680 = vmatprep.subr.bf16.mxu0 0
      %681 = vmatpush1.bf16.msra.mxu0 0
      %682 = vmatprep.subr.bf16.mxu0 0
      %683 = vmatpush1.bf16.msra.mxu0 0
      %684 = vmatprep.mubr.bf16.mxu0 0
      %685 = vmatmul.mubr.bf16.gmra.mrb[0].mxu0 %v599
      %v686 = vpop.f32.mrb[0].mxu0
      %v687 = vadd.f32 0.0, %v686
      %v688 = vpop.f32.mrb[0].mxu0
      %v689 = vpop.f32.mrb[0].mxu0
      %v690 = vadd.f32 0.0, %v689
      %v691 = vpop.f32.mrb[0].mxu0
      %692 = vmatprep.mubr.bf16.mxu0 0
      %693 = vmatmul.mubr.bf16.gmra.mrb[0].mxu0 %v602
      %v694 = vpop.f32.mrb[0].mxu0
      %v695 = vadd.f32 0.0, %v694
      %v696 = vpop.f32.mrb[0].mxu0
      %v697 = vpop.f32.mrb[0].mxu0
      %v698 = vadd.f32 0.0, %v697
      %v699 = vpop.f32.mrb[0].mxu0
      %700 = vmatprep.mubr.bf16.mxu0 0
      %701 = vmatmul.mubr.bf16.gmra.mrb[0].mxu0 %v605
      %v702 = vpop.f32.mrb[0].mxu0
      %v703 = vadd.f32 0.0, %v702
      %v704 = vpop.f32.mrb[0].mxu0
      %v705 = vpop.f32.mrb[0].mxu0
      %v706 = vadd.f32 0.0, %v705
      %v707 = vpop.f32.mrb[0].mxu0
      %708 = vmatprep.mubr.bf16.mxu0 0
      %709 = vmatmul.mubr.bf16.gmra.mrb[0].mxu0 %v608
      %v710 = vpop.f32.mrb[0].mxu0
      %v711 = vadd.f32 0.0, %v710
      %v712 = vpop.f32.mrb[0].mxu0
      %v713 = vpop.f32.mrb[0].mxu0
      %v714 = vadd.f32 0.0, %v713
      %v715 = vpop.f32.mrb[0].mxu0
      %716 = vmatprep.mubr.bf16.mxu0 0
      %717 = vmatmul.mubr.bf16.gmra.mrb[0].mxu0 %v611
      %v718 = vpop.f32.mrb[0].mxu0
      %v719 = vadd.f32 0.0, %v718
      %v720 = vpop.f32.mrb[0].mxu0
      %v721 = vpop.f32.mrb[0].mxu0
      %v722 = vadd.f32 0.0, %v721
      %v723 = vpop.f32.mrb[0].mxu0
      %724 = vmatprep.mubr.bf16.mxu0 0
      %725 = vmatmul.mubr.bf16.gmra.mrb[0].mxu0 %v614
      %v726 = vpop.f32.mrb[0].mxu0
      %v727 = vadd.f32 0.0, %v726
      %v728 = vpop.f32.mrb[0].mxu0
      %v729 = vpop.f32.mrb[0].mxu0
      %v730 = vadd.f32 0.0, %v729
      %v731 = vpop.f32.mrb[0].mxu0
      %732 = vmatprep.mubr.bf16.mxu0 0
      %733 = vmatmul.mubr.bf16.gmra.mrb[0].mxu0 %v617
      %v734 = vpop.f32.mrb[0].mxu0
      %v735 = vadd.f32 0.0, %v734
      %v736 = vpop.f32.mrb[0].mxu0
      %v737 = vpop.f32.mrb[0].mxu0
      %v738 = vadd.f32 0.0, %v737
      %v739 = vpop.f32.mrb[0].mxu0
      %740 = vmatprep.mubr.bf16.mxu0 0
      %741 = vmatmul.mubr.bf16.gmra.mrb[0].mxu0 %v620
      %v742 = vpop.f32.mrb[0].mxu0
      %v743 = vadd.f32 0.0, %v742
      %v744 = vpop.f32.mrb[0].mxu0
      %v745 = vpop.f32.mrb[0].mxu0
      %v746 = vadd.f32 0.0, %v745
      %v747 = vpop.f32.mrb[0].mxu0
      %748 = vmatprep.mubr.bf16.mxu0 0
      %749 = vmatmul.mubr.bf16.gmra.mrb[0].mxu0 %v623
      %v750 = vpop.f32.mrb[0].mxu0
      %v751 = vadd.f32 0.0, %v750
      %v752 = vpop.f32.mrb[0].mxu0
      %v753 = vpop.f32.mrb[0].mxu0
      %v754 = vadd.f32 0.0, %v753
      %v755 = vpop.f32.mrb[0].mxu0
      %756 = vmatprep.mubr.bf16.mxu0 0
      %757 = vmatmul.mubr.bf16.gmra.mrb[0].mxu0 %v626
      %v758 = vpop.f32.mrb[0].mxu0
      %v759 = vadd.f32 0.0, %v758
      %v760 = vpop.f32.mrb[0].mxu0
      %v761 = vpop.f32.mrb[0].mxu0
      %v762 = vadd.f32 0.0, %v761
      %v763 = vpop.f32.mrb[0].mxu0
      %764 = vmatprep.mubr.bf16.mxu0 0
      %765 = vmatmul.mubr.bf16.gmra.mrb[0].mxu0 %v629
      %v766 = vpop.f32.mrb[0].mxu0
      %v767 = vadd.f32 0.0, %v766
      %v768 = vpop.f32.mrb[0].mxu0
      %v769 = vpop.f32.mrb[0].mxu0
      %v770 = vadd.f32 0.0, %v769
      %v771 = vpop.f32.mrb[0].mxu0
      %772 = vmatprep.mubr.bf16.mxu0 0
      %773 = vmatmul.mubr.bf16.gmra.mrb[0].mxu0 %v632
      %v774 = vpop.f32.mrb[0].mxu0
      %v775 = vadd.f32 0.0, %v774
      %v776 = vpop.f32.mrb[0].mxu0
      %v777 = vpop.f32.mrb[0].mxu0
      %v778 = vadd.f32 0.0, %v777
      %v779 = vpop.f32.mrb[0].mxu0
      %780 = vmatprep.mubr.bf16.mxu0 0
      %781 = vmatmul.mubr.bf16.gmra.mrb[0].mxu0 %v635
      %v782 = vpop.f32.mrb[0].mxu0
      %v783 = vadd.f32 0.0, %v782
      %v784 = vpop.f32.mrb[0].mxu0
      %v785 = vpop.f32.mrb[0].mxu0
      %v786 = vadd.f32 0.0, %v785
      %v787 = vpop.f32.mrb[0].mxu0
      %788 = vmatprep.mubr.bf16.mxu0 0
      %789 = vmatmul.mubr.bf16.gmra.mrb[0].mxu0 %v638
      %v790 = vpop.f32.mrb[0].mxu0
      %v791 = vadd.f32 0.0, %v790
      %v792 = vpop.f32.mrb[0].mxu0
      %v793 = vpop.f32.mrb[0].mxu0
      %v794 = vadd.f32 0.0, %v793
      %v795 = vpop.f32.mrb[0].mxu0
      %796 = vmatprep.mubr.bf16.mxu0 0
      %797 = vmatmul.mubr.bf16.gmra.mrb[0].mxu0 %v641
      %v798 = vpop.f32.mrb[0].mxu0
      %v799 = vadd.f32 0.0, %v798
      %v800 = vpop.f32.mrb[0].mxu0
      %v801 = vpop.f32.mrb[0].mxu0
      %v802 = vadd.f32 0.0, %v801
      %v803 = vpop.f32.mrb[0].mxu0
      %804 = vmatprep.mubr.bf16.mxu0 0
      %805 = vmatmul.mubr.bf16.gmra.mrb[0].mxu0 %v644
      %v806 = vpop.f32.mrb[0].mxu0
      %v807 = vadd.f32 0.0, %v806
      %v808 = vpop.f32.mrb[0].mxu0
      %v809 = vpop.f32.mrb[0].mxu0
      %v810 = vadd.f32 0.0, %v809
      %v811 = vpop.f32.mrb[0].mxu0
      %812 = vmatprep.mubr.bf16.mxu0 0
      %813 = vmatmul.mubr.bf16.gmra.mrb[0].mxu0 %v647
      %v814 = vpop.f32.mrb[0].mxu0
      %v815 = vadd.f32 0.0, %v814
      %v816 = vpop.f32.mrb[0].mxu0
      %v817 = vpop.f32.mrb[0].mxu0
      %v818 = vadd.f32 0.0, %v817
      %v819 = vpop.f32.mrb[0].mxu0
      %820 = vmatprep.mubr.bf16.mxu0 0
      %821 = vmatmul.mubr.bf16.gmra.mrb[0].mxu0 %v650
      %v822 = vpop.f32.mrb[0].mxu0
      %v823 = vadd.f32 0.0, %v822
      %v824 = vpop.f32.mrb[0].mxu0
      %v825 = vpop.f32.mrb[0].mxu0
      %v826 = vadd.f32 0.0, %v825
      %v827 = vpop.f32.mrb[0].mxu0
      %828 = vdwg.mxu0
      %v831 = vunpack.c.l.b16 %v343
      %v832 = vunpack.c.l.b16 %v344
      %v833 = vpack.c.b16 %v832, %v831
      %v835 = vsel %vm597, %v423, 0
      %v837 = vsel %vm597, %v424, 0
      %v839 = vsel %vm597, %v425, 0
      %v841 = vsel %vm597, %v426, 0
      %v843 = vsel %vm597, %v427, 0
      %v845 = vsel %vm597, %v428, 0
      %v847 = vsel %vm597, %v429, 0
      %v849 = vsel %vm597, %v430, 0
      %v851 = vsel %vm597, %v431, 0
      %v853 = vsel %vm597, %v432, 0
      %v855 = vsel %vm597, %v433, 0
      %v857 = vsel %vm597, %v434, 0
      %v859 = vsel %vm597, %v435, 0
      %v861 = vsel %vm597, %v436, 0
      %v863 = vsel %vm597, %v437, 0
      %v865 = vsel %vm597, %v438, 0
      %v867 = vsel %vm597, %v439, 0
      %v869 = vsel %vm597, %v440, 0
      %871 = vmatprep.subr.bf16.mxu0 0
      %872 = vmatpush1.bf16.msra.mxu0 %v833
      %873 = vmatprep.subr.bf16.mxu0 0
      %874 = vmatpush1.bf16.msra.mxu0 0
      %875 = vmatprep.subr.bf16.mxu0 0
      %876 = vmatpush1.bf16.msra.mxu0 0
      %877 = vmatprep.subr.bf16.mxu0 0
      %878 = vmatpush1.bf16.msra.mxu0 0
      %879 = vmatprep.subr.bf16.mxu0 0
      %880 = vmatpush1.bf16.msra.mxu0 0
      %881 = vmatprep.subr.bf16.mxu0 0
      %882 = vmatpush1.bf16.msra.mxu0 0
      %883 = vmatprep.subr.bf16.mxu0 0
      %884 = vmatpush1.bf16.msra.mxu0 0
      %885 = vmatprep.subr.bf16.mxu0 0
      %886 = vmatpush1.bf16.msra.mxu0 0
      %887 = vmatprep.subr.bf16.mxu0 0
      %888 = vmatpush1.bf16.msra.mxu0 0
      %889 = vmatprep.subr.bf16.mxu0 0
      %890 = vmatpush1.bf16.msra.mxu0 0
      %891 = vmatprep.subr.bf16.mxu0 0
      %892 = vmatpush1.bf16.msra.mxu0 0
      %893 = vmatprep.subr.bf16.mxu0 0
      %894 = vmatpush1.bf16.msra.mxu0 0
      %895 = vmatprep.subr.bf16.mxu0 0
      %896 = vmatpush1.bf16.msra.mxu0 0
      %897 = vmatprep.subr.bf16.mxu0 0
      %898 = vmatpush1.bf16.msra.mxu0 0
      %899 = vmatprep.subr.bf16.mxu0 0
      %900 = vmatpush1.bf16.msra.mxu0 0
      %901 = vmatprep.subr.bf16.mxu0 0
      %902 = vmatpush1.bf16.msra.mxu0 0
      %903 = vmatprep.mubr.bf16.mxu0 0
      %904 = vmatmul.mubr.bf16.gmra.mrb[0].mxu0 %v835
      %v905 = vpop.f32.mrb[0].mxu0
      %v906 = vadd.f32 %v687, %v905
      %v907 = vpop.f32.mrb[0].mxu0
      %v908 = vpop.f32.mrb[0].mxu0
      %v909 = vadd.f32 %v690, %v908
      %v910 = vpop.f32.mrb[0].mxu0
      %911 = vmatprep.mubr.bf16.mxu0 0
      %912 = vmatmul.mubr.bf16.gmra.mrb[0].mxu0 %v837
      %v913 = vpop.f32.mrb[0].mxu0
      %v914 = vadd.f32 %v695, %v913
      %v915 = vpop.f32.mrb[0].mxu0
      %v916 = vpop.f32.mrb[0].mxu0
      %v917 = vadd.f32 %v698, %v916
      %v918 = vpop.f32.mrb[0].mxu0
      %919 = vmatprep.mubr.bf16.mxu0 0
      %920 = vmatmul.mubr.bf16.gmra.mrb[0].mxu0 %v839
      %v921 = vpop.f32.mrb[0].mxu0
      %v922 = vadd.f32 %v703, %v921
      %v923 = vpop.f32.mrb[0].mxu0
      %v924 = vpop.f32.mrb[0].mxu0
      %v925 = vadd.f32 %v706, %v924
      %v926 = vpop.f32.mrb[0].mxu0
      %927 = vmatprep.mubr.bf16.mxu0 0
      %928 = vmatmul.mubr.bf16.gmra.mrb[0].mxu0 %v841
      %v929 = vpop.f32.mrb[0].mxu0
      %v930 = vadd.f32 %v711, %v929
      %v931 = vpop.f32.mrb[0].mxu0
      %v932 = vpop.f32.mrb[0].mxu0
      %v933 = vadd.f32 %v714, %v932
      %v934 = vpop.f32.mrb[0].mxu0
      %935 = vmatprep.mubr.bf16.mxu0 0
      %936 = vmatmul.mubr.bf16.gmra.mrb[0].mxu0 %v843
      %v937 = vpop.f32.mrb[0].mxu0
      %v938 = vadd.f32 %v719, %v937
      %v939 = vpop.f32.mrb[0].mxu0
      %v940 = vpop.f32.mrb[0].mxu0
      %v941 = vadd.f32 %v722, %v940
      %v942 = vpop.f32.mrb[0].mxu0
      %943 = vmatprep.mubr.bf16.mxu0 0
      %944 = vmatmul.mubr.bf16.gmra.mrb[0].mxu0 %v845
      %v945 = vpop.f32.mrb[0].mxu0
      %v946 = vadd.f32 %v727, %v945
      %v947 = vpop.f32.mrb[0].mxu0
      %v948 = vpop.f32.mrb[0].mxu0
      %v949 = vadd.f32 %v730, %v948
      %v950 = vpop.f32.mrb[0].mxu0
      %951 = vmatprep.mubr.bf16.mxu0 0
      %952 = vmatmul.mubr.bf16.gmra.mrb[0].mxu0 %v847
      %v953 = vpop.f32.mrb[0].mxu0
      %v954 = vadd.f32 %v735, %v953
      %v955 = vpop.f32.mrb[0].mxu0
      %v956 = vpop.f32.mrb[0].mxu0
      %v957 = vadd.f32 %v738, %v956
      %v958 = vpop.f32.mrb[0].mxu0
      %959 = vmatprep.mubr.bf16.mxu0 0
      %960 = vmatmul.mubr.bf16.gmra.mrb[0].mxu0 %v849
      %v961 = vpop.f32.mrb[0].mxu0
      %v962 = vadd.f32 %v743, %v961
      %v963 = vpop.f32.mrb[0].mxu0
      %v964 = vpop.f32.mrb[0].mxu0
      %v965 = vadd.f32 %v746, %v964
      %v966 = vpop.f32.mrb[0].mxu0
      %967 = vmatprep.mubr.bf16.mxu0 0
      %968 = vmatmul.mubr.bf16.gmra.mrb[0].mxu0 %v851
      %v969 = vpop.f32.mrb[0].mxu0
      %v970 = vadd.f32 %v751, %v969
      %v971 = vpop.f32.mrb[0].mxu0
      %v972 = vpop.f32.mrb[0].mxu0
      %v973 = vadd.f32 %v754, %v972
      %v974 = vpop.f32.mrb[0].mxu0
      %975 = vmatprep.mubr.bf16.mxu0 0
      %976 = vmatmul.mubr.bf16.gmra.mrb[0].mxu0 %v853
      %v977 = vpop.f32.mrb[0].mxu0
      %v978 = vadd.f32 %v759, %v977
      %v979 = vpop.f32.mrb[0].mxu0
      %v980 = vpop.f32.mrb[0].mxu0
      %v981 = vadd.f32 %v762, %v980
      %v982 = vpop.f32.mrb[0].mxu0
      %983 = vmatprep.mubr.bf16.mxu0 0
      %984 = vmatmul.mubr.bf16.gmra.mrb[0].mxu0 %v855
      %v985 = vpop.f32.mrb[0].mxu0
      %v986 = vadd.f32 %v767, %v985
      %v987 = vpop.f32.mrb[0].mxu0
      %v988 = vpop.f32.mrb[0].mxu0
      %v989 = vadd.f32 %v770, %v988
      %v990 = vpop.f32.mrb[0].mxu0
      %991 = vmatprep.mubr.bf16.mxu0 0
      %992 = vmatmul.mubr.bf16.gmra.mrb[0].mxu0 %v857
      %v993 = vpop.f32.mrb[0].mxu0
      %v994 = vadd.f32 %v775, %v993
      %v995 = vpop.f32.mrb[0].mxu0
      %v996 = vpop.f32.mrb[0].mxu0
      %v997 = vadd.f32 %v778, %v996
      %v998 = vpop.f32.mrb[0].mxu0
      %999 = vmatprep.mubr.bf16.mxu0 0
      %1000 = vmatmul.mubr.bf16.gmra.mrb[0].mxu0 %v859
      %v1001 = vpop.f32.mrb[0].mxu0
      %v1002 = vadd.f32 %v783, %v1001
      %v1003 = vpop.f32.mrb[0].mxu0
      %v1004 = vpop.f32.mrb[0].mxu0
      %v1005 = vadd.f32 %v786, %v1004
      %v1006 = vpop.f32.mrb[0].mxu0
      %1007 = vmatprep.mubr.bf16.mxu0 0
      %1008 = vmatmul.mubr.bf16.gmra.mrb[0].mxu0 %v861
      %v1009 = vpop.f32.mrb[0].mxu0
      %v1010 = vadd.f32 %v791, %v1009
      %v1011 = vpop.f32.mrb[0].mxu0
      %v1012 = vpop.f32.mrb[0].mxu0
      %v1013 = vadd.f32 %v794, %v1012
      %v1014 = vpop.f32.mrb[0].mxu0
      %1015 = vmatprep.mubr.bf16.mxu0 0
      %1016 = vmatmul.mubr.bf16.gmra.mrb[0].mxu0 %v863
      %v1017 = vpop.f32.mrb[0].mxu0
      %v1018 = vadd.f32 %v799, %v1017
      %v1019 = vpop.f32.mrb[0].mxu0
      %v1020 = vpop.f32.mrb[0].mxu0
      %v1021 = vadd.f32 %v802, %v1020
      %v1022 = vpop.f32.mrb[0].mxu0
      %1023 = vmatprep.mubr.bf16.mxu0 0
      %1024 = vmatmul.mubr.bf16.gmra.mrb[0].mxu0 %v865
      %v1025 = vpop.f32.mrb[0].mxu0
      %v1026 = vadd.f32 %v807, %v1025
      %v1027 = vpop.f32.mrb[0].mxu0
      %v1028 = vpop.f32.mrb[0].mxu0
      %v1029 = vadd.f32 %v810, %v1028
      %v1030 = vpop.f32.mrb[0].mxu0
      %1031 = vmatprep.mubr.bf16.mxu0 0
      %1032 = vmatmul.mubr.bf16.gmra.mrb[0].mxu0 %v867
      %v1033 = vpop.f32.mrb[0].mxu0
      %v1034 = vadd.f32 %v815, %v1033
      %v1035 = vpop.f32.mrb[0].mxu0
      %v1036 = vpop.f32.mrb[0].mxu0
      %v1037 = vadd.f32 %v818, %v1036
      %v1038 = vpop.f32.mrb[0].mxu0
      %1039 = vmatprep.mubr.bf16.mxu0 0
      %1040 = vmatmul.mubr.bf16.gmra.mrb[0].mxu0 %v869
      %v1041 = vpop.f32.mrb[0].mxu0
      %v1042 = vadd.f32 %v823, %v1041
      %v1043 = vpop.f32.mrb[0].mxu0
      %v1044 = vpop.f32.mrb[0].mxu0
      %v1045 = vadd.f32 %v826, %v1044
      %v1046 = vpop.f32.mrb[0].mxu0
      %1047 = vdwg.mxu0
      %v1048 = vld [vmem:[%s300] sm:$0xe]
      %s1049 = scalar_lea.vmem %s1, 16
      %v1050 = vld [vmem:[%s1049] sm:$0xf]
      %v1051 = vld [vmem:[%s1049 + $0x4] sm:$0xf]
      %v1053 = vunpack.c.l.b16 %v1048
      %v1054 = vpack.c.b16 %v387, %v1053
      %vm1055 = vcmask 1046528
      %v1056 = vrot.slane %v1054, 1
      %v1057 = vrot.slane %v424, 1
      %v1058 = vsel %vm1055, %v1056, %v1057
      %v1059 = vrot.slane %v425, 1
      %v1060 = vsel %vm1055, %v1057, %v1059
      %v1061 = vrot.slane %v426, 1
      %v1062 = vsel %vm1055, %v1059, %v1061
      %v1063 = vrot.slane %v427, 1
      %v1064 = vsel %vm1055, %v1061, %v1063
      %v1065 = vrot.slane %v428, 1
      %v1066 = vsel %vm1055, %v1063, %v1065
      %v1067 = vrot.slane %v429, 1
      %v1068 = vsel %vm1055, %v1065, %v1067
      %v1069 = vrot.slane %v430, 1
      %v1070 = vsel %vm1055, %v1067, %v1069
      %v1071 = vrot.slane %v431, 1
      %v1072 = vsel %vm1055, %v1069, %v1071
      %v1073 = vrot.slane %v432, 1
      %v1074 = vsel %vm1055, %v1071, %v1073
      %v1075 = vrot.slane %v433, 1
      %v1076 = vsel %vm1055, %v1073, %v1075
      %v1077 = vrot.slane %v434, 1
      %v1078 = vsel %vm1055, %v1075, %v1077
      %v1079 = vrot.slane %v435, 1
      %v1080 = vsel %vm1055, %v1077, %v1079
      %v1081 = vrot.slane %v436, 1
      %v1082 = vsel %vm1055, %v1079, %v1081
      %v1083 = vrot.slane %v437, 1
      %v1084 = vsel %vm1055, %v1081, %v1083
      %v1085 = vrot.slane %v438, 1
      %v1086 = vsel %vm1055, %v1083, %v1085
      %v1087 = vrot.slane %v439, 1
      %v1088 = vsel %vm1055, %v1085, %v1087
      %v1089 = vrot.slane %v440, 1
      %v1090 = vsel %vm1055, %v1087, %v1089
      %v1091 = vrot.slane %v441, 1
      %v1092 = vsel %vm1055, %v1089, %v1091
      %v1095 = vunpack.c.l.b16 %v1050
      %v1096 = vunpack.c.l.b16 %v1051
      %v1097 = vpack.c.b16 %v1096, %v1095
      %v1100 = vsel %vm597, %v1058, 0
      %v1103 = vsel %vm597, %v1060, 0
      %v1106 = vsel %vm597, %v1062, 0
      %v1109 = vsel %vm597, %v1064, 0
      %v1112 = vsel %vm597, %v1066, 0
      %v1115 = vsel %vm597, %v1068, 0
      %v1118 = vsel %vm597, %v1070, 0
      %v1121 = vsel %vm597, %v1072, 0
      %v1124 = vsel %vm597, %v1074, 0
      %v1127 = vsel %vm597, %v1076, 0
      %v1130 = vsel %vm597, %v1078, 0
      %v1133 = vsel %vm597, %v1080, 0
      %v1136 = vsel %vm597, %v1082, 0
      %v1139 = vsel %vm597, %v1084, 0
      %v1142 = vsel %vm597, %v1086, 0
      %v1145 = vsel %vm597, %v1088, 0
      %v1148 = vsel %vm597, %v1090, 0
      %v1151 = vsel %vm597, %v1092, 0
      %1153 = vmatprep.subr.bf16.mxu0 0
      %1154 = vmatpush1.bf16.msra.mxu0 %v1097
      %1155 = vmatprep.subr.bf16.mxu0 0
      %1156 = vmatpush1.bf16.msra.mxu0 0
      %1157 = vmatprep.subr.bf16.mxu0 0
      %1158 = vmatpush1.bf16.msra.mxu0 0
      %1159 = vmatprep.subr.bf16.mxu0 0
      %1160 = vmatpush1.bf16.msra.mxu0 0
      %1161 = vmatprep.subr.bf16.mxu0 0
      %1162 = vmatpush1.bf16.msra.mxu0 0
      %1163 = vmatprep.subr.bf16.mxu0 0
      %1164 = vmatpush1.bf16.msra.mxu0 0
      %1165 = vmatprep.subr.bf16.mxu0 0
      %1166 = vmatpush1.bf16.msra.mxu0 0
      %1167 = vmatprep.subr.bf16.mxu0 0
      %1168 = vmatpush1.bf16.msra.mxu0 0
      %1169 = vmatprep.subr.bf16.mxu0 0
      %1170 = vmatpush1.bf16.msra.mxu0 0
      %1171 = vmatprep.subr.bf16.mxu0 0
      %1172 = vmatpush1.bf16.msra.mxu0 0
      %1173 = vmatprep.subr.bf16.mxu0 0
      %1174 = vmatpush1.bf16.msra.mxu0 0
      %1175 = vmatprep.subr.bf16.mxu0 0
      %1176 = vmatpush1.bf16.msra.mxu0 0
      %1177 = vmatprep.subr.bf16.mxu0 0
      %1178 = vmatpush1.bf16.msra.mxu0 0
      %1179 = vmatprep.subr.bf16.mxu0 0
      %1180 = vmatpush1.bf16.msra.mxu0 0
      %1181 = vmatprep.subr.bf16.mxu0 0
      %1182 = vmatpush1.bf16.msra.mxu0 0
      %1183 = vmatprep.subr.bf16.mxu0 0
      %1184 = vmatpush1.bf16.msra.mxu0 0
      %1185 = vmatprep.mubr.bf16.mxu0 0
      %1186 = vmatmul.mubr.bf16.gmra.mrb[0].mxu0 %v1100
      %v1187 = vpop.f32.mrb[0].mxu0
      %v1188 = vadd.f32 0.0, %v1187
      %v1189 = vpop.f32.mrb[0].mxu0
      %v1190 = vpop.f32.mrb[0].mxu0
      %v1191 = vadd.f32 0.0, %v1190
      %v1192 = vpop.f32.mrb[0].mxu0
      %1193 = vmatprep.mubr.bf16.mxu0 0
      %1194 = vmatmul.mubr.bf16.gmra.mrb[0].mxu0 %v1103
      %v1195 = vpop.f32.mrb[0].mxu0
      %v1196 = vadd.f32 0.0, %v1195
      %v1197 = vpop.f32.mrb[0].mxu0
      %v1198 = vpop.f32.mrb[0].mxu0
      %v1199 = vadd.f32 0.0, %v1198
      %v1200 = vpop.f32.mrb[0].mxu0
      %1201 = vmatprep.mubr.bf16.mxu0 0
      %1202 = vmatmul.mubr.bf16.gmra.mrb[0].mxu0 %v1106
      %v1203 = vpop.f32.mrb[0].mxu0
      %v1204 = vadd.f32 0.0, %v1203
      %v1205 = vpop.f32.mrb[0].mxu0
      %v1206 = vpop.f32.mrb[0].mxu0
      %v1207 = vadd.f32 0.0, %v1206
      %v1208 = vpop.f32.mrb[0].mxu0
      %1209 = vmatprep.mubr.bf16.mxu0 0
      %1210 = vmatmul.mubr.bf16.gmra.mrb[0].mxu0 %v1109
      %v1211 = vpop.f32.mrb[0].mxu0
      %v1212 = vadd.f32 0.0, %v1211
      %v1213 = vpop.f32.mrb[0].mxu0
      %v1214 = vpop.f32.mrb[0].mxu0
      %v1215 = vadd.f32 0.0, %v1214
      %v1216 = vpop.f32.mrb[0].mxu0
      %1217 = vmatprep.mubr.bf16.mxu0 0
      %1218 = vmatmul.mubr.bf16.gmra.mrb[0].mxu0 %v1112
      %v1219 = vpop.f32.mrb[0].mxu0
      %v1220 = vadd.f32 0.0, %v1219
      %v1221 = vpop.f32.mrb[0].mxu0
      %v1222 = vpop.f32.mrb[0].mxu0
      %v1223 = vadd.f32 0.0, %v1222
      %v1224 = vpop.f32.mrb[0].mxu0
      %1225 = vmatprep.mubr.bf16.mxu0 0
      %1226 = vmatmul.mubr.bf16.gmra.mrb[0].mxu0 %v1115
      %v1227 = vpop.f32.mrb[0].mxu0
      %v1228 = vadd.f32 0.0, %v1227
      %v1229 = vpop.f32.mrb[0].mxu0
      %v1230 = vpop.f32.mrb[0].mxu0
      %v1231 = vadd.f32 0.0, %v1230
      %v1232 = vpop.f32.mrb[0].mxu0
      %1233 = vmatprep.mubr.bf16.mxu0 0
      %1234 = vmatmul.mubr.bf16.gmra.mrb[0].mxu0 %v1118
      %v1235 = vpop.f32.mrb[0].mxu0
      %v1236 = vadd.f32 0.0, %v1235
      %v1237 = vpop.f32.mrb[0].mxu0
      %v1238 = vpop.f32.mrb[0].mxu0
      %v1239 = vadd.f32 0.0, %v1238
      %v1240 = vpop.f32.mrb[0].mxu0
      %1241 = vmatprep.mubr.bf16.mxu0 0
      %1242 = vmatmul.mubr.bf16.gmra.mrb[0].mxu0 %v1121
      %v1243 = vpop.f32.mrb[0].mxu0
      %v1244 = vadd.f32 0.0, %v1243
      %v1245 = vpop.f32.mrb[0].mxu0
      %v1246 = vpop.f32.mrb[0].mxu0
      %v1247 = vadd.f32 0.0, %v1246
      %v1248 = vpop.f32.mrb[0].mxu0
      %1249 = vmatprep.mubr.bf16.mxu0 0
      %1250 = vmatmul.mubr.bf16.gmra.mrb[0].mxu0 %v1124
      %v1251 = vpop.f32.mrb[0].mxu0
      %v1252 = vadd.f32 0.0, %v1251
      %v1253 = vpop.f32.mrb[0].mxu0
      %v1254 = vpop.f32.mrb[0].mxu0
      %v1255 = vadd.f32 0.0, %v1254
      %v1256 = vpop.f32.mrb[0].mxu0
      %1257 = vmatprep.mubr.bf16.mxu0 0
      %1258 = vmatmul.mubr.bf16.gmra.mrb[0].mxu0 %v1127
      %v1259 = vpop.f32.mrb[0].mxu0
      %v1260 = vadd.f32 0.0, %v1259
      %v1261 = vpop.f32.mrb[0].mxu0
      %v1262 = vpop.f32.mrb[0].mxu0
      %v1263 = vadd.f32 0.0, %v1262
      %v1264 = vpop.f32.mrb[0].mxu0
      %1265 = vmatprep.mubr.bf16.mxu0 0
      %1266 = vmatmul.mubr.bf16.gmra.mrb[0].mxu0 %v1130
      %v1267 = vpop.f32.mrb[0].mxu0
      %v1268 = vadd.f32 0.0, %v1267
      %v1269 = vpop.f32.mrb[0].mxu0
      %v1270 = vpop.f32.mrb[0].mxu0
      %v1271 = vadd.f32 0.0, %v1270
      %v1272 = vpop.f32.mrb[0].mxu0
      %1273 = vmatprep.mubr.bf16.mxu0 0
      %1274 = vmatmul.mubr.bf16.gmra.mrb[0].mxu0 %v1133
      %v1275 = vpop.f32.mrb[0].mxu0
      %v1276 = vadd.f32 0.0, %v1275
      %v1277 = vpop.f32.mrb[0].mxu0
      %v1278 = vpop.f32.mrb[0].mxu0
      %v1279 = vadd.f32 0.0, %v1278
      %v1280 = vpop.f32.mrb[0].mxu0
      %1281 = vmatprep.mubr.bf16.mxu0 0
      %1282 = vmatmul.mubr.bf16.gmra.mrb[0].mxu0 %v1136
      %v1283 = vpop.f32.mrb[0].mxu0
      %v1284 = vadd.f32 0.0, %v1283
      %v1285 = vpop.f32.mrb[0].mxu0
      %v1286 = vpop.f32.mrb[0].mxu0
      %v1287 = vadd.f32 0.0, %v1286
      %v1288 = vpop.f32.mrb[0].mxu0
      %1289 = vmatprep.mubr.bf16.mxu0 0
      %1290 = vmatmul.mubr.bf16.gmra.mrb[0].mxu0 %v1139
      %v1291 = vpop.f32.mrb[0].mxu0
      %v1292 = vadd.f32 0.0, %v1291
      %v1293 = vpop.f32.mrb[0].mxu0
      %v1294 = vpop.f32.mrb[0].mxu0
      %v1295 = vadd.f32 0.0, %v1294
      %v1296 = vpop.f32.mrb[0].mxu0
      %1297 = vmatprep.mubr.bf16.mxu0 0
      %1298 = vmatmul.mubr.bf16.gmra.mrb[0].mxu0 %v1142
      %v1299 = vpop.f32.mrb[0].mxu0
      %v1300 = vadd.f32 0.0, %v1299
      %v1301 = vpop.f32.mrb[0].mxu0
      %v1302 = vpop.f32.mrb[0].mxu0
      %v1303 = vadd.f32 0.0, %v1302
      %v1304 = vpop.f32.mrb[0].mxu0
      %1305 = vmatprep.mubr.bf16.mxu0 0
      %1306 = vmatmul.mubr.bf16.gmra.mrb[0].mxu0 %v1145
      %v1307 = vpop.f32.mrb[0].mxu0
      %v1308 = vadd.f32 0.0, %v1307
      %v1309 = vpop.f32.mrb[0].mxu0
      %v1310 = vpop.f32.mrb[0].mxu0
      %v1311 = vadd.f32 0.0, %v1310
      %v1312 = vpop.f32.mrb[0].mxu0
      %1313 = vmatprep.mubr.bf16.mxu0 0
      %1314 = vmatmul.mubr.bf16.gmra.mrb[0].mxu0 %v1148
      %v1315 = vpop.f32.mrb[0].mxu0
      %v1316 = vadd.f32 0.0, %v1315
      %v1317 = vpop.f32.mrb[0].mxu0
      %v1318 = vpop.f32.mrb[0].mxu0
      %v1319 = vadd.f32 0.0, %v1318
      %v1320 = vpop.f32.mrb[0].mxu0
      %1321 = vmatprep.mubr.bf16.mxu0 0
      %1322 = vmatmul.mubr.bf16.gmra.mrb[0].mxu0 %v1151
      %v1323 = vpop.f32.mrb[0].mxu0
      %v1324 = vadd.f32 0.0, %v1323
      %v1325 = vpop.f32.mrb[0].mxu0
      %v1326 = vpop.f32.mrb[0].mxu0
      %v1327 = vadd.f32 0.0, %v1326
      %v1328 = vpop.f32.mrb[0].mxu0
      %1329 = vdwg.mxu0
      %v1330 = vadd.f32 %v906, %v1188
      %v1331 = vadd.f32 %v909, %v1191
      %v1332 = vadd.f32 %v914, %v1196
      %v1333 = vadd.f32 %v917, %v1199
      %v1334 = vadd.f32 %v922, %v1204
      %v1335 = vadd.f32 %v925, %v1207
      %v1336 = vadd.f32 %v930, %v1212
      %v1337 = vadd.f32 %v933, %v1215
      %v1338 = vadd.f32 %v938, %v1220
      %v1339 = vadd.f32 %v941, %v1223
      %v1340 = vadd.f32 %v946, %v1228
      %v1341 = vadd.f32 %v949, %v1231
      %v1342 = vadd.f32 %v954, %v1236
      %v1343 = vadd.f32 %v957, %v1239
      %v1344 = vadd.f32 %v962, %v1244
      %v1345 = vadd.f32 %v965, %v1247
      %v1346 = vadd.f32 %v970, %v1252
      %v1347 = vadd.f32 %v973, %v1255
      %v1348 = vadd.f32 %v978, %v1260
      %v1349 = vadd.f32 %v981, %v1263
      %v1350 = vadd.f32 %v986, %v1268
      %v1351 = vadd.f32 %v989, %v1271
      %v1352 = vadd.f32 %v994, %v1276
      %v1353 = vadd.f32 %v997, %v1279
      %v1354 = vadd.f32 %v1002, %v1284
      %v1355 = vadd.f32 %v1005, %v1287
      %v1356 = vadd.f32 %v1010, %v1292
      %v1357 = vadd.f32 %v1013, %v1295
      %v1358 = vadd.f32 %v1018, %v1300
      %v1359 = vadd.f32 %v1021, %v1303
      %v1360 = vadd.f32 %v1026, %v1308
      %v1361 = vadd.f32 %v1029, %v1311
      %v1362 = vadd.f32 %v1034, %v1316
      %v1363 = vadd.f32 %v1037, %v1319
      %v1364 = vadd.f32 %v1042, %v1324
      %v1365 = vadd.f32 %v1045, %v1327
      %v1366 = vld [vmem:[%s300 + $0x8] sm:$0xe]
      %v1367 = vld [vmem:[%s300 + $0xc] sm:$0xf]
      %v1368 = vld [vmem:[%s300 + $0x10] sm:$0xf]
      %v1369 = vld [vmem:[%s300 + $0x14] sm:$0xf]
      %v1370 = vld [vmem:[%s300 + $0x18] sm:$0xf]
      %v1371 = vld [vmem:[%s300 + $0x1c] sm:$0xf]
      %v1372 = vld [vmem:[%s300 + $0x20] sm:$0xf]
      %v1373 = vld [vmem:[%s300 + $0x24] sm:$0xf]
      %v1374 = vld [vmem:[%s300 + $0x28] sm:$0xf]
      %v1375 = vld [vmem:[%s300 + $0x2c] sm:$0xf]
      %v1376 = vld [vmem:[%s300 + $0x30] sm:$0xf]
      %v1377 = vld [vmem:[%s300 + $0x34] sm:$0xf]
      %v1378 = vld [vmem:[%s300 + $0x38] sm:$0xf]
      %v1379 = vld [vmem:[%s300 + $0x3c] sm:$0xf]
      %v1380 = vld [vmem:[%s300 + $0x40] sm:$0xf]
      %v1381 = vld [vmem:[%s300 + $0x44] sm:$0xf]
      %v1382 = vld [vmem:[%s300 + $0x48] sm:$0xf]
      %v1383 = vld [vmem:[%s300 + $0x4c] sm:$0xf]
      %v1384 = vld [vmem:[%s300 + $0x50] sm:$0xf]
      %v1385 = vld [vmem:[%s300 + $0x54] sm:$0xf]
      %v1386 = vld [vmem:[%s300 + $0x58] sm:$0xf]
      %v1387 = vld [vmem:[%s300 + $0x5c] sm:$0xf]
      %v1388 = vld [vmem:[%s300 + $0x60] sm:$0xf]
      %v1389 = vld [vmem:[%s300 + $0x64] sm:$0xf]
      %v1390 = vld [vmem:[%s300 + $0x68] sm:$0xf]
      %v1391 = vld [vmem:[%s300 + $0x6c] sm:$0xf]
      %v1392 = vld [vmem:[%s300 + $0x70] sm:$0xf]
      %v1393 = vld [vmem:[%s300 + $0x74] sm:$0xf]
      %v1394 = vld [vmem:[%s300 + $0x78] sm:$0xf]
      %v1395 = vld [vmem:[%s300 + $0x7c] sm:$0xf]
      %v1396 = vld [vmem:[%s300 + $0x80] sm:$0xf]
      %v1397 = vld [vmem:[%s300 + $0x84] sm:$0xf]
      %v1398 = vld [vmem:[%s300 + $0x88] sm:$0xf]
      %v1399 = vld [vmem:[%s300 + $0x8c] sm:$0xf]
      %v1400 = vld [vmem:[%s300 + $0x90] sm:$0xf]
      %v1401 = vld [vmem:[%s300 + $0x94] sm:$0xf]
      %v1402 = vld [vmem:[%s300 + $0x98] sm:$0x1]
      %s1403 = scalar_lea.vmem %s1, 24
      %v1404 = vld [vmem:[%s1403] sm:$0xf]
      %v1405 = vld [vmem:[%s1403 + $0x4] sm:$0xf]
      %v1443 = vunpack.c.l.b16 %v1366
      %v1444 = vunpack.c.l.b16 %v1367
      %v1445 = vunpack.c.l.b16 %v1368
      %v1446 = vunpack.c.l.b16 %v1369
      %v1447 = vunpack.c.l.b16 %v1370
      %v1448 = vunpack.c.l.b16 %v1371
      %v1449 = vunpack.c.l.b16 %v1372
      %v1450 = vunpack.c.l.b16 %v1373
      %v1451 = vunpack.c.l.b16 %v1374
      %v1452 = vunpack.c.l.b16 %v1375
      %v1453 = vunpack.c.l.b16 %v1376
      %v1454 = vunpack.c.l.b16 %v1377
      %v1455 = vunpack.c.l.b16 %v1378
      %v1456 = vunpack.c.l.b16 %v1379
      %v1457 = vunpack.c.l.b16 %v1380
      %v1458 = vunpack.c.l.b16 %v1381
      %v1459 = vunpack.c.l.b16 %v1382
      %v1460 = vunpack.c.l.b16 %v1383
      %v1461 = vunpack.c.l.b16 %v1384
      %v1462 = vunpack.c.l.b16 %v1385
      %v1463 = vunpack.c.l.b16 %v1386
      %v1464 = vunpack.c.l.b16 %v1387
      %v1465 = vunpack.c.l.b16 %v1388
      %v1466 = vunpack.c.l.b16 %v1389
      %v1467 = vunpack.c.l.b16 %v1390
      %v1468 = vunpack.c.l.b16 %v1391
      %v1469 = vunpack.c.l.b16 %v1392
      %v1470 = vunpack.c.l.b16 %v1393
      %v1471 = vunpack.c.l.b16 %v1394
      %v1472 = vunpack.c.l.b16 %v1395
      %v1473 = vunpack.c.l.b16 %v1396
      %v1474 = vunpack.c.l.b16 %v1397
      %v1475 = vunpack.c.l.b16 %v1398
      %v1476 = vunpack.c.l.b16 %v1399
      %v1477 = vunpack.c.l.b16 %v1400
      %v1478 = vunpack.c.l.b16 %v1401
      %v1479 = vunpack.c.l.b16 %v1402
      %v1480 = vpack.c.b16 %v1444, %v1443
      %v1481 = vpack.c.b16 %v1446, %v1445
      %v1482 = vpack.c.b16 %v1448, %v1447
      %v1483 = vpack.c.b16 %v1450, %v1449
      %v1484 = vpack.c.b16 %v1452, %v1451
      %v1485 = vpack.c.b16 %v1454, %v1453
      %v1486 = vpack.c.b16 %v1456, %v1455
      %v1487 = vpack.c.b16 %v1458, %v1457
      %v1488 = vpack.c.b16 %v1460, %v1459
      %v1489 = vpack.c.b16 %v1462, %v1461
      %v1490 = vpack.c.b16 %v1464, %v1463
      %v1491 = vpack.c.b16 %v1466, %v1465
      %v1492 = vpack.c.b16 %v1468, %v1467
      %v1493 = vpack.c.b16 %v1470, %v1469
      %v1494 = vpack.c.b16 %v1472, %v1471
      %v1495 = vpack.c.b16 %v1474, %v1473
      %v1496 = vpack.c.b16 %v1476, %v1475
      %v1497 = vpack.c.b16 %v1478, %v1477
      %v1498 = vpack.c.b16 %v1479, %v1479
      %v1499 = vrot.slane %v1480, 1
      %v1500 = vrot.slane %v1481, 1
      %v1501 = vsel %vm1055, %v1499, %v1500
      %v1502 = vrot.slane %v1482, 1
      %v1503 = vsel %vm1055, %v1500, %v1502
      %v1504 = vrot.slane %v1483, 1
      %v1505 = vsel %vm1055, %v1502, %v1504
      %v1506 = vrot.slane %v1484, 1
      %v1507 = vsel %vm1055, %v1504, %v1506
      %v1508 = vrot.slane %v1485, 1
      %v1509 = vsel %vm1055, %v1506, %v1508
      %v1510 = vrot.slane %v1486, 1
      %v1511 = vsel %vm1055, %v1508, %v1510
      %v1512 = vrot.slane %v1487, 1
      %v1513 = vsel %vm1055, %v1510, %v1512
      %v1514 = vrot.slane %v1488, 1
      %v1515 = vsel %vm1055, %v1512, %v1514
      %v1516 = vrot.slane %v1489, 1
      %v1517 = vsel %vm1055, %v1514, %v1516
      %v1518 = vrot.slane %v1490, 1
      %v1519 = vsel %vm1055, %v1516, %v1518
      %v1520 = vrot.slane %v1491, 1
      %v1521 = vsel %vm1055, %v1518, %v1520
      %v1522 = vrot.slane %v1492, 1
      %v1523 = vsel %vm1055, %v1520, %v1522
      %v1524 = vrot.slane %v1493, 1
      %v1525 = vsel %vm1055, %v1522, %v1524
      %v1526 = vrot.slane %v1494, 1
      %v1527 = vsel %vm1055, %v1524, %v1526
      %v1528 = vrot.slane %v1495, 1
      %v1529 = vsel %vm1055, %v1526, %v1528
      %v1530 = vrot.slane %v1496, 1
      %v1531 = vsel %vm1055, %v1528, %v1530
      %v1532 = vrot.slane %v1497, 1
      %v1533 = vsel %vm1055, %v1530, %v1532
      %v1534 = vrot.slane %v1498, 1
      %v1535 = vsel %vm1055, %v1532, %v1534
      %v1538 = vunpack.c.l.b16 %v1404
      %v1539 = vunpack.c.l.b16 %v1405
      %v1540 = vpack.c.b16 %v1539, %v1538
      %v1543 = vsel %vm597, %v1501, 0
      %v1546 = vsel %vm597, %v1503, 0
      %v1549 = vsel %vm597, %v1505, 0
      %v1552 = vsel %vm597, %v1507, 0
      %v1555 = vsel %vm597, %v1509, 0
      %v1558 = vsel %vm597, %v1511, 0
      %v1561 = vsel %vm597, %v1513, 0
      %v1564 = vsel %vm597, %v1515, 0
      %v1567 = vsel %vm597, %v1517, 0
      %v1570 = vsel %vm597, %v1519, 0
      %v1573 = vsel %vm597, %v1521, 0
      %v1576 = vsel %vm597, %v1523, 0
      %v1579 = vsel %vm597, %v1525, 0
      %v1582 = vsel %vm597, %v1527, 0
      %v1585 = vsel %vm597, %v1529, 0
      %v1588 = vsel %vm597, %v1531, 0
      %v1591 = vsel %vm597, %v1533, 0
      %v1594 = vsel %vm597, %v1535, 0
      %1596 = vmatprep.subr.bf16.mxu0 0
      %1597 = vmatpush1.bf16.msra.mxu0 %v1540
      %1598 = vmatprep.subr.bf16.mxu0 0
      %1599 = vmatpush1.bf16.msra.mxu0 0
      %1600 = vmatprep.subr.bf16.mxu0 0
      %1601 = vmatpush1.bf16.msra.mxu0 0
      %1602 = vmatprep.subr.bf16.mxu0 0
      %1603 = vmatpush1.bf16.msra.mxu0 0
      %1604 = vmatprep.subr.bf16.mxu0 0
      %1605 = vmatpush1.bf16.msra.mxu0 0
      %1606 = vmatprep.subr.bf16.mxu0 0
      %1607 = vmatpush1.bf16.msra.mxu0 0
      %1608 = vmatprep.subr.bf16.mxu0 0
      %1609 = vmatpush1.bf16.msra.mxu0 0
      %1610 = vmatprep.subr.bf16.mxu0 0
      %1611 = vmatpush1.bf16.msra.mxu0 0
      %1612 = vmatprep.subr.bf16.mxu0 0
      %1613 = vmatpush1.bf16.msra.mxu0 0
      %1614 = vmatprep.subr.bf16.mxu0 0
      %1615 = vmatpush1.bf16.msra.mxu0 0
      %1616 = vmatprep.subr.bf16.mxu0 0
      %1617 = vmatpush1.bf16.msra.mxu0 0
      %1618 = vmatprep.subr.bf16.mxu0 0
      %1619 = vmatpush1.bf16.msra.mxu0 0
      %1620 = vmatprep.subr.bf16.mxu0 0
      %1621 = vmatpush1.bf16.msra.mxu0 0
      %1622 = vmatprep.subr.bf16.mxu0 0
      %1623 = vmatpush1.bf16.msra.mxu0 0
      %1624 = vmatprep.subr.bf16.mxu0 0
      %1625 = vmatpush1.bf16.msra.mxu0 0
      %1626 = vmatprep.subr.bf16.mxu0 0
      %1627 = vmatpush1.bf16.msra.mxu0 0
      %1628 = vmatprep.mubr.bf16.mxu0 0
      %1629 = vmatmul.mubr.bf16.gmra.mrb[0].mxu0 %v1543
      %v1630 = vpop.f32.mrb[0].mxu0
      %v1631 = vadd.f32 0.0, %v1630
      %v1632 = vpop.f32.mrb[0].mxu0
      %v1633 = vpop.f32.mrb[0].mxu0
      %v1634 = vadd.f32 0.0, %v1633
      %v1635 = vpop.f32.mrb[0].mxu0
      %1636 = vmatprep.mubr.bf16.mxu0 0
      %1637 = vmatmul.mubr.bf16.gmra.mrb[0].mxu0 %v1546
      %v1638 = vpop.f32.mrb[0].mxu0
      %v1639 = vadd.f32 0.0, %v1638
      %v1640 = vpop.f32.mrb[0].mxu0
      %v1641 = vpop.f32.mrb[0].mxu0
      %v1642 = vadd.f32 0.0, %v1641
      %v1643 = vpop.f32.mrb[0].mxu0
      %1644 = vmatprep.mubr.bf16.mxu0 0
      %1645 = vmatmul.mubr.bf16.gmra.mrb[0].mxu0 %v1549
      %v1646 = vpop.f32.mrb[0].mxu0
      %v1647 = vadd.f32 0.0, %v1646
      %v1648 = vpop.f32.mrb[0].mxu0
      %v1649 = vpop.f32.mrb[0].mxu0
      %v1650 = vadd.f32 0.0, %v1649
      %v1651 = vpop.f32.mrb[0].mxu0
      %1652 = vmatprep.mubr.bf16.mxu0 0
      %1653 = vmatmul.mubr.bf16.gmra.mrb[0].mxu0 %v1552
      %v1654 = vpop.f32.mrb[0].mxu0
      %v1655 = vadd.f32 0.0, %v1654
      %v1656 = vpop.f32.mrb[0].mxu0
      %v1657 = vpop.f32.mrb[0].mxu0
      %v1658 = vadd.f32 0.0, %v1657
      %v1659 = vpop.f32.mrb[0].mxu0
      %1660 = vmatprep.mubr.bf16.mxu0 0
      %1661 = vmatmul.mubr.bf16.gmra.mrb[0].mxu0 %v1555
      %v1662 = vpop.f32.mrb[0].mxu0
      %v1663 = vadd.f32 0.0, %v1662
      %v1664 = vpop.f32.mrb[0].mxu0
      %v1665 = vpop.f32.mrb[0].mxu0
      %v1666 = vadd.f32 0.0, %v1665
      %v1667 = vpop.f32.mrb[0].mxu0
      %1668 = vmatprep.mubr.bf16.mxu0 0
      %1669 = vmatmul.mubr.bf16.gmra.mrb[0].mxu0 %v1558
      %v1670 = vpop.f32.mrb[0].mxu0
      %v1671 = vadd.f32 0.0, %v1670
      %v1672 = vpop.f32.mrb[0].mxu0
      %v1673 = vpop.f32.mrb[0].mxu0
      %v1674 = vadd.f32 0.0, %v1673
      %v1675 = vpop.f32.mrb[0].mxu0
      %1676 = vmatprep.mubr.bf16.mxu0 0
      %1677 = vmatmul.mubr.bf16.gmra.mrb[0].mxu0 %v1561
      %v1678 = vpop.f32.mrb[0].mxu0
      %v1679 = vadd.f32 0.0, %v1678
      %v1680 = vpop.f32.mrb[0].mxu0
      %v1681 = vpop.f32.mrb[0].mxu0
      %v1682 = vadd.f32 0.0, %v1681
      %v1683 = vpop.f32.mrb[0].mxu0
      %1684 = vmatprep.mubr.bf16.mxu0 0
      %1685 = vmatmul.mubr.bf16.gmra.mrb[0].mxu0 %v1564
      %v1686 = vpop.f32.mrb[0].mxu0
      %v1687 = vadd.f32 0.0, %v1686
      %v1688 = vpop.f32.mrb[0].mxu0
      %v1689 = vpop.f32.mrb[0].mxu0
      %v1690 = vadd.f32 0.0, %v1689
      %v1691 = vpop.f32.mrb[0].mxu0
      %1692 = vmatprep.mubr.bf16.mxu0 0
      %1693 = vmatmul.mubr.bf16.gmra.mrb[0].mxu0 %v1567
      %v1694 = vpop.f32.mrb[0].mxu0
      %v1695 = vadd.f32 0.0, %v1694
      %v1696 = vpop.f32.mrb[0].mxu0
      %v1697 = vpop.f32.mrb[0].mxu0
      %v1698 = vadd.f32 0.0, %v1697
      %v1699 = vpop.f32.mrb[0].mxu0
      %1700 = vmatprep.mubr.bf16.mxu0 0
      %1701 = vmatmul.mubr.bf16.gmra.mrb[0].mxu0 %v1570
      %v1702 = vpop.f32.mrb[0].mxu0
      %v1703 = vadd.f32 0.0, %v1702
      %v1704 = vpop.f32.mrb[0].mxu0
      %v1705 = vpop.f32.mrb[0].mxu0
      %v1706 = vadd.f32 0.0, %v1705
      %v1707 = vpop.f32.mrb[0].mxu0
      %1708 = vmatprep.mubr.bf16.mxu0 0
      %1709 = vmatmul.mubr.bf16.gmra.mrb[0].mxu0 %v1573
      %v1710 = vpop.f32.mrb[0].mxu0
      %v1711 = vadd.f32 0.0, %v1710
      %v1712 = vpop.f32.mrb[0].mxu0
      %v1713 = vpop.f32.mrb[0].mxu0
      %v1714 = vadd.f32 0.0, %v1713
      %v1715 = vpop.f32.mrb[0].mxu0
      %1716 = vmatprep.mubr.bf16.mxu0 0
      %1717 = vmatmul.mubr.bf16.gmra.mrb[0].mxu0 %v1576
      %v1718 = vpop.f32.mrb[0].mxu0
      %v1719 = vadd.f32 0.0, %v1718
      %v1720 = vpop.f32.mrb[0].mxu0
      %v1721 = vpop.f32.mrb[0].mxu0
      %v1722 = vadd.f32 0.0, %v1721
      %v1723 = vpop.f32.mrb[0].mxu0
      %1724 = vmatprep.mubr.bf16.mxu0 0
      %1725 = vmatmul.mubr.bf16.gmra.mrb[0].mxu0 %v1579
      %v1726 = vpop.f32.mrb[0].mxu0
      %v1727 = vadd.f32 0.0, %v1726
      %v1728 = vpop.f32.mrb[0].mxu0
      %v1729 = vpop.f32.mrb[0].mxu0
      %v1730 = vadd.f32 0.0, %v1729
      %v1731 = vpop.f32.mrb[0].mxu0
      %1732 = vmatprep.mubr.bf16.mxu0 0
      %1733 = vmatmul.mubr.bf16.gmra.mrb[0].mxu0 %v1582
      %v1734 = vpop.f32.mrb[0].mxu0
      %v1735 = vadd.f32 0.0, %v1734
      %v1736 = vpop.f32.mrb[0].mxu0
      %v1737 = vpop.f32.mrb[0].mxu0
      %v1738 = vadd.f32 0.0, %v1737
      %v1739 = vpop.f32.mrb[0].mxu0
      %1740 = vmatprep.mubr.bf16.mxu0 0
      %1741 = vmatmul.mubr.bf16.gmra.mrb[0].mxu0 %v1585
      %v1742 = vpop.f32.mrb[0].mxu0
      %v1743 = vadd.f32 0.0, %v1742
      %v1744 = vpop.f32.mrb[0].mxu0
      %v1745 = vpop.f32.mrb[0].mxu0
      %v1746 = vadd.f32 0.0, %v1745
      %v1747 = vpop.f32.mrb[0].mxu0
      %1748 = vmatprep.mubr.bf16.mxu0 0
      %1749 = vmatmul.mubr.bf16.gmra.mrb[0].mxu0 %v1588
      %v1750 = vpop.f32.mrb[0].mxu0
      %v1751 = vadd.f32 0.0, %v1750
      %v1752 = vpop.f32.mrb[0].mxu0
      %v1753 = vpop.f32.mrb[0].mxu0
      %v1754 = vadd.f32 0.0, %v1753
      %v1755 = vpop.f32.mrb[0].mxu0
      %1756 = vmatprep.mubr.bf16.mxu0 0
      %1757 = vmatmul.mubr.bf16.gmra.mrb[0].mxu0 %v1591
      %v1758 = vpop.f32.mrb[0].mxu0
      %v1759 = vadd.f32 0.0, %v1758
      %v1760 = vpop.f32.mrb[0].mxu0
      %v1761 = vpop.f32.mrb[0].mxu0
      %v1762 = vadd.f32 0.0, %v1761
      %v1763 = vpop.f32.mrb[0].mxu0
      %1764 = vmatprep.mubr.bf16.mxu0 0
      %1765 = vmatmul.mubr.bf16.gmra.mrb[0].mxu0 %v1594
      %v1766 = vpop.f32.mrb[0].mxu0
      %v1767 = vadd.f32 0.0, %v1766
      %v1768 = vpop.f32.mrb[0].mxu0
      %v1769 = vpop.f32.mrb[0].mxu0
      %v1770 = vadd.f32 0.0, %v1769
      %v1771 = vpop.f32.mrb[0].mxu0
      %1772 = vdwg.mxu0
      %v1773 = vadd.f32 %v1330, %v1631
      %v1774 = vadd.f32 %v1331, %v1634
      %v1775 = vadd.f32 %v1332, %v1639
      %v1776 = vadd.f32 %v1333, %v1642
      %v1777 = vadd.f32 %v1334, %v1647
      %v1778 = vadd.f32 %v1335, %v1650
      %v1779 = vadd.f32 %v1336, %v1655
      %v1780 = vadd.f32 %v1337, %v1658
      %v1781 = vadd.f32 %v1338, %v1663
      %v1782 = vadd.f32 %v1339, %v1666
      %v1783 = vadd.f32 %v1340, %v1671
      %v1784 = vadd.f32 %v1341, %v1674
      %v1785 = vadd.f32 %v1342, %v1679
      %v1786 = vadd.f32 %v1343, %v1682
      %v1787 = vadd.f32 %v1344, %v1687
      %v1788 = vadd.f32 %v1345, %v1690
      %v1789 = vadd.f32 %v1346, %v1695
      %v1790 = vadd.f32 %v1347, %v1698
      %v1791 = vadd.f32 %v1348, %v1703
      %v1792 = vadd.f32 %v1349, %v1706
      %v1793 = vadd.f32 %v1350, %v1711
      %v1794 = vadd.f32 %v1351, %v1714
      %v1795 = vadd.f32 %v1352, %v1719
      %v1796 = vadd.f32 %v1353, %v1722
      %v1797 = vadd.f32 %v1354, %v1727
      %v1798 = vadd.f32 %v1355, %v1730
      %v1799 = vadd.f32 %v1356, %v1735
      %v1800 = vadd.f32 %v1357, %v1738
      %v1801 = vadd.f32 %v1358, %v1743
      %v1802 = vadd.f32 %v1359, %v1746
      %v1803 = vadd.f32 %v1360, %v1751
      %v1804 = vadd.f32 %v1361, %v1754
      %v1805 = vadd.f32 %v1362, %v1759
      %v1806 = vadd.f32 %v1363, %v1762
      %v1807 = vadd.f32 %v1364, %v1767
      %v1808 = vadd.f32 %v1365, %v1770
      %v1809 = vld [vmem:[%s300 + $0x98] sm:$0x3]
      %s1810 = scalar_lea.vmem %s1, 32
      %v1811 = vld [vmem:[%s1810] sm:$0xf]
      %v1812 = vld [vmem:[%s1810 + $0x4] sm:$0xf]
      %v1814 = vunpack.c.l.b16 %v1809
      %v1815 = vpack.c.b16 %v1814, %v1814
      %vm1816 = vsmask.f32 6400
      %v1818 = vshrl.u32 %v1480, 16
      %v1820 = vrot.slane %v1818, 1
      %v1821 = vshll.u32 %v1480, 16
      %v1823 = vrot.slane %v1821, 2
      %v1824 = vor.u32 %v1820, %v1823
      %v1826 = vshrl.u32 %v1481, 16
      %v1828 = vrot.slane %v1826, 1
      %v1829 = vshll.u32 %v1481, 16
      %v1831 = vrot.slane %v1829, 2
      %v1832 = vor.u32 %v1828, %v1831
      %v1833 = vsel %vm1816, %v1824, %v1832
      %v1835 = vshrl.u32 %v1482, 16
      %v1837 = vrot.slane %v1835, 1
      %v1838 = vshll.u32 %v1482, 16
      %v1840 = vrot.slane %v1838, 2
      %v1841 = vor.u32 %v1837, %v1840
      %v1842 = vsel %vm1816, %v1832, %v1841
      %v1844 = vshrl.u32 %v1483, 16
      %v1846 = vrot.slane %v1844, 1
      %v1847 = vshll.u32 %v1483, 16
      %v1849 = vrot.slane %v1847, 2
      %v1850 = vor.u32 %v1846, %v1849
      %v1851 = vsel %vm1816, %v1841, %v1850
      %v1853 = vshrl.u32 %v1484, 16
      %v1855 = vrot.slane %v1853, 1
      %v1856 = vshll.u32 %v1484, 16
      %v1858 = vrot.slane %v1856, 2
      %v1859 = vor.u32 %v1855, %v1858
      %v1860 = vsel %vm1816, %v1850, %v1859
      %v1862 = vshrl.u32 %v1485, 16
      %v1864 = vrot.slane %v1862, 1
      %v1865 = vshll.u32 %v1485, 16
      %v1867 = vrot.slane %v1865, 2
      %v1868 = vor.u32 %v1864, %v1867
      %v1869 = vsel %vm1816, %v1859, %v1868
      %v1871 = vshrl.u32 %v1486, 16
      %v1873 = vrot.slane %v1871, 1
      %v1874 = vshll.u32 %v1486, 16
      %v1876 = vrot.slane %v1874, 2
      %v1877 = vor.u32 %v1873, %v1876
      %v1878 = vsel %vm1816, %v1868, %v1877
      %v1880 = vshrl.u32 %v1487, 16
      %v1882 = vrot.slane %v1880, 1
      %v1883 = vshll.u32 %v1487, 16
      %v1885 = vrot.slane %v1883, 2
      %v1886 = vor.u32 %v1882, %v1885
      %v1887 = vsel %vm1816, %v1877, %v1886
      %v1889 = vshrl.u32 %v1488, 16
      %v1891 = vrot.slane %v1889, 1
      %v1892 = vshll.u32 %v1488, 16
      %v1894 = vrot.slane %v1892, 2
      %v1895 = vor.u32 %v1891, %v1894
      %v1896 = vsel %vm1816, %v1886, %v1895
      %v1898 = vshrl.u32 %v1489, 16
      %v1900 = vrot.slane %v1898, 1
      %v1901 = vshll.u32 %v1489, 16
      %v1903 = vrot.slane %v1901, 2
      %v1904 = vor.u32 %v1900, %v1903
      %v1905 = vsel %vm1816, %v1895, %v1904
      %v1907 = vshrl.u32 %v1490, 16
      %v1909 = vrot.slane %v1907, 1
      %v1910 = vshll.u32 %v1490, 16
      %v1912 = vrot.slane %v1910, 2
      %v1913 = vor.u32 %v1909, %v1912
      %v1914 = vsel %vm1816, %v1904, %v1913
      %v1916 = vshrl.u32 %v1491, 16
      %v1918 = vrot.slane %v1916, 1
      %v1919 = vshll.u32 %v1491, 16
      %v1921 = vrot.slane %v1919, 2
      %v1922 = vor.u32 %v1918, %v1921
      %v1923 = vsel %vm1816, %v1913, %v1922
      %v1925 = vshrl.u32 %v1492, 16
      %v1927 = vrot.slane %v1925, 1
      %v1928 = vshll.u32 %v1492, 16
      %v1930 = vrot.slane %v1928, 2
      %v1931 = vor.u32 %v1927, %v1930
      %v1932 = vsel %vm1816, %v1922, %v1931
      %v1934 = vshrl.u32 %v1493, 16
      %v1936 = vrot.slane %v1934, 1
      %v1937 = vshll.u32 %v1493, 16
      %v1939 = vrot.slane %v1937, 2
      %v1940 = vor.u32 %v1936, %v1939
      %v1941 = vsel %vm1816, %v1931, %v1940
      %v1943 = vshrl.u32 %v1494, 16
      %v1945 = vrot.slane %v1943, 1
      %v1946 = vshll.u32 %v1494, 16
      %v1948 = vrot.slane %v1946, 2
      %v1949 = vor.u32 %v1945, %v1948
      %v1950 = vsel %vm1816, %v1940, %v1949
      %v1952 = vshrl.u32 %v1495, 16
      %v1954 = vrot.slane %v1952, 1
      %v1955 = vshll.u32 %v1495, 16
      %v1957 = vrot.slane %v1955, 2
      %v1958 = vor.u32 %v1954, %v1957
      %v1959 = vsel %vm1816, %v1949, %v1958
      %v1961 = vshrl.u32 %v1496, 16
      %v1963 = vrot.slane %v1961, 1
      %v1964 = vshll.u32 %v1496, 16
      %v1966 = vrot.slane %v1964, 2
      %v1967 = vor.u32 %v1963, %v1966
      %v1968 = vsel %vm1816, %v1958, %v1967
      %v1970 = vshrl.u32 %v1497, 16
      %v1972 = vrot.slane %v1970, 1
      %v1973 = vshll.u32 %v1497, 16
      %v1975 = vrot.slane %v1973, 2
      %v1976 = vor.u32 %v1972, %v1975
      %v1977 = vsel %vm1816, %v1967, %v1976
      %v1979 = vshrl.u32 %v1815, 16
      %v1981 = vrot.slane %v1979, 1
      %v1982 = vshll.u32 %v1815, 16
      %v1984 = vrot.slane %v1982, 2
      %v1985 = vor.u32 %v1981, %v1984
      %v1986 = vsel %vm1816, %v1976, %v1985
      %v1989 = vunpack.c.l.b16 %v1811
      %v1990 = vunpack.c.l.b16 %v1812
      %v1991 = vpack.c.b16 %v1990, %v1989
      %v1994 = vsel %vm597, %v1833, 0
      %v1997 = vsel %vm597, %v1842, 0
      %v2000 = vsel %vm597, %v1851, 0
      %v2003 = vsel %vm597, %v1860, 0
      %v2006 = vsel %vm597, %v1869, 0
      %v2009 = vsel %vm597, %v1878, 0
      %v2012 = vsel %vm597, %v1887, 0
      %v2015 = vsel %vm597, %v1896, 0
      %v2018 = vsel %vm597, %v1905, 0
      %v2021 = vsel %vm597, %v1914, 0
      %v2024 = vsel %vm597, %v1923, 0
      %v2027 = vsel %vm597, %v1932, 0
      %v2030 = vsel %vm597, %v1941, 0
      %v2033 = vsel %vm597, %v1950, 0
      %v2036 = vsel %vm597, %v1959, 0
      %v2039 = vsel %vm597, %v1968, 0
      %v2042 = vsel %vm597, %v1977, 0
      %v2045 = vsel %vm597, %v1986, 0
      %2047 = vmatprep.subr.bf16.mxu0 0
      %2048 = vmatpush1.bf16.msra.mxu0 %v1991
      %2049 = vmatprep.subr.bf16.mxu0 0
      %2050 = vmatpush1.bf16.msra.mxu0 0
      %2051 = vmatprep.subr.bf16.mxu0 0
      %2052 = vmatpush1.bf16.msra.mxu0 0
      %2053 = vmatprep.subr.bf16.mxu0 0
      %2054 = vmatpush1.bf16.msra.mxu0 0
      %2055 = vmatprep.subr.bf16.mxu0 0
      %2056 = vmatpush1.bf16.msra.mxu0 0
      %2057 = vmatprep.subr.bf16.mxu0 0
      %2058 = vmatpush1.bf16.msra.mxu0 0
      %2059 = vmatprep.subr.bf16.mxu0 0
      %2060 = vmatpush1.bf16.msra.mxu0 0
      %2061 = vmatprep.subr.bf16.mxu0 0
      %2062 = vmatpush1.bf16.msra.mxu0 0
      %2063 = vmatprep.subr.bf16.mxu0 0
      %2064 = vmatpush1.bf16.msra.mxu0 0
      %2065 = vmatprep.subr.bf16.mxu0 0
      %2066 = vmatpush1.bf16.msra.mxu0 0
      %2067 = vmatprep.subr.bf16.mxu0 0
      %2068 = vmatpush1.bf16.msra.mxu0 0
      %2069 = vmatprep.subr.bf16.mxu0 0
      %2070 = vmatpush1.bf16.msra.mxu0 0
      %2071 = vmatprep.subr.bf16.mxu0 0
      %2072 = vmatpush1.bf16.msra.mxu0 0
      %2073 = vmatprep.subr.bf16.mxu0 0
      %2074 = vmatpush1.bf16.msra.mxu0 0
      %2075 = vmatprep.subr.bf16.mxu0 0
      %2076 = vmatpush1.bf16.msra.mxu0 0
      %2077 = vmatprep.subr.bf16.mxu0 0
      %2078 = vmatpush1.bf16.msra.mxu0 0
      %2079 = vmatprep.mubr.bf16.mxu0 0
      %2080 = vmatmul.mubr.bf16.gmra.mrb[0].mxu0 %v1994
      %v2081 = vpop.f32.mrb[0].mxu0
      %v2082 = vadd.f32 0.0, %v2081
      %v2083 = vpop.f32.mrb[0].mxu0
      %v2084 = vpop.f32.mrb[0].mxu0
      %v2085 = vadd.f32 0.0, %v2084
      %v2086 = vpop.f32.mrb[0].mxu0
      %2087 = vmatprep.mubr.bf16.mxu0 0
      %2088 = vmatmul.mubr.bf16.gmra.mrb[0].mxu0 %v1997
      %v2089 = vpop.f32.mrb[0].mxu0
      %v2090 = vadd.f32 0.0, %v2089
      %v2091 = vpop.f32.mrb[0].mxu0
      %v2092 = vpop.f32.mrb[0].mxu0
      %v2093 = vadd.f32 0.0, %v2092
      %v2094 = vpop.f32.mrb[0].mxu0
      %2095 = vmatprep.mubr.bf16.mxu0 0
      %2096 = vmatmul.mubr.bf16.gmra.mrb[0].mxu0 %v2000
      %v2097 = vpop.f32.mrb[0].mxu0
      %v2098 = vadd.f32 0.0, %v2097
      %v2099 = vpop.f32.mrb[0].mxu0
      %v2100 = vpop.f32.mrb[0].mxu0
      %v2101 = vadd.f32 0.0, %v2100
      %v2102 = vpop.f32.mrb[0].mxu0
      %2103 = vmatprep.mubr.bf16.mxu0 0
      %2104 = vmatmul.mubr.bf16.gmra.mrb[0].mxu0 %v2003
      %v2105 = vpop.f32.mrb[0].mxu0
      %v2106 = vadd.f32 0.0, %v2105
      %v2107 = vpop.f32.mrb[0].mxu0
      %v2108 = vpop.f32.mrb[0].mxu0
      %v2109 = vadd.f32 0.0, %v2108
      %v2110 = vpop.f32.mrb[0].mxu0
      %2111 = vmatprep.mubr.bf16.mxu0 0
      %2112 = vmatmul.mubr.bf16.gmra.mrb[0].mxu0 %v2006
      %v2113 = vpop.f32.mrb[0].mxu0
      %v2114 = vadd.f32 0.0, %v2113
      %v2115 = vpop.f32.mrb[0].mxu0
      %v2116 = vpop.f32.mrb[0].mxu0
      %v2117 = vadd.f32 0.0, %v2116
      %v2118 = vpop.f32.mrb[0].mxu0
      %2119 = vmatprep.mubr.bf16.mxu0 0
      %2120 = vmatmul.mubr.bf16.gmra.mrb[0].mxu0 %v2009
      %v2121 = vpop.f32.mrb[0].mxu0
      %v2122 = vadd.f32 0.0, %v2121
      %v2123 = vpop.f32.mrb[0].mxu0
      %v2124 = vpop.f32.mrb[0].mxu0
      %v2125 = vadd.f32 0.0, %v2124
      %v2126 = vpop.f32.mrb[0].mxu0
      %2127 = vmatprep.mubr.bf16.mxu0 0
      %2128 = vmatmul.mubr.bf16.gmra.mrb[0].mxu0 %v2012
      %v2129 = vpop.f32.mrb[0].mxu0
      %v2130 = vadd.f32 0.0, %v2129
      %v2131 = vpop.f32.mrb[0].mxu0
      %v2132 = vpop.f32.mrb[0].mxu0
      %v2133 = vadd.f32 0.0, %v2132
      %v2134 = vpop.f32.mrb[0].mxu0
      %2135 = vmatprep.mubr.bf16.mxu0 0
      %2136 = vmatmul.mubr.bf16.gmra.mrb[0].mxu0 %v2015
      %v2137 = vpop.f32.mrb[0].mxu0
      %v2138 = vadd.f32 0.0, %v2137
      %v2139 = vpop.f32.mrb[0].mxu0
      %v2140 = vpop.f32.mrb[0].mxu0
      %v2141 = vadd.f32 0.0, %v2140
      %v2142 = vpop.f32.mrb[0].mxu0
      %2143 = vmatprep.mubr.bf16.mxu0 0
      %2144 = vmatmul.mubr.bf16.gmra.mrb[0].mxu0 %v2018
      %v2145 = vpop.f32.mrb[0].mxu0
      %v2146 = vadd.f32 0.0, %v2145
      %v2147 = vpop.f32.mrb[0].mxu0
      %v2148 = vpop.f32.mrb[0].mxu0
      %v2149 = vadd.f32 0.0, %v2148
      %v2150 = vpop.f32.mrb[0].mxu0
      %2151 = vmatprep.mubr.bf16.mxu0 0
      %2152 = vmatmul.mubr.bf16.gmra.mrb[0].mxu0 %v2021
      %v2153 = vpop.f32.mrb[0].mxu0
      %v2154 = vadd.f32 0.0, %v2153
      %v2155 = vpop.f32.mrb[0].mxu0
      %v2156 = vpop.f32.mrb[0].mxu0
      %v2157 = vadd.f32 0.0, %v2156
      %v2158 = vpop.f32.mrb[0].mxu0
      %2159 = vmatprep.mubr.bf16.mxu0 0
      %2160 = vmatmul.mubr.bf16.gmra.mrb[0].mxu0 %v2024
      %v2161 = vpop.f32.mrb[0].mxu0
      %v2162 = vadd.f32 0.0, %v2161
      %v2163 = vpop.f32.mrb[0].mxu0
      %v2164 = vpop.f32.mrb[0].mxu0
      %v2165 = vadd.f32 0.0, %v2164
      %v2166 = vpop.f32.mrb[0].mxu0
      %2167 = vmatprep.mubr.bf16.mxu0 0
      %2168 = vmatmul.mubr.bf16.gmra.mrb[0].mxu0 %v2027
      %v2169 = vpop.f32.mrb[0].mxu0
      %v2170 = vadd.f32 0.0, %v2169
      %v2171 = vpop.f32.mrb[0].mxu0
      %v2172 = vpop.f32.mrb[0].mxu0
      %v2173 = vadd.f32 0.0, %v2172
      %v2174 = vpop.f32.mrb[0].mxu0
      %2175 = vmatprep.mubr.bf16.mxu0 0
      %2176 = vmatmul.mubr.bf16.gmra.mrb[0].mxu0 %v2030
      %v2177 = vpop.f32.mrb[0].mxu0
      %v2178 = vadd.f32 0.0, %v2177
      %v2179 = vpop.f32.mrb[0].mxu0
      %v2180 = vpop.f32.mrb[0].mxu0
      %v2181 = vadd.f32 0.0, %v2180
      %v2182 = vpop.f32.mrb[0].mxu0
      %2183 = vmatprep.mubr.bf16.mxu0 0
      %2184 = vmatmul.mubr.bf16.gmra.mrb[0].mxu0 %v2033
      %v2185 = vpop.f32.mrb[0].mxu0
      %v2186 = vadd.f32 0.0, %v2185
      %v2187 = vpop.f32.mrb[0].mxu0
      %v2188 = vpop.f32.mrb[0].mxu0
      %v2189 = vadd.f32 0.0, %v2188
      %v2190 = vpop.f32.mrb[0].mxu0
      %2191 = vmatprep.mubr.bf16.mxu0 0
      %2192 = vmatmul.mubr.bf16.gmra.mrb[0].mxu0 %v2036
      %v2193 = vpop.f32.mrb[0].mxu0
      %v2194 = vadd.f32 0.0, %v2193
      %v2195 = vpop.f32.mrb[0].mxu0
      %v2196 = vpop.f32.mrb[0].mxu0
      %v2197 = vadd.f32 0.0, %v2196
      %v2198 = vpop.f32.mrb[0].mxu0
      %2199 = vmatprep.mubr.bf16.mxu0 0
      %2200 = vmatmul.mubr.bf16.gmra.mrb[0].mxu0 %v2039
      %v2201 = vpop.f32.mrb[0].mxu0
      %v2202 = vadd.f32 0.0, %v2201
      %v2203 = vpop.f32.mrb[0].mxu0
      %v2204 = vpop.f32.mrb[0].mxu0
      %v2205 = vadd.f32 0.0, %v2204
      %v2206 = vpop.f32.mrb[0].mxu0
      %2207 = vmatprep.mubr.bf16.mxu0 0
      %2208 = vmatmul.mubr.bf16.gmra.mrb[0].mxu0 %v2042
      %v2209 = vpop.f32.mrb[0].mxu0
      %v2210 = vadd.f32 0.0, %v2209
      %v2211 = vpop.f32.mrb[0].mxu0
      %v2212 = vpop.f32.mrb[0].mxu0
      %v2213 = vadd.f32 0.0, %v2212
      %v2214 = vpop.f32.mrb[0].mxu0
      %2215 = vmatprep.mubr.bf16.mxu0 0
      %2216 = vmatmul.mubr.bf16.gmra.mrb[0].mxu0 %v2045
      %v2217 = vpop.f32.mrb[0].mxu0
      %v2218 = vadd.f32 0.0, %v2217
      %v2219 = vpop.f32.mrb[0].mxu0
      %v2220 = vpop.f32.mrb[0].mxu0
      %v2221 = vadd.f32 0.0, %v2220
      %v2222 = vpop.f32.mrb[0].mxu0
      %2223 = vdwg.mxu0
      %v2224 = vadd.f32 %v1773, %v2082
      %v2225 = vadd.f32 %v1774, %v2085
      %v2226 = vadd.f32 %v1775, %v2090
      %v2227 = vadd.f32 %v1776, %v2093
      %v2228 = vadd.f32 %v1777, %v2098
      %v2229 = vadd.f32 %v1778, %v2101
      %v2230 = vadd.f32 %v1779, %v2106
      %v2231 = vadd.f32 %v1780, %v2109
      %v2232 = vadd.f32 %v1781, %v2114
      %v2233 = vadd.f32 %v1782, %v2117
      %v2234 = vadd.f32 %v1783, %v2122
      %v2235 = vadd.f32 %v1784, %v2125
      %v2236 = vadd.f32 %v1785, %v2130
      %v2237 = vadd.f32 %v1786, %v2133
      %v2238 = vadd.f32 %v1787, %v2138
      %v2239 = vadd.f32 %v1788, %v2141
      %v2240 = vadd.f32 %v1789, %v2146
      %v2241 = vadd.f32 %v1790, %v2149
      %v2242 = vadd.f32 %v1791, %v2154
      %v2243 = vadd.f32 %v1792, %v2157
      %v2244 = vadd.f32 %v1793, %v2162
      %v2245 = vadd.f32 %v1794, %v2165
      %v2246 = vadd.f32 %v1795, %v2170
      %v2247 = vadd.f32 %v1796, %v2173
      %v2248 = vadd.f32 %v1797, %v2178
      %v2249 = vadd.f32 %v1798, %v2181
      %v2250 = vadd.f32 %v1799, %v2186
      %v2251 = vadd.f32 %v1800, %v2189
      %v2252 = vadd.f32 %v1801, %v2194
      %v2253 = vadd.f32 %v1802, %v2197
      %v2254 = vadd.f32 %v1803, %v2202
      %v2255 = vadd.f32 %v1804, %v2205
      %v2256 = vadd.f32 %v1805, %v2210
      %v2257 = vadd.f32 %v1806, %v2213
      %v2258 = vadd.f32 %v1807, %v2218
      %v2259 = vadd.f32 %v1808, %v2221
      %v2260 = vld [vmem:[%s300 + $0x8] sm:$0xc]
      %s2261 = scalar_lea.vmem %s1, 40
      %v2262 = vld [vmem:[%s2261] sm:$0xf]
      %v2263 = vld [vmem:[%s2261 + $0x4] sm:$0xf]
      %v2265 = vunpack.c.l.b16 %v2260
      %v2266 = vpack.c.b16 %v1444, %v2265
      %vm2267 = vcmask 1045504
      %v2268 = vrot.slane %v2266, 2
      %v2269 = vrot.slane %v1481, 2
      %v2270 = vsel %vm2267, %v2268, %v2269
      %v2271 = vrot.slane %v1482, 2
      %v2272 = vsel %vm2267, %v2269, %v2271
      %v2273 = vrot.slane %v1483, 2
      %v2274 = vsel %vm2267, %v2271, %v2273
      %v2275 = vrot.slane %v1484, 2
      %v2276 = vsel %vm2267, %v2273, %v2275
      %v2277 = vrot.slane %v1485, 2
      %v2278 = vsel %vm2267, %v2275, %v2277
      %v2279 = vrot.slane %v1486, 2
      %v2280 = vsel %vm2267, %v2277, %v2279
      %v2281 = vrot.slane %v1487, 2
      %v2282 = vsel %vm2267, %v2279, %v2281
      %v2283 = vrot.slane %v1488, 2
      %v2284 = vsel %vm2267, %v2281, %v2283
      %v2285 = vrot.slane %v1489, 2
      %v2286 = vsel %vm2267, %v2283, %v2285
      %v2287 = vrot.slane %v1490, 2
      %v2288 = vsel %vm2267, %v2285, %v2287
      %v2289 = vrot.slane %v1491, 2
      %v2290 = vsel %vm2267, %v2287, %v2289
      %v2291 = vrot.slane %v1492, 2
      %v2292 = vsel %vm2267, %v2289, %v2291
      %v2293 = vrot.slane %v1493, 2
      %v2294 = vsel %vm2267, %v2291, %v2293
      %v2295 = vrot.slane %v1494, 2
      %v2296 = vsel %vm2267, %v2293, %v2295
      %v2297 = vrot.slane %v1495, 2
      %v2298 = vsel %vm2267, %v2295, %v2297
      %v2299 = vrot.slane %v1496, 2
      %v2300 = vsel %vm2267, %v2297, %v2299
      %v2301 = vrot.slane %v1497, 2
      %v2302 = vsel %vm2267, %v2299, %v2301
      %v2303 = vrot.slane %v1815, 2
      %v2304 = vsel %vm2267, %v2301, %v2303
      %v2307 = vunpack.c.l.b16 %v2262
      %v2308 = vunpack.c.l.b16 %v2263
      %v2309 = vpack.c.b16 %v2308, %v2307
      %v2312 = vsel %vm597, %v2270, 0
      %v2315 = vsel %vm597, %v2272, 0
      %v2318 = vsel %vm597, %v2274, 0
      %v2321 = vsel %vm597, %v2276, 0
      %v2324 = vsel %vm597, %v2278, 0
      %v2327 = vsel %vm597, %v2280, 0
      %v2330 = vsel %vm597, %v2282, 0
      %v2333 = vsel %vm597, %v2284, 0
      %v2336 = vsel %vm597, %v2286, 0
      %v2339 = vsel %vm597, %v2288, 0
      %v2342 = vsel %vm597, %v2290, 0
      %v2345 = vsel %vm597, %v2292, 0
      %v2348 = vsel %vm597, %v2294, 0
      %v2351 = vsel %vm597, %v2296, 0
      %v2354 = vsel %vm597, %v2298, 0
      %v2357 = vsel %vm597, %v2300, 0
      %v2360 = vsel %vm597, %v2302, 0
      %v2363 = vsel %vm597, %v2304, 0
      %2365 = vmatprep.subr.bf16.mxu0 0
      %2366 = vmatpush1.bf16.msra.mxu0 %v2309
      %2367 = vmatprep.subr.bf16.mxu0 0
      %2368 = vmatpush1.bf16.msra.mxu0 0
      %2369 = vmatprep.subr.bf16.mxu0 0
      %2370 = vmatpush1.bf16.msra.mxu0 0
      %2371 = vmatprep.subr.bf16.mxu0 0
      %2372 = vmatpush1.bf16.msra.mxu0 0
      %2373 = vmatprep.subr.bf16.mxu0 0
      %2374 = vmatpush1.bf16.msra.mxu0 0
      %2375 = vmatprep.subr.bf16.mxu0 0
      %2376 = vmatpush1.bf16.msra.mxu0 0
      %2377 = vmatprep.subr.bf16.mxu0 0
      %2378 = vmatpush1.bf16.msra.mxu0 0
      %2379 = vmatprep.subr.bf16.mxu0 0
      %2380 = vmatpush1.bf16.msra.mxu0 0
      %2381 = vmatprep.subr.bf16.mxu0 0
      %2382 = vmatpush1.bf16.msra.mxu0 0
      %2383 = vmatprep.subr.bf16.mxu0 0
      %2384 = vmatpush1.bf16.msra.mxu0 0
      %2385 = vmatprep.subr.bf16.mxu0 0
      %2386 = vmatpush1.bf16.msra.mxu0 0
      %2387 = vmatprep.subr.bf16.mxu0 0
      %2388 = vmatpush1.bf16.msra.mxu0 0
      %2389 = vmatprep.subr.bf16.mxu0 0
      %2390 = vmatpush1.bf16.msra.mxu0 0
      %2391 = vmatprep.subr.bf16.mxu0 0
      %2392 = vmatpush1.bf16.msra.mxu0 0
      %2393 = vmatprep.subr.bf16.mxu0 0
      %2394 = vmatpush1.bf16.msra.mxu0 0
      %2395 = vmatprep.subr.bf16.mxu0 0
      %2396 = vmatpush1.bf16.msra.mxu0 0
      %2397 = vmatprep.mubr.bf16.mxu0 0
      %2398 = vmatmul.mubr.bf16.gmra.mrb[0].mxu0 %v2312
      %v2399 = vpop.f32.mrb[0].mxu0
      %v2400 = vadd.f32 0.0, %v2399
      %v2401 = vpop.f32.mrb[0].mxu0
      %v2402 = vpop.f32.mrb[0].mxu0
      %v2403 = vadd.f32 0.0, %v2402
      %v2404 = vpop.f32.mrb[0].mxu0
      %2405 = vmatprep.mubr.bf16.mxu0 0
      %2406 = vmatmul.mubr.bf16.gmra.mrb[0].mxu0 %v2315
      %v2407 = vpop.f32.mrb[0].mxu0
      %v2408 = vadd.f32 0.0, %v2407
      %v2409 = vpop.f32.mrb[0].mxu0
      %v2410 = vpop.f32.mrb[0].mxu0
      %v2411 = vadd.f32 0.0, %v2410
      %v2412 = vpop.f32.mrb[0].mxu0
      %2413 = vmatprep.mubr.bf16.mxu0 0
      %2414 = vmatmul.mubr.bf16.gmra.mrb[0].mxu0 %v2318
      %v2415 = vpop.f32.mrb[0].mxu0
      %v2416 = vadd.f32 0.0, %v2415
      %v2417 = vpop.f32.mrb[0].mxu0
      %v2418 = vpop.f32.mrb[0].mxu0
      %v2419 = vadd.f32 0.0, %v2418
      %v2420 = vpop.f32.mrb[0].mxu0
      %2421 = vmatprep.mubr.bf16.mxu0 0
      %2422 = vmatmul.mubr.bf16.gmra.mrb[0].mxu0 %v2321
      %v2423 = vpop.f32.mrb[0].mxu0
      %v2424 = vadd.f32 0.0, %v2423
      %v2425 = vpop.f32.mrb[0].mxu0
      %v2426 = vpop.f32.mrb[0].mxu0
      %v2427 = vadd.f32 0.0, %v2426
      %v2428 = vpop.f32.mrb[0].mxu0
      %2429 = vmatprep.mubr.bf16.mxu0 0
      %2430 = vmatmul.mubr.bf16.gmra.mrb[0].mxu0 %v2324
      %v2431 = vpop.f32.mrb[0].mxu0
      %v2432 = vadd.f32 0.0, %v2431
      %v2433 = vpop.f32.mrb[0].mxu0
      %v2434 = vpop.f32.mrb[0].mxu0
      %v2435 = vadd.f32 0.0, %v2434
      %v2436 = vpop.f32.mrb[0].mxu0
      %2437 = vmatprep.mubr.bf16.mxu0 0
      %2438 = vmatmul.mubr.bf16.gmra.mrb[0].mxu0 %v2327
      %v2439 = vpop.f32.mrb[0].mxu0
      %v2440 = vadd.f32 0.0, %v2439
      %v2441 = vpop.f32.mrb[0].mxu0
      %v2442 = vpop.f32.mrb[0].mxu0
      %v2443 = vadd.f32 0.0, %v2442
      %v2444 = vpop.f32.mrb[0].mxu0
      %2445 = vmatprep.mubr.bf16.mxu0 0
      %2446 = vmatmul.mubr.bf16.gmra.mrb[0].mxu0 %v2330
      %v2447 = vpop.f32.mrb[0].mxu0
      %v2448 = vadd.f32 0.0, %v2447
      %v2449 = vpop.f32.mrb[0].mxu0
      %v2450 = vpop.f32.mrb[0].mxu0
      %v2451 = vadd.f32 0.0, %v2450
      %v2452 = vpop.f32.mrb[0].mxu0
      %2453 = vmatprep.mubr.bf16.mxu0 0
      %2454 = vmatmul.mubr.bf16.gmra.mrb[0].mxu0 %v2333
      %v2455 = vpop.f32.mrb[0].mxu0
      %v2456 = vadd.f32 0.0, %v2455
      %v2457 = vpop.f32.mrb[0].mxu0
      %v2458 = vpop.f32.mrb[0].mxu0
      %v2459 = vadd.f32 0.0, %v2458
      %v2460 = vpop.f32.mrb[0].mxu0
      %2461 = vmatprep.mubr.bf16.mxu0 0
      %2462 = vmatmul.mubr.bf16.gmra.mrb[0].mxu0 %v2336
      %v2463 = vpop.f32.mrb[0].mxu0
      %v2464 = vadd.f32 0.0, %v2463
      %v2465 = vpop.f32.mrb[0].mxu0
      %v2466 = vpop.f32.mrb[0].mxu0
      %v2467 = vadd.f32 0.0, %v2466
      %v2468 = vpop.f32.mrb[0].mxu0
      %2469 = vmatprep.mubr.bf16.mxu0 0
      %2470 = vmatmul.mubr.bf16.gmra.mrb[0].mxu0 %v2339
      %v2471 = vpop.f32.mrb[0].mxu0
      %v2472 = vadd.f32 0.0, %v2471
      %v2473 = vpop.f32.mrb[0].mxu0
      %v2474 = vpop.f32.mrb[0].mxu0
      %v2475 = vadd.f32 0.0, %v2474
      %v2476 = vpop.f32.mrb[0].mxu0
      %2477 = vmatprep.mubr.bf16.mxu0 0
      %2478 = vmatmul.mubr.bf16.gmra.mrb[0].mxu0 %v2342
      %v2479 = vpop.f32.mrb[0].mxu0
      %v2480 = vadd.f32 0.0, %v2479
      %v2481 = vpop.f32.mrb[0].mxu0
      %v2482 = vpop.f32.mrb[0].mxu0
      %v2483 = vadd.f32 0.0, %v2482
      %v2484 = vpop.f32.mrb[0].mxu0
      %2485 = vmatprep.mubr.bf16.mxu0 0
      %2486 = vmatmul.mubr.bf16.gmra.mrb[0].mxu0 %v2345
      %v2487 = vpop.f32.mrb[0].mxu0
      %v2488 = vadd.f32 0.0, %v2487
      %v2489 = vpop.f32.mrb[0].mxu0
      %v2490 = vpop.f32.mrb[0].mxu0
      %v2491 = vadd.f32 0.0, %v2490
      %v2492 = vpop.f32.mrb[0].mxu0
      %2493 = vmatprep.mubr.bf16.mxu0 0
      %2494 = vmatmul.mubr.bf16.gmra.mrb[0].mxu0 %v2348
      %v2495 = vpop.f32.mrb[0].mxu0
      %v2496 = vadd.f32 0.0, %v2495
      %v2497 = vpop.f32.mrb[0].mxu0
      %v2498 = vpop.f32.mrb[0].mxu0
      %v2499 = vadd.f32 0.0, %v2498
      %v2500 = vpop.f32.mrb[0].mxu0
      %2501 = vmatprep.mubr.bf16.mxu0 0
      %2502 = vmatmul.mubr.bf16.gmra.mrb[0].mxu0 %v2351
      %v2503 = vpop.f32.mrb[0].mxu0
      %v2504 = vadd.f32 0.0, %v2503
      %v2505 = vpop.f32.mrb[0].mxu0
      %v2506 = vpop.f32.mrb[0].mxu0
      %v2507 = vadd.f32 0.0, %v2506
      %v2508 = vpop.f32.mrb[0].mxu0
      %2509 = vmatprep.mubr.bf16.mxu0 0
      %2510 = vmatmul.mubr.bf16.gmra.mrb[0].mxu0 %v2354
      %v2511 = vpop.f32.mrb[0].mxu0
      %v2512 = vadd.f32 0.0, %v2511
      %v2513 = vpop.f32.mrb[0].mxu0
      %v2514 = vpop.f32.mrb[0].mxu0
      %v2515 = vadd.f32 0.0, %v2514
      %v2516 = vpop.f32.mrb[0].mxu0
      %2517 = vmatprep.mubr.bf16.mxu0 0
      %2518 = vmatmul.mubr.bf16.gmra.mrb[0].mxu0 %v2357
      %v2519 = vpop.f32.mrb[0].mxu0
      %v2520 = vadd.f32 0.0, %v2519
      %v2521 = vpop.f32.mrb[0].mxu0
      %v2522 = vpop.f32.mrb[0].mxu0
      %v2523 = vadd.f32 0.0, %v2522
      %v2524 = vpop.f32.mrb[0].mxu0
      %2525 = vmatprep.mubr.bf16.mxu0 0
      %2526 = vmatmul.mubr.bf16.gmra.mrb[0].mxu0 %v2360
      %v2527 = vpop.f32.mrb[0].mxu0
      %v2528 = vadd.f32 0.0, %v2527
      %v2529 = vpop.f32.mrb[0].mxu0
      %v2530 = vpop.f32.mrb[0].mxu0
      %v2531 = vadd.f32 0.0, %v2530
      %v2532 = vpop.f32.mrb[0].mxu0
      %2533 = vmatprep.mubr.bf16.mxu0 0
      %2534 = vmatmul.mubr.bf16.gmra.mrb[0].mxu0 %v2363
      %v2535 = vpop.f32.mrb[0].mxu0
      %v2536 = vadd.f32 0.0, %v2535
      %v2537 = vpop.f32.mrb[0].mxu0
      %v2538 = vpop.f32.mrb[0].mxu0
      %v2539 = vadd.f32 0.0, %v2538
      %v2540 = vpop.f32.mrb[0].mxu0
      %2541 = vdwg.mxu0
      %v2542 = vadd.f32 %v2224, %v2400
      %v2543 = vadd.f32 %v2225, %v2403
      %v2544 = vadd.f32 %v2226, %v2408
      %v2545 = vadd.f32 %v2227, %v2411
      %v2546 = vadd.f32 %v2228, %v2416
      %v2547 = vadd.f32 %v2229, %v2419
      %v2548 = vadd.f32 %v2230, %v2424
      %v2549 = vadd.f32 %v2231, %v2427
      %v2550 = vadd.f32 %v2232, %v2432
      %v2551 = vadd.f32 %v2233, %v2435
      %v2552 = vadd.f32 %v2234, %v2440
      %v2553 = vadd.f32 %v2235, %v2443
      %v2554 = vadd.f32 %v2236, %v2448
      %v2555 = vadd.f32 %v2237, %v2451
      %v2556 = vadd.f32 %v2238, %v2456
      %v2557 = vadd.f32 %v2239, %v2459
      %v2558 = vadd.f32 %v2240, %v2464
      %v2559 = vadd.f32 %v2241, %v2467
      %v2560 = vadd.f32 %v2242, %v2472
      %v2561 = vadd.f32 %v2243, %v2475
      %v2562 = vadd.f32 %v2244, %v2480
      %v2563 = vadd.f32 %v2245, %v2483
      %v2564 = vadd.f32 %v2246, %v2488
      %v2565 = vadd.f32 %v2247, %v2491
      %v2566 = vadd.f32 %v2248, %v2496
      %v2567 = vadd.f32 %v2249, %v2499
      %v2568 = vadd.f32 %v2250, %v2504
      %v2569 = vadd.f32 %v2251, %v2507
      %v2570 = vadd.f32 %v2252, %v2512
      %v2571 = vadd.f32 %v2253, %v2515
      %v2572 = vadd.f32 %v2254, %v2520
      %v2573 = vadd.f32 %v2255, %v2523
      %v2574 = vadd.f32 %v2256, %v2528
      %v2575 = vadd.f32 %v2257, %v2531
      %v2576 = vadd.f32 %v2258, %v2536
      %v2577 = vadd.f32 %v2259, %v2539
      %v2578 = vld [vmem:[%s300 + $0x10] sm:$0xc]
      %v2579 = vld [vmem:[%s300 + $0x14] sm:$0xf]
      %v2580 = vld [vmem:[%s300 + $0x18] sm:$0xf]
      %v2581 = vld [vmem:[%s300 + $0x1c] sm:$0xf]
      %v2582 = vld [vmem:[%s300 + $0x20] sm:$0xf]
      %v2583 = vld [vmem:[%s300 + $0x24] sm:$0xf]
      %v2584 = vld [vmem:[%s300 + $0x28] sm:$0xf]
      %v2585 = vld [vmem:[%s300 + $0x2c] sm:$0xf]
      %v2586 = vld [vmem:[%s300 + $0x30] sm:$0xf]
      %v2587 = vld [vmem:[%s300 + $0x34] sm:$0xf]
      %v2588 = vld [vmem:[%s300 + $0x38] sm:$0xf]
      %v2589 = vld [vmem:[%s300 + $0x3c] sm:$0xf]
      %v2590 = vld [vmem:[%s300 + $0x40] sm:$0xf]
      %v2591 = vld [vmem:[%s300 + $0x44] sm:$0xf]
      %v2592 = vld [vmem:[%s300 + $0x48] sm:$0xf]
      %v2593 = vld [vmem:[%s300 + $0x4c] sm:$0xf]
      %v2594 = vld [vmem:[%s300 + $0x50] sm:$0xf]
      %v2595 = vld [vmem:[%s300 + $0x54] sm:$0xf]
      %v2596 = vld [vmem:[%s300 + $0x58] sm:$0xf]
      %v2597 = vld [vmem:[%s300 + $0x5c] sm:$0xf]
      %v2598 = vld [vmem:[%s300 + $0x60] sm:$0xf]
      %v2599 = vld [vmem:[%s300 + $0x64] sm:$0xf]
      %v2600 = vld [vmem:[%s300 + $0x68] sm:$0xf]
      %v2601 = vld [vmem:[%s300 + $0x6c] sm:$0xf]
      %v2602 = vld [vmem:[%s300 + $0x70] sm:$0xf]
      %v2603 = vld [vmem:[%s300 + $0x74] sm:$0xf]
      %v2604 = vld [vmem:[%s300 + $0x78] sm:$0xf]
      %v2605 = vld [vmem:[%s300 + $0x7c] sm:$0xf]
      %v2606 = vld [vmem:[%s300 + $0x80] sm:$0xf]
      %v2607 = vld [vmem:[%s300 + $0x84] sm:$0xf]
      %v2608 = vld [vmem:[%s300 + $0x88] sm:$0xf]
      %v2609 = vld [vmem:[%s300 + $0x8c] sm:$0xf]
      %v2610 = vld [vmem:[%s300 + $0x90] sm:$0xf]
      %v2611 = vld [vmem:[%s300 + $0x94] sm:$0xf]
      %v2612 = vld [vmem:[%s300 + $0x98] sm:$0xf]
      %v2613 = vld [vmem:[%s300 + $0x9c] sm:$0xf]
      %v2614 = vld [vmem:[%s300 + $0xa0] sm:$0x3]
      %s2615 = scalar_lea.vmem %s1, 48
      %v2616 = vld [vmem:[%s2615] sm:$0xf]
      %v2617 = vld [vmem:[%s2615 + $0x4] sm:$0xf]
      %v2655 = vunpack.c.l.b16 %v2578
      %v2656 = vunpack.c.l.b16 %v2579
      %v2657 = vunpack.c.l.b16 %v2580
      %v2658 = vunpack.c.l.b16 %v2581
      %v2659 = vunpack.c.l.b16 %v2582
      %v2660 = vunpack.c.l.b16 %v2583
      %v2661 = vunpack.c.l.b16 %v2584
      %v2662 = vunpack.c.l.b16 %v2585
      %v2663 = vunpack.c.l.b16 %v2586
      %v2664 = vunpack.c.l.b16 %v2587
      %v2665 = vunpack.c.l.b16 %v2588
      %v2666 = vunpack.c.l.b16 %v2589
      %v2667 = vunpack.c.l.b16 %v2590
      %v2668 = vunpack.c.l.b16 %v2591
      %v2669 = vunpack.c.l.b16 %v2592
      %v2670 = vunpack.c.l.b16 %v2593
      %v2671 = vunpack.c.l.b16 %v2594
      %v2672 = vunpack.c.l.b16 %v2595
      %v2673 = vunpack.c.l.b16 %v2596
      %v2674 = vunpack.c.l.b16 %v2597
      %v2675 = vunpack.c.l.b16 %v2598
      %v2676 = vunpack.c.l.b16 %v2599
      %v2677 = vunpack.c.l.b16 %v2600
      %v2678 = vunpack.c.l.b16 %v2601
      %v2679 = vunpack.c.l.b16 %v2602
      %v2680 = vunpack.c.l.b16 %v2603
      %v2681 = vunpack.c.l.b16 %v2604
      %v2682 = vunpack.c.l.b16 %v2605
      %v2683 = vunpack.c.l.b16 %v2606
      %v2684 = vunpack.c.l.b16 %v2607
      %v2685 = vunpack.c.l.b16 %v2608
      %v2686 = vunpack.c.l.b16 %v2609
      %v2687 = vunpack.c.l.b16 %v2610
      %v2688 = vunpack.c.l.b16 %v2611
      %v2689 = vunpack.c.l.b16 %v2612
      %v2690 = vunpack.c.l.b16 %v2613
      %v2691 = vunpack.c.l.b16 %v2614
      %v2692 = vpack.c.b16 %v2656, %v2655
      %v2693 = vpack.c.b16 %v2658, %v2657
      %v2694 = vpack.c.b16 %v2660, %v2659
      %v2695 = vpack.c.b16 %v2662, %v2661
      %v2696 = vpack.c.b16 %v2664, %v2663
      %v2697 = vpack.c.b16 %v2666, %v2665
      %v2698 = vpack.c.b16 %v2668, %v2667
      %v2699 = vpack.c.b16 %v2670, %v2669
      %v2700 = vpack.c.b16 %v2672, %v2671
      %v2701 = vpack.c.b16 %v2674, %v2673
      %v2702 = vpack.c.b16 %v2676, %v2675
      %v2703 = vpack.c.b16 %v2678, %v2677
      %v2704 = vpack.c.b16 %v2680, %v2679
      %v2705 = vpack.c.b16 %v2682, %v2681
      %v2706 = vpack.c.b16 %v2684, %v2683
      %v2707 = vpack.c.b16 %v2686, %v2685
      %v2708 = vpack.c.b16 %v2688, %v2687
      %v2709 = vpack.c.b16 %v2690, %v2689
      %v2710 = vpack.c.b16 %v2691, %v2691
      %v2711 = vrot.slane %v2692, 2
      %v2712 = vrot.slane %v2693, 2
      %v2713 = vsel %vm2267, %v2711, %v2712
      %v2714 = vrot.slane %v2694, 2
      %v2715 = vsel %vm2267, %v2712, %v2714
      %v2716 = vrot.slane %v2695, 2
      %v2717 = vsel %vm2267, %v2714, %v2716
      %v2718 = vrot.slane %v2696, 2
      %v2719 = vsel %vm2267, %v2716, %v2718
      %v2720 = vrot.slane %v2697, 2
      %v2721 = vsel %vm2267, %v2718, %v2720
      %v2722 = vrot.slane %v2698, 2
      %v2723 = vsel %vm2267, %v2720, %v2722
      %v2724 = vrot.slane %v2699, 2
      %v2725 = vsel %vm2267, %v2722, %v2724
      %v2726 = vrot.slane %v2700, 2
      %v2727 = vsel %vm2267, %v2724, %v2726
      %v2728 = vrot.slane %v2701, 2
      %v2729 = vsel %vm2267, %v2726, %v2728
      %v2730 = vrot.slane %v2702, 2
      %v2731 = vsel %vm2267, %v2728, %v2730
      %v2732 = vrot.slane %v2703, 2
      %v2733 = vsel %vm2267, %v2730, %v2732
      %v2734 = vrot.slane %v2704, 2
      %v2735 = vsel %vm2267, %v2732, %v2734
      %v2736 = vrot.slane %v2705, 2
      %v2737 = vsel %vm2267, %v2734, %v2736
      %v2738 = vrot.slane %v2706, 2
      %v2739 = vsel %vm2267, %v2736, %v2738
      %v2740 = vrot.slane %v2707, 2
      %v2741 = vsel %vm2267, %v2738, %v2740
      %v2742 = vrot.slane %v2708, 2
      %v2743 = vsel %vm2267, %v2740, %v2742
      %v2744 = vrot.slane %v2709, 2
      %v2745 = vsel %vm2267, %v2742, %v2744
      %v2746 = vrot.slane %v2710, 2
      %v2747 = vsel %vm2267, %v2744, %v2746
      %v2750 = vunpack.c.l.b16 %v2616
      %v2751 = vunpack.c.l.b16 %v2617
      %v2752 = vpack.c.b16 %v2751, %v2750
      %v2755 = vsel %vm597, %v2713, 0
      %v2758 = vsel %vm597, %v2715, 0
      %v2761 = vsel %vm597, %v2717, 0
      %v2764 = vsel %vm597, %v2719, 0
      %v2767 = vsel %vm597, %v2721, 0
      %v2770 = vsel %vm597, %v2723, 0
      %v2773 = vsel %vm597, %v2725, 0
      %v2776 = vsel %vm597, %v2727, 0
      %v2779 = vsel %vm597, %v2729, 0
      %v2782 = vsel %vm597, %v2731, 0
      %v2785 = vsel %vm597, %v2733, 0
      %v2788 = vsel %vm597, %v2735, 0
      %v2791 = vsel %vm597, %v2737, 0
      %v2794 = vsel %vm597, %v2739, 0
      %v2797 = vsel %vm597, %v2741, 0
      %v2800 = vsel %vm597, %v2743, 0
      %v2803 = vsel %vm597, %v2745, 0
      %v2806 = vsel %vm597, %v2747, 0
      %2808 = vmatprep.subr.bf16.mxu0 0
      %2809 = vmatpush1.bf16.msra.mxu0 %v2752
      %2810 = vmatprep.subr.bf16.mxu0 0
      %2811 = vmatpush1.bf16.msra.mxu0 0
      %2812 = vmatprep.subr.bf16.mxu0 0
      %2813 = vmatpush1.bf16.msra.mxu0 0
      %2814 = vmatprep.subr.bf16.mxu0 0
      %2815 = vmatpush1.bf16.msra.mxu0 0
      %2816 = vmatprep.subr.bf16.mxu0 0
      %2817 = vmatpush1.bf16.msra.mxu0 0
      %2818 = vmatprep.subr.bf16.mxu0 0
      %2819 = vmatpush1.bf16.msra.mxu0 0
      %2820 = vmatprep.subr.bf16.mxu0 0
      %2821 = vmatpush1.bf16.msra.mxu0 0
      %2822 = vmatprep.subr.bf16.mxu0 0
      %2823 = vmatpush1.bf16.msra.mxu0 0
      %2824 = vmatprep.subr.bf16.mxu0 0
      %2825 = vmatpush1.bf16.msra.mxu0 0
      %2826 = vmatprep.subr.bf16.mxu0 0
      %2827 = vmatpush1.bf16.msra.mxu0 0
      %2828 = vmatprep.subr.bf16.mxu0 0
      %2829 = vmatpush1.bf16.msra.mxu0 0
      %2830 = vmatprep.subr.bf16.mxu0 0
      %2831 = vmatpush1.bf16.msra.mxu0 0
      %2832 = vmatprep.subr.bf16.mxu0 0
      %2833 = vmatpush1.bf16.msra.mxu0 0
      %2834 = vmatprep.subr.bf16.mxu0 0
      %2835 = vmatpush1.bf16.msra.mxu0 0
      %2836 = vmatprep.subr.bf16.mxu0 0
      %2837 = vmatpush1.bf16.msra.mxu0 0
      %2838 = vmatprep.subr.bf16.mxu0 0
      %2839 = vmatpush1.bf16.msra.mxu0 0
      %2840 = vmatprep.mubr.bf16.mxu0 0
      %2841 = vmatmul.mubr.bf16.gmra.mrb[0].mxu0 %v2755
      %v2842 = vpop.f32.mrb[0].mxu0
      %v2843 = vadd.f32 0.0, %v2842
      %v2844 = vpop.f32.mrb[0].mxu0
      %v2845 = vpop.f32.mrb[0].mxu0
      %v2846 = vadd.f32 0.0, %v2845
      %v2847 = vpop.f32.mrb[0].mxu0
      %2848 = vmatprep.mubr.bf16.mxu0 0
      %2849 = vmatmul.mubr.bf16.gmra.mrb[0].mxu0 %v2758
      %v2850 = vpop.f32.mrb[0].mxu0
      %v2851 = vadd.f32 0.0, %v2850
      %v2852 = vpop.f32.mrb[0].mxu0
      %v2853 = vpop.f32.mrb[0].mxu0
      %v2854 = vadd.f32 0.0, %v2853
      %v2855 = vpop.f32.mrb[0].mxu0
      %2856 = vmatprep.mubr.bf16.mxu0 0
      %2857 = vmatmul.mubr.bf16.gmra.mrb[0].mxu0 %v2761
      %v2858 = vpop.f32.mrb[0].mxu0
      %v2859 = vadd.f32 0.0, %v2858
      %v2860 = vpop.f32.mrb[0].mxu0
      %v2861 = vpop.f32.mrb[0].mxu0
      %v2862 = vadd.f32 0.0, %v2861
      %v2863 = vpop.f32.mrb[0].mxu0
      %2864 = vmatprep.mubr.bf16.mxu0 0
      %2865 = vmatmul.mubr.bf16.gmra.mrb[0].mxu0 %v2764
      %v2866 = vpop.f32.mrb[0].mxu0
      %v2867 = vadd.f32 0.0, %v2866
      %v2868 = vpop.f32.mrb[0].mxu0
      %v2869 = vpop.f32.mrb[0].mxu0
      %v2870 = vadd.f32 0.0, %v2869
      %v2871 = vpop.f32.mrb[0].mxu0
      %2872 = vmatprep.mubr.bf16.mxu0 0
      %2873 = vmatmul.mubr.bf16.gmra.mrb[0].mxu0 %v2767
      %v2874 = vpop.f32.mrb[0].mxu0
      %v2875 = vadd.f32 0.0, %v2874
      %v2876 = vpop.f32.mrb[0].mxu0
      %v2877 = vpop.f32.mrb[0].mxu0
      %v2878 = vadd.f32 0.0, %v2877
      %v2879 = vpop.f32.mrb[0].mxu0
      %2880 = vmatprep.mubr.bf16.mxu0 0
      %2881 = vmatmul.mubr.bf16.gmra.mrb[0].mxu0 %v2770
      %v2882 = vpop.f32.mrb[0].mxu0
      %v2883 = vadd.f32 0.0, %v2882
      %v2884 = vpop.f32.mrb[0].mxu0
      %v2885 = vpop.f32.mrb[0].mxu0
      %v2886 = vadd.f32 0.0, %v2885
      %v2887 = vpop.f32.mrb[0].mxu0
      %2888 = vmatprep.mubr.bf16.mxu0 0
      %2889 = vmatmul.mubr.bf16.gmra.mrb[0].mxu0 %v2773
      %v2890 = vpop.f32.mrb[0].mxu0
      %v2891 = vadd.f32 0.0, %v2890
      %v2892 = vpop.f32.mrb[0].mxu0
      %v2893 = vpop.f32.mrb[0].mxu0
      %v2894 = vadd.f32 0.0, %v2893
      %v2895 = vpop.f32.mrb[0].mxu0
      %2896 = vmatprep.mubr.bf16.mxu0 0
      %2897 = vmatmul.mubr.bf16.gmra.mrb[0].mxu0 %v2776
      %v2898 = vpop.f32.mrb[0].mxu0
      %v2899 = vadd.f32 0.0, %v2898
      %v2900 = vpop.f32.mrb[0].mxu0
      %v2901 = vpop.f32.mrb[0].mxu0
      %v2902 = vadd.f32 0.0, %v2901
      %v2903 = vpop.f32.mrb[0].mxu0
      %2904 = vmatprep.mubr.bf16.mxu0 0
      %2905 = vmatmul.mubr.bf16.gmra.mrb[0].mxu0 %v2779
      %v2906 = vpop.f32.mrb[0].mxu0
      %v2907 = vadd.f32 0.0, %v2906
      %v2908 = vpop.f32.mrb[0].mxu0
      %v2909 = vpop.f32.mrb[0].mxu0
      %v2910 = vadd.f32 0.0, %v2909
      %v2911 = vpop.f32.mrb[0].mxu0
      %2912 = vmatprep.mubr.bf16.mxu0 0
      %2913 = vmatmul.mubr.bf16.gmra.mrb[0].mxu0 %v2782
      %v2914 = vpop.f32.mrb[0].mxu0
      %v2915 = vadd.f32 0.0, %v2914
      %v2916 = vpop.f32.mrb[0].mxu0
      %v2917 = vpop.f32.mrb[0].mxu0
      %v2918 = vadd.f32 0.0, %v2917
      %v2919 = vpop.f32.mrb[0].mxu0
      %2920 = vmatprep.mubr.bf16.mxu0 0
      %2921 = vmatmul.mubr.bf16.gmra.mrb[0].mxu0 %v2785
      %v2922 = vpop.f32.mrb[0].mxu0
      %v2923 = vadd.f32 0.0, %v2922
      %v2924 = vpop.f32.mrb[0].mxu0
      %v2925 = vpop.f32.mrb[0].mxu0
      %v2926 = vadd.f32 0.0, %v2925
      %v2927 = vpop.f32.mrb[0].mxu0
      %2928 = vmatprep.mubr.bf16.mxu0 0
      %2929 = vmatmul.mubr.bf16.gmra.mrb[0].mxu0 %v2788
      %v2930 = vpop.f32.mrb[0].mxu0
      %v2931 = vadd.f32 0.0, %v2930
      %v2932 = vpop.f32.mrb[0].mxu0
      %v2933 = vpop.f32.mrb[0].mxu0
      %v2934 = vadd.f32 0.0, %v2933
      %v2935 = vpop.f32.mrb[0].mxu0
      %2936 = vmatprep.mubr.bf16.mxu0 0
      %2937 = vmatmul.mubr.bf16.gmra.mrb[0].mxu0 %v2791
      %v2938 = vpop.f32.mrb[0].mxu0
      %v2939 = vadd.f32 0.0, %v2938
      %v2940 = vpop.f32.mrb[0].mxu0
      %v2941 = vpop.f32.mrb[0].mxu0
      %v2942 = vadd.f32 0.0, %v2941
      %v2943 = vpop.f32.mrb[0].mxu0
      %2944 = vmatprep.mubr.bf16.mxu0 0
      %2945 = vmatmul.mubr.bf16.gmra.mrb[0].mxu0 %v2794
      %v2946 = vpop.f32.mrb[0].mxu0
      %v2947 = vadd.f32 0.0, %v2946
      %v2948 = vpop.f32.mrb[0].mxu0
      %v2949 = vpop.f32.mrb[0].mxu0
      %v2950 = vadd.f32 0.0, %v2949
      %v2951 = vpop.f32.mrb[0].mxu0
      %2952 = vmatprep.mubr.bf16.mxu0 0
      %2953 = vmatmul.mubr.bf16.gmra.mrb[0].mxu0 %v2797
      %v2954 = vpop.f32.mrb[0].mxu0
      %v2955 = vadd.f32 0.0, %v2954
      %v2956 = vpop.f32.mrb[0].mxu0
      %v2957 = vpop.f32.mrb[0].mxu0
      %v2958 = vadd.f32 0.0, %v2957
      %v2959 = vpop.f32.mrb[0].mxu0
      %2960 = vmatprep.mubr.bf16.mxu0 0
      %2961 = vmatmul.mubr.bf16.gmra.mrb[0].mxu0 %v2800
      %v2962 = vpop.f32.mrb[0].mxu0
      %v2963 = vadd.f32 0.0, %v2962
      %v2964 = vpop.f32.mrb[0].mxu0
      %v2965 = vpop.f32.mrb[0].mxu0
      %v2966 = vadd.f32 0.0, %v2965
      %v2967 = vpop.f32.mrb[0].mxu0
      %2968 = vmatprep.mubr.bf16.mxu0 0
      %2969 = vmatmul.mubr.bf16.gmra.mrb[0].mxu0 %v2803
      %v2970 = vpop.f32.mrb[0].mxu0
      %v2971 = vadd.f32 0.0, %v2970
      %v2972 = vpop.f32.mrb[0].mxu0
      %v2973 = vpop.f32.mrb[0].mxu0
      %v2974 = vadd.f32 0.0, %v2973
      %v2975 = vpop.f32.mrb[0].mxu0
      %2976 = vmatprep.mubr.bf16.mxu0 0
      %2977 = vmatmul.mubr.bf16.gmra.mrb[0].mxu0 %v2806
      %v2978 = vpop.f32.mrb[0].mxu0
      %v2979 = vadd.f32 0.0, %v2978
      %v2980 = vpop.f32.mrb[0].mxu0
      %v2981 = vpop.f32.mrb[0].mxu0
      %v2982 = vadd.f32 0.0, %v2981
      %v2983 = vpop.f32.mrb[0].mxu0
      %2984 = vdwg.mxu0
      %v2985 = vadd.f32 %v2542, %v2843
      %v2986 = vadd.f32 %v2543, %v2846
      %v2987 = vadd.f32 %v2544, %v2851
      %v2988 = vadd.f32 %v2545, %v2854
      %v2989 = vadd.f32 %v2546, %v2859
      %v2990 = vadd.f32 %v2547, %v2862
      %v2991 = vadd.f32 %v2548, %v2867
      %v2992 = vadd.f32 %v2549, %v2870
      %v2993 = vadd.f32 %v2550, %v2875
      %v2994 = vadd.f32 %v2551, %v2878
      %v2995 = vadd.f32 %v2552, %v2883
      %v2996 = vadd.f32 %v2553, %v2886
      %v2997 = vadd.f32 %v2554, %v2891
      %v2998 = vadd.f32 %v2555, %v2894
      %v2999 = vadd.f32 %v2556, %v2899
      %v3000 = vadd.f32 %v2557, %v2902
      %v3001 = vadd.f32 %v2558, %v2907
      %v3002 = vadd.f32 %v2559, %v2910
      %v3003 = vadd.f32 %v2560, %v2915
      %v3004 = vadd.f32 %v2561, %v2918
      %v3005 = vadd.f32 %v2562, %v2923
      %v3006 = vadd.f32 %v2563, %v2926
      %v3007 = vadd.f32 %v2564, %v2931
      %v3008 = vadd.f32 %v2565, %v2934
      %v3009 = vadd.f32 %v2566, %v2939
      %v3010 = vadd.f32 %v2567, %v2942
      %v3011 = vadd.f32 %v2568, %v2947
      %v3012 = vadd.f32 %v2569, %v2950
      %v3013 = vadd.f32 %v2570, %v2955
      %v3014 = vadd.f32 %v2571, %v2958
      %v3015 = vadd.f32 %v2572, %v2963
      %v3016 = vadd.f32 %v2573, %v2966
      %v3017 = vadd.f32 %v2574, %v2971
      %v3018 = vadd.f32 %v2575, %v2974
      %v3019 = vadd.f32 %v2576, %v2979
      %v3020 = vadd.f32 %v2577, %v2982
      %v3021 = vld [vmem:[%s300 + $0xa0] sm:$0x7]
      %s3022 = scalar_lea.vmem %s1, 56
      %v3023 = vld [vmem:[%s3022] sm:$0xf]
      %v3024 = vld [vmem:[%s3022 + $0x4] sm:$0xf]
      %v3026 = vunpack.c.l.b16 %v3021
      %v3027 = vpack.c.b16 %v3026, %v3026
      %vm3028 = vsmask.f32 5376
      %v3030 = vshrl.u32 %v2692, 16
      %v3032 = vrot.slane %v3030, 2
      %v3033 = vshll.u32 %v2692, 16
      %v3035 = vrot.slane %v3033, 3
      %v3036 = vor.u32 %v3032, %v3035
      %v3038 = vshrl.u32 %v2693, 16
      %v3040 = vrot.slane %v3038, 2
      %v3041 = vshll.u32 %v2693, 16
      %v3043 = vrot.slane %v3041, 3
      %v3044 = vor.u32 %v3040, %v3043
      %v3045 = vsel %vm3028, %v3036, %v3044
      %v3047 = vshrl.u32 %v2694, 16
      %v3049 = vrot.slane %v3047, 2
      %v3050 = vshll.u32 %v2694, 16
      %v3052 = vrot.slane %v3050, 3
      %v3053 = vor.u32 %v3049, %v3052
      %v3054 = vsel %vm3028, %v3044, %v3053
      %v3056 = vshrl.u32 %v2695, 16
      %v3058 = vrot.slane %v3056, 2
      %v3059 = vshll.u32 %v2695, 16
      %v3061 = vrot.slane %v3059, 3
      %v3062 = vor.u32 %v3058, %v3061
      %v3063 = vsel %vm3028, %v3053, %v3062
      %v3065 = vshrl.u32 %v2696, 16
      %v3067 = vrot.slane %v3065, 2
      %v3068 = vshll.u32 %v2696, 16
      %v3070 = vrot.slane %v3068, 3
      %v3071 = vor.u32 %v3067, %v3070
      %v3072 = vsel %vm3028, %v3062, %v3071
      %v3074 = vshrl.u32 %v2697, 16
      %v3076 = vrot.slane %v3074, 2
      %v3077 = vshll.u32 %v2697, 16
      %v3079 = vrot.slane %v3077, 3
      %v3080 = vor.u32 %v3076, %v3079
      %v3081 = vsel %vm3028, %v3071, %v3080
      %v3083 = vshrl.u32 %v2698, 16
      %v3085 = vrot.slane %v3083, 2
      %v3086 = vshll.u32 %v2698, 16
      %v3088 = vrot.slane %v3086, 3
      %v3089 = vor.u32 %v3085, %v3088
      %v3090 = vsel %vm3028, %v3080, %v3089
      %v3092 = vshrl.u32 %v2699, 16
      %v3094 = vrot.slane %v3092, 2
      %v3095 = vshll.u32 %v2699, 16
      %v3097 = vrot.slane %v3095, 3
      %v3098 = vor.u32 %v3094, %v3097
      %v3099 = vsel %vm3028, %v3089, %v3098
      %v3101 = vshrl.u32 %v2700, 16
      %v3103 = vrot.slane %v3101, 2
      %v3104 = vshll.u32 %v2700, 16
      %v3106 = vrot.slane %v3104, 3
      %v3107 = vor.u32 %v3103, %v3106
      %v3108 = vsel %vm3028, %v3098, %v3107
      %v3110 = vshrl.u32 %v2701, 16
      %v3112 = vrot.slane %v3110, 2
      %v3113 = vshll.u32 %v2701, 16
      %v3115 = vrot.slane %v3113, 3
      %v3116 = vor.u32 %v3112, %v3115
      %v3117 = vsel %vm3028, %v3107, %v3116
      %v3119 = vshrl.u32 %v2702, 16
      %v3121 = vrot.slane %v3119, 2
      %v3122 = vshll.u32 %v2702, 16
      %v3124 = vrot.slane %v3122, 3
      %v3125 = vor.u32 %v3121, %v3124
      %v3126 = vsel %vm3028, %v3116, %v3125
      %v3128 = vshrl.u32 %v2703, 16
      %v3130 = vrot.slane %v3128, 2
      %v3131 = vshll.u32 %v2703, 16
      %v3133 = vrot.slane %v3131, 3
      %v3134 = vor.u32 %v3130, %v3133
      %v3135 = vsel %vm3028, %v3125, %v3134
      %v3137 = vshrl.u32 %v2704, 16
      %v3139 = vrot.slane %v3137, 2
      %v3140 = vshll.u32 %v2704, 16
      %v3142 = vrot.slane %v3140, 3
      %v3143 = vor.u32 %v3139, %v3142
      %v3144 = vsel %vm3028, %v3134, %v3143
      %v3146 = vshrl.u32 %v2705, 16
      %v3148 = vrot.slane %v3146, 2
      %v3149 = vshll.u32 %v2705, 16
      %v3151 = vrot.slane %v3149, 3
      %v3152 = vor.u32 %v3148, %v3151
      %v3153 = vsel %vm3028, %v3143, %v3152
      %v3155 = vshrl.u32 %v2706, 16
      %v3157 = vrot.slane %v3155, 2
      %v3158 = vshll.u32 %v2706, 16
      %v3160 = vrot.slane %v3158, 3
      %v3161 = vor.u32 %v3157, %v3160
      %v3162 = vsel %vm3028, %v3152, %v3161
      %v3164 = vshrl.u32 %v2707, 16
      %v3166 = vrot.slane %v3164, 2
      %v3167 = vshll.u32 %v2707, 16
      %v3169 = vrot.slane %v3167, 3
      %v3170 = vor.u32 %v3166, %v3169
      %v3171 = vsel %vm3028, %v3161, %v3170
      %v3173 = vshrl.u32 %v2708, 16
      %v3175 = vrot.slane %v3173, 2
      %v3176 = vshll.u32 %v2708, 16
      %v3178 = vrot.slane %v3176, 3
      %v3179 = vor.u32 %v3175, %v3178
      %v3180 = vsel %vm3028, %v3170, %v3179
      %v3182 = vshrl.u32 %v2709, 16
      %v3184 = vrot.slane %v3182, 2
      %v3185 = vshll.u32 %v2709, 16
      %v3187 = vrot.slane %v3185, 3
      %v3188 = vor.u32 %v3184, %v3187
      %v3189 = vsel %vm3028, %v3179, %v3188
      %v3191 = vshrl.u32 %v3027, 16
      %v3193 = vrot.slane %v3191, 2
      %v3194 = vshll.u32 %v3027, 16
      %v3196 = vrot.slane %v3194, 3
      %v3197 = vor.u32 %v3193, %v3196
      %v3198 = vsel %vm3028, %v3188, %v3197
      %v3201 = vunpack.c.l.b16 %v3023
      %v3202 = vunpack.c.l.b16 %v3024
      %v3203 = vpack.c.b16 %v3202, %v3201
      %v3206 = vsel %vm597, %v3045, 0
      %v3209 = vsel %vm597, %v3054, 0
      %v3212 = vsel %vm597, %v3063, 0
      %v3215 = vsel %vm597, %v3072, 0
      %v3218 = vsel %vm597, %v3081, 0
      %v3221 = vsel %vm597, %v3090, 0
      %v3224 = vsel %vm597, %v3099, 0
      %v3227 = vsel %vm597, %v3108, 0
      %v3230 = vsel %vm597, %v3117, 0
      %v3233 = vsel %vm597, %v3126, 0
      %v3236 = vsel %vm597, %v3135, 0
      %v3239 = vsel %vm597, %v3144, 0
      %v3242 = vsel %vm597, %v3153, 0
      %v3245 = vsel %vm597, %v3162, 0
      %v3248 = vsel %vm597, %v3171, 0
      %v3251 = vsel %vm597, %v3180, 0
      %v3254 = vsel %vm597, %v3189, 0
      %v3257 = vsel %vm597, %v3198, 0
      %3259 = vmatprep.subr.bf16.mxu0 0
      %3260 = vmatpush1.bf16.msra.mxu0 %v3203
      %3261 = vmatprep.subr.bf16.mxu0 0
      %3262 = vmatpush1.bf16.msra.mxu0 0
      %3263 = vmatprep.subr.bf16.mxu0 0
      %3264 = vmatpush1.bf16.msra.mxu0 0
      %3265 = vmatprep.subr.bf16.mxu0 0
      %3266 = vmatpush1.bf16.msra.mxu0 0
      %3267 = vmatprep.subr.bf16.mxu0 0
      %3268 = vmatpush1.bf16.msra.mxu0 0
      %3269 = vmatprep.subr.bf16.mxu0 0
      %3270 = vmatpush1.bf16.msra.mxu0 0
      %3271 = vmatprep.subr.bf16.mxu0 0
      %3272 = vmatpush1.bf16.msra.mxu0 0
      %3273 = vmatprep.subr.bf16.mxu0 0
      %3274 = vmatpush1.bf16.msra.mxu0 0
      %3275 = vmatprep.subr.bf16.mxu0 0
      %3276 = vmatpush1.bf16.msra.mxu0 0
      %3277 = vmatprep.subr.bf16.mxu0 0
      %3278 = vmatpush1.bf16.msra.mxu0 0
      %3279 = vmatprep.subr.bf16.mxu0 0
      %3280 = vmatpush1.bf16.msra.mxu0 0
      %3281 = vmatprep.subr.bf16.mxu0 0
      %3282 = vmatpush1.bf16.msra.mxu0 0
      %3283 = vmatprep.subr.bf16.mxu0 0
      %3284 = vmatpush1.bf16.msra.mxu0 0
      %3285 = vmatprep.subr.bf16.mxu0 0
      %3286 = vmatpush1.bf16.msra.mxu0 0
      %3287 = vmatprep.subr.bf16.mxu0 0
      %3288 = vmatpush1.bf16.msra.mxu0 0
      %3289 = vmatprep.subr.bf16.mxu0 0
      %3290 = vmatpush1.bf16.msra.mxu0 0
      %3291 = vmatprep.mubr.bf16.mxu0 0
      %3292 = vmatmul.mubr.bf16.gmra.mrb[0].mxu0 %v3206
      %v3293 = vpop.f32.mrb[0].mxu0
      %v3294 = vadd.f32 0.0, %v3293
      %v3295 = vpop.f32.mrb[0].mxu0
      %v3296 = vpop.f32.mrb[0].mxu0
      %v3297 = vadd.f32 0.0, %v3296
      %v3298 = vpop.f32.mrb[0].mxu0
      %3299 = vmatprep.mubr.bf16.mxu0 0
      %3300 = vmatmul.mubr.bf16.gmra.mrb[0].mxu0 %v3209
      %v3301 = vpop.f32.mrb[0].mxu0
      %v3302 = vadd.f32 0.0, %v3301
      %v3303 = vpop.f32.mrb[0].mxu0
      %v3304 = vpop.f32.mrb[0].mxu0
      %v3305 = vadd.f32 0.0, %v3304
      %v3306 = vpop.f32.mrb[0].mxu0
      %3307 = vmatprep.mubr.bf16.mxu0 0
      %3308 = vmatmul.mubr.bf16.gmra.mrb[0].mxu0 %v3212
      %v3309 = vpop.f32.mrb[0].mxu0
      %v3310 = vadd.f32 0.0, %v3309
      %v3311 = vpop.f32.mrb[0].mxu0
      %v3312 = vpop.f32.mrb[0].mxu0
      %v3313 = vadd.f32 0.0, %v3312
      %v3314 = vpop.f32.mrb[0].mxu0
      %3315 = vmatprep.mubr.bf16.mxu0 0
      %3316 = vmatmul.mubr.bf16.gmra.mrb[0].mxu0 %v3215
      %v3317 = vpop.f32.mrb[0].mxu0
      %v3318 = vadd.f32 0.0, %v3317
      %v3319 = vpop.f32.mrb[0].mxu0
      %v3320 = vpop.f32.mrb[0].mxu0
      %v3321 = vadd.f32 0.0, %v3320
      %v3322 = vpop.f32.mrb[0].mxu0
      %3323 = vmatprep.mubr.bf16.mxu0 0
      %3324 = vmatmul.mubr.bf16.gmra.mrb[0].mxu0 %v3218
      %v3325 = vpop.f32.mrb[0].mxu0
      %v3326 = vadd.f32 0.0, %v3325
      %v3327 = vpop.f32.mrb[0].mxu0
      %v3328 = vpop.f32.mrb[0].mxu0
      %v3329 = vadd.f32 0.0, %v3328
      %v3330 = vpop.f32.mrb[0].mxu0
      %3331 = vmatprep.mubr.bf16.mxu0 0
      %3332 = vmatmul.mubr.bf16.gmra.mrb[0].mxu0 %v3221
      %v3333 = vpop.f32.mrb[0].mxu0
      %v3334 = vadd.f32 0.0, %v3333
      %v3335 = vpop.f32.mrb[0].mxu0
      %v3336 = vpop.f32.mrb[0].mxu0
      %v3337 = vadd.f32 0.0, %v3336
      %v3338 = vpop.f32.mrb[0].mxu0
      %3339 = vmatprep.mubr.bf16.mxu0 0
      %3340 = vmatmul.mubr.bf16.gmra.mrb[0].mxu0 %v3224
      %v3341 = vpop.f32.mrb[0].mxu0
      %v3342 = vadd.f32 0.0, %v3341
      %v3343 = vpop.f32.mrb[0].mxu0
      %v3344 = vpop.f32.mrb[0].mxu0
      %v3345 = vadd.f32 0.0, %v3344
      %v3346 = vpop.f32.mrb[0].mxu0
      %3347 = vmatprep.mubr.bf16.mxu0 0
      %3348 = vmatmul.mubr.bf16.gmra.mrb[0].mxu0 %v3227
      %v3349 = vpop.f32.mrb[0].mxu0
      %v3350 = vadd.f32 0.0, %v3349
      %v3351 = vpop.f32.mrb[0].mxu0
      %v3352 = vpop.f32.mrb[0].mxu0
      %v3353 = vadd.f32 0.0, %v3352
      %v3354 = vpop.f32.mrb[0].mxu0
      %3355 = vmatprep.mubr.bf16.mxu0 0
      %3356 = vmatmul.mubr.bf16.gmra.mrb[0].mxu0 %v3230
      %v3357 = vpop.f32.mrb[0].mxu0
      %v3358 = vadd.f32 0.0, %v3357
      %v3359 = vpop.f32.mrb[0].mxu0
      %v3360 = vpop.f32.mrb[0].mxu0
      %v3361 = vadd.f32 0.0, %v3360
      %v3362 = vpop.f32.mrb[0].mxu0
      %3363 = vmatprep.mubr.bf16.mxu0 0
      %3364 = vmatmul.mubr.bf16.gmra.mrb[0].mxu0 %v3233
      %v3365 = vpop.f32.mrb[0].mxu0
      %v3366 = vadd.f32 0.0, %v3365
      %v3367 = vpop.f32.mrb[0].mxu0
      %v3368 = vpop.f32.mrb[0].mxu0
      %v3369 = vadd.f32 0.0, %v3368
      %v3370 = vpop.f32.mrb[0].mxu0
      %3371 = vmatprep.mubr.bf16.mxu0 0
      %3372 = vmatmul.mubr.bf16.gmra.mrb[0].mxu0 %v3236
      %v3373 = vpop.f32.mrb[0].mxu0
      %v3374 = vadd.f32 0.0, %v3373
      %v3375 = vpop.f32.mrb[0].mxu0
      %v3376 = vpop.f32.mrb[0].mxu0
      %v3377 = vadd.f32 0.0, %v3376
      %v3378 = vpop.f32.mrb[0].mxu0
      %3379 = vmatprep.mubr.bf16.mxu0 0
      %3380 = vmatmul.mubr.bf16.gmra.mrb[0].mxu0 %v3239
      %v3381 = vpop.f32.mrb[0].mxu0
      %v3382 = vadd.f32 0.0, %v3381
      %v3383 = vpop.f32.mrb[0].mxu0
      %v3384 = vpop.f32.mrb[0].mxu0
      %v3385 = vadd.f32 0.0, %v3384
      %v3386 = vpop.f32.mrb[0].mxu0
      %3387 = vmatprep.mubr.bf16.mxu0 0
      %3388 = vmatmul.mubr.bf16.gmra.mrb[0].mxu0 %v3242
      %v3389 = vpop.f32.mrb[0].mxu0
      %v3390 = vadd.f32 0.0, %v3389
      %v3391 = vpop.f32.mrb[0].mxu0
      %v3392 = vpop.f32.mrb[0].mxu0
      %v3393 = vadd.f32 0.0, %v3392
      %v3394 = vpop.f32.mrb[0].mxu0
      %3395 = vmatprep.mubr.bf16.mxu0 0
      %3396 = vmatmul.mubr.bf16.gmra.mrb[0].mxu0 %v3245
      %v3397 = vpop.f32.mrb[0].mxu0
      %v3398 = vadd.f32 0.0, %v3397
      %v3399 = vpop.f32.mrb[0].mxu0
      %v3400 = vpop.f32.mrb[0].mxu0
      %v3401 = vadd.f32 0.0, %v3400
      %v3402 = vpop.f32.mrb[0].mxu0
      %3403 = vmatprep.mubr.bf16.mxu0 0
      %3404 = vmatmul.mubr.bf16.gmra.mrb[0].mxu0 %v3248
      %v3405 = vpop.f32.mrb[0].mxu0
      %v3406 = vadd.f32 0.0, %v3405
      %v3407 = vpop.f32.mrb[0].mxu0
      %v3408 = vpop.f32.mrb[0].mxu0
      %v3409 = vadd.f32 0.0, %v3408
      %v3410 = vpop.f32.mrb[0].mxu0
      %3411 = vmatprep.mubr.bf16.mxu0 0
      %3412 = vmatmul.mubr.bf16.gmra.mrb[0].mxu0 %v3251
      %v3413 = vpop.f32.mrb[0].mxu0
      %v3414 = vadd.f32 0.0, %v3413
      %v3415 = vpop.f32.mrb[0].mxu0
      %v3416 = vpop.f32.mrb[0].mxu0
      %v3417 = vadd.f32 0.0, %v3416
      %v3418 = vpop.f32.mrb[0].mxu0
      %3419 = vmatprep.mubr.bf16.mxu0 0
      %3420 = vmatmul.mubr.bf16.gmra.mrb[0].mxu0 %v3254
      %v3421 = vpop.f32.mrb[0].mxu0
      %v3422 = vadd.f32 0.0, %v3421
      %v3423 = vpop.f32.mrb[0].mxu0
      %v3424 = vpop.f32.mrb[0].mxu0
      %v3425 = vadd.f32 0.0, %v3424
      %v3426 = vpop.f32.mrb[0].mxu0
      %3427 = vmatprep.mubr.bf16.mxu0 0
      %3428 = vmatmul.mubr.bf16.gmra.mrb[0].mxu0 %v3257
      %v3429 = vpop.f32.mrb[0].mxu0
      %v3430 = vadd.f32 0.0, %v3429
      %v3431 = vpop.f32.mrb[0].mxu0
      %v3432 = vpop.f32.mrb[0].mxu0
      %v3433 = vadd.f32 0.0, %v3432
      %v3434 = vpop.f32.mrb[0].mxu0
      %3435 = vdwg.mxu0
      %v3436 = vadd.f32 %v2985, %v3294
      %v3437 = vadd.f32 %v2986, %v3297
      %v3438 = vadd.f32 %v2987, %v3302
      %v3439 = vadd.f32 %v2988, %v3305
      %v3440 = vadd.f32 %v2989, %v3310
      %v3441 = vadd.f32 %v2990, %v3313
      %v3442 = vadd.f32 %v2991, %v3318
      %v3443 = vadd.f32 %v2992, %v3321
      %v3444 = vadd.f32 %v2993, %v3326
      %v3445 = vadd.f32 %v2994, %v3329
      %v3446 = vadd.f32 %v2995, %v3334
      %v3447 = vadd.f32 %v2996, %v3337
      %v3448 = vadd.f32 %v2997, %v3342
      %v3449 = vadd.f32 %v2998, %v3345
      %v3450 = vadd.f32 %v2999, %v3350
      %v3451 = vadd.f32 %v3000, %v3353
      %v3452 = vadd.f32 %v3001, %v3358
      %v3453 = vadd.f32 %v3002, %v3361
      %v3454 = vadd.f32 %v3003, %v3366
      %v3455 = vadd.f32 %v3004, %v3369
      %v3456 = vadd.f32 %v3005, %v3374
      %v3457 = vadd.f32 %v3006, %v3377
      %v3458 = vadd.f32 %v3007, %v3382
      %v3459 = vadd.f32 %v3008, %v3385
      %v3460 = vadd.f32 %v3009, %v3390
      %v3461 = vadd.f32 %v3010, %v3393
      %v3462 = vadd.f32 %v3011, %v3398
      %v3463 = vadd.f32 %v3012, %v3401
      %v3464 = vadd.f32 %v3013, %v3406
      %v3465 = vadd.f32 %v3014, %v3409
      %v3466 = vadd.f32 %v3015, %v3414
      %v3467 = vadd.f32 %v3016, %v3417
      %v3468 = vadd.f32 %v3017, %v3422
      %v3469 = vadd.f32 %v3018, %v3425
      %v3470 = vadd.f32 %v3019, %v3430
      %v3471 = vadd.f32 %v3020, %v3433
      %v3472 = vld [vmem:[%s300 + $0x10] sm:$0x8]
      %s3473 = scalar_lea.vmem %s1, 64
      %v3474 = vld [vmem:[%s3473] sm:$0xf]
      %v3475 = vld [vmem:[%s3473 + $0x4] sm:$0xf]
      %v3477 = vunpack.c.l.b16 %v3472
      %v3478 = vpack.c.b16 %v2656, %v3477
      %vm3479 = vcmask 1044480
      %v3480 = vrot.slane %v3478, 3
      %v3481 = vrot.slane %v2693, 3
      %v3482 = vsel %vm3479, %v3480, %v3481
      %v3483 = vrot.slane %v2694, 3
      %v3484 = vsel %vm3479, %v3481, %v3483
      %v3485 = vrot.slane %v2695, 3
      %v3486 = vsel %vm3479, %v3483, %v3485
      %v3487 = vrot.slane %v2696, 3
      %v3488 = vsel %vm3479, %v3485, %v3487
      %v3489 = vrot.slane %v2697, 3
      %v3490 = vsel %vm3479, %v3487, %v3489
      %v3491 = vrot.slane %v2698, 3
      %v3492 = vsel %vm3479, %v3489, %v3491
      %v3493 = vrot.slane %v2699, 3
      %v3494 = vsel %vm3479, %v3491, %v3493
      %v3495 = vrot.slane %v2700, 3
      %v3496 = vsel %vm3479, %v3493, %v3495
      %v3497 = vrot.slane %v2701, 3
      %v3498 = vsel %vm3479, %v3495, %v3497
      %v3499 = vrot.slane %v2702, 3
      %v3500 = vsel %vm3479, %v3497, %v3499
      %v3501 = vrot.slane %v2703, 3
      %v3502 = vsel %vm3479, %v3499, %v3501
      %v3503 = vrot.slane %v2704, 3
      %v3504 = vsel %vm3479, %v3501, %v3503
      %v3505 = vrot.slane %v2705, 3
      %v3506 = vsel %vm3479, %v3503, %v3505
      %v3507 = vrot.slane %v2706, 3
      %v3508 = vsel %vm3479, %v3505, %v3507
      %v3509 = vrot.slane %v2707, 3
      %v3510 = vsel %vm3479, %v3507, %v3509
      %v3511 = vrot.slane %v2708, 3
      %v3512 = vsel %vm3479, %v3509, %v3511
      %v3513 = vrot.slane %v2709, 3
      %v3514 = vsel %vm3479, %v3511, %v3513
      %v3515 = vrot.slane %v3027, 3
      %v3516 = vsel %vm3479, %v3513, %v3515
      %v3519 = vunpack.c.l.b16 %v3474
      %v3520 = vunpack.c.l.b16 %v3475
      %v3521 = vpack.c.b16 %v3520, %v3519
      %v3524 = vsel %vm597, %v3482, 0
      %v3527 = vsel %vm597, %v3484, 0
      %v3530 = vsel %vm597, %v3486, 0
      %v3533 = vsel %vm597, %v3488, 0
      %v3536 = vsel %vm597, %v3490, 0
      %v3539 = vsel %vm597, %v3492, 0
      %v3542 = vsel %vm597, %v3494, 0
      %v3545 = vsel %vm597, %v3496, 0
      %v3548 = vsel %vm597, %v3498, 0
      %v3551 = vsel %vm597, %v3500, 0
      %v3554 = vsel %vm597, %v3502, 0
      %v3557 = vsel %vm597, %v3504, 0
      %v3560 = vsel %vm597, %v3506, 0
      %v3563 = vsel %vm597, %v3508, 0
      %v3566 = vsel %vm597, %v3510, 0
      %v3569 = vsel %vm597, %v3512, 0
      %v3572 = vsel %vm597, %v3514, 0
      %v3575 = vsel %vm597, %v3516, 0
      %3577 = vmatprep.subr.bf16.mxu0 0
      %3578 = vmatpush1.bf16.msra.mxu0 %v3521
      %3579 = vmatprep.subr.bf16.mxu0 0
      %3580 = vmatpush1.bf16.msra.mxu0 0
      %3581 = vmatprep.subr.bf16.mxu0 0
      %3582 = vmatpush1.bf16.msra.mxu0 0
      %3583 = vmatprep.subr.bf16.mxu0 0
      %3584 = vmatpush1.bf16.msra.mxu0 0
      %3585 = vmatprep.subr.bf16.mxu0 0
      %3586 = vmatpush1.bf16.msra.mxu0 0
      %3587 = vmatprep.subr.bf16.mxu0 0
      %3588 = vmatpush1.bf16.msra.mxu0 0
      %3589 = vmatprep.subr.bf16.mxu0 0
      %3590 = vmatpush1.bf16.msra.mxu0 0
      %3591 = vmatprep.subr.bf16.mxu0 0
      %3592 = vmatpush1.bf16.msra.mxu0 0
      %3593 = vmatprep.subr.bf16.mxu0 0
      %3594 = vmatpush1.bf16.msra.mxu0 0
      %3595 = vmatprep.subr.bf16.mxu0 0
      %3596 = vmatpush1.bf16.msra.mxu0 0
      %3597 = vmatprep.subr.bf16.mxu0 0
      %3598 = vmatpush1.bf16.msra.mxu0 0
      %3599 = vmatprep.subr.bf16.mxu0 0
      %3600 = vmatpush1.bf16.msra.mxu0 0
      %3601 = vmatprep.subr.bf16.mxu0 0
      %3602 = vmatpush1.bf16.msra.mxu0 0
      %3603 = vmatprep.subr.bf16.mxu0 0
      %3604 = vmatpush1.bf16.msra.mxu0 0
      %3605 = vmatprep.subr.bf16.mxu0 0
      %3606 = vmatpush1.bf16.msra.mxu0 0
      %3607 = vmatprep.subr.bf16.mxu0 0
      %3608 = vmatpush1.bf16.msra.mxu0 0
      %3609 = vmatprep.mubr.bf16.mxu0 0
      %3610 = vmatmul.mubr.bf16.gmra.mrb[0].mxu0 %v3524
      %v3611 = vpop.f32.mrb[0].mxu0
      %v3612 = vadd.f32 0.0, %v3611
      %v3613 = vpop.f32.mrb[0].mxu0
      %v3614 = vpop.f32.mrb[0].mxu0
      %v3615 = vadd.f32 0.0, %v3614
      %v3616 = vpop.f32.mrb[0].mxu0
      %3617 = vmatprep.mubr.bf16.mxu0 0
      %3618 = vmatmul.mubr.bf16.gmra.mrb[0].mxu0 %v3527
      %v3619 = vpop.f32.mrb[0].mxu0
      %v3620 = vadd.f32 0.0, %v3619
      %v3621 = vpop.f32.mrb[0].mxu0
      %v3622 = vpop.f32.mrb[0].mxu0
      %v3623 = vadd.f32 0.0, %v3622
      %v3624 = vpop.f32.mrb[0].mxu0
      %3625 = vmatprep.mubr.bf16.mxu0 0
      %3626 = vmatmul.mubr.bf16.gmra.mrb[0].mxu0 %v3530
      %v3627 = vpop.f32.mrb[0].mxu0
      %v3628 = vadd.f32 0.0, %v3627
      %v3629 = vpop.f32.mrb[0].mxu0
      %v3630 = vpop.f32.mrb[0].mxu0
      %v3631 = vadd.f32 0.0, %v3630
      %v3632 = vpop.f32.mrb[0].mxu0
      %3633 = vmatprep.mubr.bf16.mxu0 0
      %3634 = vmatmul.mubr.bf16.gmra.mrb[0].mxu0 %v3533
      %v3635 = vpop.f32.mrb[0].mxu0
      %v3636 = vadd.f32 0.0, %v3635
      %v3637 = vpop.f32.mrb[0].mxu0
      %v3638 = vpop.f32.mrb[0].mxu0
      %v3639 = vadd.f32 0.0, %v3638
      %v3640 = vpop.f32.mrb[0].mxu0
      %3641 = vmatprep.mubr.bf16.mxu0 0
      %3642 = vmatmul.mubr.bf16.gmra.mrb[0].mxu0 %v3536
      %v3643 = vpop.f32.mrb[0].mxu0
      %v3644 = vadd.f32 0.0, %v3643
      %v3645 = vpop.f32.mrb[0].mxu0
      %v3646 = vpop.f32.mrb[0].mxu0
      %v3647 = vadd.f32 0.0, %v3646
      %v3648 = vpop.f32.mrb[0].mxu0
      %3649 = vmatprep.mubr.bf16.mxu0 0
      %3650 = vmatmul.mubr.bf16.gmra.mrb[0].mxu0 %v3539
      %v3651 = vpop.f32.mrb[0].mxu0
      %v3652 = vadd.f32 0.0, %v3651
      %v3653 = vpop.f32.mrb[0].mxu0
      %v3654 = vpop.f32.mrb[0].mxu0
      %v3655 = vadd.f32 0.0, %v3654
      %v3656 = vpop.f32.mrb[0].mxu0
      %3657 = vmatprep.mubr.bf16.mxu0 0
      %3658 = vmatmul.mubr.bf16.gmra.mrb[0].mxu0 %v3542
      %v3659 = vpop.f32.mrb[0].mxu0
      %v3660 = vadd.f32 0.0, %v3659
      %v3661 = vpop.f32.mrb[0].mxu0
      %v3662 = vpop.f32.mrb[0].mxu0
      %v3663 = vadd.f32 0.0, %v3662
      %v3664 = vpop.f32.mrb[0].mxu0
      %3665 = vmatprep.mubr.bf16.mxu0 0
      %3666 = vmatmul.mubr.bf16.gmra.mrb[0].mxu0 %v3545
      %v3667 = vpop.f32.mrb[0].mxu0
      %v3668 = vadd.f32 0.0, %v3667
      %v3669 = vpop.f32.mrb[0].mxu0
      %v3670 = vpop.f32.mrb[0].mxu0
      %v3671 = vadd.f32 0.0, %v3670
      %v3672 = vpop.f32.mrb[0].mxu0
      %3673 = vmatprep.mubr.bf16.mxu0 0
      %3674 = vmatmul.mubr.bf16.gmra.mrb[0].mxu0 %v3548
      %v3675 = vpop.f32.mrb[0].mxu0
      %v3676 = vadd.f32 0.0, %v3675
      %v3677 = vpop.f32.mrb[0].mxu0
      %v3678 = vpop.f32.mrb[0].mxu0
      %v3679 = vadd.f32 0.0, %v3678
      %v3680 = vpop.f32.mrb[0].mxu0
      %3681 = vmatprep.mubr.bf16.mxu0 0
      %3682 = vmatmul.mubr.bf16.gmra.mrb[0].mxu0 %v3551
      %v3683 = vpop.f32.mrb[0].mxu0
      %v3684 = vadd.f32 0.0, %v3683
      %v3685 = vpop.f32.mrb[0].mxu0
      %v3686 = vpop.f32.mrb[0].mxu0
      %v3687 = vadd.f32 0.0, %v3686
      %v3688 = vpop.f32.mrb[0].mxu0
      %3689 = vmatprep.mubr.bf16.mxu0 0
      %3690 = vmatmul.mubr.bf16.gmra.mrb[0].mxu0 %v3554
      %v3691 = vpop.f32.mrb[0].mxu0
      %v3692 = vadd.f32 0.0, %v3691
      %v3693 = vpop.f32.mrb[0].mxu0
      %v3694 = vpop.f32.mrb[0].mxu0
      %v3695 = vadd.f32 0.0, %v3694
      %v3696 = vpop.f32.mrb[0].mxu0
      %3697 = vmatprep.mubr.bf16.mxu0 0
      %3698 = vmatmul.mubr.bf16.gmra.mrb[0].mxu0 %v3557
      %v3699 = vpop.f32.mrb[0].mxu0
      %v3700 = vadd.f32 0.0, %v3699
      %v3701 = vpop.f32.mrb[0].mxu0
      %v3702 = vpop.f32.mrb[0].mxu0
      %v3703 = vadd.f32 0.0, %v3702
      %v3704 = vpop.f32.mrb[0].mxu0
      %3705 = vmatprep.mubr.bf16.mxu0 0
      %3706 = vmatmul.mubr.bf16.gmra.mrb[0].mxu0 %v3560
      %v3707 = vpop.f32.mrb[0].mxu0
      %v3708 = vadd.f32 0.0, %v3707
      %v3709 = vpop.f32.mrb[0].mxu0
      %v3710 = vpop.f32.mrb[0].mxu0
      %v3711 = vadd.f32 0.0, %v3710
      %v3712 = vpop.f32.mrb[0].mxu0
      %3713 = vmatprep.mubr.bf16.mxu0 0
      %3714 = vmatmul.mubr.bf16.gmra.mrb[0].mxu0 %v3563
      %v3715 = vpop.f32.mrb[0].mxu0
      %v3716 = vadd.f32 0.0, %v3715
      %v3717 = vpop.f32.mrb[0].mxu0
      %v3718 = vpop.f32.mrb[0].mxu0
      %v3719 = vadd.f32 0.0, %v3718
      %v3720 = vpop.f32.mrb[0].mxu0
      %3721 = vmatprep.mubr.bf16.mxu0 0
      %3722 = vmatmul.mubr.bf16.gmra.mrb[0].mxu0 %v3566
      %v3723 = vpop.f32.mrb[0].mxu0
      %v3724 = vadd.f32 0.0, %v3723
      %v3725 = vpop.f32.mrb[0].mxu0
      %v3726 = vpop.f32.mrb[0].mxu0
      %v3727 = vadd.f32 0.0, %v3726
      %v3728 = vpop.f32.mrb[0].mxu0
      %3729 = vmatprep.mubr.bf16.mxu0 0
      %3730 = vmatmul.mubr.bf16.gmra.mrb[0].mxu0 %v3569
      %v3731 = vpop.f32.mrb[0].mxu0
      %v3732 = vadd.f32 0.0, %v3731
      %v3733 = vpop.f32.mrb[0].mxu0
      %v3734 = vpop.f32.mrb[0].mxu0
      %v3735 = vadd.f32 0.0, %v3734
      %v3736 = vpop.f32.mrb[0].mxu0
      %3737 = vmatprep.mubr.bf16.mxu0 0
      %3738 = vmatmul.mubr.bf16.gmra.mrb[0].mxu0 %v3572
      %v3739 = vpop.f32.mrb[0].mxu0
      %v3740 = vadd.f32 0.0, %v3739
      %v3741 = vpop.f32.mrb[0].mxu0
      %v3742 = vpop.f32.mrb[0].mxu0
      %v3743 = vadd.f32 0.0, %v3742
      %v3744 = vpop.f32.mrb[0].mxu0
      %3745 = vmatprep.mubr.bf16.mxu0 0
      %3746 = vmatmul.mubr.bf16.gmra.mrb[0].mxu0 %v3575
      %v3747 = vpop.f32.mrb[0].mxu0
      %v3748 = vadd.f32 0.0, %v3747
      %v3749 = vpop.f32.mrb[0].mxu0
      %v3750 = vpop.f32.mrb[0].mxu0
      %v3751 = vadd.f32 0.0, %v3750
      %v3752 = vpop.f32.mrb[0].mxu0
      %3753 = vdwg.mxu0
      %v3754 = vadd.f32 %v3436, %v3612
      %v3755 = vadd.f32 %v3437, %v3615
      %v3756 = vadd.f32 %v3438, %v3620
      %v3757 = vadd.f32 %v3439, %v3623
      %v3758 = vadd.f32 %v3440, %v3628
      %v3759 = vadd.f32 %v3441, %v3631
      %v3760 = vadd.f32 %v3442, %v3636
      %v3761 = vadd.f32 %v3443, %v3639
      %v3762 = vadd.f32 %v3444, %v3644
      %v3763 = vadd.f32 %v3445, %v3647
      %v3764 = vadd.f32 %v3446, %v3652
      %v3765 = vadd.f32 %v3447, %v3655
      %v3766 = vadd.f32 %v3448, %v3660
      %v3767 = vadd.f32 %v3449, %v3663
      %v3768 = vadd.f32 %v3450, %v3668
      %v3769 = vadd.f32 %v3451, %v3671
      %v3770 = vadd.f32 %v3452, %v3676
      %v3771 = vadd.f32 %v3453, %v3679
      %v3772 = vadd.f32 %v3454, %v3684
      %v3773 = vadd.f32 %v3455, %v3687
      %v3774 = vadd.f32 %v3456, %v3692
      %v3775 = vadd.f32 %v3457, %v3695
      %v3776 = vadd.f32 %v3458, %v3700
      %v3777 = vadd.f32 %v3459, %v3703
      %v3778 = vadd.f32 %v3460, %v3708
      %v3779 = vadd.f32 %v3461, %v3711
      %v3780 = vadd.f32 %v3462, %v3716
      %v3781 = vadd.f32 %v3463, %v3719
      %v3782 = vadd.f32 %v3464, %v3724
      %v3783 = vadd.f32 %v3465, %v3727
      %v3784 = vadd.f32 %v3466, %v3732
      %v3785 = vadd.f32 %v3467, %v3735
      %v3786 = vadd.f32 %v3468, %v3740
      %v3787 = vadd.f32 %v3469, %v3743
      %v3788 = vadd.f32 %v3470, %v3748
      %v3789 = vadd.f32 %v3471, %v3751
      %v3790 = vld [vmem:[%s2] sm:$0x1]
      %v3792 = vlaneseq
      %v3793 = vshrl.u32 %v3792, 7
      %v3794 = vsub.s32 0, %v3793
      %v3795 = vrot.slane %v3790, %v3794
      %v3797 = vmul.f32 %v3754, %v3795
      %v3798 = vmul.f32 %v3755, %v3795
      %v3799 = vmul.f32 %v3756, %v3795
      %v3800 = vmul.f32 %v3757, %v3795
      %v3801 = vmul.f32 %v3758, %v3795
      %v3802 = vmul.f32 %v3759, %v3795
      %v3803 = vmul.f32 %v3760, %v3795
      %v3804 = vmul.f32 %v3761, %v3795
      %v3805 = vmul.f32 %v3762, %v3795
      %v3806 = vmul.f32 %v3763, %v3795
      %v3807 = vmul.f32 %v3764, %v3795
      %v3808 = vmul.f32 %v3765, %v3795
      %v3809 = vmul.f32 %v3766, %v3795
      %v3810 = vmul.f32 %v3767, %v3795
      %v3811 = vmul.f32 %v3768, %v3795
      %v3812 = vmul.f32 %v3769, %v3795
      %v3813 = vmul.f32 %v3770, %v3795
      %v3814 = vmul.f32 %v3771, %v3795
      %v3815 = vmul.f32 %v3772, %v3795
      %v3816 = vmul.f32 %v3773, %v3795
      %v3817 = vmul.f32 %v3774, %v3795
      %v3818 = vmul.f32 %v3775, %v3795
      %v3819 = vmul.f32 %v3776, %v3795
      %v3820 = vmul.f32 %v3777, %v3795
      %v3821 = vmul.f32 %v3778, %v3795
      %v3822 = vmul.f32 %v3779, %v3795
      %v3823 = vmul.f32 %v3780, %v3795
      %v3824 = vmul.f32 %v3781, %v3795
      %v3825 = vmul.f32 %v3782, %v3795
      %v3826 = vmul.f32 %v3783, %v3795
      %v3827 = vmul.f32 %v3784, %v3795
      %v3828 = vmul.f32 %v3785, %v3795
      %v3829 = vmul.f32 %v3786, %v3795
      %v3830 = vmul.f32 %v3787, %v3795
      %v3831 = vmul.f32 %v3788, %v3795
      %v3832 = vmul.f32 %v3789, %v3795
      %v3833 = vld [vmem:[%s3] sm:$0x1]
      %v3835 = vlaneseq
      %v3836 = vshrl.u32 %v3835, 7
      %v3837 = vsub.s32 0, %v3836
      %v3838 = vrot.slane %v3833, %v3837
      %v3840 = vadd.f32 %v3797, %v3838
      %v3841 = vadd.f32 %v3798, %v3838
      %v3842 = vadd.f32 %v3799, %v3838
      %v3843 = vadd.f32 %v3800, %v3838
      %v3844 = vadd.f32 %v3801, %v3838
      %v3845 = vadd.f32 %v3802, %v3838
      %v3846 = vadd.f32 %v3803, %v3838
      %v3847 = vadd.f32 %v3804, %v3838
      %v3848 = vadd.f32 %v3805, %v3838
      %v3849 = vadd.f32 %v3806, %v3838
      %v3850 = vadd.f32 %v3807, %v3838
      %v3851 = vadd.f32 %v3808, %v3838
      %v3852 = vadd.f32 %v3809, %v3838
      %v3853 = vadd.f32 %v3810, %v3838
      %v3854 = vadd.f32 %v3811, %v3838
      %v3855 = vadd.f32 %v3812, %v3838
      %v3856 = vadd.f32 %v3813, %v3838
      %v3857 = vadd.f32 %v3814, %v3838
      %v3858 = vadd.f32 %v3815, %v3838
      %v3859 = vadd.f32 %v3816, %v3838
      %v3860 = vadd.f32 %v3817, %v3838
      %v3861 = vadd.f32 %v3818, %v3838
      %v3862 = vadd.f32 %v3819, %v3838
      %v3863 = vadd.f32 %v3820, %v3838
      %v3864 = vadd.f32 %v3821, %v3838
      %v3865 = vadd.f32 %v3822, %v3838
      %v3866 = vadd.f32 %v3823, %v3838
      %v3867 = vadd.f32 %v3824, %v3838
      %v3868 = vadd.f32 %v3825, %v3838
      %v3869 = vadd.f32 %v3826, %v3838
      %v3870 = vadd.f32 %v3827, %v3838
      %v3871 = vadd.f32 %v3828, %v3838
      %v3872 = vadd.f32 %v3829, %v3838
      %v3873 = vadd.f32 %v3830, %v3838
      %v3874 = vadd.f32 %v3831, %v3838
      %v3875 = vadd.f32 %v3832, %v3838
      %v3876 = vmax.f32 %v3840, 0.0
      %v3877 = vmax.f32 %v3841, 0.0
      %v3878 = vmax.f32 %v3842, 0.0
      %v3879 = vmax.f32 %v3843, 0.0
      %v3880 = vmax.f32 %v3844, 0.0
      %v3881 = vmax.f32 %v3845, 0.0
      %v3882 = vmax.f32 %v3846, 0.0
      %v3883 = vmax.f32 %v3847, 0.0
      %v3884 = vmax.f32 %v3848, 0.0
      %v3885 = vmax.f32 %v3849, 0.0
      %v3886 = vmax.f32 %v3850, 0.0
      %v3887 = vmax.f32 %v3851, 0.0
      %v3888 = vmax.f32 %v3852, 0.0
      %v3889 = vmax.f32 %v3853, 0.0
      %v3890 = vmax.f32 %v3854, 0.0
      %v3891 = vmax.f32 %v3855, 0.0
      %v3892 = vmax.f32 %v3856, 0.0
      %v3893 = vmax.f32 %v3857, 0.0
      %v3894 = vmax.f32 %v3858, 0.0
      %v3895 = vmax.f32 %v3859, 0.0
      %v3896 = vmax.f32 %v3860, 0.0
      %v3897 = vmax.f32 %v3861, 0.0
      %v3898 = vmax.f32 %v3862, 0.0
      %v3899 = vmax.f32 %v3863, 0.0
      %v3900 = vmax.f32 %v3864, 0.0
      %v3901 = vmax.f32 %v3865, 0.0
      %v3902 = vmax.f32 %v3866, 0.0
      %v3903 = vmax.f32 %v3867, 0.0
      %v3904 = vmax.f32 %v3868, 0.0
      %v3905 = vmax.f32 %v3869, 0.0
      %v3906 = vmax.f32 %v3870, 0.0
      %v3907 = vmax.f32 %v3871, 0.0
      %v3908 = vmax.f32 %v3872, 0.0
      %v3909 = vmax.f32 %v3873, 0.0
      %v3910 = vmax.f32 %v3874, 0.0
      %v3911 = vmax.f32 %v3875, 0.0
      %v3912 = vlaneseq
      %v3913 = vshrl.u32 %v3912, 7
      %v3914 = vadd.s32 %v3913, 8
      %v3915 = vadd.s32 %v3913, 16
      %v3916 = vadd.s32 %v3913, 24
      %v3917 = vadd.s32 %v3913, 32
      %v3918 = vadd.s32 %v3913, 40
      %v3919 = vadd.s32 %v3913, 48
      %v3920 = vadd.s32 %v3913, 56
      %v3921 = vadd.s32 %v3913, 64
      %v3922 = vadd.s32 %v3913, 72
      %v3923 = vadd.s32 %v3913, 80
      %v3924 = vadd.s32 %v3913, 88
      %v3925 = vadd.s32 %v3913, 96
      %v3926 = vadd.s32 %v3913, 104
      %v3927 = vadd.s32 %v3913, 112
      %v3928 = vadd.s32 %v3913, 120
      %v3929 = vadd.s32 %v3913, 128
      %v3930 = vadd.s32 %v3913, 136
      %v3931 = vadd.s32 %v3913, 144
      %v3932 = vadd.s32 %v3913, 152
      %v3933 = vadd.s32 %v3913, 160
      %v3934 = vadd.s32 %v3913, 168
      %v3935 = vadd.s32 %v3913, 176
      %v3936 = vadd.s32 %v3913, 184
      %v3937 = vadd.s32 %v3913, 192
      %v3938 = vadd.s32 %v3913, 200
      %v3939 = vadd.s32 %v3913, 208
      %v3940 = vadd.s32 %v3913, 216
      %v3941 = vadd.s32 %v3913, 224
      %v3942 = vadd.s32 %v3913, 232
      %v3943 = vadd.s32 %v3913, 240
      %v3944 = vadd.s32 %v3913, 248
      %v3945 = vadd.s32 %v3913, 256
      %v3946 = vadd.s32 %v3913, 264
      %v3947 = vadd.s32 %v3913, 272
      %v3948 = vadd.s32 %v3913, 280
      %vm3949 = vcmp.lt.s32.totalorder %v3913, 0
      %v3950 = vsub.s32 0, %v3913
      %v3951 = vsel %vm3949, %v3950, %v3913
      %v3952 = vmul.u32.u64.compose %v3951, 3817748708
      %v3953 = vextract.low.u32 %v3952
      %v3954 = vextract.high.u32 %v3952
      %v3955 = vshrl.u32 %v3954, 4
      %v3956 = vmul.u32 %v3955, 18
      %v3957 = vsub.s32 %v3951, %v3956
      %v3958 = vsub.s32 0, %v3957
      %v3959 = vsel %vm3949, %v3958, %v3957
      %vm3960 = vcmp.lt.s32.totalorder %v3914, 0
      %v3961 = vsub.s32 0, %v3914
      %v3962 = vsel %vm3960, %v3961, %v3914
      %v3963 = vmul.u32.u64.compose %v3962, 3817748708
      %v3964 = vextract.low.u32 %v3963
      %v3965 = vextract.high.u32 %v3963
      %v3966 = vshrl.u32 %v3965, 4
      %v3967 = vmul.u32 %v3966, 18
      %v3968 = vsub.s32 %v3962, %v3967
      %v3969 = vsub.s32 0, %v3968
      %v3970 = vsel %vm3960, %v3969, %v3968
      %vm3971 = vcmp.lt.s32.totalorder %v3915, 0
      %v3972 = vsub.s32 0, %v3915
      %v3973 = vsel %vm3971, %v3972, %v3915
      %v3974 = vmul.u32.u64.compose %v3973, 3817748708
      %v3975 = vextract.low.u32 %v3974
      %v3976 = vextract.high.u32 %v3974
      %v3977 = vshrl.u32 %v3976, 4
      %v3978 = vmul.u32 %v3977, 18
      %v3979 = vsub.s32 %v3973, %v3978
      %v3980 = vsub.s32 0, %v3979
      %v3981 = vsel %vm3971, %v3980, %v3979
      %vm3982 = vcmp.lt.s32.totalorder %v3916, 0
      %v3983 = vsub.s32 0, %v3916
      %v3984 = vsel %vm3982, %v3983, %v3916
      %v3985 = vmul.u32.u64.compose %v3984, 3817748708
      %v3986 = vextract.low.u32 %v3985
      %v3987 = vextract.high.u32 %v3985
      %v3988 = vshrl.u32 %v3987, 4
      %v3989 = vmul.u32 %v3988, 18
      %v3990 = vsub.s32 %v3984, %v3989
      %v3991 = vsub.s32 0, %v3990
      %v3992 = vsel %vm3982, %v3991, %v3990
      %vm3993 = vcmp.lt.s32.totalorder %v3917, 0
      %v3994 = vsub.s32 0, %v3917
      %v3995 = vsel %vm3993, %v3994, %v3917
      %v3996 = vmul.u32.u64.compose %v3995, 3817748708
      %v3997 = vextract.low.u32 %v3996
      %v3998 = vextract.high.u32 %v3996
      %v3999 = vshrl.u32 %v3998, 4
      %v4000 = vmul.u32 %v3999, 18
      %v4001 = vsub.s32 %v3995, %v4000
      %v4002 = vsub.s32 0, %v4001
      %v4003 = vsel %vm3993, %v4002, %v4001
      %vm4004 = vcmp.lt.s32.totalorder %v3918, 0
      %v4005 = vsub.s32 0, %v3918
      %v4006 = vsel %vm4004, %v4005, %v3918
      %v4007 = vmul.u32.u64.compose %v4006, 3817748708
      %v4008 = vextract.low.u32 %v4007
      %v4009 = vextract.high.u32 %v4007
      %v4010 = vshrl.u32 %v4009, 4
      %v4011 = vmul.u32 %v4010, 18
      %v4012 = vsub.s32 %v4006, %v4011
      %v4013 = vsub.s32 0, %v4012
      %v4014 = vsel %vm4004, %v4013, %v4012
      %vm4015 = vcmp.lt.s32.totalorder %v3919, 0
      %v4016 = vsub.s32 0, %v3919
      %v4017 = vsel %vm4015, %v4016, %v3919
      %v4018 = vmul.u32.u64.compose %v4017, 3817748708
      %v4019 = vextract.low.u32 %v4018
      %v4020 = vextract.high.u32 %v4018
      %v4021 = vshrl.u32 %v4020, 4
      %v4022 = vmul.u32 %v4021, 18
      %v4023 = vsub.s32 %v4017, %v4022
      %v4024 = vsub.s32 0, %v4023
      %v4025 = vsel %vm4015, %v4024, %v4023
      %vm4026 = vcmp.lt.s32.totalorder %v3920, 0
      %v4027 = vsub.s32 0, %v3920
      %v4028 = vsel %vm4026, %v4027, %v3920
      %v4029 = vmul.u32.u64.compose %v4028, 3817748708
      %v4030 = vextract.low.u32 %v4029
      %v4031 = vextract.high.u32 %v4029
      %v4032 = vshrl.u32 %v4031, 4
      %v4033 = vmul.u32 %v4032, 18
      %v4034 = vsub.s32 %v4028, %v4033
      %v4035 = vsub.s32 0, %v4034
      %v4036 = vsel %vm4026, %v4035, %v4034
      %vm4037 = vcmp.lt.s32.totalorder %v3921, 0
      %v4038 = vsub.s32 0, %v3921
      %v4039 = vsel %vm4037, %v4038, %v3921
      %v4040 = vmul.u32.u64.compose %v4039, 3817748708
      %v4041 = vextract.low.u32 %v4040
      %v4042 = vextract.high.u32 %v4040
      %v4043 = vshrl.u32 %v4042, 4
      %v4044 = vmul.u32 %v4043, 18
      %v4045 = vsub.s32 %v4039, %v4044
      %v4046 = vsub.s32 0, %v4045
      %v4047 = vsel %vm4037, %v4046, %v4045
      %vm4048 = vcmp.lt.s32.totalorder %v3922, 0
      %v4049 = vsub.s32 0, %v3922
      %v4050 = vsel %vm4048, %v4049, %v3922
      %v4051 = vmul.u32.u64.compose %v4050, 3817748708
      %v4052 = vextract.low.u32 %v4051
      %v4053 = vextract.high.u32 %v4051
      %v4054 = vshrl.u32 %v4053, 4
      %v4055 = vmul.u32 %v4054, 18
      %v4056 = vsub.s32 %v4050, %v4055
      %v4057 = vsub.s32 0, %v4056
      %v4058 = vsel %vm4048, %v4057, %v4056
      %vm4059 = vcmp.lt.s32.totalorder %v3923, 0
      %v4060 = vsub.s32 0, %v3923
      %v4061 = vsel %vm4059, %v4060, %v3923
      %v4062 = vmul.u32.u64.compose %v4061, 3817748708
      %v4063 = vextract.low.u32 %v4062
      %v4064 = vextract.high.u32 %v4062
      %v4065 = vshrl.u32 %v4064, 4
      %v4066 = vmul.u32 %v4065, 18
      %v4067 = vsub.s32 %v4061, %v4066
      %v4068 = vsub.s32 0, %v4067
      %v4069 = vsel %vm4059, %v4068, %v4067
      %vm4070 = vcmp.lt.s32.totalorder %v3924, 0
      %v4071 = vsub.s32 0, %v3924
      %v4072 = vsel %vm4070, %v4071, %v3924
      %v4073 = vmul.u32.u64.compose %v4072, 3817748708
      %v4074 = vextract.low.u32 %v4073
      %v4075 = vextract.high.u32 %v4073
      %v4076 = vshrl.u32 %v4075, 4
      %v4077 = vmul.u32 %v4076, 18
      %v4078 = vsub.s32 %v4072, %v4077
      %v4079 = vsub.s32 0, %v4078
      %v4080 = vsel %vm4070, %v4079, %v4078
      %vm4081 = vcmp.lt.s32.totalorder %v3925, 0
      %v4082 = vsub.s32 0, %v3925
      %v4083 = vsel %vm4081, %v4082, %v3925
      %v4084 = vmul.u32.u64.compose %v4083, 3817748708
      %v4085 = vextract.low.u32 %v4084
      %v4086 = vextract.high.u32 %v4084
      %v4087 = vshrl.u32 %v4086, 4
      %v4088 = vmul.u32 %v4087, 18
      %v4089 = vsub.s32 %v4083, %v4088
      %v4090 = vsub.s32 0, %v4089
      %v4091 = vsel %vm4081, %v4090, %v4089
      %vm4092 = vcmp.lt.s32.totalorder %v3926, 0
      %v4093 = vsub.s32 0, %v3926
      %v4094 = vsel %vm4092, %v4093, %v3926
      %v4095 = vmul.u32.u64.compose %v4094, 3817748708
      %v4096 = vextract.low.u32 %v4095
      %v4097 = vextract.high.u32 %v4095
      %v4098 = vshrl.u32 %v4097, 4
      %v4099 = vmul.u32 %v4098, 18
      %v4100 = vsub.s32 %v4094, %v4099
      %v4101 = vsub.s32 0, %v4100
      %v4102 = vsel %vm4092, %v4101, %v4100
      %vm4103 = vcmp.lt.s32.totalorder %v3927, 0
      %v4104 = vsub.s32 0, %v3927
      %v4105 = vsel %vm4103, %v4104, %v3927
      %v4106 = vmul.u32.u64.compose %v4105, 3817748708
      %v4107 = vextract.low.u32 %v4106
      %v4108 = vextract.high.u32 %v4106
      %v4109 = vshrl.u32 %v4108, 4
      %v4110 = vmul.u32 %v4109, 18
      %v4111 = vsub.s32 %v4105, %v4110
      %v4112 = vsub.s32 0, %v4111
      %v4113 = vsel %vm4103, %v4112, %v4111
      %vm4114 = vcmp.lt.s32.totalorder %v3928, 0
      %v4115 = vsub.s32 0, %v3928
      %v4116 = vsel %vm4114, %v4115, %v3928
      %v4117 = vmul.u32.u64.compose %v4116, 3817748708
      %v4118 = vextract.low.u32 %v4117
      %v4119 = vextract.high.u32 %v4117
      %v4120 = vshrl.u32 %v4119, 4
      %v4121 = vmul.u32 %v4120, 18
      %v4122 = vsub.s32 %v4116, %v4121
      %v4123 = vsub.s32 0, %v4122
      %v4124 = vsel %vm4114, %v4123, %v4122
      %vm4125 = vcmp.lt.s32.totalorder %v3929, 0
      %v4126 = vsub.s32 0, %v3929
      %v4127 = vsel %vm4125, %v4126, %v3929
      %v4128 = vmul.u32.u64.compose %v4127, 3817748708
      %v4129 = vextract.low.u32 %v4128
      %v4130 = vextract.high.u32 %v4128
      %v4131 = vshrl.u32 %v4130, 4
      %v4132 = vmul.u32 %v4131, 18
      %v4133 = vsub.s32 %v4127, %v4132
      %v4134 = vsub.s32 0, %v4133
      %v4135 = vsel %vm4125, %v4134, %v4133
      %vm4136 = vcmp.lt.s32.totalorder %v3930, 0
      %v4137 = vsub.s32 0, %v3930
      %v4138 = vsel %vm4136, %v4137, %v3930
      %v4139 = vmul.u32.u64.compose %v4138, 3817748708
      %v4140 = vextract.low.u32 %v4139
      %v4141 = vextract.high.u32 %v4139
      %v4142 = vshrl.u32 %v4141, 4
      %v4143 = vmul.u32 %v4142, 18
      %v4144 = vsub.s32 %v4138, %v4143
      %v4145 = vsub.s32 0, %v4144
      %v4146 = vsel %vm4136, %v4145, %v4144
      %vm4147 = vcmp.lt.s32.totalorder %v3931, 0
      %v4148 = vsub.s32 0, %v3931
      %v4149 = vsel %vm4147, %v4148, %v3931
      %v4150 = vmul.u32.u64.compose %v4149, 3817748708
      %v4151 = vextract.low.u32 %v4150
      %v4152 = vextract.high.u32 %v4150
      %v4153 = vshrl.u32 %v4152, 4
      %v4154 = vmul.u32 %v4153, 18
      %v4155 = vsub.s32 %v4149, %v4154
      %v4156 = vsub.s32 0, %v4155
      %v4157 = vsel %vm4147, %v4156, %v4155
      %vm4158 = vcmp.lt.s32.totalorder %v3932, 0
      %v4159 = vsub.s32 0, %v3932
      %v4160 = vsel %vm4158, %v4159, %v3932
      %v4161 = vmul.u32.u64.compose %v4160, 3817748708
      %v4162 = vextract.low.u32 %v4161
      %v4163 = vextract.high.u32 %v4161
      %v4164 = vshrl.u32 %v4163, 4
      %v4165 = vmul.u32 %v4164, 18
      %v4166 = vsub.s32 %v4160, %v4165
      %v4167 = vsub.s32 0, %v4166
      %v4168 = vsel %vm4158, %v4167, %v4166
      %vm4169 = vcmp.lt.s32.totalorder %v3933, 0
      %v4170 = vsub.s32 0, %v3933
      %v4171 = vsel %vm4169, %v4170, %v3933
      %v4172 = vmul.u32.u64.compose %v4171, 3817748708
      %v4173 = vextract.low.u32 %v4172
      %v4174 = vextract.high.u32 %v4172
      %v4175 = vshrl.u32 %v4174, 4
      %v4176 = vmul.u32 %v4175, 18
      %v4177 = vsub.s32 %v4171, %v4176
      %v4178 = vsub.s32 0, %v4177
      %v4179 = vsel %vm4169, %v4178, %v4177
      %vm4180 = vcmp.lt.s32.totalorder %v3934, 0
      %v4181 = vsub.s32 0, %v3934
      %v4182 = vsel %vm4180, %v4181, %v3934
      %v4183 = vmul.u32.u64.compose %v4182, 3817748708
      %v4184 = vextract.low.u32 %v4183
      %v4185 = vextract.high.u32 %v4183
      %v4186 = vshrl.u32 %v4185, 4
      %v4187 = vmul.u32 %v4186, 18
      %v4188 = vsub.s32 %v4182, %v4187
      %v4189 = vsub.s32 0, %v4188
      %v4190 = vsel %vm4180, %v4189, %v4188
      %vm4191 = vcmp.lt.s32.totalorder %v3935, 0
      %v4192 = vsub.s32 0, %v3935
      %v4193 = vsel %vm4191, %v4192, %v3935
      %v4194 = vmul.u32.u64.compose %v4193, 3817748708
      %v4195 = vextract.low.u32 %v4194
      %v4196 = vextract.high.u32 %v4194
      %v4197 = vshrl.u32 %v4196, 4
      %v4198 = vmul.u32 %v4197, 18
      %v4199 = vsub.s32 %v4193, %v4198
      %v4200 = vsub.s32 0, %v4199
      %v4201 = vsel %vm4191, %v4200, %v4199
      %vm4202 = vcmp.lt.s32.totalorder %v3936, 0
      %v4203 = vsub.s32 0, %v3936
      %v4204 = vsel %vm4202, %v4203, %v3936
      %v4205 = vmul.u32.u64.compose %v4204, 3817748708
      %v4206 = vextract.low.u32 %v4205
      %v4207 = vextract.high.u32 %v4205
      %v4208 = vshrl.u32 %v4207, 4
      %v4209 = vmul.u32 %v4208, 18
      %v4210 = vsub.s32 %v4204, %v4209
      %v4211 = vsub.s32 0, %v4210
      %v4212 = vsel %vm4202, %v4211, %v4210
      %vm4213 = vcmp.lt.s32.totalorder %v3937, 0
      %v4214 = vsub.s32 0, %v3937
      %v4215 = vsel %vm4213, %v4214, %v3937
      %v4216 = vmul.u32.u64.compose %v4215, 3817748708
      %v4217 = vextract.low.u32 %v4216
      %v4218 = vextract.high.u32 %v4216
      %v4219 = vshrl.u32 %v4218, 4
      %v4220 = vmul.u32 %v4219, 18
      %v4221 = vsub.s32 %v4215, %v4220
      %v4222 = vsub.s32 0, %v4221
      %v4223 = vsel %vm4213, %v4222, %v4221
      %vm4224 = vcmp.lt.s32.totalorder %v3938, 0
      %v4225 = vsub.s32 0, %v3938
      %v4226 = vsel %vm4224, %v4225, %v3938
      %v4227 = vmul.u32.u64.compose %v4226, 3817748708
      %v4228 = vextract.low.u32 %v4227
      %v4229 = vextract.high.u32 %v4227
      %v4230 = vshrl.u32 %v4229, 4
      %v4231 = vmul.u32 %v4230, 18
      %v4232 = vsub.s32 %v4226, %v4231
      %v4233 = vsub.s32 0, %v4232
      %v4234 = vsel %vm4224, %v4233, %v4232
      %vm4235 = vcmp.lt.s32.totalorder %v3939, 0
      %v4236 = vsub.s32 0, %v3939
      %v4237 = vsel %vm4235, %v4236, %v3939
      %v4238 = vmul.u32.u64.compose %v4237, 3817748708
      %v4239 = vextract.low.u32 %v4238
      %v4240 = vextract.high.u32 %v4238
      %v4241 = vshrl.u32 %v4240, 4
      %v4242 = vmul.u32 %v4241, 18
      %v4243 = vsub.s32 %v4237, %v4242
      %v4244 = vsub.s32 0, %v4243
      %v4245 = vsel %vm4235, %v4244, %v4243
      %vm4246 = vcmp.lt.s32.totalorder %v3940, 0
      %v4247 = vsub.s32 0, %v3940
      %v4248 = vsel %vm4246, %v4247, %v3940
      %v4249 = vmul.u32.u64.compose %v4248, 3817748708
      %v4250 = vextract.low.u32 %v4249
      %v4251 = vextract.high.u32 %v4249
      %v4252 = vshrl.u32 %v4251, 4
      %v4253 = vmul.u32 %v4252, 18
      %v4254 = vsub.s32 %v4248, %v4253
      %v4255 = vsub.s32 0, %v4254
      %v4256 = vsel %vm4246, %v4255, %v4254
      %vm4257 = vcmp.lt.s32.totalorder %v3941, 0
      %v4258 = vsub.s32 0, %v3941
      %v4259 = vsel %vm4257, %v4258, %v3941
      %v4260 = vmul.u32.u64.compose %v4259, 3817748708
      %v4261 = vextract.low.u32 %v4260
      %v4262 = vextract.high.u32 %v4260
      %v4263 = vshrl.u32 %v4262, 4
      %v4264 = vmul.u32 %v4263, 18
      %v4265 = vsub.s32 %v4259, %v4264
      %v4266 = vsub.s32 0, %v4265
      %v4267 = vsel %vm4257, %v4266, %v4265
      %vm4268 = vcmp.lt.s32.totalorder %v3942, 0
      %v4269 = vsub.s32 0, %v3942
      %v4270 = vsel %vm4268, %v4269, %v3942
      %v4271 = vmul.u32.u64.compose %v4270, 3817748708
      %v4272 = vextract.low.u32 %v4271
      %v4273 = vextract.high.u32 %v4271
      %v4274 = vshrl.u32 %v4273, 4
      %v4275 = vmul.u32 %v4274, 18
      %v4276 = vsub.s32 %v4270, %v4275
      %v4277 = vsub.s32 0, %v4276
      %v4278 = vsel %vm4268, %v4277, %v4276
      %vm4279 = vcmp.lt.s32.totalorder %v3943, 0
      %v4280 = vsub.s32 0, %v3943
      %v4281 = vsel %vm4279, %v4280, %v3943
      %v4282 = vmul.u32.u64.compose %v4281, 3817748708
      %v4283 = vextract.low.u32 %v4282
      %v4284 = vextract.high.u32 %v4282
      %v4285 = vshrl.u32 %v4284, 4
      %v4286 = vmul.u32 %v4285, 18
      %v4287 = vsub.s32 %v4281, %v4286
      %v4288 = vsub.s32 0, %v4287
      %v4289 = vsel %vm4279, %v4288, %v4287
      %vm4290 = vcmp.lt.s32.totalorder %v3944, 0
      %v4291 = vsub.s32 0, %v3944
      %v4292 = vsel %vm4290, %v4291, %v3944
      %v4293 = vmul.u32.u64.compose %v4292, 3817748708
      %v4294 = vextract.low.u32 %v4293
      %v4295 = vextract.high.u32 %v4293
      %v4296 = vshrl.u32 %v4295, 4
      %v4297 = vmul.u32 %v4296, 18
      %v4298 = vsub.s32 %v4292, %v4297
      %v4299 = vsub.s32 0, %v4298
      %v4300 = vsel %vm4290, %v4299, %v4298
      %vm4301 = vcmp.lt.s32.totalorder %v3945, 0
      %v4302 = vsub.s32 0, %v3945
      %v4303 = vsel %vm4301, %v4302, %v3945
      %v4304 = vmul.u32.u64.compose %v4303, 3817748708
      %v4305 = vextract.low.u32 %v4304
      %v4306 = vextract.high.u32 %v4304
      %v4307 = vshrl.u32 %v4306, 4
      %v4308 = vmul.u32 %v4307, 18
      %v4309 = vsub.s32 %v4303, %v4308
      %v4310 = vsub.s32 0, %v4309
      %v4311 = vsel %vm4301, %v4310, %v4309
      %vm4312 = vcmp.lt.s32.totalorder %v3946, 0
      %v4313 = vsub.s32 0, %v3946
      %v4314 = vsel %vm4312, %v4313, %v3946
      %v4315 = vmul.u32.u64.compose %v4314, 3817748708
      %v4316 = vextract.low.u32 %v4315
      %v4317 = vextract.high.u32 %v4315
      %v4318 = vshrl.u32 %v4317, 4
      %v4319 = vmul.u32 %v4318, 18
      %v4320 = vsub.s32 %v4314, %v4319
      %v4321 = vsub.s32 0, %v4320
      %v4322 = vsel %vm4312, %v4321, %v4320
      %vm4323 = vcmp.lt.s32.totalorder %v3947, 0
      %v4324 = vsub.s32 0, %v3947
      %v4325 = vsel %vm4323, %v4324, %v3947
      %v4326 = vmul.u32.u64.compose %v4325, 3817748708
      %v4327 = vextract.low.u32 %v4326
      %v4328 = vextract.high.u32 %v4326
      %v4329 = vshrl.u32 %v4328, 4
      %v4330 = vmul.u32 %v4329, 18
      %v4331 = vsub.s32 %v4325, %v4330
      %v4332 = vsub.s32 0, %v4331
      %v4333 = vsel %vm4323, %v4332, %v4331
      %vm4334 = vcmp.lt.s32.totalorder %v3948, 0
      %v4335 = vsub.s32 0, %v3948
      %v4336 = vsel %vm4334, %v4335, %v3948
      %v4337 = vmul.u32.u64.compose %v4336, 3817748708
      %v4338 = vextract.low.u32 %v4337
      %v4339 = vextract.high.u32 %v4337
      %v4340 = vshrl.u32 %v4339, 4
      %v4341 = vmul.u32 %v4340, 18
      %v4342 = vsub.s32 %v4336, %v4341
      %v4343 = vsub.s32 0, %v4342
      %v4344 = vsel %vm4334, %v4343, %v4342
      %vm4345 = vcmp.ne.s32.totalorder %v3959, 0
      %vm4346 = vcmp.ne.s32.totalorder %v3970, 0
      %vm4347 = vcmp.ne.s32.totalorder %v3981, 0
      %vm4348 = vcmp.ne.s32.totalorder %v3992, 0
      %vm4349 = vcmp.ne.s32.totalorder %v4003, 0
      %vm4350 = vcmp.ne.s32.totalorder %v4014, 0
      %vm4351 = vcmp.ne.s32.totalorder %v4025, 0
      %vm4352 = vcmp.ne.s32.totalorder %v4036, 0
      %vm4353 = vcmp.ne.s32.totalorder %v4047, 0
      %vm4354 = vcmp.ne.s32.totalorder %v4058, 0
      %vm4355 = vcmp.ne.s32.totalorder %v4069, 0
      %vm4356 = vcmp.ne.s32.totalorder %v4080, 0
      %vm4357 = vcmp.ne.s32.totalorder %v4091, 0
      %vm4358 = vcmp.ne.s32.totalorder %v4102, 0
      %vm4359 = vcmp.ne.s32.totalorder %v4113, 0
      %vm4360 = vcmp.ne.s32.totalorder %v4124, 0
      %vm4361 = vcmp.ne.s32.totalorder %v4135, 0
      %vm4362 = vcmp.ne.s32.totalorder %v4146, 0
      %vm4363 = vcmp.ne.s32.totalorder %v4157, 0
      %vm4364 = vcmp.ne.s32.totalorder %v4168, 0
      %vm4365 = vcmp.ne.s32.totalorder %v4179, 0
      %vm4366 = vcmp.ne.s32.totalorder %v4190, 0
      %vm4367 = vcmp.ne.s32.totalorder %v4201, 0
      %vm4368 = vcmp.ne.s32.totalorder %v4212, 0
      %vm4369 = vcmp.ne.s32.totalorder %v4223, 0
      %vm4370 = vcmp.ne.s32.totalorder %v4234, 0
      %vm4371 = vcmp.ne.s32.totalorder %v4245, 0
      %vm4372 = vcmp.ne.s32.totalorder %v4256, 0
      %vm4373 = vcmp.ne.s32.totalorder %v4267, 0
      %vm4374 = vcmp.ne.s32.totalorder %v4278, 0
      %vm4375 = vcmp.ne.s32.totalorder %v4289, 0
      %vm4376 = vcmp.ne.s32.totalorder %v4300, 0
      %vm4377 = vcmp.ne.s32.totalorder %v4311, 0
      %vm4378 = vcmp.ne.s32.totalorder %v4322, 0
      %vm4379 = vcmp.ne.s32.totalorder %v4333, 0
      %vm4380 = vcmp.ne.s32.totalorder %v4344, 0
      %vm4381 = vcmp.lt.s32.totalorder %v3959, 0
      %vm4382 = vcmp.lt.s32.totalorder %v3970, 0
      %vm4383 = vcmp.lt.s32.totalorder %v3981, 0
      %vm4384 = vcmp.lt.s32.totalorder %v3992, 0
      %vm4385 = vcmp.lt.s32.totalorder %v4003, 0
      %vm4386 = vcmp.lt.s32.totalorder %v4014, 0
      %vm4387 = vcmp.lt.s32.totalorder %v4025, 0
      %vm4388 = vcmp.lt.s32.totalorder %v4036, 0
      %vm4389 = vcmp.lt.s32.totalorder %v4047, 0
      %vm4390 = vcmp.lt.s32.totalorder %v4058, 0
      %vm4391 = vcmp.lt.s32.totalorder %v4069, 0
      %vm4392 = vcmp.lt.s32.totalorder %v4080, 0
      %vm4393 = vcmp.lt.s32.totalorder %v4091, 0
      %vm4394 = vcmp.lt.s32.totalorder %v4102, 0
      %vm4395 = vcmp.lt.s32.totalorder %v4113, 0
      %vm4396 = vcmp.lt.s32.totalorder %v4124, 0
      %vm4397 = vcmp.lt.s32.totalorder %v4135, 0
      %vm4398 = vcmp.lt.s32.totalorder %v4146, 0
      %vm4399 = vcmp.lt.s32.totalorder %v4157, 0
      %vm4400 = vcmp.lt.s32.totalorder %v4168, 0
      %vm4401 = vcmp.lt.s32.totalorder %v4179, 0
      %vm4402 = vcmp.lt.s32.totalorder %v4190, 0
      %vm4403 = vcmp.lt.s32.totalorder %v4201, 0
      %vm4404 = vcmp.lt.s32.totalorder %v4212, 0
      %vm4405 = vcmp.lt.s32.totalorder %v4223, 0
      %vm4406 = vcmp.lt.s32.totalorder %v4234, 0
      %vm4407 = vcmp.lt.s32.totalorder %v4245, 0
      %vm4408 = vcmp.lt.s32.totalorder %v4256, 0
      %vm4409 = vcmp.lt.s32.totalorder %v4267, 0
      %vm4410 = vcmp.lt.s32.totalorder %v4278, 0
      %vm4411 = vcmp.lt.s32.totalorder %v4289, 0
      %vm4412 = vcmp.lt.s32.totalorder %v4300, 0
      %vm4413 = vcmp.lt.s32.totalorder %v4311, 0
      %vm4414 = vcmp.lt.s32.totalorder %v4322, 0
      %vm4415 = vcmp.lt.s32.totalorder %v4333, 0
      %vm4416 = vcmp.lt.s32.totalorder %v4344, 0
      %vm4417 = vmand %vm4381, %vm4345
      %vm4418 = vmand %vm4382, %vm4346
      %vm4419 = vmand %vm4383, %vm4347
      %vm4420 = vmand %vm4384, %vm4348
      %vm4421 = vmand %vm4385, %vm4349
      %vm4422 = vmand %vm4386, %vm4350
      %vm4423 = vmand %vm4387, %vm4351
      %vm4424 = vmand %vm4388, %vm4352
      %vm4425 = vmand %vm4389, %vm4353
      %vm4426 = vmand %vm4390, %vm4354
      %vm4427 = vmand %vm4391, %vm4355
      %vm4428 = vmand %vm4392, %vm4356
      %vm4429 = vmand %vm4393, %vm4357
      %vm4430 = vmand %vm4394, %vm4358
      %vm4431 = vmand %vm4395, %vm4359
      %vm4432 = vmand %vm4396, %vm4360
      %vm4433 = vmand %vm4397, %vm4361
      %vm4434 = vmand %vm4398, %vm4362
      %vm4435 = vmand %vm4399, %vm4363
      %vm4436 = vmand %vm4400, %vm4364
      %vm4437 = vmand %vm4401, %vm4365
      %vm4438 = vmand %vm4402, %vm4366
      %vm4439 = vmand %vm4403, %vm4367
      %vm4440 = vmand %vm4404, %vm4368
      %vm4441 = vmand %vm4405, %vm4369
      %vm4442 = vmand %vm4406, %vm4370
      %vm4443 = vmand %vm4407, %vm4371
      %vm4444 = vmand %vm4408, %vm4372
      %vm4445 = vmand %vm4409, %vm4373
      %vm4446 = vmand %vm4410, %vm4374
      %vm4447 = vmand %vm4411, %vm4375
      %vm4448 = vmand %vm4412, %vm4376
      %vm4449 = vmand %vm4413, %vm4377
      %vm4450 = vmand %vm4414, %vm4378
      %vm4451 = vmand %vm4415, %vm4379
      %vm4452 = vmand %vm4416, %vm4380
      %v4453 = vadd.s32 %v3959, 18
      %v4454 = vadd.s32 %v3970, 18
      %v4455 = vadd.s32 %v3981, 18
      %v4456 = vadd.s32 %v3992, 18
      %v4457 = vadd.s32 %v4003, 18
      %v4458 = vadd.s32 %v4014, 18
      %v4459 = vadd.s32 %v4025, 18
      %v4460 = vadd.s32 %v4036, 18
      %v4461 = vadd.s32 %v4047, 18
      %v4462 = vadd.s32 %v4058, 18
      %v4463 = vadd.s32 %v4069, 18
      %v4464 = vadd.s32 %v4080, 18
      %v4465 = vadd.s32 %v4091, 18
      %v4466 = vadd.s32 %v4102, 18
      %v4467 = vadd.s32 %v4113, 18
      %v4468 = vadd.s32 %v4124, 18
      %v4469 = vadd.s32 %v4135, 18
      %v4470 = vadd.s32 %v4146, 18
      %v4471 = vadd.s32 %v4157, 18
      %v4472 = vadd.s32 %v4168, 18
      %v4473 = vadd.s32 %v4179, 18
      %v4474 = vadd.s32 %v4190, 18
      %v4475 = vadd.s32 %v4201, 18
      %v4476 = vadd.s32 %v4212, 18
      %v4477 = vadd.s32 %v4223, 18
      %v4478 = vadd.s32 %v4234, 18
      %v4479 = vadd.s32 %v4245, 18
      %v4480 = vadd.s32 %v4256, 18
      %v4481 = vadd.s32 %v4267, 18
      %v4482 = vadd.s32 %v4278, 18
      %v4483 = vadd.s32 %v4289, 18
      %v4484 = vadd.s32 %v4300, 18
      %v4485 = vadd.s32 %v4311, 18
      %v4486 = vadd.s32 %v4322, 18
      %v4487 = vadd.s32 %v4333, 18
      %v4488 = vadd.s32 %v4344, 18
      %v4489 = vsel %vm4417, %v4453, %v3959
      %v4490 = vsel %vm4418, %v4454, %v3970
      %v4491 = vsel %vm4419, %v4455, %v3981
      %v4492 = vsel %vm4420, %v4456, %v3992
      %v4493 = vsel %vm4421, %v4457, %v4003
      %v4494 = vsel %vm4422, %v4458, %v4014
      %v4495 = vsel %vm4423, %v4459, %v4025
      %v4496 = vsel %vm4424, %v4460, %v4036
      %v4497 = vsel %vm4425, %v4461, %v4047
      %v4498 = vsel %vm4426, %v4462, %v4058
      %v4499 = vsel %vm4427, %v4463, %v4069
      %v4500 = vsel %vm4428, %v4464, %v4080
      %v4501 = vsel %vm4429, %v4465, %v4091
      %v4502 = vsel %vm4430, %v4466, %v4102
      %v4503 = vsel %vm4431, %v4467, %v4113
      %v4504 = vsel %vm4432, %v4468, %v4124
      %v4505 = vsel %vm4433, %v4469, %v4135
      %v4506 = vsel %vm4434, %v4470, %v4146
      %v4507 = vsel %vm4435, %v4471, %v4157
      %v4508 = vsel %vm4436, %v4472, %v4168
      %v4509 = vsel %vm4437, %v4473, %v4179
      %v4510 = vsel %vm4438, %v4474, %v4190
      %v4511 = vsel %vm4439, %v4475, %v4201
      %v4512 = vsel %vm4440, %v4476, %v4212
      %v4513 = vsel %vm4441, %v4477, %v4223
      %v4514 = vsel %vm4442, %v4478, %v4234
      %v4515 = vsel %vm4443, %v4479, %v4245
      %v4516 = vsel %vm4444, %v4480, %v4256
      %v4517 = vsel %vm4445, %v4481, %v4267
      %v4518 = vsel %vm4446, %v4482, %v4278
      %v4519 = vsel %vm4447, %v4483, %v4289
      %v4520 = vsel %vm4448, %v4484, %v4300
      %v4521 = vsel %vm4449, %v4485, %v4311
      %v4522 = vsel %vm4450, %v4486, %v4322
      %v4523 = vsel %vm4451, %v4487, %v4333
      %v4524 = vsel %vm4452, %v4488, %v4344
      %vm4525 = vcmp.lt.s32.totalorder %v4489, 16
      %vm4526 = vcmp.lt.s32.totalorder %v4490, 16
      %vm4527 = vcmp.lt.s32.totalorder %v4491, 16
      %vm4528 = vcmp.lt.s32.totalorder %v4492, 16
      %vm4529 = vcmp.lt.s32.totalorder %v4493, 16
      %vm4530 = vcmp.lt.s32.totalorder %v4494, 16
      %vm4531 = vcmp.lt.s32.totalorder %v4495, 16
      %vm4532 = vcmp.lt.s32.totalorder %v4496, 16
      %vm4533 = vcmp.lt.s32.totalorder %v4497, 16
      %vm4534 = vcmp.lt.s32.totalorder %v4498, 16
      %vm4535 = vcmp.lt.s32.totalorder %v4499, 16
      %vm4536 = vcmp.lt.s32.totalorder %v4500, 16
      %vm4537 = vcmp.lt.s32.totalorder %v4501, 16
      %vm4538 = vcmp.lt.s32.totalorder %v4502, 16
      %vm4539 = vcmp.lt.s32.totalorder %v4503, 16
      %vm4540 = vcmp.lt.s32.totalorder %v4504, 16
      %vm4541 = vcmp.lt.s32.totalorder %v4505, 16
      %vm4542 = vcmp.lt.s32.totalorder %v4506, 16
      %vm4543 = vcmp.lt.s32.totalorder %v4507, 16
      %vm4544 = vcmp.lt.s32.totalorder %v4508, 16
      %vm4545 = vcmp.lt.s32.totalorder %v4509, 16
      %vm4546 = vcmp.lt.s32.totalorder %v4510, 16
      %vm4547 = vcmp.lt.s32.totalorder %v4511, 16
      %vm4548 = vcmp.lt.s32.totalorder %v4512, 16
      %vm4549 = vcmp.lt.s32.totalorder %v4513, 16
      %vm4550 = vcmp.lt.s32.totalorder %v4514, 16
      %vm4551 = vcmp.lt.s32.totalorder %v4515, 16
      %vm4552 = vcmp.lt.s32.totalorder %v4516, 16
      %vm4553 = vcmp.lt.s32.totalorder %v4517, 16
      %vm4554 = vcmp.lt.s32.totalorder %v4518, 16
      %vm4555 = vcmp.lt.s32.totalorder %v4519, 16
      %vm4556 = vcmp.lt.s32.totalorder %v4520, 16
      %vm4557 = vcmp.lt.s32.totalorder %v4521, 16
      %vm4558 = vcmp.lt.s32.totalorder %v4522, 16
      %vm4559 = vcmp.lt.s32.totalorder %v4523, 16
      %vm4560 = vcmp.lt.s32.totalorder %v4524, 16
      %v4561 = vsel %vm4525, 1, 0
      %v4562 = vsel %vm4526, 1, 0
      %v4563 = vsel %vm4527, 1, 0
      %v4564 = vsel %vm4528, 1, 0
      %v4565 = vsel %vm4529, 1, 0
      %v4566 = vsel %vm4530, 1, 0
      %v4567 = vsel %vm4531, 1, 0
      %v4568 = vsel %vm4532, 1, 0
      %v4569 = vsel %vm4533, 1, 0
      %v4570 = vsel %vm4534, 1, 0
      %v4571 = vsel %vm4535, 1, 0
      %v4572 = vsel %vm4536, 1, 0
      %v4573 = vsel %vm4537, 1, 0
      %v4574 = vsel %vm4538, 1, 0
      %v4575 = vsel %vm4539, 1, 0
      %v4576 = vsel %vm4540, 1, 0
      %v4577 = vsel %vm4541, 1, 0
      %v4578 = vsel %vm4542, 1, 0
      %v4579 = vsel %vm4543, 1, 0
      %v4580 = vsel %vm4544, 1, 0
      %v4581 = vsel %vm4545, 1, 0
      %v4582 = vsel %vm4546, 1, 0
      %v4583 = vsel %vm4547, 1, 0
      %v4584 = vsel %vm4548, 1, 0
      %v4585 = vsel %vm4549, 1, 0
      %v4586 = vsel %vm4550, 1, 0
      %v4587 = vsel %vm4551, 1, 0
      %v4588 = vsel %vm4552, 1, 0
      %v4589 = vsel %vm4553, 1, 0
      %v4590 = vsel %vm4554, 1, 0
      %v4591 = vsel %vm4555, 1, 0
      %v4592 = vsel %vm4556, 1, 0
      %v4593 = vsel %vm4557, 1, 0
      %v4594 = vsel %vm4558, 1, 0
      %v4595 = vsel %vm4559, 1, 0
      %v4596 = vsel %vm4560, 1, 0
      %vm4597 = vcmp.eq.s32.totalorder %v4561, 1
      %vm4598 = vcmp.eq.s32.totalorder %v4562, 1
      %vm4599 = vcmp.eq.s32.totalorder %v4563, 1
      %vm4600 = vcmp.eq.s32.totalorder %v4564, 1
      %vm4601 = vcmp.eq.s32.totalorder %v4565, 1
      %vm4602 = vcmp.eq.s32.totalorder %v4566, 1
      %vm4603 = vcmp.eq.s32.totalorder %v4567, 1
      %vm4604 = vcmp.eq.s32.totalorder %v4568, 1
      %vm4605 = vcmp.eq.s32.totalorder %v4569, 1
      %vm4606 = vcmp.eq.s32.totalorder %v4570, 1
      %vm4607 = vcmp.eq.s32.totalorder %v4571, 1
      %vm4608 = vcmp.eq.s32.totalorder %v4572, 1
      %vm4609 = vcmp.eq.s32.totalorder %v4573, 1
      %vm4610 = vcmp.eq.s32.totalorder %v4574, 1
      %vm4611 = vcmp.eq.s32.totalorder %v4575, 1
      %vm4612 = vcmp.eq.s32.totalorder %v4576, 1
      %vm4613 = vcmp.eq.s32.totalorder %v4577, 1
      %vm4614 = vcmp.eq.s32.totalorder %v4578, 1
      %vm4615 = vcmp.eq.s32.totalorder %v4579, 1
      %vm4616 = vcmp.eq.s32.totalorder %v4580, 1
      %vm4617 = vcmp.eq.s32.totalorder %v4581, 1
      %vm4618 = vcmp.eq.s32.totalorder %v4582, 1
      %vm4619 = vcmp.eq.s32.totalorder %v4583, 1
      %vm4620 = vcmp.eq.s32.totalorder %v4584, 1
      %vm4621 = vcmp.eq.s32.totalorder %v4585, 1
      %vm4622 = vcmp.eq.s32.totalorder %v4586, 1
      %vm4623 = vcmp.eq.s32.totalorder %v4587, 1
      %vm4624 = vcmp.eq.s32.totalorder %v4588, 1
      %vm4625 = vcmp.eq.s32.totalorder %v4589, 1
      %vm4626 = vcmp.eq.s32.totalorder %v4590, 1
      %vm4627 = vcmp.eq.s32.totalorder %v4591, 1
      %vm4628 = vcmp.eq.s32.totalorder %v4592, 1
      %vm4629 = vcmp.eq.s32.totalorder %v4593, 1
      %vm4630 = vcmp.eq.s32.totalorder %v4594, 1
      %vm4631 = vcmp.eq.s32.totalorder %v4595, 1
      %vm4632 = vcmp.eq.s32.totalorder %v4596, 1
      %v4633 = vsel %vm4597, %v3876, 0.0
      %v4634 = vsel %vm4598, %v3877, 0.0
      %v4635 = vsel %vm4599, %v3878, 0.0
      %v4636 = vsel %vm4600, %v3879, 0.0
      %v4637 = vsel %vm4601, %v3880, 0.0
      %v4638 = vsel %vm4602, %v3881, 0.0
      %v4639 = vsel %vm4603, %v3882, 0.0
      %v4640 = vsel %vm4604, %v3883, 0.0
      %v4641 = vsel %vm4605, %v3884, 0.0
      %v4642 = vsel %vm4606, %v3885, 0.0
      %v4643 = vsel %vm4607, %v3886, 0.0
      %v4644 = vsel %vm4608, %v3887, 0.0
      %v4645 = vsel %vm4609, %v3888, 0.0
      %v4646 = vsel %vm4610, %v3889, 0.0
      %v4647 = vsel %vm4611, %v3890, 0.0
      %v4648 = vsel %vm4612, %v3891, 0.0
      %v4649 = vsel %vm4613, %v3892, 0.0
      %v4650 = vsel %vm4614, %v3893, 0.0
      %v4651 = vsel %vm4615, %v3894, 0.0
      %v4652 = vsel %vm4616, %v3895, 0.0
      %v4653 = vsel %vm4617, %v3896, 0.0
      %v4654 = vsel %vm4618, %v3897, 0.0
      %v4655 = vsel %vm4619, %v3898, 0.0
      %v4656 = vsel %vm4620, %v3899, 0.0
      %v4657 = vsel %vm4621, %v3900, 0.0
      %v4658 = vsel %vm4622, %v3901, 0.0
      %v4659 = vsel %vm4623, %v3902, 0.0
      %v4660 = vsel %vm4624, %v3903, 0.0
      %v4661 = vsel %vm4625, %v3904, 0.0
      %v4662 = vsel %vm4626, %v3905, 0.0
      %v4663 = vsel %vm4627, %v3906, 0.0
      %v4664 = vsel %vm4628, %v3907, 0.0
      %v4665 = vsel %vm4629, %v3908, 0.0
      %v4666 = vsel %vm4630, %v3909, 0.0
      %v4667 = vsel %vm4631, %v3910, 0.0
      %v4668 = vsel %vm4632, %v3911, 0.0
      %v4669 = vpack.c.bf16 %v4634, %v4633
      %v4670 = vpack.c.bf16 %v4636, %v4635
      %v4671 = vpack.c.bf16 %v4638, %v4637
      %v4672 = vpack.c.bf16 %v4640, %v4639
      %v4673 = vpack.c.bf16 %v4642, %v4641
      %v4674 = vpack.c.bf16 %v4644, %v4643
      %v4675 = vpack.c.bf16 %v4646, %v4645
      %v4676 = vpack.c.bf16 %v4648, %v4647
      %v4677 = vpack.c.bf16 %v4650, %v4649
      %v4678 = vpack.c.bf16 %v4652, %v4651
      %v4679 = vpack.c.bf16 %v4654, %v4653
      %v4680 = vpack.c.bf16 %v4656, %v4655
      %v4681 = vpack.c.bf16 %v4658, %v4657
      %v4682 = vpack.c.bf16 %v4660, %v4659
      %v4683 = vpack.c.bf16 %v4662, %v4661
      %v4684 = vpack.c.bf16 %v4664, %v4663
      %v4685 = vpack.c.bf16 %v4666, %v4665
      %v4686 = vpack.c.bf16 %v4668, %v4667
      %vm4687 = vcmask 125952
      %4688 = vst.msk [vmem:[#allocation2] sm:$0xf] %vm4687, 0
      %4689 = vst.msk [vmem:[#allocation2 + $0x4] sm:$0xf] %vm4687, 0
      %vm4690 = vcmask 123904
      %vm4691 = vsmask.f32 1280
      %vm4692 = vmand %vm4690, %vm4691
      %v4693 = vld [vmem:[#allocation2 + $0x8] sm:$0x3]
      %v4694 = vsel %vm4692, 0, %v4693
      %4695 = vst [vmem:[#allocation2 + $0x8] sm:$0x3] %v4694
      %vm4696 = vcmask 125953
      %vm4697 = vsmask.f32 7942
      %vm4698 = vmand %vm4696, %vm4697
      %v4699 = vld [vmem:[#allocation2 + $0x98] sm:$0xe]
      %v4700 = vsel %vm4698, 0, %v4699
      %4701 = vst [vmem:[#allocation2 + $0x98] sm:$0xe] %v4700
      %4702 = vst.msk [vmem:[#allocation2 + $0x9c] sm:$0xf] %vm4687, 0
      %4703 = vst.msk [vmem:[#allocation2 + $0xa0] sm:$0xf] %vm4687, 0
      %4704 = vst.msk [vmem:[#allocation2 + $0xa4] sm:$0xf] %vm4687, 0
      %vm4705 = vcmask 124928
      %4706 = vst.msk [vmem:[#allocation2 + $0xa8] sm:$0x7] %vm4705, 0
      %v4725 = vunpack.c.l.b16 %v4669
      %v4726 = vunpack.c.h.b16 %v4669
      %v4727 = vunpack.c.l.b16 %v4670
      %v4728 = vunpack.c.h.b16 %v4670
      %v4729 = vunpack.c.l.b16 %v4671
      %v4730 = vunpack.c.h.b16 %v4671
      %v4731 = vunpack.c.l.b16 %v4672
      %v4732 = vunpack.c.h.b16 %v4672
      %v4733 = vunpack.c.l.b16 %v4673
      %v4734 = vunpack.c.h.b16 %v4673
      %v4735 = vunpack.c.l.b16 %v4674
      %v4736 = vunpack.c.h.b16 %v4674
      %v4737 = vunpack.c.l.b16 %v4675
      %v4738 = vunpack.c.h.b16 %v4675
      %v4739 = vunpack.c.l.b16 %v4676
      %v4740 = vunpack.c.h.b16 %v4676
      %v4741 = vunpack.c.l.b16 %v4677
      %v4742 = vunpack.c.h.b16 %v4677
      %v4743 = vunpack.c.l.b16 %v4678
      %v4744 = vunpack.c.h.b16 %v4678
      %v4745 = vunpack.c.l.b16 %v4679
      %v4746 = vunpack.c.h.b16 %v4679
      %v4747 = vunpack.c.l.b16 %v4680
      %v4748 = vunpack.c.h.b16 %v4680
      %v4749 = vunpack.c.l.b16 %v4681
      %v4750 = vunpack.c.h.b16 %v4681
      %v4751 = vunpack.c.l.b16 %v4682
      %v4752 = vunpack.c.h.b16 %v4682
      %v4753 = vunpack.c.l.b16 %v4683
      %v4754 = vunpack.c.h.b16 %v4683
      %v4755 = vunpack.c.l.b16 %v4684
      %v4756 = vunpack.c.h.b16 %v4684
      %v4757 = vunpack.c.l.b16 %v4685
      %v4758 = vunpack.c.h.b16 %v4685
      %v4759 = vunpack.c.l.b16 %v4686
      %v4760 = vunpack.c.h.b16 %v4686
      %v4761 = vpack.c.b16 %v4725, %v4725
      %v4762 = vpack.c.b16 %v4726, %v4726
      %v4763 = vpack.c.b16 %v4727, %v4727
      %v4764 = vpack.c.b16 %v4728, %v4728
      %v4765 = vpack.c.b16 %v4729, %v4729
      %v4766 = vpack.c.b16 %v4730, %v4730
      %v4767 = vpack.c.b16 %v4731, %v4731
      %v4768 = vpack.c.b16 %v4732, %v4732
      %v4769 = vpack.c.b16 %v4733, %v4733
      %v4770 = vpack.c.b16 %v4734, %v4734
      %v4771 = vpack.c.b16 %v4735, %v4735
      %v4772 = vpack.c.b16 %v4736, %v4736
      %v4773 = vpack.c.b16 %v4737, %v4737
      %v4774 = vpack.c.b16 %v4738, %v4738
      %v4775 = vpack.c.b16 %v4739, %v4739
      %v4776 = vpack.c.b16 %v4740, %v4740
      %v4777 = vpack.c.b16 %v4741, %v4741
      %v4778 = vpack.c.b16 %v4742, %v4742
      %v4779 = vpack.c.b16 %v4743, %v4743
      %v4780 = vpack.c.b16 %v4744, %v4744
      %v4781 = vpack.c.b16 %v4745, %v4745
      %v4782 = vpack.c.b16 %v4746, %v4746
      %v4783 = vpack.c.b16 %v4747, %v4747
      %v4784 = vpack.c.b16 %v4748, %v4748
      %v4785 = vpack.c.b16 %v4749, %v4749
      %v4786 = vpack.c.b16 %v4750, %v4750
      %v4787 = vpack.c.b16 %v4751, %v4751
      %v4788 = vpack.c.b16 %v4752, %v4752
      %v4789 = vpack.c.b16 %v4753, %v4753
      %v4790 = vpack.c.b16 %v4754, %v4754
      %v4791 = vpack.c.b16 %v4755, %v4755
      %v4792 = vpack.c.b16 %v4756, %v4756
      %v4793 = vpack.c.b16 %v4757, %v4757
      %v4794 = vpack.c.b16 %v4758, %v4758
      %v4795 = vpack.c.b16 %v4759, %v4759
      %v4796 = vpack.c.b16 %v4760, %v4760
      %vm4797 = vsmask.f32 5392
      %vm4798 = vmor %vm4691, %vm4797
      %v4800 = vshrl.u32 %v4761, 16
      %v4802 = vrot.slane %v4800, 6
      %v4803 = vshll.u32 %v4761, 16
      %v4805 = vrot.slane %v4803, 7
      %v4806 = vor.u32 %v4802, %v4805
      %v4807 = vrot.slane %v4806, 4
      %v4809 = vshrl.u32 %v4762, 16
      %v4811 = vrot.slane %v4809, 6
      %v4812 = vshll.u32 %v4762, 16
      %v4814 = vrot.slane %v4812, 7
      %v4815 = vor.u32 %v4811, %v4814
      %v4816 = vsel %vm4798, %v4807, %v4815
      %v4817 = vrot.slane %v4815, 4
      %v4819 = vshrl.u32 %v4763, 16
      %v4821 = vrot.slane %v4819, 6
      %v4822 = vshll.u32 %v4763, 16
      %v4824 = vrot.slane %v4822, 7
      %v4825 = vor.u32 %v4821, %v4824
      %v4826 = vsel %vm4798, %v4817, %v4825
      %v4827 = vrot.slane %v4825, 4
      %v4829 = vshrl.u32 %v4764, 16
      %v4831 = vrot.slane %v4829, 6
      %v4832 = vshll.u32 %v4764, 16
      %v4834 = vrot.slane %v4832, 7
      %v4835 = vor.u32 %v4831, %v4834
      %v4836 = vsel %vm4798, %v4827, %v4835
      %v4837 = vrot.slane %v4835, 4
      %v4839 = vshrl.u32 %v4765, 16
      %v4841 = vrot.slane %v4839, 6
      %v4842 = vshll.u32 %v4765, 16
      %v4844 = vrot.slane %v4842, 7
      %v4845 = vor.u32 %v4841, %v4844
      %v4846 = vsel %vm4798, %v4837, %v4845
      %v4847 = vrot.slane %v4845, 4
      %v4849 = vshrl.u32 %v4766, 16
      %v4851 = vrot.slane %v4849, 6
      %v4852 = vshll.u32 %v4766, 16
      %v4854 = vrot.slane %v4852, 7
      %v4855 = vor.u32 %v4851, %v4854
      %v4856 = vsel %vm4798, %v4847, %v4855
      %v4857 = vrot.slane %v4855, 4
      %v4859 = vshrl.u32 %v4767, 16
      %v4861 = vrot.slane %v4859, 6
      %v4862 = vshll.u32 %v4767, 16
      %v4864 = vrot.slane %v4862, 7
      %v4865 = vor.u32 %v4861, %v4864
      %v4866 = vsel %vm4798, %v4857, %v4865
      %v4867 = vrot.slane %v4865, 4
      %v4869 = vshrl.u32 %v4768, 16
      %v4871 = vrot.slane %v4869, 6
      %v4872 = vshll.u32 %v4768, 16
      %v4874 = vrot.slane %v4872, 7
      %v4875 = vor.u32 %v4871, %v4874
      %v4876 = vsel %vm4798, %v4867, %v4875
      %v4877 = vrot.slane %v4875, 4
      %v4879 = vshrl.u32 %v4769, 16
      %v4881 = vrot.slane %v4879, 6
      %v4882 = vshll.u32 %v4769, 16
      %v4884 = vrot.slane %v4882, 7
      %v4885 = vor.u32 %v4881, %v4884
      %v4886 = vsel %vm4798, %v4877, %v4885
      %v4887 = vrot.slane %v4885, 4
      %v4889 = vshrl.u32 %v4770, 16
      %v4891 = vrot.slane %v4889, 6
      %v4892 = vshll.u32 %v4770, 16
      %v4894 = vrot.slane %v4892, 7
      %v4895 = vor.u32 %v4891, %v4894
      %v4896 = vsel %vm4798, %v4887, %v4895
      %v4897 = vrot.slane %v4895, 4
      %v4899 = vshrl.u32 %v4771, 16
      %v4901 = vrot.slane %v4899, 6
      %v4902 = vshll.u32 %v4771, 16
      %v4904 = vrot.slane %v4902, 7
      %v4905 = vor.u32 %v4901, %v4904
      %v4906 = vsel %vm4798, %v4897, %v4905
      %v4907 = vrot.slane %v4905, 4
      %v4909 = vshrl.u32 %v4772, 16
      %v4911 = vrot.slane %v4909, 6
      %v4912 = vshll.u32 %v4772, 16
      %v4914 = vrot.slane %v4912, 7
      %v4915 = vor.u32 %v4911, %v4914
      %v4916 = vsel %vm4798, %v4907, %v4915
      %v4917 = vrot.slane %v4915, 4
      %v4919 = vshrl.u32 %v4773, 16
      %v4921 = vrot.slane %v4919, 6
      %v4922 = vshll.u32 %v4773, 16
      %v4924 = vrot.slane %v4922, 7
      %v4925 = vor.u32 %v4921, %v4924
      %v4926 = vsel %vm4798, %v4917, %v4925
      %v4927 = vrot.slane %v4925, 4
      %v4929 = vshrl.u32 %v4774, 16
      %v4931 = vrot.slane %v4929, 6
      %v4932 = vshll.u32 %v4774, 16
      %v4934 = vrot.slane %v4932, 7
      %v4935 = vor.u32 %v4931, %v4934
      %v4936 = vsel %vm4798, %v4927, %v4935
      %v4937 = vrot.slane %v4935, 4
      %v4939 = vshrl.u32 %v4775, 16
      %v4941 = vrot.slane %v4939, 6
      %v4942 = vshll.u32 %v4775, 16
      %v4944 = vrot.slane %v4942, 7
      %v4945 = vor.u32 %v4941, %v4944
      %v4946 = vsel %vm4798, %v4937, %v4945
      %v4947 = vrot.slane %v4945, 4
      %v4949 = vshrl.u32 %v4776, 16
      %v4951 = vrot.slane %v4949, 6
      %v4952 = vshll.u32 %v4776, 16
      %v4954 = vrot.slane %v4952, 7
      %v4955 = vor.u32 %v4951, %v4954
      %v4956 = vsel %vm4798, %v4947, %v4955
      %v4957 = vrot.slane %v4955, 4
      %v4959 = vshrl.u32 %v4777, 16
      %v4961 = vrot.slane %v4959, 6
      %v4962 = vshll.u32 %v4777, 16
      %v4964 = vrot.slane %v4962, 7
      %v4965 = vor.u32 %v4961, %v4964
      %v4966 = vsel %vm4798, %v4957, %v4965
      %v4967 = vrot.slane %v4965, 4
      %v4969 = vshrl.u32 %v4778, 16
      %v4971 = vrot.slane %v4969, 6
      %v4972 = vshll.u32 %v4778, 16
      %v4974 = vrot.slane %v4972, 7
      %v4975 = vor.u32 %v4971, %v4974
      %v4976 = vsel %vm4798, %v4967, %v4975
      %v4977 = vrot.slane %v4975, 4
      %v4979 = vshrl.u32 %v4779, 16
      %v4981 = vrot.slane %v4979, 6
      %v4982 = vshll.u32 %v4779, 16
      %v4984 = vrot.slane %v4982, 7
      %v4985 = vor.u32 %v4981, %v4984
      %v4986 = vsel %vm4798, %v4977, %v4985
      %v4987 = vrot.slane %v4985, 4
      %v4989 = vshrl.u32 %v4780, 16
      %v4991 = vrot.slane %v4989, 6
      %v4992 = vshll.u32 %v4780, 16
      %v4994 = vrot.slane %v4992, 7
      %v4995 = vor.u32 %v4991, %v4994
      %v4996 = vsel %vm4798, %v4987, %v4995
      %v4997 = vrot.slane %v4995, 4
      %v4999 = vshrl.u32 %v4781, 16
      %v5001 = vrot.slane %v4999, 6
      %v5002 = vshll.u32 %v4781, 16
      %v5004 = vrot.slane %v5002, 7
      %v5005 = vor.u32 %v5001, %v5004
      %v5006 = vsel %vm4798, %v4997, %v5005
      %v5007 = vrot.slane %v5005, 4
      %v5009 = vshrl.u32 %v4782, 16
      %v5011 = vrot.slane %v5009, 6
      %v5012 = vshll.u32 %v4782, 16
      %v5014 = vrot.slane %v5012, 7
      %v5015 = vor.u32 %v5011, %v5014
      %v5016 = vsel %vm4798, %v5007, %v5015
      %v5017 = vrot.slane %v5015, 4
      %v5019 = vshrl.u32 %v4783, 16
      %v5021 = vrot.slane %v5019, 6
      %v5022 = vshll.u32 %v4783, 16
      %v5024 = vrot.slane %v5022, 7
      %v5025 = vor.u32 %v5021, %v5024
      %v5026 = vsel %vm4798, %v5017, %v5025
      %v5027 = vrot.slane %v5025, 4
      %v5029 = vshrl.u32 %v4784, 16
      %v5031 = vrot.slane %v5029, 6
      %v5032 = vshll.u32 %v4784, 16
      %v5034 = vrot.slane %v5032, 7
      %v5035 = vor.u32 %v5031, %v5034
      %v5036 = vsel %vm4798, %v5027, %v5035
      %v5037 = vrot.slane %v5035, 4
      %v5039 = vshrl.u32 %v4785, 16
      %v5041 = vrot.slane %v5039, 6
      %v5042 = vshll.u32 %v4785, 16
      %v5044 = vrot.slane %v5042, 7
      %v5045 = vor.u32 %v5041, %v5044
      %v5046 = vsel %vm4798, %v5037, %v5045
      %v5047 = vrot.slane %v5045, 4
      %v5049 = vshrl.u32 %v4786, 16
      %v5051 = vrot.slane %v5049, 6
      %v5052 = vshll.u32 %v4786, 16
      %v5054 = vrot.slane %v5052, 7
      %v5055 = vor.u32 %v5051, %v5054
      %v5056 = vsel %vm4798, %v5047, %v5055
      %v5057 = vrot.slane %v5055, 4
      %v5059 = vshrl.u32 %v4787, 16
      %v5061 = vrot.slane %v5059, 6
      %v5062 = vshll.u32 %v4787, 16
      %v5064 = vrot.slane %v5062, 7
      %v5065 = vor.u32 %v5061, %v5064
      %v5066 = vsel %vm4798, %v5057, %v5065
      %v5067 = vrot.slane %v5065, 4
      %v5069 = vshrl.u32 %v4788, 16
      %v5071 = vrot.slane %v5069, 6
      %v5072 = vshll.u32 %v4788, 16
      %v5074 = vrot.slane %v5072, 7
      %v5075 = vor.u32 %v5071, %v5074
      %v5076 = vsel %vm4798, %v5067, %v5075
      %v5077 = vrot.slane %v5075, 4
      %v5079 = vshrl.u32 %v4789, 16
      %v5081 = vrot.slane %v5079, 6
      %v5082 = vshll.u32 %v4789, 16
      %v5084 = vrot.slane %v5082, 7
      %v5085 = vor.u32 %v5081, %v5084
      %v5086 = vsel %vm4798, %v5077, %v5085
      %v5087 = vrot.slane %v5085, 4
      %v5089 = vshrl.u32 %v4790, 16
      %v5091 = vrot.slane %v5089, 6
      %v5092 = vshll.u32 %v4790, 16
      %v5094 = vrot.slane %v5092, 7
      %v5095 = vor.u32 %v5091, %v5094
      %v5096 = vsel %vm4798, %v5087, %v5095
      %v5097 = vrot.slane %v5095, 4
      %v5099 = vshrl.u32 %v4791, 16
      %v5101 = vrot.slane %v5099, 6
      %v5102 = vshll.u32 %v4791, 16
      %v5104 = vrot.slane %v5102, 7
      %v5105 = vor.u32 %v5101, %v5104
      %v5106 = vsel %vm4798, %v5097, %v5105
      %v5107 = vrot.slane %v5105, 4
      %v5109 = vshrl.u32 %v4792, 16
      %v5111 = vrot.slane %v5109, 6
      %v5112 = vshll.u32 %v4792, 16
      %v5114 = vrot.slane %v5112, 7
      %v5115 = vor.u32 %v5111, %v5114
      %v5116 = vsel %vm4798, %v5107, %v5115
      %v5117 = vrot.slane %v5115, 4
      %v5119 = vshrl.u32 %v4793, 16
      %v5121 = vrot.slane %v5119, 6
      %v5122 = vshll.u32 %v4793, 16
      %v5124 = vrot.slane %v5122, 7
      %v5125 = vor.u32 %v5121, %v5124
      %v5126 = vsel %vm4798, %v5117, %v5125
      %v5127 = vrot.slane %v5125, 4
      %v5129 = vshrl.u32 %v4794, 16
      %v5131 = vrot.slane %v5129, 6
      %v5132 = vshll.u32 %v4794, 16
      %v5134 = vrot.slane %v5132, 7
      %v5135 = vor.u32 %v5131, %v5134
      %v5136 = vsel %vm4798, %v5127, %v5135
      %v5137 = vrot.slane %v5135, 4
      %v5139 = vshrl.u32 %v4795, 16
      %v5141 = vrot.slane %v5139, 6
      %v5142 = vshll.u32 %v4795, 16
      %v5144 = vrot.slane %v5142, 7
      %v5145 = vor.u32 %v5141, %v5144
      %v5146 = vsel %vm4798, %v5137, %v5145
      %v5147 = vrot.slane %v5145, 4
      %v5149 = vshrl.u32 %v4796, 16
      %v5151 = vrot.slane %v5149, 6
      %v5152 = vshll.u32 %v4796, 16
      %v5154 = vrot.slane %v5152, 7
      %v5155 = vor.u32 %v5151, %v5154
      %v5156 = vsel %vm4798, %v5147, %v5155
      %v5157 = vrot.slane %v5155, 4
      %v5195 = vld [vmem:[#allocation2 + $0x8] sm:$0xe]
      %v5196 = vsel %vm4698, %v4806, %v5195
      %5197 = vst [vmem:[#allocation2 + $0x8] sm:$0xe] %v5196
      %5198 = vst.msk [vmem:[#allocation2 + $0xc] sm:$0xf] %vm4687, %v4816
      %5199 = vst.msk [vmem:[#allocation2 + $0x10] sm:$0xf] %vm4687, %v4826
      %5200 = vst.msk [vmem:[#allocation2 + $0x14] sm:$0xf] %vm4687, %v4836
      %5201 = vst.msk [vmem:[#allocation2 + $0x18] sm:$0xf] %vm4687, %v4846
      %5202 = vst.msk [vmem:[#allocation2 + $0x1c] sm:$0xf] %vm4687, %v4856
      %5203 = vst.msk [vmem:[#allocation2 + $0x20] sm:$0xf] %vm4687, %v4866
      %5204 = vst.msk [vmem:[#allocation2 + $0x24] sm:$0xf] %vm4687, %v4876
      %5205 = vst.msk [vmem:[#allocation2 + $0x28] sm:$0xf] %vm4687, %v4886
      %5206 = vst.msk [vmem:[#allocation2 + $0x2c] sm:$0xf] %vm4687, %v4896
      %5207 = vst.msk [vmem:[#allocation2 + $0x30] sm:$0xf] %vm4687, %v4906
      %5208 = vst.msk [vmem:[#allocation2 + $0x34] sm:$0xf] %vm4687, %v4916
      %5209 = vst.msk [vmem:[#allocation2 + $0x38] sm:$0xf] %vm4687, %v4926
      %5210 = vst.msk [vmem:[#allocation2 + $0x3c] sm:$0xf] %vm4687, %v4936
      %5211 = vst.msk [vmem:[#allocation2 + $0x40] sm:$0xf] %vm4687, %v4946
      %5212 = vst.msk [vmem:[#allocation2 + $0x44] sm:$0xf] %vm4687, %v4956
      %5213 = vst.msk [vmem:[#allocation2 + $0x48] sm:$0xf] %vm4687, %v4966
      %5214 = vst.msk [vmem:[#allocation2 + $0x4c] sm:$0xf] %vm4687, %v4976
      %5215 = vst.msk [vmem:[#allocation2 + $0x50] sm:$0xf] %vm4687, %v4986
      %5216 = vst.msk [vmem:[#allocation2 + $0x54] sm:$0xf] %vm4687, %v4996
      %5217 = vst.msk [vmem:[#allocation2 + $0x58] sm:$0xf] %vm4687, %v5006
      %5218 = vst.msk [vmem:[#allocation2 + $0x5c] sm:$0xf] %vm4687, %v5016
      %5219 = vst.msk [vmem:[#allocation2 + $0x60] sm:$0xf] %vm4687, %v5026
      %5220 = vst.msk [vmem:[#allocation2 + $0x64] sm:$0xf] %vm4687, %v5036
      %5221 = vst.msk [vmem:[#allocation2 + $0x68] sm:$0xf] %vm4687, %v5046
      %5222 = vst.msk [vmem:[#allocation2 + $0x6c] sm:$0xf] %vm4687, %v5056
      %5223 = vst.msk [vmem:[#allocation2 + $0x70] sm:$0xf] %vm4687, %v5066
      %5224 = vst.msk [vmem:[#allocation2 + $0x74] sm:$0xf] %vm4687, %v5076
      %5225 = vst.msk [vmem:[#allocation2 + $0x78] sm:$0xf] %vm4687, %v5086
      %5226 = vst.msk [vmem:[#allocation2 + $0x7c] sm:$0xf] %vm4687, %v5096
      %5227 = vst.msk [vmem:[#allocation2 + $0x80] sm:$0xf] %vm4687, %v5106
      %5228 = vst.msk [vmem:[#allocation2 + $0x84] sm:$0xf] %vm4687, %v5116
      %5229 = vst.msk [vmem:[#allocation2 + $0x88] sm:$0xf] %vm4687, %v5126
      %5230 = vst.msk [vmem:[#allocation2 + $0x8c] sm:$0xf] %vm4687, %v5136
      %5231 = vst.msk [vmem:[#allocation2 + $0x90] sm:$0xf] %vm4687, %v5146
      %5232 = vst.msk [vmem:[#allocation2 + $0x94] sm:$0xf] %vm4687, %v5156
      %v5233 = vld [vmem:[#allocation2 + $0x98] sm:$0x3]
      %v5234 = vsel %vm4692, %v5157, %v5233
      %5235 = vst [vmem:[#allocation2 + $0x98] sm:$0x3] %v5234
      %v5236 = vld [vmem:[#allocation2] sm:$0xf]
      %v5237 = vld [vmem:[#allocation2 + $0x4] sm:$0xf]
      %v5238 = vld [vmem:[#allocation2 + $0x8] sm:$0xf]
      %v5239 = vld [vmem:[#allocation2 + $0xc] sm:$0xf]
      %v5240 = vld [vmem:[#allocation2 + $0x10] sm:$0xf]
      %v5241 = vld [vmem:[#allocation2 + $0x14] sm:$0xf]
      %v5242 = vld [vmem:[#allocation2 + $0x18] sm:$0xf]
      %v5243 = vld [vmem:[#allocation2 + $0x1c] sm:$0xf]
      %v5244 = vld [vmem:[#allocation2 + $0x20] sm:$0xf]
      %v5245 = vld [vmem:[#allocation2 + $0x24] sm:$0xf]
      %v5246 = vld [vmem:[#allocation2 + $0x28] sm:$0xf]
      %v5247 = vld [vmem:[#allocation2 + $0x2c] sm:$0xf]
      %v5248 = vld [vmem:[#allocation2 + $0x30] sm:$0xf]
      %v5249 = vld [vmem:[#allocation2 + $0x34] sm:$0xf]
      %v5250 = vld [vmem:[#allocation2 + $0x38] sm:$0xf]
      %v5251 = vld [vmem:[#allocation2 + $0x3c] sm:$0xf]
      %v5252 = vld [vmem:[#allocation2 + $0x40] sm:$0xf]
      %v5253 = vld [vmem:[#allocation2 + $0x44] sm:$0xf]
      %v5254 = vld [vmem:[#allocation2 + $0x48] sm:$0xf]
      %v5255 = vld [vmem:[#allocation2 + $0x4c] sm:$0xf]
      %v5256 = vld [vmem:[#allocation2 + $0x50] sm:$0xf]
      %v5257 = vld [vmem:[#allocation2 + $0x54] sm:$0xf]
      %v5258 = vld [vmem:[#allocation2 + $0x58] sm:$0xf]
      %v5259 = vld [vmem:[#allocation2 + $0x5c] sm:$0xf]
      %v5260 = vld [vmem:[#allocation2 + $0x60] sm:$0xf]
      %v5261 = vld [vmem:[#allocation2 + $0x64] sm:$0xf]
      %v5262 = vld [vmem:[#allocation2 + $0x68] sm:$0xf]
      %v5263 = vld [vmem:[#allocation2 + $0x6c] sm:$0xf]
      %v5264 = vld [vmem:[#allocation2 + $0x70] sm:$0xf]
      %v5265 = vld [vmem:[#allocation2 + $0x74] sm:$0xf]
      %v5266 = vld [vmem:[#allocation2 + $0x78] sm:$0xf]
      %v5267 = vld [vmem:[#allocation2 + $0x7c] sm:$0xf]
      %v5268 = vld [vmem:[#allocation2 + $0x80] sm:$0xf]
      %v5269 = vld [vmem:[#allocation2 + $0x84] sm:$0xf]
      %v5270 = vld [vmem:[#allocation2 + $0x88] sm:$0xf]
      %v5271 = vld [vmem:[#allocation2 + $0x8c] sm:$0xf]
      %v5272 = vld [vmem:[%s4] sm:$0xf]
      %v5273 = vld [vmem:[%s4 + $0x4] sm:$0xf]
      %v5274 = vld [vmem:[#allocation2 + $0x90] sm:$0x1]
      %s5275 = scalar_lea.vmem %s4, 8
      %v5276 = vld [vmem:[%s5275] sm:$0xf]
      %v5277 = vld [vmem:[%s5275 + $0x4] sm:$0xf]
      %v5315 = vunpack.c.l.b16 %v5236
      %v5316 = vunpack.c.l.b16 %v5237
      %v5317 = vunpack.c.l.b16 %v5238
      %v5318 = vunpack.c.l.b16 %v5239
      %v5319 = vunpack.c.l.b16 %v5240
      %v5320 = vunpack.c.l.b16 %v5241
      %v5321 = vunpack.c.l.b16 %v5242
      %v5322 = vunpack.c.l.b16 %v5243
      %v5323 = vunpack.c.l.b16 %v5244
      %v5324 = vunpack.c.l.b16 %v5245
      %v5325 = vunpack.c.l.b16 %v5246
      %v5326 = vunpack.c.l.b16 %v5247
      %v5327 = vunpack.c.l.b16 %v5248
      %v5328 = vunpack.c.l.b16 %v5249
      %v5329 = vunpack.c.l.b16 %v5250
      %v5330 = vunpack.c.l.b16 %v5251
      %v5331 = vunpack.c.l.b16 %v5252
      %v5332 = vunpack.c.l.b16 %v5253
      %v5333 = vunpack.c.l.b16 %v5254
      %v5334 = vunpack.c.l.b16 %v5255
      %v5335 = vunpack.c.l.b16 %v5256
      %v5336 = vunpack.c.l.b16 %v5257
      %v5337 = vunpack.c.l.b16 %v5258
      %v5338 = vunpack.c.l.b16 %v5259
      %v5339 = vunpack.c.l.b16 %v5260
      %v5340 = vunpack.c.l.b16 %v5261
      %v5341 = vunpack.c.l.b16 %v5262
      %v5342 = vunpack.c.l.b16 %v5263
      %v5343 = vunpack.c.l.b16 %v5264
      %v5344 = vunpack.c.l.b16 %v5265
      %v5345 = vunpack.c.l.b16 %v5266
      %v5346 = vunpack.c.l.b16 %v5267
      %v5347 = vunpack.c.l.b16 %v5268
      %v5348 = vunpack.c.l.b16 %v5269
      %v5349 = vunpack.c.l.b16 %v5270
      %v5350 = vunpack.c.l.b16 %v5271
      %v5351 = vunpack.c.l.b16 %v5274
      %v5352 = vpack.c.b16 %v5316, %v5315
      %v5353 = vpack.c.b16 %v5318, %v5317
      %v5354 = vpack.c.b16 %v5320, %v5319
      %v5355 = vpack.c.b16 %v5322, %v5321
      %v5356 = vpack.c.b16 %v5324, %v5323
      %v5357 = vpack.c.b16 %v5326, %v5325
      %v5358 = vpack.c.b16 %v5328, %v5327
      %v5359 = vpack.c.b16 %v5330, %v5329
      %v5360 = vpack.c.b16 %v5332, %v5331
      %v5361 = vpack.c.b16 %v5334, %v5333
      %v5362 = vpack.c.b16 %v5336, %v5335
      %v5363 = vpack.c.b16 %v5338, %v5337
      %v5364 = vpack.c.b16 %v5340, %v5339
      %v5365 = vpack.c.b16 %v5342, %v5341
      %v5366 = vpack.c.b16 %v5344, %v5343
      %v5367 = vpack.c.b16 %v5346, %v5345
      %v5368 = vpack.c.b16 %v5348, %v5347
      %v5369 = vpack.c.b16 %v5350, %v5349
      %v5370 = vpack.c.b16 %v5351, %v5351
      %v5372 = vshrl.u32 %v5352, 16
      %v5374 = vshll.u32 %v5352, 16
      %v5376 = vrot.slane %v5374, 1
      %v5377 = vor.u32 %v5372, %v5376
      %v5379 = vshll.u32 %v5353, 16
      %v5381 = vrot.slane %v5379, 1
      %v5382 = vsel %vm442, %v5377, %v5381
      %v5383 = vshrl.u32 %v5353, 16
      %v5385 = vor.u32 %v5383, %v5381
      %v5387 = vshll.u32 %v5354, 16
      %v5389 = vrot.slane %v5387, 1
      %v5390 = vsel %vm442, %v5385, %v5389
      %v5391 = vshrl.u32 %v5354, 16
      %v5393 = vor.u32 %v5391, %v5389
      %v5395 = vshll.u32 %v5355, 16
      %v5397 = vrot.slane %v5395, 1
      %v5398 = vsel %vm442, %v5393, %v5397
      %v5399 = vshrl.u32 %v5355, 16
      %v5401 = vor.u32 %v5399, %v5397
      %v5403 = vshll.u32 %v5356, 16
      %v5405 = vrot.slane %v5403, 1
      %v5406 = vsel %vm442, %v5401, %v5405
      %v5407 = vshrl.u32 %v5356, 16
      %v5409 = vor.u32 %v5407, %v5405
      %v5411 = vshll.u32 %v5357, 16
      %v5413 = vrot.slane %v5411, 1
      %v5414 = vsel %vm442, %v5409, %v5413
      %v5415 = vshrl.u32 %v5357, 16
      %v5417 = vor.u32 %v5415, %v5413
      %v5419 = vshll.u32 %v5358, 16
      %v5421 = vrot.slane %v5419, 1
      %v5422 = vsel %vm442, %v5417, %v5421
      %v5423 = vshrl.u32 %v5358, 16
      %v5425 = vor.u32 %v5423, %v5421
      %v5427 = vshll.u32 %v5359, 16
      %v5429 = vrot.slane %v5427, 1
      %v5430 = vsel %vm442, %v5425, %v5429
      %v5431 = vshrl.u32 %v5359, 16
      %v5433 = vor.u32 %v5431, %v5429
      %v5435 = vshll.u32 %v5360, 16
      %v5437 = vrot.slane %v5435, 1
      %v5438 = vsel %vm442, %v5433, %v5437
      %v5439 = vshrl.u32 %v5360, 16
      %v5441 = vor.u32 %v5439, %v5437
      %v5443 = vshll.u32 %v5361, 16
      %v5445 = vrot.slane %v5443, 1
      %v5446 = vsel %vm442, %v5441, %v5445
      %v5447 = vshrl.u32 %v5361, 16
      %v5449 = vor.u32 %v5447, %v5445
      %v5451 = vshll.u32 %v5362, 16
      %v5453 = vrot.slane %v5451, 1
      %v5454 = vsel %vm442, %v5449, %v5453
      %v5455 = vshrl.u32 %v5362, 16
      %v5457 = vor.u32 %v5455, %v5453
      %v5459 = vshll.u32 %v5363, 16
      %v5461 = vrot.slane %v5459, 1
      %v5462 = vsel %vm442, %v5457, %v5461
      %v5463 = vshrl.u32 %v5363, 16
      %v5465 = vor.u32 %v5463, %v5461
      %v5467 = vshll.u32 %v5364, 16
      %v5469 = vrot.slane %v5467, 1
      %v5470 = vsel %vm442, %v5465, %v5469
      %v5471 = vshrl.u32 %v5364, 16
      %v5473 = vor.u32 %v5471, %v5469
      %v5475 = vshll.u32 %v5365, 16
      %v5477 = vrot.slane %v5475, 1
      %v5478 = vsel %vm442, %v5473, %v5477
      %v5479 = vshrl.u32 %v5365, 16
      %v5481 = vor.u32 %v5479, %v5477
      %v5483 = vshll.u32 %v5366, 16
      %v5485 = vrot.slane %v5483, 1
      %v5486 = vsel %vm442, %v5481, %v5485
      %v5487 = vshrl.u32 %v5366, 16
      %v5489 = vor.u32 %v5487, %v5485
      %v5491 = vshll.u32 %v5367, 16
      %v5493 = vrot.slane %v5491, 1
      %v5494 = vsel %vm442, %v5489, %v5493
      %v5495 = vshrl.u32 %v5367, 16
      %v5497 = vor.u32 %v5495, %v5493
      %v5499 = vshll.u32 %v5368, 16
      %v5501 = vrot.slane %v5499, 1
      %v5502 = vsel %vm442, %v5497, %v5501
      %v5503 = vshrl.u32 %v5368, 16
      %v5505 = vor.u32 %v5503, %v5501
      %v5507 = vshll.u32 %v5369, 16
      %v5509 = vrot.slane %v5507, 1
      %v5510 = vsel %vm442, %v5505, %v5509
      %v5511 = vshrl.u32 %v5369, 16
      %v5513 = vor.u32 %v5511, %v5509
      %v5515 = vshll.u32 %v5370, 16
      %v5517 = vrot.slane %v5515, 1
      %v5518 = vsel %vm442, %v5513, %v5517
      %v5521 = vunpack.c.l.b16 %v5276
      %v5522 = vunpack.c.l.b16 %v5277
      %v5523 = vpack.c.b16 %v5522, %v5521
      %v5526 = vsel %vm597, %v5382, 0
      %v5529 = vsel %vm597, %v5390, 0
      %v5532 = vsel %vm597, %v5398, 0
      %v5535 = vsel %vm597, %v5406, 0
      %v5538 = vsel %vm597, %v5414, 0
      %v5541 = vsel %vm597, %v5422, 0
      %v5544 = vsel %vm597, %v5430, 0
      %v5547 = vsel %vm597, %v5438, 0
      %v5550 = vsel %vm597, %v5446, 0
      %v5553 = vsel %vm597, %v5454, 0
      %v5556 = vsel %vm597, %v5462, 0
      %v5559 = vsel %vm597, %v5470, 0
      %v5562 = vsel %vm597, %v5478, 0
      %v5565 = vsel %vm597, %v5486, 0
      %v5568 = vsel %vm597, %v5494, 0
      %v5571 = vsel %vm597, %v5502, 0
      %v5574 = vsel %vm597, %v5510, 0
      %v5577 = vsel %vm597, %v5518, 0
      %5579 = vmatprep.subr.bf16.mxu0 0
      %5580 = vmatpush1.bf16.msra.mxu0 %v5523
      %5581 = vmatprep.subr.bf16.mxu0 0
      %5582 = vmatpush1.bf16.msra.mxu0 0
      %5583 = vmatprep.subr.bf16.mxu0 0
      %5584 = vmatpush1.bf16.msra.mxu0 0
      %5585 = vmatprep.subr.bf16.mxu0 0
      %5586 = vmatpush1.bf16.msra.mxu0 0
      %5587 = vmatprep.subr.bf16.mxu0 0
      %5588 = vmatpush1.bf16.msra.mxu0 0
      %5589 = vmatprep.subr.bf16.mxu0 0
      %5590 = vmatpush1.bf16.msra.mxu0 0
      %5591 = vmatprep.subr.bf16.mxu0 0
      %5592 = vmatpush1.bf16.msra.mxu0 0
      %5593 = vmatprep.subr.bf16.mxu0 0
      %5594 = vmatpush1.bf16.msra.mxu0 0
      %5595 = vmatprep.subr.bf16.mxu0 0
      %5596 = vmatpush1.bf16.msra.mxu0 0
      %5597 = vmatprep.subr.bf16.mxu0 0
      %5598 = vmatpush1.bf16.msra.mxu0 0
      %5599 = vmatprep.subr.bf16.mxu0 0
      %5600 = vmatpush1.bf16.msra.mxu0 0
      %5601 = vmatprep.subr.bf16.mxu0 0
      %5602 = vmatpush1.bf16.msra.mxu0 0
      %5603 = vmatprep.subr.bf16.mxu0 0
      %5604 = vmatpush1.bf16.msra.mxu0 0
      %5605 = vmatprep.subr.bf16.mxu0 0
      %5606 = vmatpush1.bf16.msra.mxu0 0
      %5607 = vmatprep.subr.bf16.mxu0 0
      %5608 = vmatpush1.bf16.msra.mxu0 0
      %5609 = vmatprep.subr.bf16.mxu0 0
      %5610 = vmatpush1.bf16.msra.mxu0 0
      %5611 = vmatprep.mubr.bf16.mxu0 0
      %5612 = vmatmul.mubr.bf16.gmra.mrb[0].mxu0 %v5526
      %v5613 = vpop.f32.mrb[0].mxu0
      %v5614 = vadd.f32 0.0, %v5613
      %v5615 = vpop.f32.mrb[0].mxu0
      %v5616 = vpop.f32.mrb[0].mxu0
      %v5617 = vadd.f32 0.0, %v5616
      %v5618 = vpop.f32.mrb[0].mxu0
      %5619 = vmatprep.mubr.bf16.mxu0 0
      %5620 = vmatmul.mubr.bf16.gmra.mrb[0].mxu0 %v5529
      %v5621 = vpop.f32.mrb[0].mxu0
      %v5622 = vadd.f32 0.0, %v5621
      %v5623 = vpop.f32.mrb[0].mxu0
      %v5624 = vpop.f32.mrb[0].mxu0
      %v5625 = vadd.f32 0.0, %v5624
      %v5626 = vpop.f32.mrb[0].mxu0
      %5627 = vmatprep.mubr.bf16.mxu0 0
      %5628 = vmatmul.mubr.bf16.gmra.mrb[0].mxu0 %v5532
      %v5629 = vpop.f32.mrb[0].mxu0
      %v5630 = vadd.f32 0.0, %v5629
      %v5631 = vpop.f32.mrb[0].mxu0
      %v5632 = vpop.f32.mrb[0].mxu0
      %v5633 = vadd.f32 0.0, %v5632
      %v5634 = vpop.f32.mrb[0].mxu0
      %5635 = vmatprep.mubr.bf16.mxu0 0
      %5636 = vmatmul.mubr.bf16.gmra.mrb[0].mxu0 %v5535
      %v5637 = vpop.f32.mrb[0].mxu0
      %v5638 = vadd.f32 0.0, %v5637
      %v5639 = vpop.f32.mrb[0].mxu0
      %v5640 = vpop.f32.mrb[0].mxu0
      %v5641 = vadd.f32 0.0, %v5640
      %v5642 = vpop.f32.mrb[0].mxu0
      %5643 = vmatprep.mubr.bf16.mxu0 0
      %5644 = vmatmul.mubr.bf16.gmra.mrb[0].mxu0 %v5538
      %v5645 = vpop.f32.mrb[0].mxu0
      %v5646 = vadd.f32 0.0, %v5645
      %v5647 = vpop.f32.mrb[0].mxu0
      %v5648 = vpop.f32.mrb[0].mxu0
      %v5649 = vadd.f32 0.0, %v5648
      %v5650 = vpop.f32.mrb[0].mxu0
      %5651 = vmatprep.mubr.bf16.mxu0 0
      %5652 = vmatmul.mubr.bf16.gmra.mrb[0].mxu0 %v5541
      %v5653 = vpop.f32.mrb[0].mxu0
      %v5654 = vadd.f32 0.0, %v5653
      %v5655 = vpop.f32.mrb[0].mxu0
      %v5656 = vpop.f32.mrb[0].mxu0
      %v5657 = vadd.f32 0.0, %v5656
      %v5658 = vpop.f32.mrb[0].mxu0
      %5659 = vmatprep.mubr.bf16.mxu0 0
      %5660 = vmatmul.mubr.bf16.gmra.mrb[0].mxu0 %v5544
      %v5661 = vpop.f32.mrb[0].mxu0
      %v5662 = vadd.f32 0.0, %v5661
      %v5663 = vpop.f32.mrb[0].mxu0
      %v5664 = vpop.f32.mrb[0].mxu0
      %v5665 = vadd.f32 0.0, %v5664
      %v5666 = vpop.f32.mrb[0].mxu0
      %5667 = vmatprep.mubr.bf16.mxu0 0
      %5668 = vmatmul.mubr.bf16.gmra.mrb[0].mxu0 %v5547
      %v5669 = vpop.f32.mrb[0].mxu0
      %v5670 = vadd.f32 0.0, %v5669
      %v5671 = vpop.f32.mrb[0].mxu0
      %v5672 = vpop.f32.mrb[0].mxu0
      %v5673 = vadd.f32 0.0, %v5672
      %v5674 = vpop.f32.mrb[0].mxu0
      %5675 = vmatprep.mubr.bf16.mxu0 0
      %5676 = vmatmul.mubr.bf16.gmra.mrb[0].mxu0 %v5550
      %v5677 = vpop.f32.mrb[0].mxu0
      %v5678 = vadd.f32 0.0, %v5677
      %v5679 = vpop.f32.mrb[0].mxu0
      %v5680 = vpop.f32.mrb[0].mxu0
      %v5681 = vadd.f32 0.0, %v5680
      %v5682 = vpop.f32.mrb[0].mxu0
      %5683 = vmatprep.mubr.bf16.mxu0 0
      %5684 = vmatmul.mubr.bf16.gmra.mrb[0].mxu0 %v5553
      %v5685 = vpop.f32.mrb[0].mxu0
      %v5686 = vadd.f32 0.0, %v5685
      %v5687 = vpop.f32.mrb[0].mxu0
      %v5688 = vpop.f32.mrb[0].mxu0
      %v5689 = vadd.f32 0.0, %v5688
      %v5690 = vpop.f32.mrb[0].mxu0
      %5691 = vmatprep.mubr.bf16.mxu0 0
      %5692 = vmatmul.mubr.bf16.gmra.mrb[0].mxu0 %v5556
      %v5693 = vpop.f32.mrb[0].mxu0
      %v5694 = vadd.f32 0.0, %v5693
      %v5695 = vpop.f32.mrb[0].mxu0
      %v5696 = vpop.f32.mrb[0].mxu0
      %v5697 = vadd.f32 0.0, %v5696
      %v5698 = vpop.f32.mrb[0].mxu0
      %5699 = vmatprep.mubr.bf16.mxu0 0
      %5700 = vmatmul.mubr.bf16.gmra.mrb[0].mxu0 %v5559
      %v5701 = vpop.f32.mrb[0].mxu0
      %v5702 = vadd.f32 0.0, %v5701
      %v5703 = vpop.f32.mrb[0].mxu0
      %v5704 = vpop.f32.mrb[0].mxu0
      %v5705 = vadd.f32 0.0, %v5704
      %v5706 = vpop.f32.mrb[0].mxu0
      %5707 = vmatprep.mubr.bf16.mxu0 0
      %5708 = vmatmul.mubr.bf16.gmra.mrb[0].mxu0 %v5562
      %v5709 = vpop.f32.mrb[0].mxu0
      %v5710 = vadd.f32 0.0, %v5709
      %v5711 = vpop.f32.mrb[0].mxu0
      %v5712 = vpop.f32.mrb[0].mxu0
      %v5713 = vadd.f32 0.0, %v5712
      %v5714 = vpop.f32.mrb[0].mxu0
      %5715 = vmatprep.mubr.bf16.mxu0 0
      %5716 = vmatmul.mubr.bf16.gmra.mrb[0].mxu0 %v5565
      %v5717 = vpop.f32.mrb[0].mxu0
      %v5718 = vadd.f32 0.0, %v5717
      %v5719 = vpop.f32.mrb[0].mxu0
      %v5720 = vpop.f32.mrb[0].mxu0
      %v5721 = vadd.f32 0.0, %v5720
      %v5722 = vpop.f32.mrb[0].mxu0
      %5723 = vmatprep.mubr.bf16.mxu0 0
      %5724 = vmatmul.mubr.bf16.gmra.mrb[0].mxu0 %v5568
      %v5725 = vpop.f32.mrb[0].mxu0
      %v5726 = vadd.f32 0.0, %v5725
      %v5727 = vpop.f32.mrb[0].mxu0
      %v5728 = vpop.f32.mrb[0].mxu0
      %v5729 = vadd.f32 0.0, %v5728
      %v5730 = vpop.f32.mrb[0].mxu0
      %5731 = vmatprep.mubr.bf16.mxu0 0
      %5732 = vmatmul.mubr.bf16.gmra.mrb[0].mxu0 %v5571
      %v5733 = vpop.f32.mrb[0].mxu0
      %v5734 = vadd.f32 0.0, %v5733
      %v5735 = vpop.f32.mrb[0].mxu0
      %v5736 = vpop.f32.mrb[0].mxu0
      %v5737 = vadd.f32 0.0, %v5736
      %v5738 = vpop.f32.mrb[0].mxu0
      %5739 = vmatprep.mubr.bf16.mxu0 0
      %5740 = vmatmul.mubr.bf16.gmra.mrb[0].mxu0 %v5574
      %v5741 = vpop.f32.mrb[0].mxu0
      %v5742 = vadd.f32 0.0, %v5741
      %v5743 = vpop.f32.mrb[0].mxu0
      %v5744 = vpop.f32.mrb[0].mxu0
      %v5745 = vadd.f32 0.0, %v5744
      %v5746 = vpop.f32.mrb[0].mxu0
      %5747 = vmatprep.mubr.bf16.mxu0 0
      %5748 = vmatmul.mubr.bf16.gmra.mrb[0].mxu0 %v5577
      %v5749 = vpop.f32.mrb[0].mxu0
      %v5750 = vadd.f32 0.0, %v5749
      %v5751 = vpop.f32.mrb[0].mxu0
      %v5752 = vpop.f32.mrb[0].mxu0
      %v5753 = vadd.f32 0.0, %v5752
      %v5754 = vpop.f32.mrb[0].mxu0
      %5755 = vdwg.mxu0
      %v5758 = vunpack.c.l.b16 %v5272
      %v5759 = vunpack.c.l.b16 %v5273
      %v5760 = vpack.c.b16 %v5759, %v5758
      %v5762 = vsel %vm597, %v5352, 0
      %v5764 = vsel %vm597, %v5353, 0
      %v5766 = vsel %vm597, %v5354, 0
      %v5768 = vsel %vm597, %v5355, 0
      %v5770 = vsel %vm597, %v5356, 0
      %v5772 = vsel %vm597, %v5357, 0
      %v5774 = vsel %vm597, %v5358, 0
      %v5776 = vsel %vm597, %v5359, 0
      %v5778 = vsel %vm597, %v5360, 0
      %v5780 = vsel %vm597, %v5361, 0
      %v5782 = vsel %vm597, %v5362, 0
      %v5784 = vsel %vm597, %v5363, 0
      %v5786 = vsel %vm597, %v5364, 0
      %v5788 = vsel %vm597, %v5365, 0
      %v5790 = vsel %vm597, %v5366, 0
      %v5792 = vsel %vm597, %v5367, 0
      %v5794 = vsel %vm597, %v5368, 0
      %v5796 = vsel %vm597, %v5369, 0
      %5798 = vmatprep.subr.bf16.mxu0 0
      %5799 = vmatpush1.bf16.msra.mxu0 %v5760
      %5800 = vmatprep.subr.bf16.mxu0 0
      %5801 = vmatpush1.bf16.msra.mxu0 0
      %5802 = vmatprep.subr.bf16.mxu0 0
      %5803 = vmatpush1.bf16.msra.mxu0 0
      %5804 = vmatprep.subr.bf16.mxu0 0
      %5805 = vmatpush1.bf16.msra.mxu0 0
      %5806 = vmatprep.subr.bf16.mxu0 0
      %5807 = vmatpush1.bf16.msra.mxu0 0
      %5808 = vmatprep.subr.bf16.mxu0 0
      %5809 = vmatpush1.bf16.msra.mxu0 0
      %5810 = vmatprep.subr.bf16.mxu0 0
      %5811 = vmatpush1.bf16.msra.mxu0 0
      %5812 = vmatprep.subr.bf16.mxu0 0
      %5813 = vmatpush1.bf16.msra.mxu0 0
      %5814 = vmatprep.subr.bf16.mxu0 0
      %5815 = vmatpush1.bf16.msra.mxu0 0
      %5816 = vmatprep.subr.bf16.mxu0 0
      %5817 = vmatpush1.bf16.msra.mxu0 0
      %5818 = vmatprep.subr.bf16.mxu0 0
      %5819 = vmatpush1.bf16.msra.mxu0 0
      %5820 = vmatprep.subr.bf16.mxu0 0
      %5821 = vmatpush1.bf16.msra.mxu0 0
      %5822 = vmatprep.subr.bf16.mxu0 0
      %5823 = vmatpush1.bf16.msra.mxu0 0
      %5824 = vmatprep.subr.bf16.mxu0 0
      %5825 = vmatpush1.bf16.msra.mxu0 0
      %5826 = vmatprep.subr.bf16.mxu0 0
      %5827 = vmatpush1.bf16.msra.mxu0 0
      %5828 = vmatprep.subr.bf16.mxu0 0
      %5829 = vmatpush1.bf16.msra.mxu0 0
      %5830 = vmatprep.mubr.bf16.mxu0 0
      %5831 = vmatmul.mubr.bf16.gmra.mrb[0].mxu0 %v5762
      %v5832 = vpop.f32.mrb[0].mxu0
      %v5833 = vadd.f32 %v5614, %v5832
      %v5834 = vpop.f32.mrb[0].mxu0
      %v5835 = vpop.f32.mrb[0].mxu0
      %v5836 = vadd.f32 %v5617, %v5835
      %v5837 = vpop.f32.mrb[0].mxu0
      %5838 = vmatprep.mubr.bf16.mxu0 0
      %5839 = vmatmul.mubr.bf16.gmra.mrb[0].mxu0 %v5764
      %v5840 = vpop.f32.mrb[0].mxu0
      %v5841 = vadd.f32 %v5622, %v5840
      %v5842 = vpop.f32.mrb[0].mxu0
      %v5843 = vpop.f32.mrb[0].mxu0
      %v5844 = vadd.f32 %v5625, %v5843
      %v5845 = vpop.f32.mrb[0].mxu0
      %5846 = vmatprep.mubr.bf16.mxu0 0
      %5847 = vmatmul.mubr.bf16.gmra.mrb[0].mxu0 %v5766
      %v5848 = vpop.f32.mrb[0].mxu0
      %v5849 = vadd.f32 %v5630, %v5848
      %v5850 = vpop.f32.mrb[0].mxu0
      %v5851 = vpop.f32.mrb[0].mxu0
      %v5852 = vadd.f32 %v5633, %v5851
      %v5853 = vpop.f32.mrb[0].mxu0
      %5854 = vmatprep.mubr.bf16.mxu0 0
      %5855 = vmatmul.mubr.bf16.gmra.mrb[0].mxu0 %v5768
      %v5856 = vpop.f32.mrb[0].mxu0
      %v5857 = vadd.f32 %v5638, %v5856
      %v5858 = vpop.f32.mrb[0].mxu0
      %v5859 = vpop.f32.mrb[0].mxu0
      %v5860 = vadd.f32 %v5641, %v5859
      %v5861 = vpop.f32.mrb[0].mxu0
      %5862 = vmatprep.mubr.bf16.mxu0 0
      %5863 = vmatmul.mubr.bf16.gmra.mrb[0].mxu0 %v5770
      %v5864 = vpop.f32.mrb[0].mxu0
      %v5865 = vadd.f32 %v5646, %v5864
      %v5866 = vpop.f32.mrb[0].mxu0
      %v5867 = vpop.f32.mrb[0].mxu0
      %v5868 = vadd.f32 %v5649, %v5867
      %v5869 = vpop.f32.mrb[0].mxu0
      %5870 = vmatprep.mubr.bf16.mxu0 0
      %5871 = vmatmul.mubr.bf16.gmra.mrb[0].mxu0 %v5772
      %v5872 = vpop.f32.mrb[0].mxu0
      %v5873 = vadd.f32 %v5654, %v5872
      %v5874 = vpop.f32.mrb[0].mxu0
      %v5875 = vpop.f32.mrb[0].mxu0
      %v5876 = vadd.f32 %v5657, %v5875
      %v5877 = vpop.f32.mrb[0].mxu0
      %5878 = vmatprep.mubr.bf16.mxu0 0
      %5879 = vmatmul.mubr.bf16.gmra.mrb[0].mxu0 %v5774
      %v5880 = vpop.f32.mrb[0].mxu0
      %v5881 = vadd.f32 %v5662, %v5880
      %v5882 = vpop.f32.mrb[0].mxu0
      %v5883 = vpop.f32.mrb[0].mxu0
      %v5884 = vadd.f32 %v5665, %v5883
      %v5885 = vpop.f32.mrb[0].mxu0
      %5886 = vmatprep.mubr.bf16.mxu0 0
      %5887 = vmatmul.mubr.bf16.gmra.mrb[0].mxu0 %v5776
      %v5888 = vpop.f32.mrb[0].mxu0
      %v5889 = vadd.f32 %v5670, %v5888
      %v5890 = vpop.f32.mrb[0].mxu0
      %v5891 = vpop.f32.mrb[0].mxu0
      %v5892 = vadd.f32 %v5673, %v5891
      %v5893 = vpop.f32.mrb[0].mxu0
      %5894 = vmatprep.mubr.bf16.mxu0 0
      %5895 = vmatmul.mubr.bf16.gmra.mrb[0].mxu0 %v5778
      %v5896 = vpop.f32.mrb[0].mxu0
      %v5897 = vadd.f32 %v5678, %v5896
      %v5898 = vpop.f32.mrb[0].mxu0
      %v5899 = vpop.f32.mrb[0].mxu0
      %v5900 = vadd.f32 %v5681, %v5899
      %v5901 = vpop.f32.mrb[0].mxu0
      %5902 = vmatprep.mubr.bf16.mxu0 0
      %5903 = vmatmul.mubr.bf16.gmra.mrb[0].mxu0 %v5780
      %v5904 = vpop.f32.mrb[0].mxu0
      %v5905 = vadd.f32 %v5686, %v5904
      %v5906 = vpop.f32.mrb[0].mxu0
      %v5907 = vpop.f32.mrb[0].mxu0
      %v5908 = vadd.f32 %v5689, %v5907
      %v5909 = vpop.f32.mrb[0].mxu0
      %5910 = vmatprep.mubr.bf16.mxu0 0
      %5911 = vmatmul.mubr.bf16.gmra.mrb[0].mxu0 %v5782
      %v5912 = vpop.f32.mrb[0].mxu0
      %v5913 = vadd.f32 %v5694, %v5912
      %v5914 = vpop.f32.mrb[0].mxu0
      %v5915 = vpop.f32.mrb[0].mxu0
      %v5916 = vadd.f32 %v5697, %v5915
      %v5917 = vpop.f32.mrb[0].mxu0
      %5918 = vmatprep.mubr.bf16.mxu0 0
      %5919 = vmatmul.mubr.bf16.gmra.mrb[0].mxu0 %v5784
      %v5920 = vpop.f32.mrb[0].mxu0
      %v5921 = vadd.f32 %v5702, %v5920
      %v5922 = vpop.f32.mrb[0].mxu0
      %v5923 = vpop.f32.mrb[0].mxu0
      %v5924 = vadd.f32 %v5705, %v5923
      %v5925 = vpop.f32.mrb[0].mxu0
      %5926 = vmatprep.mubr.bf16.mxu0 0
      %5927 = vmatmul.mubr.bf16.gmra.mrb[0].mxu0 %v5786
      %v5928 = vpop.f32.mrb[0].mxu0
      %v5929 = vadd.f32 %v5710, %v5928
      %v5930 = vpop.f32.mrb[0].mxu0
      %v5931 = vpop.f32.mrb[0].mxu0
      %v5932 = vadd.f32 %v5713, %v5931
      %v5933 = vpop.f32.mrb[0].mxu0
      %5934 = vmatprep.mubr.bf16.mxu0 0
      %5935 = vmatmul.mubr.bf16.gmra.mrb[0].mxu0 %v5788
      %v5936 = vpop.f32.mrb[0].mxu0
      %v5937 = vadd.f32 %v5718, %v5936
      %v5938 = vpop.f32.mrb[0].mxu0
      %v5939 = vpop.f32.mrb[0].mxu0
      %v5940 = vadd.f32 %v5721, %v5939
      %v5941 = vpop.f32.mrb[0].mxu0
      %5942 = vmatprep.mubr.bf16.mxu0 0
      %5943 = vmatmul.mubr.bf16.gmra.mrb[0].mxu0 %v5790
      %v5944 = vpop.f32.mrb[0].mxu0
      %v5945 = vadd.f32 %v5726, %v5944
      %v5946 = vpop.f32.mrb[0].mxu0
      %v5947 = vpop.f32.mrb[0].mxu0
      %v5948 = vadd.f32 %v5729, %v5947
      %v5949 = vpop.f32.mrb[0].mxu0
      %5950 = vmatprep.mubr.bf16.mxu0 0
      %5951 = vmatmul.mubr.bf16.gmra.mrb[0].mxu0 %v5792
      %v5952 = vpop.f32.mrb[0].mxu0
      %v5953 = vadd.f32 %v5734, %v5952
      %v5954 = vpop.f32.mrb[0].mxu0
      %v5955 = vpop.f32.mrb[0].mxu0
      %v5956 = vadd.f32 %v5737, %v5955
      %v5957 = vpop.f32.mrb[0].mxu0
      %5958 = vmatprep.mubr.bf16.mxu0 0
      %5959 = vmatmul.mubr.bf16.gmra.mrb[0].mxu0 %v5794
      %v5960 = vpop.f32.mrb[0].mxu0
      %v5961 = vadd.f32 %v5742, %v5960
      %v5962 = vpop.f32.mrb[0].mxu0
      %v5963 = vpop.f32.mrb[0].mxu0
      %v5964 = vadd.f32 %v5745, %v5963
      %v5965 = vpop.f32.mrb[0].mxu0
      %5966 = vmatprep.mubr.bf16.mxu0 0
      %5967 = vmatmul.mubr.bf16.gmra.mrb[0].mxu0 %v5796
      %v5968 = vpop.f32.mrb[0].mxu0
      %v5969 = vadd.f32 %v5750, %v5968
      %v5970 = vpop.f32.mrb[0].mxu0
      %v5971 = vpop.f32.mrb[0].mxu0
      %v5972 = vadd.f32 %v5753, %v5971
      %v5973 = vpop.f32.mrb[0].mxu0
      %5974 = vdwg.mxu0
      %v5975 = vld [vmem:[#allocation2] sm:$0xe]
      %s5976 = scalar_lea.vmem %s4, 16
      %v5977 = vld [vmem:[%s5976] sm:$0xf]
      %v5978 = vld [vmem:[%s5976 + $0x4] sm:$0xf]
      %v5980 = vunpack.c.l.b16 %v5975
      %v5981 = vpack.c.b16 %v5316, %v5980
      %v5982 = vrot.slane %v5981, 1
      %v5983 = vrot.slane %v5353, 1
      %v5984 = vsel %vm1055, %v5982, %v5983
      %v5985 = vrot.slane %v5354, 1
      %v5986 = vsel %vm1055, %v5983, %v5985
      %v5987 = vrot.slane %v5355, 1
      %v5988 = vsel %vm1055, %v5985, %v5987
      %v5989 = vrot.slane %v5356, 1
      %v5990 = vsel %vm1055, %v5987, %v5989
      %v5991 = vrot.slane %v5357, 1
      %v5992 = vsel %vm1055, %v5989, %v5991
      %v5993 = vrot.slane %v5358, 1
      %v5994 = vsel %vm1055, %v5991, %v5993
      %v5995 = vrot.slane %v5359, 1
      %v5996 = vsel %vm1055, %v5993, %v5995
      %v5997 = vrot.slane %v5360, 1
      %v5998 = vsel %vm1055, %v5995, %v5997
      %v5999 = vrot.slane %v5361, 1
      %v6000 = vsel %vm1055, %v5997, %v5999
      %v6001 = vrot.slane %v5362, 1
      %v6002 = vsel %vm1055, %v5999, %v6001
      %v6003 = vrot.slane %v5363, 1
      %v6004 = vsel %vm1055, %v6001, %v6003
      %v6005 = vrot.slane %v5364, 1
      %v6006 = vsel %vm1055, %v6003, %v6005
      %v6007 = vrot.slane %v5365, 1
      %v6008 = vsel %vm1055, %v6005, %v6007
      %v6009 = vrot.slane %v5366, 1
      %v6010 = vsel %vm1055, %v6007, %v6009
      %v6011 = vrot.slane %v5367, 1
      %v6012 = vsel %vm1055, %v6009, %v6011
      %v6013 = vrot.slane %v5368, 1
      %v6014 = vsel %vm1055, %v6011, %v6013
      %v6015 = vrot.slane %v5369, 1
      %v6016 = vsel %vm1055, %v6013, %v6015
      %v6017 = vrot.slane %v5370, 1
      %v6018 = vsel %vm1055, %v6015, %v6017
      %v6021 = vunpack.c.l.b16 %v5977
      %v6022 = vunpack.c.l.b16 %v5978
      %v6023 = vpack.c.b16 %v6022, %v6021
      %v6026 = vsel %vm597, %v5984, 0
      %v6029 = vsel %vm597, %v5986, 0
      %v6032 = vsel %vm597, %v5988, 0
      %v6035 = vsel %vm597, %v5990, 0
      %v6038 = vsel %vm597, %v5992, 0
      %v6041 = vsel %vm597, %v5994, 0
      %v6044 = vsel %vm597, %v5996, 0
      %v6047 = vsel %vm597, %v5998, 0
      %v6050 = vsel %vm597, %v6000, 0
      %v6053 = vsel %vm597, %v6002, 0
      %v6056 = vsel %vm597, %v6004, 0
      %v6059 = vsel %vm597, %v6006, 0
      %v6062 = vsel %vm597, %v6008, 0
      %v6065 = vsel %vm597, %v6010, 0
      %v6068 = vsel %vm597, %v6012, 0
      %v6071 = vsel %vm597, %v6014, 0
      %v6074 = vsel %vm597, %v6016, 0
      %v6077 = vsel %vm597, %v6018, 0
      %6079 = vmatprep.subr.bf16.mxu0 0
      %6080 = vmatpush1.bf16.msra.mxu0 %v6023
      %6081 = vmatprep.subr.bf16.mxu0 0
      %6082 = vmatpush1.bf16.msra.mxu0 0
      %6083 = vmatprep.subr.bf16.mxu0 0
      %6084 = vmatpush1.bf16.msra.mxu0 0
      %6085 = vmatprep.subr.bf16.mxu0 0
      %6086 = vmatpush1.bf16.msra.mxu0 0
      %6087 = vmatprep.subr.bf16.mxu0 0
      %6088 = vmatpush1.bf16.msra.mxu0 0
      %6089 = vmatprep.subr.bf16.mxu0 0
      %6090 = vmatpush1.bf16.msra.mxu0 0
      %6091 = vmatprep.subr.bf16.mxu0 0
      %6092 = vmatpush1.bf16.msra.mxu0 0
      %6093 = vmatprep.subr.bf16.mxu0 0
      %6094 = vmatpush1.bf16.msra.mxu0 0
      %6095 = vmatprep.subr.bf16.mxu0 0
      %6096 = vmatpush1.bf16.msra.mxu0 0
      %6097 = vmatprep.subr.bf16.mxu0 0
      %6098 = vmatpush1.bf16.msra.mxu0 0
      %6099 = vmatprep.subr.bf16.mxu0 0
      %6100 = vmatpush1.bf16.msra.mxu0 0
      %6101 = vmatprep.subr.bf16.mxu0 0
      %6102 = vmatpush1.bf16.msra.mxu0 0
      %6103 = vmatprep.subr.bf16.mxu0 0
      %6104 = vmatpush1.bf16.msra.mxu0 0
      %6105 = vmatprep.subr.bf16.mxu0 0
      %6106 = vmatpush1.bf16.msra.mxu0 0
      %6107 = vmatprep.subr.bf16.mxu0 0
      %6108 = vmatpush1.bf16.msra.mxu0 0
      %6109 = vmatprep.subr.bf16.mxu0 0
      %6110 = vmatpush1.bf16.msra.mxu0 0
      %6111 = vmatprep.mubr.bf16.mxu0 0
      %6112 = vmatmul.mubr.bf16.gmra.mrb[0].mxu0 %v6026
      %v6113 = vpop.f32.mrb[0].mxu0
      %v6114 = vadd.f32 0.0, %v6113
      %v6115 = vpop.f32.mrb[0].mxu0
      %v6116 = vpop.f32.mrb[0].mxu0
      %v6117 = vadd.f32 0.0, %v6116
      %v6118 = vpop.f32.mrb[0].mxu0
      %6119 = vmatprep.mubr.bf16.mxu0 0
      %6120 = vmatmul.mubr.bf16.gmra.mrb[0].mxu0 %v6029
      %v6121 = vpop.f32.mrb[0].mxu0
      %v6122 = vadd.f32 0.0, %v6121
      %v6123 = vpop.f32.mrb[0].mxu0
      %v6124 = vpop.f32.mrb[0].mxu0
      %v6125 = vadd.f32 0.0, %v6124
      %v6126 = vpop.f32.mrb[0].mxu0
      %6127 = vmatprep.mubr.bf16.mxu0 0
      %6128 = vmatmul.mubr.bf16.gmra.mrb[0].mxu0 %v6032
      %v6129 = vpop.f32.mrb[0].mxu0
      %v6130 = vadd.f32 0.0, %v6129
      %v6131 = vpop.f32.mrb[0].mxu0
      %v6132 = vpop.f32.mrb[0].mxu0
      %v6133 = vadd.f32 0.0, %v6132
      %v6134 = vpop.f32.mrb[0].mxu0
      %6135 = vmatprep.mubr.bf16.mxu0 0
      %6136 = vmatmul.mubr.bf16.gmra.mrb[0].mxu0 %v6035
      %v6137 = vpop.f32.mrb[0].mxu0
      %v6138 = vadd.f32 0.0, %v6137
      %v6139 = vpop.f32.mrb[0].mxu0
      %v6140 = vpop.f32.mrb[0].mxu0
      %v6141 = vadd.f32 0.0, %v6140
      %v6142 = vpop.f32.mrb[0].mxu0
      %6143 = vmatprep.mubr.bf16.mxu0 0
      %6144 = vmatmul.mubr.bf16.gmra.mrb[0].mxu0 %v6038
      %v6145 = vpop.f32.mrb[0].mxu0
      %v6146 = vadd.f32 0.0, %v6145
      %v6147 = vpop.f32.mrb[0].mxu0
      %v6148 = vpop.f32.mrb[0].mxu0
      %v6149 = vadd.f32 0.0, %v6148
      %v6150 = vpop.f32.mrb[0].mxu0
      %6151 = vmatprep.mubr.bf16.mxu0 0
      %6152 = vmatmul.mubr.bf16.gmra.mrb[0].mxu0 %v6041
      %v6153 = vpop.f32.mrb[0].mxu0
      %v6154 = vadd.f32 0.0, %v6153
      %v6155 = vpop.f32.mrb[0].mxu0
      %v6156 = vpop.f32.mrb[0].mxu0
      %v6157 = vadd.f32 0.0, %v6156
      %v6158 = vpop.f32.mrb[0].mxu0
      %6159 = vmatprep.mubr.bf16.mxu0 0
      %6160 = vmatmul.mubr.bf16.gmra.mrb[0].mxu0 %v6044
      %v6161 = vpop.f32.mrb[0].mxu0
      %v6162 = vadd.f32 0.0, %v6161
      %v6163 = vpop.f32.mrb[0].mxu0
      %v6164 = vpop.f32.mrb[0].mxu0
      %v6165 = vadd.f32 0.0, %v6164
      %v6166 = vpop.f32.mrb[0].mxu0
      %6167 = vmatprep.mubr.bf16.mxu0 0
      %6168 = vmatmul.mubr.bf16.gmra.mrb[0].mxu0 %v6047
      %v6169 = vpop.f32.mrb[0].mxu0
      %v6170 = vadd.f32 0.0, %v6169
      %v6171 = vpop.f32.mrb[0].mxu0
      %v6172 = vpop.f32.mrb[0].mxu0
      %v6173 = vadd.f32 0.0, %v6172
      %v6174 = vpop.f32.mrb[0].mxu0
      %6175 = vmatprep.mubr.bf16.mxu0 0
      %6176 = vmatmul.mubr.bf16.gmra.mrb[0].mxu0 %v6050
      %v6177 = vpop.f32.mrb[0].mxu0
      %v6178 = vadd.f32 0.0, %v6177
      %v6179 = vpop.f32.mrb[0].mxu0
      %v6180 = vpop.f32.mrb[0].mxu0
      %v6181 = vadd.f32 0.0, %v6180
      %v6182 = vpop.f32.mrb[0].mxu0
      %6183 = vmatprep.mubr.bf16.mxu0 0
      %6184 = vmatmul.mubr.bf16.gmra.mrb[0].mxu0 %v6053
      %v6185 = vpop.f32.mrb[0].mxu0
      %v6186 = vadd.f32 0.0, %v6185
      %v6187 = vpop.f32.mrb[0].mxu0
      %v6188 = vpop.f32.mrb[0].mxu0
      %v6189 = vadd.f32 0.0, %v6188
      %v6190 = vpop.f32.mrb[0].mxu0
      %6191 = vmatprep.mubr.bf16.mxu0 0
      %6192 = vmatmul.mubr.bf16.gmra.mrb[0].mxu0 %v6056
      %v6193 = vpop.f32.mrb[0].mxu0
      %v6194 = vadd.f32 0.0, %v6193
      %v6195 = vpop.f32.mrb[0].mxu0
      %v6196 = vpop.f32.mrb[0].mxu0
      %v6197 = vadd.f32 0.0, %v6196
      %v6198 = vpop.f32.mrb[0].mxu0
      %6199 = vmatprep.mubr.bf16.mxu0 0
      %6200 = vmatmul.mubr.bf16.gmra.mrb[0].mxu0 %v6059
      %v6201 = vpop.f32.mrb[0].mxu0
      %v6202 = vadd.f32 0.0, %v6201
      %v6203 = vpop.f32.mrb[0].mxu0
      %v6204 = vpop.f32.mrb[0].mxu0
      %v6205 = vadd.f32 0.0, %v6204
      %v6206 = vpop.f32.mrb[0].mxu0
      %6207 = vmatprep.mubr.bf16.mxu0 0
      %6208 = vmatmul.mubr.bf16.gmra.mrb[0].mxu0 %v6062
      %v6209 = vpop.f32.mrb[0].mxu0
      %v6210 = vadd.f32 0.0, %v6209
      %v6211 = vpop.f32.mrb[0].mxu0
      %v6212 = vpop.f32.mrb[0].mxu0
      %v6213 = vadd.f32 0.0, %v6212
      %v6214 = vpop.f32.mrb[0].mxu0
      %6215 = vmatprep.mubr.bf16.mxu0 0
      %6216 = vmatmul.mubr.bf16.gmra.mrb[0].mxu0 %v6065
      %v6217 = vpop.f32.mrb[0].mxu0
      %v6218 = vadd.f32 0.0, %v6217
      %v6219 = vpop.f32.mrb[0].mxu0
      %v6220 = vpop.f32.mrb[0].mxu0
      %v6221 = vadd.f32 0.0, %v6220
      %v6222 = vpop.f32.mrb[0].mxu0
      %6223 = vmatprep.mubr.bf16.mxu0 0
      %6224 = vmatmul.mubr.bf16.gmra.mrb[0].mxu0 %v6068
      %v6225 = vpop.f32.mrb[0].mxu0
      %v6226 = vadd.f32 0.0, %v6225
      %v6227 = vpop.f32.mrb[0].mxu0
      %v6228 = vpop.f32.mrb[0].mxu0
      %v6229 = vadd.f32 0.0, %v6228
      %v6230 = vpop.f32.mrb[0].mxu0
      %6231 = vmatprep.mubr.bf16.mxu0 0
      %6232 = vmatmul.mubr.bf16.gmra.mrb[0].mxu0 %v6071
      %v6233 = vpop.f32.mrb[0].mxu0
      %v6234 = vadd.f32 0.0, %v6233
      %v6235 = vpop.f32.mrb[0].mxu0
      %v6236 = vpop.f32.mrb[0].mxu0
      %v6237 = vadd.f32 0.0, %v6236
      %v6238 = vpop.f32.mrb[0].mxu0
      %6239 = vmatprep.mubr.bf16.mxu0 0
      %6240 = vmatmul.mubr.bf16.gmra.mrb[0].mxu0 %v6074
      %v6241 = vpop.f32.mrb[0].mxu0
      %v6242 = vadd.f32 0.0, %v6241
      %v6243 = vpop.f32.mrb[0].mxu0
      %v6244 = vpop.f32.mrb[0].mxu0
      %v6245 = vadd.f32 0.0, %v6244
      %v6246 = vpop.f32.mrb[0].mxu0
      %6247 = vmatprep.mubr.bf16.mxu0 0
      %6248 = vmatmul.mubr.bf16.gmra.mrb[0].mxu0 %v6077
      %v6249 = vpop.f32.mrb[0].mxu0
      %v6250 = vadd.f32 0.0, %v6249
      %v6251 = vpop.f32.mrb[0].mxu0
      %v6252 = vpop.f32.mrb[0].mxu0
      %v6253 = vadd.f32 0.0, %v6252
      %v6254 = vpop.f32.mrb[0].mxu0
      %6255 = vdwg.mxu0
      %v6256 = vadd.f32 %v5833, %v6114
      %v6257 = vadd.f32 %v5836, %v6117
      %v6258 = vadd.f32 %v5841, %v6122
      %v6259 = vadd.f32 %v5844, %v6125
      %v6260 = vadd.f32 %v5849, %v6130
      %v6261 = vadd.f32 %v5852, %v6133
      %v6262 = vadd.f32 %v5857, %v6138
      %v6263 = vadd.f32 %v5860, %v6141
      %v6264 = vadd.f32 %v5865, %v6146
      %v6265 = vadd.f32 %v5868, %v6149
      %v6266 = vadd.f32 %v5873, %v6154
      %v6267 = vadd.f32 %v5876, %v6157
      %v6268 = vadd.f32 %v5881, %v6162
      %v6269 = vadd.f32 %v5884, %v6165
      %v6270 = vadd.f32 %v5889, %v6170
      %v6271 = vadd.f32 %v5892, %v6173
      %v6272 = vadd.f32 %v5897, %v6178
      %v6273 = vadd.f32 %v5900, %v6181
      %v6274 = vadd.f32 %v5905, %v6186
      %v6275 = vadd.f32 %v5908, %v6189
      %v6276 = vadd.f32 %v5913, %v6194
      %v6277 = vadd.f32 %v5916, %v6197
      %v6278 = vadd.f32 %v5921, %v6202
      %v6279 = vadd.f32 %v5924, %v6205
      %v6280 = vadd.f32 %v5929, %v6210
      %v6281 = vadd.f32 %v5932, %v6213
      %v6282 = vadd.f32 %v5937, %v6218
      %v6283 = vadd.f32 %v5940, %v6221
      %v6284 = vadd.f32 %v5945, %v6226
      %v6285 = vadd.f32 %v5948, %v6229
      %v6286 = vadd.f32 %v5953, %v6234
      %v6287 = vadd.f32 %v5956, %v6237
      %v6288 = vadd.f32 %v5961, %v6242
      %v6289 = vadd.f32 %v5964, %v6245
      %v6290 = vadd.f32 %v5969, %v6250
      %v6291 = vadd.f32 %v5972, %v6253
      %v6292 = vld [vmem:[#allocation2 + $0x8] sm:$0xe]
      %v6293 = vld [vmem:[#allocation2 + $0xc] sm:$0xf]
      %v6294 = vld [vmem:[#allocation2 + $0x10] sm:$0xf]
      %v6295 = vld [vmem:[#allocation2 + $0x14] sm:$0xf]
      %v6296 = vld [vmem:[#allocation2 + $0x18] sm:$0xf]
      %v6297 = vld [vmem:[#allocation2 + $0x1c] sm:$0xf]
      %v6298 = vld [vmem:[#allocation2 + $0x20] sm:$0xf]
      %v6299 = vld [vmem:[#allocation2 + $0x24] sm:$0xf]
      %v6300 = vld [vmem:[#allocation2 + $0x28] sm:$0xf]
      %v6301 = vld [vmem:[#allocation2 + $0x2c] sm:$0xf]
      %v6302 = vld [vmem:[#allocation2 + $0x30] sm:$0xf]
      %v6303 = vld [vmem:[#allocation2 + $0x34] sm:$0xf]
      %v6304 = vld [vmem:[#allocation2 + $0x38] sm:$0xf]
      %v6305 = vld [vmem:[#allocation2 + $0x3c] sm:$0xf]
      %v6306 = vld [vmem:[#allocation2 + $0x40] sm:$0xf]
      %v6307 = vld [vmem:[#allocation2 + $0x44] sm:$0xf]
      %v6308 = vld [vmem:[#allocation2 + $0x48] sm:$0xf]
      %v6309 = vld [vmem:[#allocation2 + $0x4c] sm:$0xf]
      %v6310 = vld [vmem:[#allocation2 + $0x50] sm:$0xf]
      %v6311 = vld [vmem:[#allocation2 + $0x54] sm:$0xf]
      %v6312 = vld [vmem:[#allocation2 + $0x58] sm:$0xf]
      %v6313 = vld [vmem:[#allocation2 + $0x5c] sm:$0xf]
      %v6314 = vld [vmem:[#allocation2 + $0x60] sm:$0xf]
      %v6315 = vld [vmem:[#allocation2 + $0x64] sm:$0xf]
      %v6316 = vld [vmem:[#allocation2 + $0x68] sm:$0xf]
      %v6317 = vld [vmem:[#allocation2 + $0x6c] sm:$0xf]
      %v6318 = vld [vmem:[#allocation2 + $0x70] sm:$0xf]
      %v6319 = vld [vmem:[#allocation2 + $0x74] sm:$0xf]
      %v6320 = vld [vmem:[#allocation2 + $0x78] sm:$0xf]
      %v6321 = vld [vmem:[#allocation2 + $0x7c] sm:$0xf]
      %v6322 = vld [vmem:[#allocation2 + $0x80] sm:$0xf]
      %v6323 = vld [vmem:[#allocation2 + $0x84] sm:$0xf]
      %v6324 = vld [vmem:[#allocation2 + $0x88] sm:$0xf]
      %v6325 = vld [vmem:[#allocation2 + $0x8c] sm:$0xf]
      %v6326 = vld [vmem:[#allocation2 + $0x90] sm:$0xf]
      %v6327 = vld [vmem:[#allocation2 + $0x94] sm:$0xf]
      %v6328 = vld [vmem:[#allocation2 + $0x98] sm:$0x1]
      %s6329 = scalar_lea.vmem %s4, 24
      %v6330 = vld [vmem:[%s6329] sm:$0xf]
      %v6331 = vld [vmem:[%s6329 + $0x4] sm:$0xf]
      %v6369 = vunpack.c.l.b16 %v6292
      %v6370 = vunpack.c.l.b16 %v6293
      %v6371 = vunpack.c.l.b16 %v6294
      %v6372 = vunpack.c.l.b16 %v6295
      %v6373 = vunpack.c.l.b16 %v6296
      %v6374 = vunpack.c.l.b16 %v6297
      %v6375 = vunpack.c.l.b16 %v6298
      %v6376 = vunpack.c.l.b16 %v6299
      %v6377 = vunpack.c.l.b16 %v6300
      %v6378 = vunpack.c.l.b16 %v6301
      %v6379 = vunpack.c.l.b16 %v6302
      %v6380 = vunpack.c.l.b16 %v6303
      %v6381 = vunpack.c.l.b16 %v6304
      %v6382 = vunpack.c.l.b16 %v6305
      %v6383 = vunpack.c.l.b16 %v6306
      %v6384 = vunpack.c.l.b16 %v6307
      %v6385 = vunpack.c.l.b16 %v6308
      %v6386 = vunpack.c.l.b16 %v6309
      %v6387 = vunpack.c.l.b16 %v6310
      %v6388 = vunpack.c.l.b16 %v6311
      %v6389 = vunpack.c.l.b16 %v6312
      %v6390 = vunpack.c.l.b16 %v6313
      %v6391 = vunpack.c.l.b16 %v6314
      %v6392 = vunpack.c.l.b16 %v6315
      %v6393 = vunpack.c.l.b16 %v6316
      %v6394 = vunpack.c.l.b16 %v6317
      %v6395 = vunpack.c.l.b16 %v6318
      %v6396 = vunpack.c.l.b16 %v6319
      %v6397 = vunpack.c.l.b16 %v6320
      %v6398 = vunpack.c.l.b16 %v6321
      %v6399 = vunpack.c.l.b16 %v6322
      %v6400 = vunpack.c.l.b16 %v6323
      %v6401 = vunpack.c.l.b16 %v6324
      %v6402 = vunpack.c.l.b16 %v6325
      %v6403 = vunpack.c.l.b16 %v6326
      %v6404 = vunpack.c.l.b16 %v6327
      %v6405 = vunpack.c.l.b16 %v6328
      %v6406 = vpack.c.b16 %v6370, %v6369
      %v6407 = vpack.c.b16 %v6372, %v6371
      %v6408 = vpack.c.b16 %v6374, %v6373
      %v6409 = vpack.c.b16 %v6376, %v6375
      %v6410 = vpack.c.b16 %v6378, %v6377
      %v6411 = vpack.c.b16 %v6380, %v6379
      %v6412 = vpack.c.b16 %v6382, %v6381
      %v6413 = vpack.c.b16 %v6384, %v6383
      %v6414 = vpack.c.b16 %v6386, %v6385
      %v6415 = vpack.c.b16 %v6388, %v6387
      %v6416 = vpack.c.b16 %v6390, %v6389
      %v6417 = vpack.c.b16 %v6392, %v6391
      %v6418 = vpack.c.b16 %v6394, %v6393
      %v6419 = vpack.c.b16 %v6396, %v6395
      %v6420 = vpack.c.b16 %v6398, %v6397
      %v6421 = vpack.c.b16 %v6400, %v6399
      %v6422 = vpack.c.b16 %v6402, %v6401
      %v6423 = vpack.c.b16 %v6404, %v6403
      %v6424 = vpack.c.b16 %v6405, %v6405
      %v6425 = vrot.slane %v6406, 1
      %v6426 = vrot.slane %v6407, 1
      %v6427 = vsel %vm1055, %v6425, %v6426
      %v6428 = vrot.slane %v6408, 1
      %v6429 = vsel %vm1055, %v6426, %v6428
      %v6430 = vrot.slane %v6409, 1
      %v6431 = vsel %vm1055, %v6428, %v6430
      %v6432 = vrot.slane %v6410, 1
      %v6433 = vsel %vm1055, %v6430, %v6432
      %v6434 = vrot.slane %v6411, 1
      %v6435 = vsel %vm1055, %v6432, %v6434
      %v6436 = vrot.slane %v6412, 1
      %v6437 = vsel %vm1055, %v6434, %v6436
      %v6438 = vrot.slane %v6413, 1
      %v6439 = vsel %vm1055, %v6436, %v6438
      %v6440 = vrot.slane %v6414, 1
      %v6441 = vsel %vm1055, %v6438, %v6440
      %v6442 = vrot.slane %v6415, 1
      %v6443 = vsel %vm1055, %v6440, %v6442
      %v6444 = vrot.slane %v6416, 1
      %v6445 = vsel %vm1055, %v6442, %v6444
      %v6446 = vrot.slane %v6417, 1
      %v6447 = vsel %vm1055, %v6444, %v6446
      %v6448 = vrot.slane %v6418, 1
      %v6449 = vsel %vm1055, %v6446, %v6448
      %v6450 = vrot.slane %v6419, 1
      %v6451 = vsel %vm1055, %v6448, %v6450
      %v6452 = vrot.slane %v6420, 1
      %v6453 = vsel %vm1055, %v6450, %v6452
      %v6454 = vrot.slane %v6421, 1
      %v6455 = vsel %vm1055, %v6452, %v6454
      %v6456 = vrot.slane %v6422, 1
      %v6457 = vsel %vm1055, %v6454, %v6456
      %v6458 = vrot.slane %v6423, 1
      %v6459 = vsel %vm1055, %v6456, %v6458
      %v6460 = vrot.slane %v6424, 1
      %v6461 = vsel %vm1055, %v6458, %v6460
      %v6464 = vunpack.c.l.b16 %v6330
      %v6465 = vunpack.c.l.b16 %v6331
      %v6466 = vpack.c.b16 %v6465, %v6464
      %v6469 = vsel %vm597, %v6427, 0
      %v6472 = vsel %vm597, %v6429, 0
      %v6475 = vsel %vm597, %v6431, 0
      %v6478 = vsel %vm597, %v6433, 0
      %v6481 = vsel %vm597, %v6435, 0
      %v6484 = vsel %vm597, %v6437, 0
      %v6487 = vsel %vm597, %v6439, 0
      %v6490 = vsel %vm597, %v6441, 0
      %v6493 = vsel %vm597, %v6443, 0
      %v6496 = vsel %vm597, %v6445, 0
      %v6499 = vsel %vm597, %v6447, 0
      %v6502 = vsel %vm597, %v6449, 0
      %v6505 = vsel %vm597, %v6451, 0
      %v6508 = vsel %vm597, %v6453, 0
      %v6511 = vsel %vm597, %v6455, 0
      %v6514 = vsel %vm597, %v6457, 0
      %v6517 = vsel %vm597, %v6459, 0
      %v6520 = vsel %vm597, %v6461, 0
      %6522 = vmatprep.subr.bf16.mxu0 0
      %6523 = vmatpush1.bf16.msra.mxu0 %v6466
      %6524 = vmatprep.subr.bf16.mxu0 0
      %6525 = vmatpush1.bf16.msra.mxu0 0
      %6526 = vmatprep.subr.bf16.mxu0 0
      %6527 = vmatpush1.bf16.msra.mxu0 0
      %6528 = vmatprep.subr.bf16.mxu0 0
      %6529 = vmatpush1.bf16.msra.mxu0 0
      %6530 = vmatprep.subr.bf16.mxu0 0
      %6531 = vmatpush1.bf16.msra.mxu0 0
      %6532 = vmatprep.subr.bf16.mxu0 0
      %6533 = vmatpush1.bf16.msra.mxu0 0
      %6534 = vmatprep.subr.bf16.mxu0 0
      %6535 = vmatpush1.bf16.msra.mxu0 0
      %6536 = vmatprep.subr.bf16.mxu0 0
      %6537 = vmatpush1.bf16.msra.mxu0 0
      %6538 = vmatprep.subr.bf16.mxu0 0
      %6539 = vmatpush1.bf16.msra.mxu0 0
      %6540 = vmatprep.subr.bf16.mxu0 0
      %6541 = vmatpush1.bf16.msra.mxu0 0
      %6542 = vmatprep.subr.bf16.mxu0 0
      %6543 = vmatpush1.bf16.msra.mxu0 0
      %6544 = vmatprep.subr.bf16.mxu0 0
      %6545 = vmatpush1.bf16.msra.mxu0 0
      %6546 = vmatprep.subr.bf16.mxu0 0
      %6547 = vmatpush1.bf16.msra.mxu0 0
      %6548 = vmatprep.subr.bf16.mxu0 0
      %6549 = vmatpush1.bf16.msra.mxu0 0
      %6550 = vmatprep.subr.bf16.mxu0 0
      %6551 = vmatpush1.bf16.msra.mxu0 0
      %6552 = vmatprep.subr.bf16.mxu0 0
      %6553 = vmatpush1.bf16.msra.mxu0 0
      %6554 = vmatprep.mubr.bf16.mxu0 0
      %6555 = vmatmul.mubr.bf16.gmra.mrb[0].mxu0 %v6469
      %v6556 = vpop.f32.mrb[0].mxu0
      %v6557 = vadd.f32 0.0, %v6556
      %v6558 = vpop.f32.mrb[0].mxu0
      %v6559 = vpop.f32.mrb[0].mxu0
      %v6560 = vadd.f32 0.0, %v6559
      %v6561 = vpop.f32.mrb[0].mxu0
      %6562 = vmatprep.mubr.bf16.mxu0 0
      %6563 = vmatmul.mubr.bf16.gmra.mrb[0].mxu0 %v6472
      %v6564 = vpop.f32.mrb[0].mxu0
      %v6565 = vadd.f32 0.0, %v6564
      %v6566 = vpop.f32.mrb[0].mxu0
      %v6567 = vpop.f32.mrb[0].mxu0
      %v6568 = vadd.f32 0.0, %v6567
      %v6569 = vpop.f32.mrb[0].mxu0
      %6570 = vmatprep.mubr.bf16.mxu0 0
      %6571 = vmatmul.mubr.bf16.gmra.mrb[0].mxu0 %v6475
      %v6572 = vpop.f32.mrb[0].mxu0
      %v6573 = vadd.f32 0.0, %v6572
      %v6574 = vpop.f32.mrb[0].mxu0
      %v6575 = vpop.f32.mrb[0].mxu0
      %v6576 = vadd.f32 0.0, %v6575
      %v6577 = vpop.f32.mrb[0].mxu0
      %6578 = vmatprep.mubr.bf16.mxu0 0
      %6579 = vmatmul.mubr.bf16.gmra.mrb[0].mxu0 %v6478
      %v6580 = vpop.f32.mrb[0].mxu0
      %v6581 = vadd.f32 0.0, %v6580
      %v6582 = vpop.f32.mrb[0].mxu0
      %v6583 = vpop.f32.mrb[0].mxu0
      %v6584 = vadd.f32 0.0, %v6583
      %v6585 = vpop.f32.mrb[0].mxu0
      %6586 = vmatprep.mubr.bf16.mxu0 0
      %6587 = vmatmul.mubr.bf16.gmra.mrb[0].mxu0 %v6481
      %v6588 = vpop.f32.mrb[0].mxu0
      %v6589 = vadd.f32 0.0, %v6588
      %v6590 = vpop.f32.mrb[0].mxu0
      %v6591 = vpop.f32.mrb[0].mxu0
      %v6592 = vadd.f32 0.0, %v6591
      %v6593 = vpop.f32.mrb[0].mxu0
      %6594 = vmatprep.mubr.bf16.mxu0 0
      %6595 = vmatmul.mubr.bf16.gmra.mrb[0].mxu0 %v6484
      %v6596 = vpop.f32.mrb[0].mxu0
      %v6597 = vadd.f32 0.0, %v6596
      %v6598 = vpop.f32.mrb[0].mxu0
      %v6599 = vpop.f32.mrb[0].mxu0
      %v6600 = vadd.f32 0.0, %v6599
      %v6601 = vpop.f32.mrb[0].mxu0
      %6602 = vmatprep.mubr.bf16.mxu0 0
      %6603 = vmatmul.mubr.bf16.gmra.mrb[0].mxu0 %v6487
      %v6604 = vpop.f32.mrb[0].mxu0
      %v6605 = vadd.f32 0.0, %v6604
      %v6606 = vpop.f32.mrb[0].mxu0
      %v6607 = vpop.f32.mrb[0].mxu0
      %v6608 = vadd.f32 0.0, %v6607
      %v6609 = vpop.f32.mrb[0].mxu0
      %6610 = vmatprep.mubr.bf16.mxu0 0
      %6611 = vmatmul.mubr.bf16.gmra.mrb[0].mxu0 %v6490
      %v6612 = vpop.f32.mrb[0].mxu0
      %v6613 = vadd.f32 0.0, %v6612
      %v6614 = vpop.f32.mrb[0].mxu0
      %v6615 = vpop.f32.mrb[0].mxu0
      %v6616 = vadd.f32 0.0, %v6615
      %v6617 = vpop.f32.mrb[0].mxu0
      %6618 = vmatprep.mubr.bf16.mxu0 0
      %6619 = vmatmul.mubr.bf16.gmra.mrb[0].mxu0 %v6493
      %v6620 = vpop.f32.mrb[0].mxu0
      %v6621 = vadd.f32 0.0, %v6620
      %v6622 = vpop.f32.mrb[0].mxu0
      %v6623 = vpop.f32.mrb[0].mxu0
      %v6624 = vadd.f32 0.0, %v6623
      %v6625 = vpop.f32.mrb[0].mxu0
      %6626 = vmatprep.mubr.bf16.mxu0 0
      %6627 = vmatmul.mubr.bf16.gmra.mrb[0].mxu0 %v6496
      %v6628 = vpop.f32.mrb[0].mxu0
      %v6629 = vadd.f32 0.0, %v6628
      %v6630 = vpop.f32.mrb[0].mxu0
      %v6631 = vpop.f32.mrb[0].mxu0
      %v6632 = vadd.f32 0.0, %v6631
      %v6633 = vpop.f32.mrb[0].mxu0
      %6634 = vmatprep.mubr.bf16.mxu0 0
      %6635 = vmatmul.mubr.bf16.gmra.mrb[0].mxu0 %v6499
      %v6636 = vpop.f32.mrb[0].mxu0
      %v6637 = vadd.f32 0.0, %v6636
      %v6638 = vpop.f32.mrb[0].mxu0
      %v6639 = vpop.f32.mrb[0].mxu0
      %v6640 = vadd.f32 0.0, %v6639
      %v6641 = vpop.f32.mrb[0].mxu0
      %6642 = vmatprep.mubr.bf16.mxu0 0
      %6643 = vmatmul.mubr.bf16.gmra.mrb[0].mxu0 %v6502
      %v6644 = vpop.f32.mrb[0].mxu0
      %v6645 = vadd.f32 0.0, %v6644
      %v6646 = vpop.f32.mrb[0].mxu0
      %v6647 = vpop.f32.mrb[0].mxu0
      %v6648 = vadd.f32 0.0, %v6647
      %v6649 = vpop.f32.mrb[0].mxu0
      %6650 = vmatprep.mubr.bf16.mxu0 0
      %6651 = vmatmul.mubr.bf16.gmra.mrb[0].mxu0 %v6505
      %v6652 = vpop.f32.mrb[0].mxu0
      %v6653 = vadd.f32 0.0, %v6652
      %v6654 = vpop.f32.mrb[0].mxu0
      %v6655 = vpop.f32.mrb[0].mxu0
      %v6656 = vadd.f32 0.0, %v6655
      %v6657 = vpop.f32.mrb[0].mxu0
      %6658 = vmatprep.mubr.bf16.mxu0 0
      %6659 = vmatmul.mubr.bf16.gmra.mrb[0].mxu0 %v6508
      %v6660 = vpop.f32.mrb[0].mxu0
      %v6661 = vadd.f32 0.0, %v6660
      %v6662 = vpop.f32.mrb[0].mxu0
      %v6663 = vpop.f32.mrb[0].mxu0
      %v6664 = vadd.f32 0.0, %v6663
      %v6665 = vpop.f32.mrb[0].mxu0
      %6666 = vmatprep.mubr.bf16.mxu0 0
      %6667 = vmatmul.mubr.bf16.gmra.mrb[0].mxu0 %v6511
      %v6668 = vpop.f32.mrb[0].mxu0
      %v6669 = vadd.f32 0.0, %v6668
      %v6670 = vpop.f32.mrb[0].mxu0
      %v6671 = vpop.f32.mrb[0].mxu0
      %v6672 = vadd.f32 0.0, %v6671
      %v6673 = vpop.f32.mrb[0].mxu0
      %6674 = vmatprep.mubr.bf16.mxu0 0
      %6675 = vmatmul.mubr.bf16.gmra.mrb[0].mxu0 %v6514
      %v6676 = vpop.f32.mrb[0].mxu0
      %v6677 = vadd.f32 0.0, %v6676
      %v6678 = vpop.f32.mrb[0].mxu0
      %v6679 = vpop.f32.mrb[0].mxu0
      %v6680 = vadd.f32 0.0, %v6679
      %v6681 = vpop.f32.mrb[0].mxu0
      %6682 = vmatprep.mubr.bf16.mxu0 0
      %6683 = vmatmul.mubr.bf16.gmra.mrb[0].mxu0 %v6517
      %v6684 = vpop.f32.mrb[0].mxu0
      %v6685 = vadd.f32 0.0, %v6684
      %v6686 = vpop.f32.mrb[0].mxu0
      %v6687 = vpop.f32.mrb[0].mxu0
      %v6688 = vadd.f32 0.0, %v6687
      %v6689 = vpop.f32.mrb[0].mxu0
      %6690 = vmatprep.mubr.bf16.mxu0 0
      %6691 = vmatmul.mubr.bf16.gmra.mrb[0].mxu0 %v6520
      %v6692 = vpop.f32.mrb[0].mxu0
      %v6693 = vadd.f32 0.0, %v6692
      %v6694 = vpop.f32.mrb[0].mxu0
      %v6695 = vpop.f32.mrb[0].mxu0
      %v6696 = vadd.f32 0.0, %v6695
      %v6697 = vpop.f32.mrb[0].mxu0
      %6698 = vdwg.mxu0
      %v6699 = vadd.f32 %v6256, %v6557
      %v6700 = vadd.f32 %v6257, %v6560
      %v6701 = vadd.f32 %v6258, %v6565
      %v6702 = vadd.f32 %v6259, %v6568
      %v6703 = vadd.f32 %v6260, %v6573
      %v6704 = vadd.f32 %v6261, %v6576
      %v6705 = vadd.f32 %v6262, %v6581
      %v6706 = vadd.f32 %v6263, %v6584
      %v6707 = vadd.f32 %v6264, %v6589
      %v6708 = vadd.f32 %v6265, %v6592
      %v6709 = vadd.f32 %v6266, %v6597
      %v6710 = vadd.f32 %v6267, %v6600
      %v6711 = vadd.f32 %v6268, %v6605
      %v6712 = vadd.f32 %v6269, %v6608
      %v6713 = vadd.f32 %v6270, %v6613
      %v6714 = vadd.f32 %v6271, %v6616
      %v6715 = vadd.f32 %v6272, %v6621
      %v6716 = vadd.f32 %v6273, %v6624
      %v6717 = vadd.f32 %v6274, %v6629
      %v6718 = vadd.f32 %v6275, %v6632
      %v6719 = vadd.f32 %v6276, %v6637
      %v6720 = vadd.f32 %v6277, %v6640
      %v6721 = vadd.f32 %v6278, %v6645
      %v6722 = vadd.f32 %v6279, %v6648
      %v6723 = vadd.f32 %v6280, %v6653
      %v6724 = vadd.f32 %v6281, %v6656
      %v6725 = vadd.f32 %v6282, %v6661
      %v6726 = vadd.f32 %v6283, %v6664
      %v6727 = vadd.f32 %v6284, %v6669
      %v6728 = vadd.f32 %v6285, %v6672
      %v6729 = vadd.f32 %v6286, %v6677
      %v6730 = vadd.f32 %v6287, %v6680
      %v6731 = vadd.f32 %v6288, %v6685
      %v6732 = vadd.f32 %v6289, %v6688
      %v6733 = vadd.f32 %v6290, %v6693
      %v6734 = vadd.f32 %v6291, %v6696
      %v6735 = vld [vmem:[#allocation2 + $0x98] sm:$0x3]
      %s6736 = scalar_lea.vmem %s4, 32
      %v6737 = vld [vmem:[%s6736] sm:$0xf]
      %v6738 = vld [vmem:[%s6736 + $0x4] sm:$0xf]
      %v6740 = vunpack.c.l.b16 %v6735
      %v6741 = vpack.c.b16 %v6740, %v6740
      %v6743 = vshrl.u32 %v6406, 16
      %v6745 = vrot.slane %v6743, 1
      %v6746 = vshll.u32 %v6406, 16
      %v6748 = vrot.slane %v6746, 2
      %v6749 = vor.u32 %v6745, %v6748
      %v6751 = vshrl.u32 %v6407, 16
      %v6753 = vrot.slane %v6751, 1
      %v6754 = vshll.u32 %v6407, 16
      %v6756 = vrot.slane %v6754, 2
      %v6757 = vor.u32 %v6753, %v6756
      %v6758 = vsel %vm1816, %v6749, %v6757
      %v6760 = vshrl.u32 %v6408, 16
      %v6762 = vrot.slane %v6760, 1
      %v6763 = vshll.u32 %v6408, 16
      %v6765 = vrot.slane %v6763, 2
      %v6766 = vor.u32 %v6762, %v6765
      %v6767 = vsel %vm1816, %v6757, %v6766
      %v6769 = vshrl.u32 %v6409, 16
      %v6771 = vrot.slane %v6769, 1
      %v6772 = vshll.u32 %v6409, 16
      %v6774 = vrot.slane %v6772, 2
      %v6775 = vor.u32 %v6771, %v6774
      %v6776 = vsel %vm1816, %v6766, %v6775
      %v6778 = vshrl.u32 %v6410, 16
      %v6780 = vrot.slane %v6778, 1
      %v6781 = vshll.u32 %v6410, 16
      %v6783 = vrot.slane %v6781, 2
      %v6784 = vor.u32 %v6780, %v6783
      %v6785 = vsel %vm1816, %v6775, %v6784
      %v6787 = vshrl.u32 %v6411, 16
      %v6789 = vrot.slane %v6787, 1
      %v6790 = vshll.u32 %v6411, 16
      %v6792 = vrot.slane %v6790, 2
      %v6793 = vor.u32 %v6789, %v6792
      %v6794 = vsel %vm1816, %v6784, %v6793
      %v6796 = vshrl.u32 %v6412, 16
      %v6798 = vrot.slane %v6796, 1
      %v6799 = vshll.u32 %v6412, 16
      %v6801 = vrot.slane %v6799, 2
      %v6802 = vor.u32 %v6798, %v6801
      %v6803 = vsel %vm1816, %v6793, %v6802
      %v6805 = vshrl.u32 %v6413, 16
      %v6807 = vrot.slane %v6805, 1
      %v6808 = vshll.u32 %v6413, 16
      %v6810 = vrot.slane %v6808, 2
      %v6811 = vor.u32 %v6807, %v6810
      %v6812 = vsel %vm1816, %v6802, %v6811
      %v6814 = vshrl.u32 %v6414, 16
      %v6816 = vrot.slane %v6814, 1
      %v6817 = vshll.u32 %v6414, 16
      %v6819 = vrot.slane %v6817, 2
      %v6820 = vor.u32 %v6816, %v6819
      %v6821 = vsel %vm1816, %v6811, %v6820
      %v6823 = vshrl.u32 %v6415, 16
      %v6825 = vrot.slane %v6823, 1
      %v6826 = vshll.u32 %v6415, 16
      %v6828 = vrot.slane %v6826, 2
      %v6829 = vor.u32 %v6825, %v6828
      %v6830 = vsel %vm1816, %v6820, %v6829
      %v6832 = vshrl.u32 %v6416, 16
      %v6834 = vrot.slane %v6832, 1
      %v6835 = vshll.u32 %v6416, 16
      %v6837 = vrot.slane %v6835, 2
      %v6838 = vor.u32 %v6834, %v6837
      %v6839 = vsel %vm1816, %v6829, %v6838
      %v6841 = vshrl.u32 %v6417, 16
      %v6843 = vrot.slane %v6841, 1
      %v6844 = vshll.u32 %v6417, 16
      %v6846 = vrot.slane %v6844, 2
      %v6847 = vor.u32 %v6843, %v6846
      %v6848 = vsel %vm1816, %v6838, %v6847
      %v6850 = vshrl.u32 %v6418, 16
      %v6852 = vrot.slane %v6850, 1
      %v6853 = vshll.u32 %v6418, 16
      %v6855 = vrot.slane %v6853, 2
      %v6856 = vor.u32 %v6852, %v6855
      %v6857 = vsel %vm1816, %v6847, %v6856
      %v6859 = vshrl.u32 %v6419, 16
      %v6861 = vrot.slane %v6859, 1
      %v6862 = vshll.u32 %v6419, 16
      %v6864 = vrot.slane %v6862, 2
      %v6865 = vor.u32 %v6861, %v6864
      %v6866 = vsel %vm1816, %v6856, %v6865
      %v6868 = vshrl.u32 %v6420, 16
      %v6870 = vrot.slane %v6868, 1
      %v6871 = vshll.u32 %v6420, 16
      %v6873 = vrot.slane %v6871, 2
      %v6874 = vor.u32 %v6870, %v6873
      %v6875 = vsel %vm1816, %v6865, %v6874
      %v6877 = vshrl.u32 %v6421, 16
      %v6879 = vrot.slane %v6877, 1
      %v6880 = vshll.u32 %v6421, 16
      %v6882 = vrot.slane %v6880, 2
      %v6883 = vor.u32 %v6879, %v6882
      %v6884 = vsel %vm1816, %v6874, %v6883
      %v6886 = vshrl.u32 %v6422, 16
      %v6888 = vrot.slane %v6886, 1
      %v6889 = vshll.u32 %v6422, 16
      %v6891 = vrot.slane %v6889, 2
      %v6892 = vor.u32 %v6888, %v6891
      %v6893 = vsel %vm1816, %v6883, %v6892
      %v6895 = vshrl.u32 %v6423, 16
      %v6897 = vrot.slane %v6895, 1
      %v6898 = vshll.u32 %v6423, 16
      %v6900 = vrot.slane %v6898, 2
      %v6901 = vor.u32 %v6897, %v6900
      %v6902 = vsel %vm1816, %v6892, %v6901
      %v6904 = vshrl.u32 %v6741, 16
      %v6906 = vrot.slane %v6904, 1
      %v6907 = vshll.u32 %v6741, 16
      %v6909 = vrot.slane %v6907, 2
      %v6910 = vor.u32 %v6906, %v6909
      %v6911 = vsel %vm1816, %v6901, %v6910
      %v6914 = vunpack.c.l.b16 %v6737
      %v6915 = vunpack.c.l.b16 %v6738
      %v6916 = vpack.c.b16 %v6915, %v6914
      %v6919 = vsel %vm597, %v6758, 0
      %v6922 = vsel %vm597, %v6767, 0
      %v6925 = vsel %vm597, %v6776, 0
      %v6928 = vsel %vm597, %v6785, 0
      %v6931 = vsel %vm597, %v6794, 0
      %v6934 = vsel %vm597, %v6803, 0
      %v6937 = vsel %vm597, %v6812, 0
      %v6940 = vsel %vm597, %v6821, 0
      %v6943 = vsel %vm597, %v6830, 0
      %v6946 = vsel %vm597, %v6839, 0
      %v6949 = vsel %vm597, %v6848, 0
      %v6952 = vsel %vm597, %v6857, 0
      %v6955 = vsel %vm597, %v6866, 0
      %v6958 = vsel %vm597, %v6875, 0
      %v6961 = vsel %vm597, %v6884, 0
      %v6964 = vsel %vm597, %v6893, 0
      %v6967 = vsel %vm597, %v6902, 0
      %v6970 = vsel %vm597, %v6911, 0
      %6972 = vmatprep.subr.bf16.mxu0 0
      %6973 = vmatpush1.bf16.msra.mxu0 %v6916
      %6974 = vmatprep.subr.bf16.mxu0 0
      %6975 = vmatpush1.bf16.msra.mxu0 0
      %6976 = vmatprep.subr.bf16.mxu0 0
      %6977 = vmatpush1.bf16.msra.mxu0 0
      %6978 = vmatprep.subr.bf16.mxu0 0
      %6979 = vmatpush1.bf16.msra.mxu0 0
      %6980 = vmatprep.subr.bf16.mxu0 0
      %6981 = vmatpush1.bf16.msra.mxu0 0
      %6982 = vmatprep.subr.bf16.mxu0 0
      %6983 = vmatpush1.bf16.msra.mxu0 0
      %6984 = vmatprep.subr.bf16.mxu0 0
      %6985 = vmatpush1.bf16.msra.mxu0 0
      %6986 = vmatprep.subr.bf16.mxu0 0
      %6987 = vmatpush1.bf16.msra.mxu0 0
      %6988 = vmatprep.subr.bf16.mxu0 0
      %6989 = vmatpush1.bf16.msra.mxu0 0
      %6990 = vmatprep.subr.bf16.mxu0 0
      %6991 = vmatpush1.bf16.msra.mxu0 0
      %6992 = vmatprep.subr.bf16.mxu0 0
      %6993 = vmatpush1.bf16.msra.mxu0 0
      %6994 = vmatprep.subr.bf16.mxu0 0
      %6995 = vmatpush1.bf16.msra.mxu0 0
      %6996 = vmatprep.subr.bf16.mxu0 0
      %6997 = vmatpush1.bf16.msra.mxu0 0
      %6998 = vmatprep.subr.bf16.mxu0 0
      %6999 = vmatpush1.bf16.msra.mxu0 0
      %7000 = vmatprep.subr.bf16.mxu0 0
      %7001 = vmatpush1.bf16.msra.mxu0 0
      %7002 = vmatprep.subr.bf16.mxu0 0
      %7003 = vmatpush1.bf16.msra.mxu0 0
      %7004 = vmatprep.mubr.bf16.mxu0 0
      %7005 = vmatmul.mubr.bf16.gmra.mrb[0].mxu0 %v6919
      %v7006 = vpop.f32.mrb[0].mxu0
      %v7007 = vadd.f32 0.0, %v7006
      %v7008 = vpop.f32.mrb[0].mxu0
      %v7009 = vpop.f32.mrb[0].mxu0
      %v7010 = vadd.f32 0.0, %v7009
      %v7011 = vpop.f32.mrb[0].mxu0
      %7012 = vmatprep.mubr.bf16.mxu0 0
      %7013 = vmatmul.mubr.bf16.gmra.mrb[0].mxu0 %v6922
      %v7014 = vpop.f32.mrb[0].mxu0
      %v7015 = vadd.f32 0.0, %v7014
      %v7016 = vpop.f32.mrb[0].mxu0
      %v7017 = vpop.f32.mrb[0].mxu0
      %v7018 = vadd.f32 0.0, %v7017
      %v7019 = vpop.f32.mrb[0].mxu0
      %7020 = vmatprep.mubr.bf16.mxu0 0
      %7021 = vmatmul.mubr.bf16.gmra.mrb[0].mxu0 %v6925
      %v7022 = vpop.f32.mrb[0].mxu0
      %v7023 = vadd.f32 0.0, %v7022
      %v7024 = vpop.f32.mrb[0].mxu0
      %v7025 = vpop.f32.mrb[0].mxu0
      %v7026 = vadd.f32 0.0, %v7025
      %v7027 = vpop.f32.mrb[0].mxu0
      %7028 = vmatprep.mubr.bf16.mxu0 0
      %7029 = vmatmul.mubr.bf16.gmra.mrb[0].mxu0 %v6928
      %v7030 = vpop.f32.mrb[0].mxu0
      %v7031 = vadd.f32 0.0, %v7030
      %v7032 = vpop.f32.mrb[0].mxu0
      %v7033 = vpop.f32.mrb[0].mxu0
      %v7034 = vadd.f32 0.0, %v7033
      %v7035 = vpop.f32.mrb[0].mxu0
      %7036 = vmatprep.mubr.bf16.mxu0 0
      %7037 = vmatmul.mubr.bf16.gmra.mrb[0].mxu0 %v6931
      %v7038 = vpop.f32.mrb[0].mxu0
      %v7039 = vadd.f32 0.0, %v7038
      %v7040 = vpop.f32.mrb[0].mxu0
      %v7041 = vpop.f32.mrb[0].mxu0
      %v7042 = vadd.f32 0.0, %v7041
      %v7043 = vpop.f32.mrb[0].mxu0
      %7044 = vmatprep.mubr.bf16.mxu0 0
      %7045 = vmatmul.mubr.bf16.gmra.mrb[0].mxu0 %v6934
      %v7046 = vpop.f32.mrb[0].mxu0
      %v7047 = vadd.f32 0.0, %v7046
      %v7048 = vpop.f32.mrb[0].mxu0
      %v7049 = vpop.f32.mrb[0].mxu0
      %v7050 = vadd.f32 0.0, %v7049
      %v7051 = vpop.f32.mrb[0].mxu0
      %7052 = vmatprep.mubr.bf16.mxu0 0
      %7053 = vmatmul.mubr.bf16.gmra.mrb[0].mxu0 %v6937
      %v7054 = vpop.f32.mrb[0].mxu0
      %v7055 = vadd.f32 0.0, %v7054
      %v7056 = vpop.f32.mrb[0].mxu0
      %v7057 = vpop.f32.mrb[0].mxu0
      %v7058 = vadd.f32 0.0, %v7057
      %v7059 = vpop.f32.mrb[0].mxu0
      %7060 = vmatprep.mubr.bf16.mxu0 0
      %7061 = vmatmul.mubr.bf16.gmra.mrb[0].mxu0 %v6940
      %v7062 = vpop.f32.mrb[0].mxu0
      %v7063 = vadd.f32 0.0, %v7062
      %v7064 = vpop.f32.mrb[0].mxu0
      %v7065 = vpop.f32.mrb[0].mxu0
      %v7066 = vadd.f32 0.0, %v7065
      %v7067 = vpop.f32.mrb[0].mxu0
      %7068 = vmatprep.mubr.bf16.mxu0 0
      %7069 = vmatmul.mubr.bf16.gmra.mrb[0].mxu0 %v6943
      %v7070 = vpop.f32.mrb[0].mxu0
      %v7071 = vadd.f32 0.0, %v7070
      %v7072 = vpop.f32.mrb[0].mxu0
      %v7073 = vpop.f32.mrb[0].mxu0
      %v7074 = vadd.f32 0.0, %v7073
      %v7075 = vpop.f32.mrb[0].mxu0
      %7076 = vmatprep.mubr.bf16.mxu0 0
      %7077 = vmatmul.mubr.bf16.gmra.mrb[0].mxu0 %v6946
      %v7078 = vpop.f32.mrb[0].mxu0
      %v7079 = vadd.f32 0.0, %v7078
      %v7080 = vpop.f32.mrb[0].mxu0
      %v7081 = vpop.f32.mrb[0].mxu0
      %v7082 = vadd.f32 0.0, %v7081
      %v7083 = vpop.f32.mrb[0].mxu0
      %7084 = vmatprep.mubr.bf16.mxu0 0
      %7085 = vmatmul.mubr.bf16.gmra.mrb[0].mxu0 %v6949
      %v7086 = vpop.f32.mrb[0].mxu0
      %v7087 = vadd.f32 0.0, %v7086
      %v7088 = vpop.f32.mrb[0].mxu0
      %v7089 = vpop.f32.mrb[0].mxu0
      %v7090 = vadd.f32 0.0, %v7089
      %v7091 = vpop.f32.mrb[0].mxu0
      %7092 = vmatprep.mubr.bf16.mxu0 0
      %7093 = vmatmul.mubr.bf16.gmra.mrb[0].mxu0 %v6952
      %v7094 = vpop.f32.mrb[0].mxu0
      %v7095 = vadd.f32 0.0, %v7094
      %v7096 = vpop.f32.mrb[0].mxu0
      %v7097 = vpop.f32.mrb[0].mxu0
      %v7098 = vadd.f32 0.0, %v7097
      %v7099 = vpop.f32.mrb[0].mxu0
      %7100 = vmatprep.mubr.bf16.mxu0 0
      %7101 = vmatmul.mubr.bf16.gmra.mrb[0].mxu0 %v6955
      %v7102 = vpop.f32.mrb[0].mxu0
      %v7103 = vadd.f32 0.0, %v7102
      %v7104 = vpop.f32.mrb[0].mxu0
      %v7105 = vpop.f32.mrb[0].mxu0
      %v7106 = vadd.f32 0.0, %v7105
      %v7107 = vpop.f32.mrb[0].mxu0
      %7108 = vmatprep.mubr.bf16.mxu0 0
      %7109 = vmatmul.mubr.bf16.gmra.mrb[0].mxu0 %v6958
      %v7110 = vpop.f32.mrb[0].mxu0
      %v7111 = vadd.f32 0.0, %v7110
      %v7112 = vpop.f32.mrb[0].mxu0
      %v7113 = vpop.f32.mrb[0].mxu0
      %v7114 = vadd.f32 0.0, %v7113
      %v7115 = vpop.f32.mrb[0].mxu0
      %7116 = vmatprep.mubr.bf16.mxu0 0
      %7117 = vmatmul.mubr.bf16.gmra.mrb[0].mxu0 %v6961
      %v7118 = vpop.f32.mrb[0].mxu0
      %v7119 = vadd.f32 0.0, %v7118
      %v7120 = vpop.f32.mrb[0].mxu0
      %v7121 = vpop.f32.mrb[0].mxu0
      %v7122 = vadd.f32 0.0, %v7121
      %v7123 = vpop.f32.mrb[0].mxu0
      %7124 = vmatprep.mubr.bf16.mxu0 0
      %7125 = vmatmul.mubr.bf16.gmra.mrb[0].mxu0 %v6964
      %v7126 = vpop.f32.mrb[0].mxu0
      %v7127 = vadd.f32 0.0, %v7126
      %v7128 = vpop.f32.mrb[0].mxu0
      %v7129 = vpop.f32.mrb[0].mxu0
      %v7130 = vadd.f32 0.0, %v7129
      %v7131 = vpop.f32.mrb[0].mxu0
      %7132 = vmatprep.mubr.bf16.mxu0 0
      %7133 = vmatmul.mubr.bf16.gmra.mrb[0].mxu0 %v6967
      %v7134 = vpop.f32.mrb[0].mxu0
      %v7135 = vadd.f32 0.0, %v7134
      %v7136 = vpop.f32.mrb[0].mxu0
      %v7137 = vpop.f32.mrb[0].mxu0
      %v7138 = vadd.f32 0.0, %v7137
      %v7139 = vpop.f32.mrb[0].mxu0
      %7140 = vmatprep.mubr.bf16.mxu0 0
      %7141 = vmatmul.mubr.bf16.gmra.mrb[0].mxu0 %v6970
      %v7142 = vpop.f32.mrb[0].mxu0
      %v7143 = vadd.f32 0.0, %v7142
      %v7144 = vpop.f32.mrb[0].mxu0
      %v7145 = vpop.f32.mrb[0].mxu0
      %v7146 = vadd.f32 0.0, %v7145
      %v7147 = vpop.f32.mrb[0].mxu0
      %7148 = vdwg.mxu0
      %v7149 = vadd.f32 %v6699, %v7007
      %v7150 = vadd.f32 %v6700, %v7010
      %v7151 = vadd.f32 %v6701, %v7015
      %v7152 = vadd.f32 %v6702, %v7018
      %v7153 = vadd.f32 %v6703, %v7023
      %v7154 = vadd.f32 %v6704, %v7026
      %v7155 = vadd.f32 %v6705, %v7031
      %v7156 = vadd.f32 %v6706, %v7034
      %v7157 = vadd.f32 %v6707, %v7039
      %v7158 = vadd.f32 %v6708, %v7042
      %v7159 = vadd.f32 %v6709, %v7047
      %v7160 = vadd.f32 %v6710, %v7050
      %v7161 = vadd.f32 %v6711, %v7055
      %v7162 = vadd.f32 %v6712, %v7058
      %v7163 = vadd.f32 %v6713, %v7063
      %v7164 = vadd.f32 %v6714, %v7066
      %v7165 = vadd.f32 %v6715, %v7071
      %v7166 = vadd.f32 %v6716, %v7074
      %v7167 = vadd.f32 %v6717, %v7079
      %v7168 = vadd.f32 %v6718, %v7082
      %v7169 = vadd.f32 %v6719, %v7087
      %v7170 = vadd.f32 %v6720, %v7090
      %v7171 = vadd.f32 %v6721, %v7095
      %v7172 = vadd.f32 %v6722, %v7098
      %v7173 = vadd.f32 %v6723, %v7103
      %v7174 = vadd.f32 %v6724, %v7106
      %v7175 = vadd.f32 %v6725, %v7111
      %v7176 = vadd.f32 %v6726, %v7114
      %v7177 = vadd.f32 %v6727, %v7119
      %v7178 = vadd.f32 %v6728, %v7122
      %v7179 = vadd.f32 %v6729, %v7127
      %v7180 = vadd.f32 %v6730, %v7130
      %v7181 = vadd.f32 %v6731, %v7135
      %v7182 = vadd.f32 %v6732, %v7138
      %v7183 = vadd.f32 %v6733, %v7143
      %v7184 = vadd.f32 %v6734, %v7146
      %v7185 = vld [vmem:[#allocation2 + $0x8] sm:$0xc]
      %s7186 = scalar_lea.vmem %s4, 40
      %v7187 = vld [vmem:[%s7186] sm:$0xf]
      %v7188 = vld [vmem:[%s7186 + $0x4] sm:$0xf]
      %v7190 = vunpack.c.l.b16 %v7185
      %v7191 = vpack.c.b16 %v6370, %v7190
      %v7192 = vrot.slane %v7191, 2
      %v7193 = vrot.slane %v6407, 2
      %v7194 = vsel %vm2267, %v7192, %v7193
      %v7195 = vrot.slane %v6408, 2
      %v7196 = vsel %vm2267, %v7193, %v7195
      %v7197 = vrot.slane %v6409, 2
      %v7198 = vsel %vm2267, %v7195, %v7197
      %v7199 = vrot.slane %v6410, 2
      %v7200 = vsel %vm2267, %v7197, %v7199
      %v7201 = vrot.slane %v6411, 2
      %v7202 = vsel %vm2267, %v7199, %v7201
      %v7203 = vrot.slane %v6412, 2
      %v7204 = vsel %vm2267, %v7201, %v7203
      %v7205 = vrot.slane %v6413, 2
      %v7206 = vsel %vm2267, %v7203, %v7205
      %v7207 = vrot.slane %v6414, 2
      %v7208 = vsel %vm2267, %v7205, %v7207
      %v7209 = vrot.slane %v6415, 2
      %v7210 = vsel %vm2267, %v7207, %v7209
      %v7211 = vrot.slane %v6416, 2
      %v7212 = vsel %vm2267, %v7209, %v7211
      %v7213 = vrot.slane %v6417, 2
      %v7214 = vsel %vm2267, %v7211, %v7213
      %v7215 = vrot.slane %v6418, 2
      %v7216 = vsel %vm2267, %v7213, %v7215
      %v7217 = vrot.slane %v6419, 2
      %v7218 = vsel %vm2267, %v7215, %v7217
      %v7219 = vrot.slane %v6420, 2
      %v7220 = vsel %vm2267, %v7217, %v7219
      %v7221 = vrot.slane %v6421, 2
      %v7222 = vsel %vm2267, %v7219, %v7221
      %v7223 = vrot.slane %v6422, 2
      %v7224 = vsel %vm2267, %v7221, %v7223
      %v7225 = vrot.slane %v6423, 2
      %v7226 = vsel %vm2267, %v7223, %v7225
      %v7227 = vrot.slane %v6741, 2
      %v7228 = vsel %vm2267, %v7225, %v7227
      %v7231 = vunpack.c.l.b16 %v7187
      %v7232 = vunpack.c.l.b16 %v7188
      %v7233 = vpack.c.b16 %v7232, %v7231
      %v7236 = vsel %vm597, %v7194, 0
      %v7239 = vsel %vm597, %v7196, 0
      %v7242 = vsel %vm597, %v7198, 0
      %v7245 = vsel %vm597, %v7200, 0
      %v7248 = vsel %vm597, %v7202, 0
      %v7251 = vsel %vm597, %v7204, 0
      %v7254 = vsel %vm597, %v7206, 0
      %v7257 = vsel %vm597, %v7208, 0
      %v7260 = vsel %vm597, %v7210, 0
      %v7263 = vsel %vm597, %v7212, 0
      %v7266 = vsel %vm597, %v7214, 0
      %v7269 = vsel %vm597, %v7216, 0
      %v7272 = vsel %vm597, %v7218, 0
      %v7275 = vsel %vm597, %v7220, 0
      %v7278 = vsel %vm597, %v7222, 0
      %v7281 = vsel %vm597, %v7224, 0
      %v7284 = vsel %vm597, %v7226, 0
      %v7287 = vsel %vm597, %v7228, 0
      %7289 = vmatprep.subr.bf16.mxu0 0
      %7290 = vmatpush1.bf16.msra.mxu0 %v7233
      %7291 = vmatprep.subr.bf16.mxu0 0
      %7292 = vmatpush1.bf16.msra.mxu0 0
      %7293 = vmatprep.subr.bf16.mxu0 0
      %7294 = vmatpush1.bf16.msra.mxu0 0
      %7295 = vmatprep.subr.bf16.mxu0 0
      %7296 = vmatpush1.bf16.msra.mxu0 0
      %7297 = vmatprep.subr.bf16.mxu0 0
      %7298 = vmatpush1.bf16.msra.mxu0 0
      %7299 = vmatprep.subr.bf16.mxu0 0
      %7300 = vmatpush1.bf16.msra.mxu0 0
      %7301 = vmatprep.subr.bf16.mxu0 0
      %7302 = vmatpush1.bf16.msra.mxu0 0
      %7303 = vmatprep.subr.bf16.mxu0 0
      %7304 = vmatpush1.bf16.msra.mxu0 0
      %7305 = vmatprep.subr.bf16.mxu0 0
      %7306 = vmatpush1.bf16.msra.mxu0 0
      %7307 = vmatprep.subr.bf16.mxu0 0
      %7308 = vmatpush1.bf16.msra.mxu0 0
      %7309 = vmatprep.subr.bf16.mxu0 0
      %7310 = vmatpush1.bf16.msra.mxu0 0
      %7311 = vmatprep.subr.bf16.mxu0 0
      %7312 = vmatpush1.bf16.msra.mxu0 0
      %7313 = vmatprep.subr.bf16.mxu0 0
      %7314 = vmatpush1.bf16.msra.mxu0 0
      %7315 = vmatprep.subr.bf16.mxu0 0
      %7316 = vmatpush1.bf16.msra.mxu0 0
      %7317 = vmatprep.subr.bf16.mxu0 0
      %7318 = vmatpush1.bf16.msra.mxu0 0
      %7319 = vmatprep.subr.bf16.mxu0 0
      %7320 = vmatpush1.bf16.msra.mxu0 0
      %7321 = vmatprep.mubr.bf16.mxu0 0
      %7322 = vmatmul.mubr.bf16.gmra.mrb[0].mxu0 %v7236
      %v7323 = vpop.f32.mrb[0].mxu0
      %v7324 = vadd.f32 0.0, %v7323
      %v7325 = vpop.f32.mrb[0].mxu0
      %v7326 = vpop.f32.mrb[0].mxu0
      %v7327 = vadd.f32 0.0, %v7326
      %v7328 = vpop.f32.mrb[0].mxu0
      %7329 = vmatprep.mubr.bf16.mxu0 0
      %7330 = vmatmul.mubr.bf16.gmra.mrb[0].mxu0 %v7239
      %v7331 = vpop.f32.mrb[0].mxu0
      %v7332 = vadd.f32 0.0, %v7331
      %v7333 = vpop.f32.mrb[0].mxu0
      %v7334 = vpop.f32.mrb[0].mxu0
      %v7335 = vadd.f32 0.0, %v7334
      %v7336 = vpop.f32.mrb[0].mxu0
      %7337 = vmatprep.mubr.bf16.mxu0 0
      %7338 = vmatmul.mubr.bf16.gmra.mrb[0].mxu0 %v7242
      %v7339 = vpop.f32.mrb[0].mxu0
      %v7340 = vadd.f32 0.0, %v7339
      %v7341 = vpop.f32.mrb[0].mxu0
      %v7342 = vpop.f32.mrb[0].mxu0
      %v7343 = vadd.f32 0.0, %v7342
      %v7344 = vpop.f32.mrb[0].mxu0
      %7345 = vmatprep.mubr.bf16.mxu0 0
      %7346 = vmatmul.mubr.bf16.gmra.mrb[0].mxu0 %v7245
      %v7347 = vpop.f32.mrb[0].mxu0
      %v7348 = vadd.f32 0.0, %v7347
      %v7349 = vpop.f32.mrb[0].mxu0
      %v7350 = vpop.f32.mrb[0].mxu0
      %v7351 = vadd.f32 0.0, %v7350
      %v7352 = vpop.f32.mrb[0].mxu0
      %7353 = vmatprep.mubr.bf16.mxu0 0
      %7354 = vmatmul.mubr.bf16.gmra.mrb[0].mxu0 %v7248
      %v7355 = vpop.f32.mrb[0].mxu0
      %v7356 = vadd.f32 0.0, %v7355
      %v7357 = vpop.f32.mrb[0].mxu0
      %v7358 = vpop.f32.mrb[0].mxu0
      %v7359 = vadd.f32 0.0, %v7358
      %v7360 = vpop.f32.mrb[0].mxu0
      %7361 = vmatprep.mubr.bf16.mxu0 0
      %7362 = vmatmul.mubr.bf16.gmra.mrb[0].mxu0 %v7251
      %v7363 = vpop.f32.mrb[0].mxu0
      %v7364 = vadd.f32 0.0, %v7363
      %v7365 = vpop.f32.mrb[0].mxu0
      %v7366 = vpop.f32.mrb[0].mxu0
      %v7367 = vadd.f32 0.0, %v7366
      %v7368 = vpop.f32.mrb[0].mxu0
      %7369 = vmatprep.mubr.bf16.mxu0 0
      %7370 = vmatmul.mubr.bf16.gmra.mrb[0].mxu0 %v7254
      %v7371 = vpop.f32.mrb[0].mxu0
      %v7372 = vadd.f32 0.0, %v7371
      %v7373 = vpop.f32.mrb[0].mxu0
      %v7374 = vpop.f32.mrb[0].mxu0
      %v7375 = vadd.f32 0.0, %v7374
      %v7376 = vpop.f32.mrb[0].mxu0
      %7377 = vmatprep.mubr.bf16.mxu0 0
      %7378 = vmatmul.mubr.bf16.gmra.mrb[0].mxu0 %v7257
      %v7379 = vpop.f32.mrb[0].mxu0
      %v7380 = vadd.f32 0.0, %v7379
      %v7381 = vpop.f32.mrb[0].mxu0
      %v7382 = vpop.f32.mrb[0].mxu0
      %v7383 = vadd.f32 0.0, %v7382
      %v7384 = vpop.f32.mrb[0].mxu0
      %7385 = vmatprep.mubr.bf16.mxu0 0
      %7386 = vmatmul.mubr.bf16.gmra.mrb[0].mxu0 %v7260
      %v7387 = vpop.f32.mrb[0].mxu0
      %v7388 = vadd.f32 0.0, %v7387
      %v7389 = vpop.f32.mrb[0].mxu0
      %v7390 = vpop.f32.mrb[0].mxu0
      %v7391 = vadd.f32 0.0, %v7390
      %v7392 = vpop.f32.mrb[0].mxu0
      %7393 = vmatprep.mubr.bf16.mxu0 0
      %7394 = vmatmul.mubr.bf16.gmra.mrb[0].mxu0 %v7263
      %v7395 = vpop.f32.mrb[0].mxu0
      %v7396 = vadd.f32 0.0, %v7395
      %v7397 = vpop.f32.mrb[0].mxu0
      %v7398 = vpop.f32.mrb[0].mxu0
      %v7399 = vadd.f32 0.0, %v7398
      %v7400 = vpop.f32.mrb[0].mxu0
      %7401 = vmatprep.mubr.bf16.mxu0 0
      %7402 = vmatmul.mubr.bf16.gmra.mrb[0].mxu0 %v7266
      %v7403 = vpop.f32.mrb[0].mxu0
      %v7404 = vadd.f32 0.0, %v7403
      %v7405 = vpop.f32.mrb[0].mxu0
      %v7406 = vpop.f32.mrb[0].mxu0
      %v7407 = vadd.f32 0.0, %v7406
      %v7408 = vpop.f32.mrb[0].mxu0
      %7409 = vmatprep.mubr.bf16.mxu0 0
      %7410 = vmatmul.mubr.bf16.gmra.mrb[0].mxu0 %v7269
      %v7411 = vpop.f32.mrb[0].mxu0
      %v7412 = vadd.f32 0.0, %v7411
      %v7413 = vpop.f32.mrb[0].mxu0
      %v7414 = vpop.f32.mrb[0].mxu0
      %v7415 = vadd.f32 0.0, %v7414
      %v7416 = vpop.f32.mrb[0].mxu0
      %7417 = vmatprep.mubr.bf16.mxu0 0
      %7418 = vmatmul.mubr.bf16.gmra.mrb[0].mxu0 %v7272
      %v7419 = vpop.f32.mrb[0].mxu0
      %v7420 = vadd.f32 0.0, %v7419
      %v7421 = vpop.f32.mrb[0].mxu0
      %v7422 = vpop.f32.mrb[0].mxu0
      %v7423 = vadd.f32 0.0, %v7422
      %v7424 = vpop.f32.mrb[0].mxu0
      %7425 = vmatprep.mubr.bf16.mxu0 0
      %7426 = vmatmul.mubr.bf16.gmra.mrb[0].mxu0 %v7275
      %v7427 = vpop.f32.mrb[0].mxu0
      %v7428 = vadd.f32 0.0, %v7427
      %v7429 = vpop.f32.mrb[0].mxu0
      %v7430 = vpop.f32.mrb[0].mxu0
      %v7431 = vadd.f32 0.0, %v7430
      %v7432 = vpop.f32.mrb[0].mxu0
      %7433 = vmatprep.mubr.bf16.mxu0 0
      %7434 = vmatmul.mubr.bf16.gmra.mrb[0].mxu0 %v7278
      %v7435 = vpop.f32.mrb[0].mxu0
      %v7436 = vadd.f32 0.0, %v7435
      %v7437 = vpop.f32.mrb[0].mxu0
      %v7438 = vpop.f32.mrb[0].mxu0
      %v7439 = vadd.f32 0.0, %v7438
      %v7440 = vpop.f32.mrb[0].mxu0
      %7441 = vmatprep.mubr.bf16.mxu0 0
      %7442 = vmatmul.mubr.bf16.gmra.mrb[0].mxu0 %v7281
      %v7443 = vpop.f32.mrb[0].mxu0
      %v7444 = vadd.f32 0.0, %v7443
      %v7445 = vpop.f32.mrb[0].mxu0
      %v7446 = vpop.f32.mrb[0].mxu0
      %v7447 = vadd.f32 0.0, %v7446
      %v7448 = vpop.f32.mrb[0].mxu0
      %7449 = vmatprep.mubr.bf16.mxu0 0
      %7450 = vmatmul.mubr.bf16.gmra.mrb[0].mxu0 %v7284
      %v7451 = vpop.f32.mrb[0].mxu0
      %v7452 = vadd.f32 0.0, %v7451
      %v7453 = vpop.f32.mrb[0].mxu0
      %v7454 = vpop.f32.mrb[0].mxu0
      %v7455 = vadd.f32 0.0, %v7454
      %v7456 = vpop.f32.mrb[0].mxu0
      %7457 = vmatprep.mubr.bf16.mxu0 0
      %7458 = vmatmul.mubr.bf16.gmra.mrb[0].mxu0 %v7287
      %v7459 = vpop.f32.mrb[0].mxu0
      %v7460 = vadd.f32 0.0, %v7459
      %v7461 = vpop.f32.mrb[0].mxu0
      %v7462 = vpop.f32.mrb[0].mxu0
      %v7463 = vadd.f32 0.0, %v7462
      %v7464 = vpop.f32.mrb[0].mxu0
      %7465 = vdwg.mxu0
      %v7466 = vadd.f32 %v7149, %v7324
      %v7467 = vadd.f32 %v7150, %v7327
      %v7468 = vadd.f32 %v7151, %v7332
      %v7469 = vadd.f32 %v7152, %v7335
      %v7470 = vadd.f32 %v7153, %v7340
      %v7471 = vadd.f32 %v7154, %v7343
      %v7472 = vadd.f32 %v7155, %v7348
      %v7473 = vadd.f32 %v7156, %v7351
      %v7474 = vadd.f32 %v7157, %v7356
      %v7475 = vadd.f32 %v7158, %v7359
      %v7476 = vadd.f32 %v7159, %v7364
      %v7477 = vadd.f32 %v7160, %v7367
      %v7478 = vadd.f32 %v7161, %v7372
      %v7479 = vadd.f32 %v7162, %v7375
      %v7480 = vadd.f32 %v7163, %v7380
      %v7481 = vadd.f32 %v7164, %v7383
      %v7482 = vadd.f32 %v7165, %v7388
      %v7483 = vadd.f32 %v7166, %v7391
      %v7484 = vadd.f32 %v7167, %v7396
      %v7485 = vadd.f32 %v7168, %v7399
      %v7486 = vadd.f32 %v7169, %v7404
      %v7487 = vadd.f32 %v7170, %v7407
      %v7488 = vadd.f32 %v7171, %v7412
      %v7489 = vadd.f32 %v7172, %v7415
      %v7490 = vadd.f32 %v7173, %v7420
      %v7491 = vadd.f32 %v7174, %v7423
      %v7492 = vadd.f32 %v7175, %v7428
      %v7493 = vadd.f32 %v7176, %v7431
      %v7494 = vadd.f32 %v7177, %v7436
      %v7495 = vadd.f32 %v7178, %v7439
      %v7496 = vadd.f32 %v7179, %v7444
      %v7497 = vadd.f32 %v7180, %v7447
      %v7498 = vadd.f32 %v7181, %v7452
      %v7499 = vadd.f32 %v7182, %v7455
      %v7500 = vadd.f32 %v7183, %v7460
      %v7501 = vadd.f32 %v7184, %v7463
      %v7502 = vld [vmem:[#allocation2 + $0x10] sm:$0xc]
      %v7503 = vld [vmem:[#allocation2 + $0x14] sm:$0xf]
      %v7504 = vld [vmem:[#allocation2 + $0x18] sm:$0xf]
      %v7505 = vld [vmem:[#allocation2 + $0x1c] sm:$0xf]
      %v7506 = vld [vmem:[#allocation2 + $0x20] sm:$0xf]
      %v7507 = vld [vmem:[#allocation2 + $0x24] sm:$0xf]
      %v7508 = vld [vmem:[#allocation2 + $0x28] sm:$0xf]
      %v7509 = vld [vmem:[#allocation2 + $0x2c] sm:$0xf]
      %v7510 = vld [vmem:[#allocation2 + $0x30] sm:$0xf]
      %v7511 = vld [vmem:[#allocation2 + $0x34] sm:$0xf]
      %v7512 = vld [vmem:[#allocation2 + $0x38] sm:$0xf]
      %v7513 = vld [vmem:[#allocation2 + $0x3c] sm:$0xf]
      %v7514 = vld [vmem:[#allocation2 + $0x40] sm:$0xf]
      %v7515 = vld [vmem:[#allocation2 + $0x44] sm:$0xf]
      %v7516 = vld [vmem:[#allocation2 + $0x48] sm:$0xf]
      %v7517 = vld [vmem:[#allocation2 + $0x4c] sm:$0xf]
      %v7518 = vld [vmem:[#allocation2 + $0x50] sm:$0xf]
      %v7519 = vld [vmem:[#allocation2 + $0x54] sm:$0xf]
      %v7520 = vld [vmem:[#allocation2 + $0x58] sm:$0xf]
      %v7521 = vld [vmem:[#allocation2 + $0x5c] sm:$0xf]
      %v7522 = vld [vmem:[#allocation2 + $0x60] sm:$0xf]
      %v7523 = vld [vmem:[#allocation2 + $0x64] sm:$0xf]
      %v7524 = vld [vmem:[#allocation2 + $0x68] sm:$0xf]
      %v7525 = vld [vmem:[#allocation2 + $0x6c] sm:$0xf]
      %v7526 = vld [vmem:[#allocation2 + $0x70] sm:$0xf]
      %v7527 = vld [vmem:[#allocation2 + $0x74] sm:$0xf]
      %v7528 = vld [vmem:[#allocation2 + $0x78] sm:$0xf]
      %v7529 = vld [vmem:[#allocation2 + $0x7c] sm:$0xf]
      %v7530 = vld [vmem:[#allocation2 + $0x80] sm:$0xf]
      %v7531 = vld [vmem:[#allocation2 + $0x84] sm:$0xf]
      %v7532 = vld [vmem:[#allocation2 + $0x88] sm:$0xf]
      %v7533 = vld [vmem:[#allocation2 + $0x8c] sm:$0xf]
      %v7534 = vld [vmem:[#allocation2 + $0x90] sm:$0xf]
      %v7535 = vld [vmem:[#allocation2 + $0x94] sm:$0xf]
      %v7536 = vld [vmem:[#allocation2 + $0x98] sm:$0xf]
      %v7537 = vld [vmem:[#allocation2 + $0x9c] sm:$0xf]
      %v7538 = vld [vmem:[#allocation2 + $0xa0] sm:$0x3]
      %s7539 = scalar_lea.vmem %s4, 48
      %v7540 = vld [vmem:[%s7539] sm:$0xf]
      %v7541 = vld [vmem:[%s7539 + $0x4] sm:$0xf]
      %v7579 = vunpack.c.l.b16 %v7502
      %v7580 = vunpack.c.l.b16 %v7503
      %v7581 = vunpack.c.l.b16 %v7504
      %v7582 = vunpack.c.l.b16 %v7505
      %v7583 = vunpack.c.l.b16 %v7506
      %v7584 = vunpack.c.l.b16 %v7507
      %v7585 = vunpack.c.l.b16 %v7508
      %v7586 = vunpack.c.l.b16 %v7509
      %v7587 = vunpack.c.l.b16 %v7510
      %v7588 = vunpack.c.l.b16 %v7511
      %v7589 = vunpack.c.l.b16 %v7512
      %v7590 = vunpack.c.l.b16 %v7513
      %v7591 = vunpack.c.l.b16 %v7514
      %v7592 = vunpack.c.l.b16 %v7515
      %v7593 = vunpack.c.l.b16 %v7516
      %v7594 = vunpack.c.l.b16 %v7517
      %v7595 = vunpack.c.l.b16 %v7518
      %v7596 = vunpack.c.l.b16 %v7519
      %v7597 = vunpack.c.l.b16 %v7520
      %v7598 = vunpack.c.l.b16 %v7521
      %v7599 = vunpack.c.l.b16 %v7522
      %v7600 = vunpack.c.l.b16 %v7523
      %v7601 = vunpack.c.l.b16 %v7524
      %v7602 = vunpack.c.l.b16 %v7525
      %v7603 = vunpack.c.l.b16 %v7526
      %v7604 = vunpack.c.l.b16 %v7527
      %v7605 = vunpack.c.l.b16 %v7528
      %v7606 = vunpack.c.l.b16 %v7529
      %v7607 = vunpack.c.l.b16 %v7530
      %v7608 = vunpack.c.l.b16 %v7531
      %v7609 = vunpack.c.l.b16 %v7532
      %v7610 = vunpack.c.l.b16 %v7533
      %v7611 = vunpack.c.l.b16 %v7534
      %v7612 = vunpack.c.l.b16 %v7535
      %v7613 = vunpack.c.l.b16 %v7536
      %v7614 = vunpack.c.l.b16 %v7537
      %v7615 = vunpack.c.l.b16 %v7538
      %v7616 = vpack.c.b16 %v7580, %v7579
      %v7617 = vpack.c.b16 %v7582, %v7581
      %v7618 = vpack.c.b16 %v7584, %v7583
      %v7619 = vpack.c.b16 %v7586, %v7585
      %v7620 = vpack.c.b16 %v7588, %v7587
      %v7621 = vpack.c.b16 %v7590, %v7589
      %v7622 = vpack.c.b16 %v7592, %v7591
      %v7623 = vpack.c.b16 %v7594, %v7593
      %v7624 = vpack.c.b16 %v7596, %v7595
      %v7625 = vpack.c.b16 %v7598, %v7597
      %v7626 = vpack.c.b16 %v7600, %v7599
      %v7627 = vpack.c.b16 %v7602, %v7601
      %v7628 = vpack.c.b16 %v7604, %v7603
      %v7629 = vpack.c.b16 %v7606, %v7605
      %v7630 = vpack.c.b16 %v7608, %v7607
      %v7631 = vpack.c.b16 %v7610, %v7609
      %v7632 = vpack.c.b16 %v7612, %v7611
      %v7633 = vpack.c.b16 %v7614, %v7613
      %v7634 = vpack.c.b16 %v7615, %v7615
      %v7635 = vrot.slane %v7616, 2
      %v7636 = vrot.slane %v7617, 2
      %v7637 = vsel %vm2267, %v7635, %v7636
      %v7638 = vrot.slane %v7618, 2
      %v7639 = vsel %vm2267, %v7636, %v7638
      %v7640 = vrot.slane %v7619, 2
      %v7641 = vsel %vm2267, %v7638, %v7640
      %v7642 = vrot.slane %v7620, 2
      %v7643 = vsel %vm2267, %v7640, %v7642
      %v7644 = vrot.slane %v7621, 2
      %v7645 = vsel %vm2267, %v7642, %v7644
      %v7646 = vrot.slane %v7622, 2
      %v7647 = vsel %vm2267, %v7644, %v7646
      %v7648 = vrot.slane %v7623, 2
      %v7649 = vsel %vm2267, %v7646, %v7648
      %v7650 = vrot.slane %v7624, 2
      %v7651 = vsel %vm2267, %v7648, %v7650
      %v7652 = vrot.slane %v7625, 2
      %v7653 = vsel %vm2267, %v7650, %v7652
      %v7654 = vrot.slane %v7626, 2
      %v7655 = vsel %vm2267, %v7652, %v7654
      %v7656 = vrot.slane %v7627, 2
      %v7657 = vsel %vm2267, %v7654, %v7656
      %v7658 = vrot.slane %v7628, 2
      %v7659 = vsel %vm2267, %v7656, %v7658
      %v7660 = vrot.slane %v7629, 2
      %v7661 = vsel %vm2267, %v7658, %v7660
      %v7662 = vrot.slane %v7630, 2
      %v7663 = vsel %vm2267, %v7660, %v7662
      %v7664 = vrot.slane %v7631, 2
      %v7665 = vsel %vm2267, %v7662, %v7664
      %v7666 = vrot.slane %v7632, 2
      %v7667 = vsel %vm2267, %v7664, %v7666
      %v7668 = vrot.slane %v7633, 2
      %v7669 = vsel %vm2267, %v7666, %v7668
      %v7670 = vrot.slane %v7634, 2
      %v7671 = vsel %vm2267, %v7668, %v7670
      %v7674 = vunpack.c.l.b16 %v7540
      %v7675 = vunpack.c.l.b16 %v7541
      %v7676 = vpack.c.b16 %v7675, %v7674
      %v7679 = vsel %vm597, %v7637, 0
      %v7682 = vsel %vm597, %v7639, 0
      %v7685 = vsel %vm597, %v7641, 0
      %v7688 = vsel %vm597, %v7643, 0
      %v7691 = vsel %vm597, %v7645, 0
      %v7694 = vsel %vm597, %v7647, 0
      %v7697 = vsel %vm597, %v7649, 0
      %v7700 = vsel %vm597, %v7651, 0
      %v7703 = vsel %vm597, %v7653, 0
      %v7706 = vsel %vm597, %v7655, 0
      %v7709 = vsel %vm597, %v7657, 0
      %v7712 = vsel %vm597, %v7659, 0
      %v7715 = vsel %vm597, %v7661, 0
      %v7718 = vsel %vm597, %v7663, 0
      %v7721 = vsel %vm597, %v7665, 0
      %v7724 = vsel %vm597, %v7667, 0
      %v7727 = vsel %vm597, %v7669, 0
      %v7730 = vsel %vm597, %v7671, 0
      %7732 = vmatprep.subr.bf16.mxu0 0
      %7733 = vmatpush1.bf16.msra.mxu0 %v7676
      %7734 = vmatprep.subr.bf16.mxu0 0
      %7735 = vmatpush1.bf16.msra.mxu0 0
      %7736 = vmatprep.subr.bf16.mxu0 0
      %7737 = vmatpush1.bf16.msra.mxu0 0
      %7738 = vmatprep.subr.bf16.mxu0 0
      %7739 = vmatpush1.bf16.msra.mxu0 0
      %7740 = vmatprep.subr.bf16.mxu0 0
      %7741 = vmatpush1.bf16.msra.mxu0 0
      %7742 = vmatprep.subr.bf16.mxu0 0
      %7743 = vmatpush1.bf16.msra.mxu0 0
      %7744 = vmatprep.subr.bf16.mxu0 0
      %7745 = vmatpush1.bf16.msra.mxu0 0
      %7746 = vmatprep.subr.bf16.mxu0 0
      %7747 = vmatpush1.bf16.msra.mxu0 0
      %7748 = vmatprep.subr.bf16.mxu0 0
      %7749 = vmatpush1.bf16.msra.mxu0 0
      %7750 = vmatprep.subr.bf16.mxu0 0
      %7751 = vmatpush1.bf16.msra.mxu0 0
      %7752 = vmatprep.subr.bf16.mxu0 0
      %7753 = vmatpush1.bf16.msra.mxu0 0
      %7754 = vmatprep.subr.bf16.mxu0 0
      %7755 = vmatpush1.bf16.msra.mxu0 0
      %7756 = vmatprep.subr.bf16.mxu0 0
      %7757 = vmatpush1.bf16.msra.mxu0 0
      %7758 = vmatprep.subr.bf16.mxu0 0
      %7759 = vmatpush1.bf16.msra.mxu0 0
      %7760 = vmatprep.subr.bf16.mxu0 0
      %7761 = vmatpush1.bf16.msra.mxu0 0
      %7762 = vmatprep.subr.bf16.mxu0 0
      %7763 = vmatpush1.bf16.msra.mxu0 0
      %7764 = vmatprep.mubr.bf16.mxu0 0
      %7765 = vmatmul.mubr.bf16.gmra.mrb[0].mxu0 %v7679
      %v7766 = vpop.f32.mrb[0].mxu0
      %v7767 = vadd.f32 0.0, %v7766
      %v7768 = vpop.f32.mrb[0].mxu0
      %v7769 = vpop.f32.mrb[0].mxu0
      %v7770 = vadd.f32 0.0, %v7769
      %v7771 = vpop.f32.mrb[0].mxu0
      %7772 = vmatprep.mubr.bf16.mxu0 0
      %7773 = vmatmul.mubr.bf16.gmra.mrb[0].mxu0 %v7682
      %v7774 = vpop.f32.mrb[0].mxu0
      %v7775 = vadd.f32 0.0, %v7774
      %v7776 = vpop.f32.mrb[0].mxu0
      %v7777 = vpop.f32.mrb[0].mxu0
      %v7778 = vadd.f32 0.0, %v7777
      %v7779 = vpop.f32.mrb[0].mxu0
      %7780 = vmatprep.mubr.bf16.mxu0 0
      %7781 = vmatmul.mubr.bf16.gmra.mrb[0].mxu0 %v7685
      %v7782 = vpop.f32.mrb[0].mxu0
      %v7783 = vadd.f32 0.0, %v7782
      %v7784 = vpop.f32.mrb[0].mxu0
      %v7785 = vpop.f32.mrb[0].mxu0
      %v7786 = vadd.f32 0.0, %v7785
      %v7787 = vpop.f32.mrb[0].mxu0
      %7788 = vmatprep.mubr.bf16.mxu0 0
      %7789 = vmatmul.mubr.bf16.gmra.mrb[0].mxu0 %v7688
      %v7790 = vpop.f32.mrb[0].mxu0
      %v7791 = vadd.f32 0.0, %v7790
      %v7792 = vpop.f32.mrb[0].mxu0
      %v7793 = vpop.f32.mrb[0].mxu0
      %v7794 = vadd.f32 0.0, %v7793
      %v7795 = vpop.f32.mrb[0].mxu0
      %7796 = vmatprep.mubr.bf16.mxu0 0
      %7797 = vmatmul.mubr.bf16.gmra.mrb[0].mxu0 %v7691
      %v7798 = vpop.f32.mrb[0].mxu0
      %v7799 = vadd.f32 0.0, %v7798
      %v7800 = vpop.f32.mrb[0].mxu0
      %v7801 = vpop.f32.mrb[0].mxu0
      %v7802 = vadd.f32 0.0, %v7801
      %v7803 = vpop.f32.mrb[0].mxu0
      %7804 = vmatprep.mubr.bf16.mxu0 0
      %7805 = vmatmul.mubr.bf16.gmra.mrb[0].mxu0 %v7694
      %v7806 = vpop.f32.mrb[0].mxu0
      %v7807 = vadd.f32 0.0, %v7806
      %v7808 = vpop.f32.mrb[0].mxu0
      %v7809 = vpop.f32.mrb[0].mxu0
      %v7810 = vadd.f32 0.0, %v7809
      %v7811 = vpop.f32.mrb[0].mxu0
      %7812 = vmatprep.mubr.bf16.mxu0 0
      %7813 = vmatmul.mubr.bf16.gmra.mrb[0].mxu0 %v7697
      %v7814 = vpop.f32.mrb[0].mxu0
      %v7815 = vadd.f32 0.0, %v7814
      %v7816 = vpop.f32.mrb[0].mxu0
      %v7817 = vpop.f32.mrb[0].mxu0
      %v7818 = vadd.f32 0.0, %v7817
      %v7819 = vpop.f32.mrb[0].mxu0
      %7820 = vmatprep.mubr.bf16.mxu0 0
      %7821 = vmatmul.mubr.bf16.gmra.mrb[0].mxu0 %v7700
      %v7822 = vpop.f32.mrb[0].mxu0
      %v7823 = vadd.f32 0.0, %v7822
      %v7824 = vpop.f32.mrb[0].mxu0
      %v7825 = vpop.f32.mrb[0].mxu0
      %v7826 = vadd.f32 0.0, %v7825
      %v7827 = vpop.f32.mrb[0].mxu0
      %7828 = vmatprep.mubr.bf16.mxu0 0
      %7829 = vmatmul.mubr.bf16.gmra.mrb[0].mxu0 %v7703
      %v7830 = vpop.f32.mrb[0].mxu0
      %v7831 = vadd.f32 0.0, %v7830
      %v7832 = vpop.f32.mrb[0].mxu0
      %v7833 = vpop.f32.mrb[0].mxu0
      %v7834 = vadd.f32 0.0, %v7833
      %v7835 = vpop.f32.mrb[0].mxu0
      %7836 = vmatprep.mubr.bf16.mxu0 0
      %7837 = vmatmul.mubr.bf16.gmra.mrb[0].mxu0 %v7706
      %v7838 = vpop.f32.mrb[0].mxu0
      %v7839 = vadd.f32 0.0, %v7838
      %v7840 = vpop.f32.mrb[0].mxu0
      %v7841 = vpop.f32.mrb[0].mxu0
      %v7842 = vadd.f32 0.0, %v7841
      %v7843 = vpop.f32.mrb[0].mxu0
      %7844 = vmatprep.mubr.bf16.mxu0 0
      %7845 = vmatmul.mubr.bf16.gmra.mrb[0].mxu0 %v7709
      %v7846 = vpop.f32.mrb[0].mxu0
      %v7847 = vadd.f32 0.0, %v7846
      %v7848 = vpop.f32.mrb[0].mxu0
      %v7849 = vpop.f32.mrb[0].mxu0
      %v7850 = vadd.f32 0.0, %v7849
      %v7851 = vpop.f32.mrb[0].mxu0
      %7852 = vmatprep.mubr.bf16.mxu0 0
      %7853 = vmatmul.mubr.bf16.gmra.mrb[0].mxu0 %v7712
      %v7854 = vpop.f32.mrb[0].mxu0
      %v7855 = vadd.f32 0.0, %v7854
      %v7856 = vpop.f32.mrb[0].mxu0
      %v7857 = vpop.f32.mrb[0].mxu0
      %v7858 = vadd.f32 0.0, %v7857
      %v7859 = vpop.f32.mrb[0].mxu0
      %7860 = vmatprep.mubr.bf16.mxu0 0
      %7861 = vmatmul.mubr.bf16.gmra.mrb[0].mxu0 %v7715
      %v7862 = vpop.f32.mrb[0].mxu0
      %v7863 = vadd.f32 0.0, %v7862
      %v7864 = vpop.f32.mrb[0].mxu0
      %v7865 = vpop.f32.mrb[0].mxu0
      %v7866 = vadd.f32 0.0, %v7865
      %v7867 = vpop.f32.mrb[0].mxu0
      %7868 = vmatprep.mubr.bf16.mxu0 0
      %7869 = vmatmul.mubr.bf16.gmra.mrb[0].mxu0 %v7718
      %v7870 = vpop.f32.mrb[0].mxu0
      %v7871 = vadd.f32 0.0, %v7870
      %v7872 = vpop.f32.mrb[0].mxu0
      %v7873 = vpop.f32.mrb[0].mxu0
      %v7874 = vadd.f32 0.0, %v7873
      %v7875 = vpop.f32.mrb[0].mxu0
      %7876 = vmatprep.mubr.bf16.mxu0 0
      %7877 = vmatmul.mubr.bf16.gmra.mrb[0].mxu0 %v7721
      %v7878 = vpop.f32.mrb[0].mxu0
      %v7879 = vadd.f32 0.0, %v7878
      %v7880 = vpop.f32.mrb[0].mxu0
      %v7881 = vpop.f32.mrb[0].mxu0
      %v7882 = vadd.f32 0.0, %v7881
      %v7883 = vpop.f32.mrb[0].mxu0
      %7884 = vmatprep.mubr.bf16.mxu0 0
      %7885 = vmatmul.mubr.bf16.gmra.mrb[0].mxu0 %v7724
      %v7886 = vpop.f32.mrb[0].mxu0
      %v7887 = vadd.f32 0.0, %v7886
      %v7888 = vpop.f32.mrb[0].mxu0
      %v7889 = vpop.f32.mrb[0].mxu0
      %v7890 = vadd.f32 0.0, %v7889
      %v7891 = vpop.f32.mrb[0].mxu0
      %7892 = vmatprep.mubr.bf16.mxu0 0
      %7893 = vmatmul.mubr.bf16.gmra.mrb[0].mxu0 %v7727
      %v7894 = vpop.f32.mrb[0].mxu0
      %v7895 = vadd.f32 0.0, %v7894
      %v7896 = vpop.f32.mrb[0].mxu0
      %v7897 = vpop.f32.mrb[0].mxu0
      %v7898 = vadd.f32 0.0, %v7897
      %v7899 = vpop.f32.mrb[0].mxu0
      %7900 = vmatprep.mubr.bf16.mxu0 0
      %7901 = vmatmul.mubr.bf16.gmra.mrb[0].mxu0 %v7730
      %v7902 = vpop.f32.mrb[0].mxu0
      %v7903 = vadd.f32 0.0, %v7902
      %v7904 = vpop.f32.mrb[0].mxu0
      %v7905 = vpop.f32.mrb[0].mxu0
      %v7906 = vadd.f32 0.0, %v7905
      %v7907 = vpop.f32.mrb[0].mxu0
      %7908 = vdwg.mxu0
      %v7909 = vadd.f32 %v7466, %v7767
      %v7910 = vadd.f32 %v7467, %v7770
      %v7911 = vadd.f32 %v7468, %v7775
      %v7912 = vadd.f32 %v7469, %v7778
      %v7913 = vadd.f32 %v7470, %v7783
      %v7914 = vadd.f32 %v7471, %v7786
      %v7915 = vadd.f32 %v7472, %v7791
      %v7916 = vadd.f32 %v7473, %v7794
      %v7917 = vadd.f32 %v7474, %v7799
      %v7918 = vadd.f32 %v7475, %v7802
      %v7919 = vadd.f32 %v7476, %v7807
      %v7920 = vadd.f32 %v7477, %v7810
      %v7921 = vadd.f32 %v7478, %v7815
      %v7922 = vadd.f32 %v7479, %v7818
      %v7923 = vadd.f32 %v7480, %v7823
      %v7924 = vadd.f32 %v7481, %v7826
      %v7925 = vadd.f32 %v7482, %v7831
      %v7926 = vadd.f32 %v7483, %v7834
      %v7927 = vadd.f32 %v7484, %v7839
      %v7928 = vadd.f32 %v7485, %v7842
      %v7929 = vadd.f32 %v7486, %v7847
      %v7930 = vadd.f32 %v7487, %v7850
      %v7931 = vadd.f32 %v7488, %v7855
      %v7932 = vadd.f32 %v7489, %v7858
      %v7933 = vadd.f32 %v7490, %v7863
      %v7934 = vadd.f32 %v7491, %v7866
      %v7935 = vadd.f32 %v7492, %v7871
      %v7936 = vadd.f32 %v7493, %v7874
      %v7937 = vadd.f32 %v7494, %v7879
      %v7938 = vadd.f32 %v7495, %v7882
      %v7939 = vadd.f32 %v7496, %v7887
      %v7940 = vadd.f32 %v7497, %v7890
      %v7941 = vadd.f32 %v7498, %v7895
      %v7942 = vadd.f32 %v7499, %v7898
      %v7943 = vadd.f32 %v7500, %v7903
      %v7944 = vadd.f32 %v7501, %v7906
      %v7945 = vld [vmem:[#allocation2 + $0xa0] sm:$0x7]
      %s7946 = scalar_lea.vmem %s4, 56
      %v7947 = vld [vmem:[%s7946] sm:$0xf]
      %v7948 = vld [vmem:[%s7946 + $0x4] sm:$0xf]
      %v7950 = vunpack.c.l.b16 %v7945
      %v7951 = vpack.c.b16 %v7950, %v7950
      %v7953 = vshrl.u32 %v7616, 16
      %v7955 = vrot.slane %v7953, 2
      %v7956 = vshll.u32 %v7616, 16
      %v7958 = vrot.slane %v7956, 3
      %v7959 = vor.u32 %v7955, %v7958
      %v7961 = vshrl.u32 %v7617, 16
      %v7963 = vrot.slane %v7961, 2
      %v7964 = vshll.u32 %v7617, 16
      %v7966 = vrot.slane %v7964, 3
      %v7967 = vor.u32 %v7963, %v7966
      %v7968 = vsel %vm3028, %v7959, %v7967
      %v7970 = vshrl.u32 %v7618, 16
      %v7972 = vrot.slane %v7970, 2
      %v7973 = vshll.u32 %v7618, 16
      %v7975 = vrot.slane %v7973, 3
      %v7976 = vor.u32 %v7972, %v7975
      %v7977 = vsel %vm3028, %v7967, %v7976
      %v7979 = vshrl.u32 %v7619, 16
      %v7981 = vrot.slane %v7979, 2
      %v7982 = vshll.u32 %v7619, 16
      %v7984 = vrot.slane %v7982, 3
      %v7985 = vor.u32 %v7981, %v7984
      %v7986 = vsel %vm3028, %v7976, %v7985
      %v7988 = vshrl.u32 %v7620, 16
      %v7990 = vrot.slane %v7988, 2
      %v7991 = vshll.u32 %v7620, 16
      %v7993 = vrot.slane %v7991, 3
      %v7994 = vor.u32 %v7990, %v7993
      %v7995 = vsel %vm3028, %v7985, %v7994
      %v7997 = vshrl.u32 %v7621, 16
      %v7999 = vrot.slane %v7997, 2
      %v8000 = vshll.u32 %v7621, 16
      %v8002 = vrot.slane %v8000, 3
      %v8003 = vor.u32 %v7999, %v8002
      %v8004 = vsel %vm3028, %v7994, %v8003
      %v8006 = vshrl.u32 %v7622, 16
      %v8008 = vrot.slane %v8006, 2
      %v8009 = vshll.u32 %v7622, 16
      %v8011 = vrot.slane %v8009, 3
      %v8012 = vor.u32 %v8008, %v8011
      %v8013 = vsel %vm3028, %v8003, %v8012
      %v8015 = vshrl.u32 %v7623, 16
      %v8017 = vrot.slane %v8015, 2
      %v8018 = vshll.u32 %v7623, 16
      %v8020 = vrot.slane %v8018, 3
      %v8021 = vor.u32 %v8017, %v8020
      %v8022 = vsel %vm3028, %v8012, %v8021
      %v8024 = vshrl.u32 %v7624, 16
      %v8026 = vrot.slane %v8024, 2
      %v8027 = vshll.u32 %v7624, 16
      %v8029 = vrot.slane %v8027, 3
      %v8030 = vor.u32 %v8026, %v8029
      %v8031 = vsel %vm3028, %v8021, %v8030
      %v8033 = vshrl.u32 %v7625, 16
      %v8035 = vrot.slane %v8033, 2
      %v8036 = vshll.u32 %v7625, 16
      %v8038 = vrot.slane %v8036, 3
      %v8039 = vor.u32 %v8035, %v8038
      %v8040 = vsel %vm3028, %v8030, %v8039
      %v8042 = vshrl.u32 %v7626, 16
      %v8044 = vrot.slane %v8042, 2
      %v8045 = vshll.u32 %v7626, 16
      %v8047 = vrot.slane %v8045, 3
      %v8048 = vor.u32 %v8044, %v8047
      %v8049 = vsel %vm3028, %v8039, %v8048
      %v8051 = vshrl.u32 %v7627, 16
      %v8053 = vrot.slane %v8051, 2
      %v8054 = vshll.u32 %v7627, 16
      %v8056 = vrot.slane %v8054, 3
      %v8057 = vor.u32 %v8053, %v8056
      %v8058 = vsel %vm3028, %v8048, %v8057
      %v8060 = vshrl.u32 %v7628, 16
      %v8062 = vrot.slane %v8060, 2
      %v8063 = vshll.u32 %v7628, 16
      %v8065 = vrot.slane %v8063, 3
      %v8066 = vor.u32 %v8062, %v8065
      %v8067 = vsel %vm3028, %v8057, %v8066
      %v8069 = vshrl.u32 %v7629, 16
      %v8071 = vrot.slane %v8069, 2
      %v8072 = vshll.u32 %v7629, 16
      %v8074 = vrot.slane %v8072, 3
      %v8075 = vor.u32 %v8071, %v8074
      %v8076 = vsel %vm3028, %v8066, %v8075
      %v8078 = vshrl.u32 %v7630, 16
      %v8080 = vrot.slane %v8078, 2
      %v8081 = vshll.u32 %v7630, 16
      %v8083 = vrot.slane %v8081, 3
      %v8084 = vor.u32 %v8080, %v8083
      %v8085 = vsel %vm3028, %v8075, %v8084
      %v8087 = vshrl.u32 %v7631, 16
      %v8089 = vrot.slane %v8087, 2
      %v8090 = vshll.u32 %v7631, 16
      %v8092 = vrot.slane %v8090, 3
      %v8093 = vor.u32 %v8089, %v8092
      %v8094 = vsel %vm3028, %v8084, %v8093
      %v8096 = vshrl.u32 %v7632, 16
      %v8098 = vrot.slane %v8096, 2
      %v8099 = vshll.u32 %v7632, 16
      %v8101 = vrot.slane %v8099, 3
      %v8102 = vor.u32 %v8098, %v8101
      %v8103 = vsel %vm3028, %v8093, %v8102
      %v8105 = vshrl.u32 %v7633, 16
      %v8107 = vrot.slane %v8105, 2
      %v8108 = vshll.u32 %v7633, 16
      %v8110 = vrot.slane %v8108, 3
      %v8111 = vor.u32 %v8107, %v8110
      %v8112 = vsel %vm3028, %v8102, %v8111
      %v8114 = vshrl.u32 %v7951, 16
      %v8116 = vrot.slane %v8114, 2
      %v8117 = vshll.u32 %v7951, 16
      %v8119 = vrot.slane %v8117, 3
      %v8120 = vor.u32 %v8116, %v8119
      %v8121 = vsel %vm3028, %v8111, %v8120
      %v8124 = vunpack.c.l.b16 %v7947
      %v8125 = vunpack.c.l.b16 %v7948
      %v8126 = vpack.c.b16 %v8125, %v8124
      %v8129 = vsel %vm597, %v7968, 0
      %v8132 = vsel %vm597, %v7977, 0
      %v8135 = vsel %vm597, %v7986, 0
      %v8138 = vsel %vm597, %v7995, 0
      %v8141 = vsel %vm597, %v8004, 0
      %v8144 = vsel %vm597, %v8013, 0
      %v8147 = vsel %vm597, %v8022, 0
      %v8150 = vsel %vm597, %v8031, 0
      %v8153 = vsel %vm597, %v8040, 0
      %v8156 = vsel %vm597, %v8049, 0
      %v8159 = vsel %vm597, %v8058, 0
      %v8162 = vsel %vm597, %v8067, 0
      %v8165 = vsel %vm597, %v8076, 0
      %v8168 = vsel %vm597, %v8085, 0
      %v8171 = vsel %vm597, %v8094, 0
      %v8174 = vsel %vm597, %v8103, 0
      %v8177 = vsel %vm597, %v8112, 0
      %v8180 = vsel %vm597, %v8121, 0
      %8182 = vmatprep.subr.bf16.mxu0 0
      %8183 = vmatpush1.bf16.msra.mxu0 %v8126
      %8184 = vmatprep.subr.bf16.mxu0 0
      %8185 = vmatpush1.bf16.msra.mxu0 0
      %8186 = vmatprep.subr.bf16.mxu0 0
      %8187 = vmatpush1.bf16.msra.mxu0 0
      %8188 = vmatprep.subr.bf16.mxu0 0
      %8189 = vmatpush1.bf16.msra.mxu0 0
      %8190 = vmatprep.subr.bf16.mxu0 0
      %8191 = vmatpush1.bf16.msra.mxu0 0
      %8192 = vmatprep.subr.bf16.mxu0 0
      %8193 = vmatpush1.bf16.msra.mxu0 0
      %8194 = vmatprep.subr.bf16.mxu0 0
      %8195 = vmatpush1.bf16.msra.mxu0 0
      %8196 = vmatprep.subr.bf16.mxu0 0
      %8197 = vmatpush1.bf16.msra.mxu0 0
      %8198 = vmatprep.subr.bf16.mxu0 0
      %8199 = vmatpush1.bf16.msra.mxu0 0
      %8200 = vmatprep.subr.bf16.mxu0 0
      %8201 = vmatpush1.bf16.msra.mxu0 0
      %8202 = vmatprep.subr.bf16.mxu0 0
      %8203 = vmatpush1.bf16.msra.mxu0 0
      %8204 = vmatprep.subr.bf16.mxu0 0
      %8205 = vmatpush1.bf16.msra.mxu0 0
      %8206 = vmatprep.subr.bf16.mxu0 0
      %8207 = vmatpush1.bf16.msra.mxu0 0
      %8208 = vmatprep.subr.bf16.mxu0 0
      %8209 = vmatpush1.bf16.msra.mxu0 0
      %8210 = vmatprep.subr.bf16.mxu0 0
      %8211 = vmatpush1.bf16.msra.mxu0 0
      %8212 = vmatprep.subr.bf16.mxu0 0
      %8213 = vmatpush1.bf16.msra.mxu0 0
      %8214 = vmatprep.mubr.bf16.mxu0 0
      %8215 = vmatmul.mubr.bf16.gmra.mrb[0].mxu0 %v8129
      %v8216 = vpop.f32.mrb[0].mxu0
      %v8217 = vadd.f32 0.0, %v8216
      %v8218 = vpop.f32.mrb[0].mxu0
      %v8219 = vpop.f32.mrb[0].mxu0
      %v8220 = vadd.f32 0.0, %v8219
      %v8221 = vpop.f32.mrb[0].mxu0
      %8222 = vmatprep.mubr.bf16.mxu0 0
      %8223 = vmatmul.mubr.bf16.gmra.mrb[0].mxu0 %v8132
      %v8224 = vpop.f32.mrb[0].mxu0
      %v8225 = vadd.f32 0.0, %v8224
      %v8226 = vpop.f32.mrb[0].mxu0
      %v8227 = vpop.f32.mrb[0].mxu0
      %v8228 = vadd.f32 0.0, %v8227
      %v8229 = vpop.f32.mrb[0].mxu0
      %8230 = vmatprep.mubr.bf16.mxu0 0
      %8231 = vmatmul.mubr.bf16.gmra.mrb[0].mxu0 %v8135
      %v8232 = vpop.f32.mrb[0].mxu0
      %v8233 = vadd.f32 0.0, %v8232
      %v8234 = vpop.f32.mrb[0].mxu0
      %v8235 = vpop.f32.mrb[0].mxu0
      %v8236 = vadd.f32 0.0, %v8235
      %v8237 = vpop.f32.mrb[0].mxu0
      %8238 = vmatprep.mubr.bf16.mxu0 0
      %8239 = vmatmul.mubr.bf16.gmra.mrb[0].mxu0 %v8138
      %v8240 = vpop.f32.mrb[0].mxu0
      %v8241 = vadd.f32 0.0, %v8240
      %v8242 = vpop.f32.mrb[0].mxu0
      %v8243 = vpop.f32.mrb[0].mxu0
      %v8244 = vadd.f32 0.0, %v8243
      %v8245 = vpop.f32.mrb[0].mxu0
      %8246 = vmatprep.mubr.bf16.mxu0 0
      %8247 = vmatmul.mubr.bf16.gmra.mrb[0].mxu0 %v8141
      %v8248 = vpop.f32.mrb[0].mxu0
      %v8249 = vadd.f32 0.0, %v8248
      %v8250 = vpop.f32.mrb[0].mxu0
      %v8251 = vpop.f32.mrb[0].mxu0
      %v8252 = vadd.f32 0.0, %v8251
      %v8253 = vpop.f32.mrb[0].mxu0
      %8254 = vmatprep.mubr.bf16.mxu0 0
      %8255 = vmatmul.mubr.bf16.gmra.mrb[0].mxu0 %v8144
      %v8256 = vpop.f32.mrb[0].mxu0
      %v8257 = vadd.f32 0.0, %v8256
      %v8258 = vpop.f32.mrb[0].mxu0
      %v8259 = vpop.f32.mrb[0].mxu0
      %v8260 = vadd.f32 0.0, %v8259
      %v8261 = vpop.f32.mrb[0].mxu0
      %8262 = vmatprep.mubr.bf16.mxu0 0
      %8263 = vmatmul.mubr.bf16.gmra.mrb[0].mxu0 %v8147
      %v8264 = vpop.f32.mrb[0].mxu0
      %v8265 = vadd.f32 0.0, %v8264
      %v8266 = vpop.f32.mrb[0].mxu0
      %v8267 = vpop.f32.mrb[0].mxu0
      %v8268 = vadd.f32 0.0, %v8267
      %v8269 = vpop.f32.mrb[0].mxu0
      %8270 = vmatprep.mubr.bf16.mxu0 0
      %8271 = vmatmul.mubr.bf16.gmra.mrb[0].mxu0 %v8150
      %v8272 = vpop.f32.mrb[0].mxu0
      %v8273 = vadd.f32 0.0, %v8272
      %v8274 = vpop.f32.mrb[0].mxu0
      %v8275 = vpop.f32.mrb[0].mxu0
      %v8276 = vadd.f32 0.0, %v8275
      %v8277 = vpop.f32.mrb[0].mxu0
      %8278 = vmatprep.mubr.bf16.mxu0 0
      %8279 = vmatmul.mubr.bf16.gmra.mrb[0].mxu0 %v8153
      %v8280 = vpop.f32.mrb[0].mxu0
      %v8281 = vadd.f32 0.0, %v8280
      %v8282 = vpop.f32.mrb[0].mxu0
      %v8283 = vpop.f32.mrb[0].mxu0
      %v8284 = vadd.f32 0.0, %v8283
      %v8285 = vpop.f32.mrb[0].mxu0
      %8286 = vmatprep.mubr.bf16.mxu0 0
      %8287 = vmatmul.mubr.bf16.gmra.mrb[0].mxu0 %v8156
      %v8288 = vpop.f32.mrb[0].mxu0
      %v8289 = vadd.f32 0.0, %v8288
      %v8290 = vpop.f32.mrb[0].mxu0
      %v8291 = vpop.f32.mrb[0].mxu0
      %v8292 = vadd.f32 0.0, %v8291
      %v8293 = vpop.f32.mrb[0].mxu0
      %8294 = vmatprep.mubr.bf16.mxu0 0
      %8295 = vmatmul.mubr.bf16.gmra.mrb[0].mxu0 %v8159
      %v8296 = vpop.f32.mrb[0].mxu0
      %v8297 = vadd.f32 0.0, %v8296
      %v8298 = vpop.f32.mrb[0].mxu0
      %v8299 = vpop.f32.mrb[0].mxu0
      %v8300 = vadd.f32 0.0, %v8299
      %v8301 = vpop.f32.mrb[0].mxu0
      %8302 = vmatprep.mubr.bf16.mxu0 0
      %8303 = vmatmul.mubr.bf16.gmra.mrb[0].mxu0 %v8162
      %v8304 = vpop.f32.mrb[0].mxu0
      %v8305 = vadd.f32 0.0, %v8304
      %v8306 = vpop.f32.mrb[0].mxu0
      %v8307 = vpop.f32.mrb[0].mxu0
      %v8308 = vadd.f32 0.0, %v8307
      %v8309 = vpop.f32.mrb[0].mxu0
      %8310 = vmatprep.mubr.bf16.mxu0 0
      %8311 = vmatmul.mubr.bf16.gmra.mrb[0].mxu0 %v8165
      %v8312 = vpop.f32.mrb[0].mxu0
      %v8313 = vadd.f32 0.0, %v8312
      %v8314 = vpop.f32.mrb[0].mxu0
      %v8315 = vpop.f32.mrb[0].mxu0
      %v8316 = vadd.f32 0.0, %v8315
      %v8317 = vpop.f32.mrb[0].mxu0
      %8318 = vmatprep.mubr.bf16.mxu0 0
      %8319 = vmatmul.mubr.bf16.gmra.mrb[0].mxu0 %v8168
      %v8320 = vpop.f32.mrb[0].mxu0
      %v8321 = vadd.f32 0.0, %v8320
      %v8322 = vpop.f32.mrb[0].mxu0
      %v8323 = vpop.f32.mrb[0].mxu0
      %v8324 = vadd.f32 0.0, %v8323
      %v8325 = vpop.f32.mrb[0].mxu0
      %8326 = vmatprep.mubr.bf16.mxu0 0
      %8327 = vmatmul.mubr.bf16.gmra.mrb[0].mxu0 %v8171
      %v8328 = vpop.f32.mrb[0].mxu0
      %v8329 = vadd.f32 0.0, %v8328
      %v8330 = vpop.f32.mrb[0].mxu0
      %v8331 = vpop.f32.mrb[0].mxu0
      %v8332 = vadd.f32 0.0, %v8331
      %v8333 = vpop.f32.mrb[0].mxu0
      %8334 = vmatprep.mubr.bf16.mxu0 0
      %8335 = vmatmul.mubr.bf16.gmra.mrb[0].mxu0 %v8174
      %v8336 = vpop.f32.mrb[0].mxu0
      %v8337 = vadd.f32 0.0, %v8336
      %v8338 = vpop.f32.mrb[0].mxu0
      %v8339 = vpop.f32.mrb[0].mxu0
      %v8340 = vadd.f32 0.0, %v8339
      %v8341 = vpop.f32.mrb[0].mxu0
      %8342 = vmatprep.mubr.bf16.mxu0 0
      %8343 = vmatmul.mubr.bf16.gmra.mrb[0].mxu0 %v8177
      %v8344 = vpop.f32.mrb[0].mxu0
      %v8345 = vadd.f32 0.0, %v8344
      %v8346 = vpop.f32.mrb[0].mxu0
      %v8347 = vpop.f32.mrb[0].mxu0
      %v8348 = vadd.f32 0.0, %v8347
      %v8349 = vpop.f32.mrb[0].mxu0
      %8350 = vmatprep.mubr.bf16.mxu0 0
      %8351 = vmatmul.mubr.bf16.gmra.mrb[0].mxu0 %v8180
      %v8352 = vpop.f32.mrb[0].mxu0
      %v8353 = vadd.f32 0.0, %v8352
      %v8354 = vpop.f32.mrb[0].mxu0
      %v8355 = vpop.f32.mrb[0].mxu0
      %v8356 = vadd.f32 0.0, %v8355
      %v8357 = vpop.f32.mrb[0].mxu0
      %8358 = vdwg.mxu0
      %v8359 = vadd.f32 %v7909, %v8217
      %v8360 = vadd.f32 %v7910, %v8220
      %v8361 = vadd.f32 %v7911, %v8225
      %v8362 = vadd.f32 %v7912, %v8228
      %v8363 = vadd.f32 %v7913, %v8233
      %v8364 = vadd.f32 %v7914, %v8236
      %v8365 = vadd.f32 %v7915, %v8241
      %v8366 = vadd.f32 %v7916, %v8244
      %v8367 = vadd.f32 %v7917, %v8249
      %v8368 = vadd.f32 %v7918, %v8252
      %v8369 = vadd.f32 %v7919, %v8257
      %v8370 = vadd.f32 %v7920, %v8260
      %v8371 = vadd.f32 %v7921, %v8265
      %v8372 = vadd.f32 %v7922, %v8268
      %v8373 = vadd.f32 %v7923, %v8273
      %v8374 = vadd.f32 %v7924, %v8276
      %v8375 = vadd.f32 %v7925, %v8281
      %v8376 = vadd.f32 %v7926, %v8284
      %v8377 = vadd.f32 %v7927, %v8289
      %v8378 = vadd.f32 %v7928, %v8292
      %v8379 = vadd.f32 %v7929, %v8297
      %v8380 = vadd.f32 %v7930, %v8300
      %v8381 = vadd.f32 %v7931, %v8305
      %v8382 = vadd.f32 %v7932, %v8308
      %v8383 = vadd.f32 %v7933, %v8313
      %v8384 = vadd.f32 %v7934, %v8316
      %v8385 = vadd.f32 %v7935, %v8321
      %v8386 = vadd.f32 %v7936, %v8324
      %v8387 = vadd.f32 %v7937, %v8329
      %v8388 = vadd.f32 %v7938, %v8332
      %v8389 = vadd.f32 %v7939, %v8337
      %v8390 = vadd.f32 %v7940, %v8340
      %v8391 = vadd.f32 %v7941, %v8345
      %v8392 = vadd.f32 %v7942, %v8348
      %v8393 = vadd.f32 %v7943, %v8353
      %v8394 = vadd.f32 %v7944, %v8356
      %v8395 = vld [vmem:[#allocation2 + $0x10] sm:$0x8]
      %s8396 = scalar_lea.vmem %s4, 64
      %v8397 = vld [vmem:[%s8396] sm:$0xf]
      %v8398 = vld [vmem:[%s8396 + $0x4] sm:$0xf]
      %v8400 = vunpack.c.l.b16 %v8395
      %v8401 = vpack.c.b16 %v7580, %v8400
      %v8402 = vrot.slane %v8401, 3
      %v8403 = vrot.slane %v7617, 3
      %v8404 = vsel %vm3479, %v8402, %v8403
      %v8405 = vrot.slane %v7618, 3
      %v8406 = vsel %vm3479, %v8403, %v8405
      %v8407 = vrot.slane %v7619, 3
      %v8408 = vsel %vm3479, %v8405, %v8407
      %v8409 = vrot.slane %v7620, 3
      %v8410 = vsel %vm3479, %v8407, %v8409
      %v8411 = vrot.slane %v7621, 3
      %v8412 = vsel %vm3479, %v8409, %v8411
      %v8413 = vrot.slane %v7622, 3
      %v8414 = vsel %vm3479, %v8411, %v8413
      %v8415 = vrot.slane %v7623, 3
      %v8416 = vsel %vm3479, %v8413, %v8415
      %v8417 = vrot.slane %v7624, 3
      %v8418 = vsel %vm3479, %v8415, %v8417
      %v8419 = vrot.slane %v7625, 3
      %v8420 = vsel %vm3479, %v8417, %v8419
      %v8421 = vrot.slane %v7626, 3
      %v8422 = vsel %vm3479, %v8419, %v8421
      %v8423 = vrot.slane %v7627, 3
      %v8424 = vsel %vm3479, %v8421, %v8423
      %v8425 = vrot.slane %v7628, 3
      %v8426 = vsel %vm3479, %v8423, %v8425
      %v8427 = vrot.slane %v7629, 3
      %v8428 = vsel %vm3479, %v8425, %v8427
      %v8429 = vrot.slane %v7630, 3
      %v8430 = vsel %vm3479, %v8427, %v8429
      %v8431 = vrot.slane %v7631, 3
      %v8432 = vsel %vm3479, %v8429, %v8431
      %v8433 = vrot.slane %v7632, 3
      %v8434 = vsel %vm3479, %v8431, %v8433
      %v8435 = vrot.slane %v7633, 3
      %v8436 = vsel %vm3479, %v8433, %v8435
      %v8437 = vrot.slane %v7951, 3
      %v8438 = vsel %vm3479, %v8435, %v8437
      %v8441 = vunpack.c.l.b16 %v8397
      %v8442 = vunpack.c.l.b16 %v8398
      %v8443 = vpack.c.b16 %v8442, %v8441
      %v8446 = vsel %vm597, %v8404, 0
      %v8449 = vsel %vm597, %v8406, 0
      %v8452 = vsel %vm597, %v8408, 0
      %v8455 = vsel %vm597, %v8410, 0
      %v8458 = vsel %vm597, %v8412, 0
      %v8461 = vsel %vm597, %v8414, 0
      %v8464 = vsel %vm597, %v8416, 0
      %v8467 = vsel %vm597, %v8418, 0
      %v8470 = vsel %vm597, %v8420, 0
      %v8473 = vsel %vm597, %v8422, 0
      %v8476 = vsel %vm597, %v8424, 0
      %v8479 = vsel %vm597, %v8426, 0
      %v8482 = vsel %vm597, %v8428, 0
      %v8485 = vsel %vm597, %v8430, 0
      %v8488 = vsel %vm597, %v8432, 0
      %v8491 = vsel %vm597, %v8434, 0
      %v8494 = vsel %vm597, %v8436, 0
      %v8497 = vsel %vm597, %v8438, 0
      %8499 = vmatprep.subr.bf16.mxu0 0
      %8500 = vmatpush1.bf16.msra.mxu0 %v8443
      %8501 = vmatprep.subr.bf16.mxu0 0
      %8502 = vmatpush1.bf16.msra.mxu0 0
      %8503 = vmatprep.subr.bf16.mxu0 0
      %8504 = vmatpush1.bf16.msra.mxu0 0
      %8505 = vmatprep.subr.bf16.mxu0 0
      %8506 = vmatpush1.bf16.msra.mxu0 0
      %8507 = vmatprep.subr.bf16.mxu0 0
      %8508 = vmatpush1.bf16.msra.mxu0 0
      %8509 = vmatprep.subr.bf16.mxu0 0
      %8510 = vmatpush1.bf16.msra.mxu0 0
      %8511 = vmatprep.subr.bf16.mxu0 0
      %8512 = vmatpush1.bf16.msra.mxu0 0
      %8513 = vmatprep.subr.bf16.mxu0 0
      %8514 = vmatpush1.bf16.msra.mxu0 0
      %8515 = vmatprep.subr.bf16.mxu0 0
      %8516 = vmatpush1.bf16.msra.mxu0 0
      %8517 = vmatprep.subr.bf16.mxu0 0
      %8518 = vmatpush1.bf16.msra.mxu0 0
      %8519 = vmatprep.subr.bf16.mxu0 0
      %8520 = vmatpush1.bf16.msra.mxu0 0
      %8521 = vmatprep.subr.bf16.mxu0 0
      %8522 = vmatpush1.bf16.msra.mxu0 0
      %8523 = vmatprep.subr.bf16.mxu0 0
      %8524 = vmatpush1.bf16.msra.mxu0 0
      %8525 = vmatprep.subr.bf16.mxu0 0
      %8526 = vmatpush1.bf16.msra.mxu0 0
      %8527 = vmatprep.subr.bf16.mxu0 0
      %8528 = vmatpush1.bf16.msra.mxu0 0
      %8529 = vmatprep.subr.bf16.mxu0 0
      %8530 = vmatpush1.bf16.msra.mxu0 0
      %8531 = vmatprep.mubr.bf16.mxu0 0
      %8532 = vmatmul.mubr.bf16.gmra.mrb[0].mxu0 %v8446
      %v8533 = vpop.f32.mrb[0].mxu0
      %v8534 = vadd.f32 0.0, %v8533
      %v8535 = vpop.f32.mrb[0].mxu0
      %v8536 = vpop.f32.mrb[0].mxu0
      %v8537 = vadd.f32 0.0, %v8536
      %v8538 = vpop.f32.mrb[0].mxu0
      %8539 = vmatprep.mubr.bf16.mxu0 0
      %8540 = vmatmul.mubr.bf16.gmra.mrb[0].mxu0 %v8449
      %v8541 = vpop.f32.mrb[0].mxu0
      %v8542 = vadd.f32 0.0, %v8541
      %v8543 = vpop.f32.mrb[0].mxu0
      %v8544 = vpop.f32.mrb[0].mxu0
      %v8545 = vadd.f32 0.0, %v8544
      %v8546 = vpop.f32.mrb[0].mxu0
      %8547 = vmatprep.mubr.bf16.mxu0 0
      %8548 = vmatmul.mubr.bf16.gmra.mrb[0].mxu0 %v8452
      %v8549 = vpop.f32.mrb[0].mxu0
      %v8550 = vadd.f32 0.0, %v8549
      %v8551 = vpop.f32.mrb[0].mxu0
      %v8552 = vpop.f32.mrb[0].mxu0
      %v8553 = vadd.f32 0.0, %v8552
      %v8554 = vpop.f32.mrb[0].mxu0
      %8555 = vmatprep.mubr.bf16.mxu0 0
      %8556 = vmatmul.mubr.bf16.gmra.mrb[0].mxu0 %v8455
      %v8557 = vpop.f32.mrb[0].mxu0
      %v8558 = vadd.f32 0.0, %v8557
      %v8559 = vpop.f32.mrb[0].mxu0
      %v8560 = vpop.f32.mrb[0].mxu0
      %v8561 = vadd.f32 0.0, %v8560
      %v8562 = vpop.f32.mrb[0].mxu0
      %8563 = vmatprep.mubr.bf16.mxu0 0
      %8564 = vmatmul.mubr.bf16.gmra.mrb[0].mxu0 %v8458
      %v8565 = vpop.f32.mrb[0].mxu0
      %v8566 = vadd.f32 0.0, %v8565
      %v8567 = vpop.f32.mrb[0].mxu0
      %v8568 = vpop.f32.mrb[0].mxu0
      %v8569 = vadd.f32 0.0, %v8568
      %v8570 = vpop.f32.mrb[0].mxu0
      %8571 = vmatprep.mubr.bf16.mxu0 0
      %8572 = vmatmul.mubr.bf16.gmra.mrb[0].mxu0 %v8461
      %v8573 = vpop.f32.mrb[0].mxu0
      %v8574 = vadd.f32 0.0, %v8573
      %v8575 = vpop.f32.mrb[0].mxu0
      %v8576 = vpop.f32.mrb[0].mxu0
      %v8577 = vadd.f32 0.0, %v8576
      %v8578 = vpop.f32.mrb[0].mxu0
      %8579 = vmatprep.mubr.bf16.mxu0 0
      %8580 = vmatmul.mubr.bf16.gmra.mrb[0].mxu0 %v8464
      %v8581 = vpop.f32.mrb[0].mxu0
      %v8582 = vadd.f32 0.0, %v8581
      %v8583 = vpop.f32.mrb[0].mxu0
      %v8584 = vpop.f32.mrb[0].mxu0
      %v8585 = vadd.f32 0.0, %v8584
      %v8586 = vpop.f32.mrb[0].mxu0
      %8587 = vmatprep.mubr.bf16.mxu0 0
      %8588 = vmatmul.mubr.bf16.gmra.mrb[0].mxu0 %v8467
      %v8589 = vpop.f32.mrb[0].mxu0
      %v8590 = vadd.f32 0.0, %v8589
      %v8591 = vpop.f32.mrb[0].mxu0
      %v8592 = vpop.f32.mrb[0].mxu0
      %v8593 = vadd.f32 0.0, %v8592
      %v8594 = vpop.f32.mrb[0].mxu0
      %8595 = vmatprep.mubr.bf16.mxu0 0
      %8596 = vmatmul.mubr.bf16.gmra.mrb[0].mxu0 %v8470
      %v8597 = vpop.f32.mrb[0].mxu0
      %v8598 = vadd.f32 0.0, %v8597
      %v8599 = vpop.f32.mrb[0].mxu0
      %v8600 = vpop.f32.mrb[0].mxu0
      %v8601 = vadd.f32 0.0, %v8600
      %v8602 = vpop.f32.mrb[0].mxu0
      %8603 = vmatprep.mubr.bf16.mxu0 0
      %8604 = vmatmul.mubr.bf16.gmra.mrb[0].mxu0 %v8473
      %v8605 = vpop.f32.mrb[0].mxu0
      %v8606 = vadd.f32 0.0, %v8605
      %v8607 = vpop.f32.mrb[0].mxu0
      %v8608 = vpop.f32.mrb[0].mxu0
      %v8609 = vadd.f32 0.0, %v8608
      %v8610 = vpop.f32.mrb[0].mxu0
      %8611 = vmatprep.mubr.bf16.mxu0 0
      %8612 = vmatmul.mubr.bf16.gmra.mrb[0].mxu0 %v8476
      %v8613 = vpop.f32.mrb[0].mxu0
      %v8614 = vadd.f32 0.0, %v8613
      %v8615 = vpop.f32.mrb[0].mxu0
      %v8616 = vpop.f32.mrb[0].mxu0
      %v8617 = vadd.f32 0.0, %v8616
      %v8618 = vpop.f32.mrb[0].mxu0
      %8619 = vmatprep.mubr.bf16.mxu0 0
      %8620 = vmatmul.mubr.bf16.gmra.mrb[0].mxu0 %v8479
      %v8621 = vpop.f32.mrb[0].mxu0
      %v8622 = vadd.f32 0.0, %v8621
      %v8623 = vpop.f32.mrb[0].mxu0
      %v8624 = vpop.f32.mrb[0].mxu0
      %v8625 = vadd.f32 0.0, %v8624
      %v8626 = vpop.f32.mrb[0].mxu0
      %8627 = vmatprep.mubr.bf16.mxu0 0
      %8628 = vmatmul.mubr.bf16.gmra.mrb[0].mxu0 %v8482
      %v8629 = vpop.f32.mrb[0].mxu0
      %v8630 = vadd.f32 0.0, %v8629
      %v8631 = vpop.f32.mrb[0].mxu0
      %v8632 = vpop.f32.mrb[0].mxu0
      %v8633 = vadd.f32 0.0, %v8632
      %v8634 = vpop.f32.mrb[0].mxu0
      %8635 = vmatprep.mubr.bf16.mxu0 0
      %8636 = vmatmul.mubr.bf16.gmra.mrb[0].mxu0 %v8485
      %v8637 = vpop.f32.mrb[0].mxu0
      %v8638 = vadd.f32 0.0, %v8637
      %v8639 = vpop.f32.mrb[0].mxu0
      %v8640 = vpop.f32.mrb[0].mxu0
      %v8641 = vadd.f32 0.0, %v8640
      %v8642 = vpop.f32.mrb[0].mxu0
      %8643 = vmatprep.mubr.bf16.mxu0 0
      %8644 = vmatmul.mubr.bf16.gmra.mrb[0].mxu0 %v8488
      %v8645 = vpop.f32.mrb[0].mxu0
      %v8646 = vadd.f32 0.0, %v8645
      %v8647 = vpop.f32.mrb[0].mxu0
      %v8648 = vpop.f32.mrb[0].mxu0
      %v8649 = vadd.f32 0.0, %v8648
      %v8650 = vpop.f32.mrb[0].mxu0
      %8651 = vmatprep.mubr.bf16.mxu0 0
      %8652 = vmatmul.mubr.bf16.gmra.mrb[0].mxu0 %v8491
      %v8653 = vpop.f32.mrb[0].mxu0
      %v8654 = vadd.f32 0.0, %v8653
      %v8655 = vpop.f32.mrb[0].mxu0
      %v8656 = vpop.f32.mrb[0].mxu0
      %v8657 = vadd.f32 0.0, %v8656
      %v8658 = vpop.f32.mrb[0].mxu0
      %8659 = vmatprep.mubr.bf16.mxu0 0
      %8660 = vmatmul.mubr.bf16.gmra.mrb[0].mxu0 %v8494
      %v8661 = vpop.f32.mrb[0].mxu0
      %v8662 = vadd.f32 0.0, %v8661
      %v8663 = vpop.f32.mrb[0].mxu0
      %v8664 = vpop.f32.mrb[0].mxu0
      %v8665 = vadd.f32 0.0, %v8664
      %v8666 = vpop.f32.mrb[0].mxu0
      %8667 = vmatprep.mubr.bf16.mxu0 0
      %8668 = vmatmul.mubr.bf16.gmra.mrb[0].mxu0 %v8497
      %v8669 = vpop.f32.mrb[0].mxu0
      %v8670 = vadd.f32 0.0, %v8669
      %v8671 = vpop.f32.mrb[0].mxu0
      %v8672 = vpop.f32.mrb[0].mxu0
      %v8673 = vadd.f32 0.0, %v8672
      %v8674 = vpop.f32.mrb[0].mxu0
      %8675 = vdwg.mxu0
      %v8676 = vadd.f32 %v8359, %v8534
      %v8677 = vadd.f32 %v8360, %v8537
      %v8678 = vadd.f32 %v8361, %v8542
      %v8679 = vadd.f32 %v8362, %v8545
      %v8680 = vadd.f32 %v8363, %v8550
      %v8681 = vadd.f32 %v8364, %v8553
      %v8682 = vadd.f32 %v8365, %v8558
      %v8683 = vadd.f32 %v8366, %v8561
      %v8684 = vadd.f32 %v8367, %v8566
      %v8685 = vadd.f32 %v8368, %v8569
      %v8686 = vadd.f32 %v8369, %v8574
      %v8687 = vadd.f32 %v8370, %v8577
      %v8688 = vadd.f32 %v8371, %v8582
      %v8689 = vadd.f32 %v8372, %v8585
      %v8690 = vadd.f32 %v8373, %v8590
      %v8691 = vadd.f32 %v8374, %v8593
      %v8692 = vadd.f32 %v8375, %v8598
      %v8693 = vadd.f32 %v8376, %v8601
      %v8694 = vadd.f32 %v8377, %v8606
      %v8695 = vadd.f32 %v8378, %v8609
      %v8696 = vadd.f32 %v8379, %v8614
      %v8697 = vadd.f32 %v8380, %v8617
      %v8698 = vadd.f32 %v8381, %v8622
      %v8699 = vadd.f32 %v8382, %v8625
      %v8700 = vadd.f32 %v8383, %v8630
      %v8701 = vadd.f32 %v8384, %v8633
      %v8702 = vadd.f32 %v8385, %v8638
      %v8703 = vadd.f32 %v8386, %v8641
      %v8704 = vadd.f32 %v8387, %v8646
      %v8705 = vadd.f32 %v8388, %v8649
      %v8706 = vadd.f32 %v8389, %v8654
      %v8707 = vadd.f32 %v8390, %v8657
      %v8708 = vadd.f32 %v8391, %v8662
      %v8709 = vadd.f32 %v8392, %v8665
      %v8710 = vadd.f32 %v8393, %v8670
      %v8711 = vadd.f32 %v8394, %v8673
      %v8712 = vld [vmem:[%s5] sm:$0x1]
      %v8714 = vlaneseq
      %v8715 = vshrl.u32 %v8714, 7
      %v8716 = vsub.s32 0, %v8715
      %v8717 = vrot.slane %v8712, %v8716
      %v8719 = vmul.f32 %v8676, %v8717
      %v8720 = vmul.f32 %v8677, %v8717
      %v8721 = vmul.f32 %v8678, %v8717
      %v8722 = vmul.f32 %v8679, %v8717
      %v8723 = vmul.f32 %v8680, %v8717
      %v8724 = vmul.f32 %v8681, %v8717
      %v8725 = vmul.f32 %v8682, %v8717
      %v8726 = vmul.f32 %v8683, %v8717
      %v8727 = vmul.f32 %v8684, %v8717
      %v8728 = vmul.f32 %v8685, %v8717
      %v8729 = vmul.f32 %v8686, %v8717
      %v8730 = vmul.f32 %v8687, %v8717
      %v8731 = vmul.f32 %v8688, %v8717
      %v8732 = vmul.f32 %v8689, %v8717
      %v8733 = vmul.f32 %v8690, %v8717
      %v8734 = vmul.f32 %v8691, %v8717
      %v8735 = vmul.f32 %v8692, %v8717
      %v8736 = vmul.f32 %v8693, %v8717
      %v8737 = vmul.f32 %v8694, %v8717
      %v8738 = vmul.f32 %v8695, %v8717
      %v8739 = vmul.f32 %v8696, %v8717
      %v8740 = vmul.f32 %v8697, %v8717
      %v8741 = vmul.f32 %v8698, %v8717
      %v8742 = vmul.f32 %v8699, %v8717
      %v8743 = vmul.f32 %v8700, %v8717
      %v8744 = vmul.f32 %v8701, %v8717
      %v8745 = vmul.f32 %v8702, %v8717
      %v8746 = vmul.f32 %v8703, %v8717
      %v8747 = vmul.f32 %v8704, %v8717
      %v8748 = vmul.f32 %v8705, %v8717
      %v8749 = vmul.f32 %v8706, %v8717
      %v8750 = vmul.f32 %v8707, %v8717
      %v8751 = vmul.f32 %v8708, %v8717
      %v8752 = vmul.f32 %v8709, %v8717
      %v8753 = vmul.f32 %v8710, %v8717
      %v8754 = vmul.f32 %v8711, %v8717
      %v8755 = vld [vmem:[%s6] sm:$0x1]
      %v8757 = vlaneseq
      %v8758 = vshrl.u32 %v8757, 7
      %v8759 = vsub.s32 0, %v8758
      %v8760 = vrot.slane %v8755, %v8759
      %v8762 = vadd.f32 %v8719, %v8760
      %v8763 = vadd.f32 %v8720, %v8760
      %v8764 = vadd.f32 %v8721, %v8760
      %v8765 = vadd.f32 %v8722, %v8760
      %v8766 = vadd.f32 %v8723, %v8760
      %v8767 = vadd.f32 %v8724, %v8760
      %v8768 = vadd.f32 %v8725, %v8760
      %v8769 = vadd.f32 %v8726, %v8760
      %v8770 = vadd.f32 %v8727, %v8760
      %v8771 = vadd.f32 %v8728, %v8760
      %v8772 = vadd.f32 %v8729, %v8760
      %v8773 = vadd.f32 %v8730, %v8760
      %v8774 = vadd.f32 %v8731, %v8760
      %v8775 = vadd.f32 %v8732, %v8760
      %v8776 = vadd.f32 %v8733, %v8760
      %v8777 = vadd.f32 %v8734, %v8760
      %v8778 = vadd.f32 %v8735, %v8760
      %v8779 = vadd.f32 %v8736, %v8760
      %v8780 = vadd.f32 %v8737, %v8760
      %v8781 = vadd.f32 %v8738, %v8760
      %v8782 = vadd.f32 %v8739, %v8760
      %v8783 = vadd.f32 %v8740, %v8760
      %v8784 = vadd.f32 %v8741, %v8760
      %v8785 = vadd.f32 %v8742, %v8760
      %v8786 = vadd.f32 %v8743, %v8760
      %v8787 = vadd.f32 %v8744, %v8760
      %v8788 = vadd.f32 %v8745, %v8760
      %v8789 = vadd.f32 %v8746, %v8760
      %v8790 = vadd.f32 %v8747, %v8760
      %v8791 = vadd.f32 %v8748, %v8760
      %v8792 = vadd.f32 %v8749, %v8760
      %v8793 = vadd.f32 %v8750, %v8760
      %v8794 = vadd.f32 %v8751, %v8760
      %v8795 = vadd.f32 %v8752, %v8760
      %v8796 = vadd.f32 %v8753, %v8760
      %v8797 = vadd.f32 %v8754, %v8760
      %v8798 = vmax.f32 %v8762, 0.0
      %v8799 = vmax.f32 %v8763, 0.0
      %v8800 = vmax.f32 %v8764, 0.0
      %v8801 = vmax.f32 %v8765, 0.0
      %v8802 = vmax.f32 %v8766, 0.0
      %v8803 = vmax.f32 %v8767, 0.0
      %v8804 = vmax.f32 %v8768, 0.0
      %v8805 = vmax.f32 %v8769, 0.0
      %v8806 = vmax.f32 %v8770, 0.0
      %v8807 = vmax.f32 %v8771, 0.0
      %v8808 = vmax.f32 %v8772, 0.0
      %v8809 = vmax.f32 %v8773, 0.0
      %v8810 = vmax.f32 %v8774, 0.0
      %v8811 = vmax.f32 %v8775, 0.0
      %v8812 = vmax.f32 %v8776, 0.0
      %v8813 = vmax.f32 %v8777, 0.0
      %v8814 = vmax.f32 %v8778, 0.0
      %v8815 = vmax.f32 %v8779, 0.0
      %v8816 = vmax.f32 %v8780, 0.0
      %v8817 = vmax.f32 %v8781, 0.0
      %v8818 = vmax.f32 %v8782, 0.0
      %v8819 = vmax.f32 %v8783, 0.0
      %v8820 = vmax.f32 %v8784, 0.0
      %v8821 = vmax.f32 %v8785, 0.0
      %v8822 = vmax.f32 %v8786, 0.0
      %v8823 = vmax.f32 %v8787, 0.0
      %v8824 = vmax.f32 %v8788, 0.0
      %v8825 = vmax.f32 %v8789, 0.0
      %v8826 = vmax.f32 %v8790, 0.0
      %v8827 = vmax.f32 %v8791, 0.0
      %v8828 = vmax.f32 %v8792, 0.0
      %v8829 = vmax.f32 %v8793, 0.0
      %v8830 = vmax.f32 %v8794, 0.0
      %v8831 = vmax.f32 %v8795, 0.0
      %v8832 = vmax.f32 %v8796, 0.0
      %v8833 = vmax.f32 %v8797, 0.0
      %v8834 = vld [vmem:[%s300 + $0x8] sm:$0xe]
      %v8835 = vld [vmem:[%s300 + $0xc] sm:$0xf]
      %v8836 = vld [vmem:[%s300 + $0x10] sm:$0xf]
      %v8837 = vld [vmem:[%s300 + $0x14] sm:$0xf]
      %v8838 = vld [vmem:[%s300 + $0x18] sm:$0xf]
      %v8839 = vld [vmem:[%s300 + $0x1c] sm:$0xf]
      %v8840 = vld [vmem:[%s300 + $0x20] sm:$0xf]
      %v8841 = vld [vmem:[%s300 + $0x24] sm:$0xf]
      %v8842 = vld [vmem:[%s300 + $0x28] sm:$0xf]
      %v8843 = vld [vmem:[%s300 + $0x2c] sm:$0xf]
      %v8844 = vld [vmem:[%s300 + $0x30] sm:$0xf]
      %v8845 = vld [vmem:[%s300 + $0x34] sm:$0xf]
      %v8846 = vld [vmem:[%s300 + $0x38] sm:$0xf]
      %v8847 = vld [vmem:[%s300 + $0x3c] sm:$0xf]
      %v8848 = vld [vmem:[%s300 + $0x40] sm:$0xf]
      %v8849 = vld [vmem:[%s300 + $0x44] sm:$0xf]
      %v8850 = vld [vmem:[%s300 + $0x48] sm:$0xf]
      %v8851 = vld [vmem:[%s300 + $0x4c] sm:$0xf]
      %v8852 = vld [vmem:[%s300 + $0x50] sm:$0xf]
      %v8853 = vld [vmem:[%s300 + $0x54] sm:$0xf]
      %v8854 = vld [vmem:[%s300 + $0x58] sm:$0xf]
      %v8855 = vld [vmem:[%s300 + $0x5c] sm:$0xf]
      %v8856 = vld [vmem:[%s300 + $0x60] sm:$0xf]
      %v8857 = vld [vmem:[%s300 + $0x64] sm:$0xf]
      %v8858 = vld [vmem:[%s300 + $0x68] sm:$0xf]
      %v8859 = vld [vmem:[%s300 + $0x6c] sm:$0xf]
      %v8860 = vld [vmem:[%s300 + $0x70] sm:$0xf]
      %v8861 = vld [vmem:[%s300 + $0x74] sm:$0xf]
      %v8862 = vld [vmem:[%s300 + $0x78] sm:$0xf]
      %v8863 = vld [vmem:[%s300 + $0x7c] sm:$0xf]
      %v8864 = vld [vmem:[%s300 + $0x80] sm:$0xf]
      %v8865 = vld [vmem:[%s300 + $0x84] sm:$0xf]
      %v8866 = vld [vmem:[%s300 + $0x88] sm:$0xf]
      %v8867 = vld [vmem:[%s300 + $0x8c] sm:$0xf]
      %v8868 = vld [vmem:[%s300 + $0x90] sm:$0xf]
      %v8869 = vld [vmem:[%s300 + $0x94] sm:$0xf]
      %v8870 = vld [vmem:[%s300 + $0x98] sm:$0x3]
      %v8871 = vld [vmem:[%s7] sm:$0xf]
      %v8872 = vld [vmem:[%s7 + $0x4] sm:$0xf]
      %v8910 = vunpack.c.l.b16 %v8834
      %v8911 = vunpack.c.l.b16 %v8835
      %v8912 = vunpack.c.l.b16 %v8836
      %v8913 = vunpack.c.l.b16 %v8837
      %v8914 = vunpack.c.l.b16 %v8838
      %v8915 = vunpack.c.l.b16 %v8839
      %v8916 = vunpack.c.l.b16 %v8840
      %v8917 = vunpack.c.l.b16 %v8841
      %v8918 = vunpack.c.l.b16 %v8842
      %v8919 = vunpack.c.l.b16 %v8843
      %v8920 = vunpack.c.l.b16 %v8844
      %v8921 = vunpack.c.l.b16 %v8845
      %v8922 = vunpack.c.l.b16 %v8846
      %v8923 = vunpack.c.l.b16 %v8847
      %v8924 = vunpack.c.l.b16 %v8848
      %v8925 = vunpack.c.l.b16 %v8849
      %v8926 = vunpack.c.l.b16 %v8850
      %v8927 = vunpack.c.l.b16 %v8851
      %v8928 = vunpack.c.l.b16 %v8852
      %v8929 = vunpack.c.l.b16 %v8853
      %v8930 = vunpack.c.l.b16 %v8854
      %v8931 = vunpack.c.l.b16 %v8855
      %v8932 = vunpack.c.l.b16 %v8856
      %v8933 = vunpack.c.l.b16 %v8857
      %v8934 = vunpack.c.l.b16 %v8858
      %v8935 = vunpack.c.l.b16 %v8859
      %v8936 = vunpack.c.l.b16 %v8860
      %v8937 = vunpack.c.l.b16 %v8861
      %v8938 = vunpack.c.l.b16 %v8862
      %v8939 = vunpack.c.l.b16 %v8863
      %v8940 = vunpack.c.l.b16 %v8864
      %v8941 = vunpack.c.l.b16 %v8865
      %v8942 = vunpack.c.l.b16 %v8866
      %v8943 = vunpack.c.l.b16 %v8867
      %v8944 = vunpack.c.l.b16 %v8868
      %v8945 = vunpack.c.l.b16 %v8869
      %v8946 = vunpack.c.l.b16 %v8870
      %v8947 = vpack.c.b16 %v8911, %v8910
      %v8948 = vpack.c.b16 %v8913, %v8912
      %v8949 = vpack.c.b16 %v8915, %v8914
      %v8950 = vpack.c.b16 %v8917, %v8916
      %v8951 = vpack.c.b16 %v8919, %v8918
      %v8952 = vpack.c.b16 %v8921, %v8920
      %v8953 = vpack.c.b16 %v8923, %v8922
      %v8954 = vpack.c.b16 %v8925, %v8924
      %v8955 = vpack.c.b16 %v8927, %v8926
      %v8956 = vpack.c.b16 %v8929, %v8928
      %v8957 = vpack.c.b16 %v8931, %v8930
      %v8958 = vpack.c.b16 %v8933, %v8932
      %v8959 = vpack.c.b16 %v8935, %v8934
      %v8960 = vpack.c.b16 %v8937, %v8936
      %v8961 = vpack.c.b16 %v8939, %v8938
      %v8962 = vpack.c.b16 %v8941, %v8940
      %v8963 = vpack.c.b16 %v8943, %v8942
      %v8964 = vpack.c.b16 %v8945, %v8944
      %v8965 = vpack.c.b16 %v8946, %v8946
      %v8967 = vshrl.u32 %v8947, 16
      %v8969 = vrot.slane %v8967, 1
      %v8970 = vshll.u32 %v8947, 16
      %v8972 = vrot.slane %v8970, 2
      %v8973 = vor.u32 %v8969, %v8972
      %v8975 = vshrl.u32 %v8948, 16
      %v8977 = vrot.slane %v8975, 1
      %v8978 = vshll.u32 %v8948, 16
      %v8980 = vrot.slane %v8978, 2
      %v8981 = vor.u32 %v8977, %v8980
      %v8982 = vsel %vm1816, %v8973, %v8981
      %v8984 = vshrl.u32 %v8949, 16
      %v8986 = vrot.slane %v8984, 1
      %v8987 = vshll.u32 %v8949, 16
      %v8989 = vrot.slane %v8987, 2
      %v8990 = vor.u32 %v8986, %v8989
      %v8991 = vsel %vm1816, %v8981, %v8990
      %v8993 = vshrl.u32 %v8950, 16
      %v8995 = vrot.slane %v8993, 1
      %v8996 = vshll.u32 %v8950, 16
      %v8998 = vrot.slane %v8996, 2
      %v8999 = vor.u32 %v8995, %v8998
      %v9000 = vsel %vm1816, %v8990, %v8999
      %v9002 = vshrl.u32 %v8951, 16
      %v9004 = vrot.slane %v9002, 1
      %v9005 = vshll.u32 %v8951, 16
      %v9007 = vrot.slane %v9005, 2
      %v9008 = vor.u32 %v9004, %v9007
      %v9009 = vsel %vm1816, %v8999, %v9008
      %v9011 = vshrl.u32 %v8952, 16
      %v9013 = vrot.slane %v9011, 1
      %v9014 = vshll.u32 %v8952, 16
      %v9016 = vrot.slane %v9014, 2
      %v9017 = vor.u32 %v9013, %v9016
      %v9018 = vsel %vm1816, %v9008, %v9017
      %v9020 = vshrl.u32 %v8953, 16
      %v9022 = vrot.slane %v9020, 1
      %v9023 = vshll.u32 %v8953, 16
      %v9025 = vrot.slane %v9023, 2
      %v9026 = vor.u32 %v9022, %v9025
      %v9027 = vsel %vm1816, %v9017, %v9026
      %v9029 = vshrl.u32 %v8954, 16
      %v9031 = vrot.slane %v9029, 1
      %v9032 = vshll.u32 %v8954, 16
      %v9034 = vrot.slane %v9032, 2
      %v9035 = vor.u32 %v9031, %v9034
      %v9036 = vsel %vm1816, %v9026, %v9035
      %v9038 = vshrl.u32 %v8955, 16
      %v9040 = vrot.slane %v9038, 1
      %v9041 = vshll.u32 %v8955, 16
      %v9043 = vrot.slane %v9041, 2
      %v9044 = vor.u32 %v9040, %v9043
      %v9045 = vsel %vm1816, %v9035, %v9044
      %v9047 = vshrl.u32 %v8956, 16
      %v9049 = vrot.slane %v9047, 1
      %v9050 = vshll.u32 %v8956, 16
      %v9052 = vrot.slane %v9050, 2
      %v9053 = vor.u32 %v9049, %v9052
      %v9054 = vsel %vm1816, %v9044, %v9053
      %v9056 = vshrl.u32 %v8957, 16
      %v9058 = vrot.slane %v9056, 1
      %v9059 = vshll.u32 %v8957, 16
      %v9061 = vrot.slane %v9059, 2
      %v9062 = vor.u32 %v9058, %v9061
      %v9063 = vsel %vm1816, %v9053, %v9062
      %v9065 = vshrl.u32 %v8958, 16
      %v9067 = vrot.slane %v9065, 1
      %v9068 = vshll.u32 %v8958, 16
      %v9070 = vrot.slane %v9068, 2
      %v9071 = vor.u32 %v9067, %v9070
      %v9072 = vsel %vm1816, %v9062, %v9071
      %v9074 = vshrl.u32 %v8959, 16
      %v9076 = vrot.slane %v9074, 1
      %v9077 = vshll.u32 %v8959, 16
      %v9079 = vrot.slane %v9077, 2
      %v9080 = vor.u32 %v9076, %v9079
      %v9081 = vsel %vm1816, %v9071, %v9080
      %v9083 = vshrl.u32 %v8960, 16
      %v9085 = vrot.slane %v9083, 1
      %v9086 = vshll.u32 %v8960, 16
      %v9088 = vrot.slane %v9086, 2
      %v9089 = vor.u32 %v9085, %v9088
      %v9090 = vsel %vm1816, %v9080, %v9089
      %v9092 = vshrl.u32 %v8961, 16
      %v9094 = vrot.slane %v9092, 1
      %v9095 = vshll.u32 %v8961, 16
      %v9097 = vrot.slane %v9095, 2
      %v9098 = vor.u32 %v9094, %v9097
      %v9099 = vsel %vm1816, %v9089, %v9098
      %v9101 = vshrl.u32 %v8962, 16
      %v9103 = vrot.slane %v9101, 1
      %v9104 = vshll.u32 %v8962, 16
      %v9106 = vrot.slane %v9104, 2
      %v9107 = vor.u32 %v9103, %v9106
      %v9108 = vsel %vm1816, %v9098, %v9107
      %v9110 = vshrl.u32 %v8963, 16
      %v9112 = vrot.slane %v9110, 1
      %v9113 = vshll.u32 %v8963, 16
      %v9115 = vrot.slane %v9113, 2
      %v9116 = vor.u32 %v9112, %v9115
      %v9117 = vsel %vm1816, %v9107, %v9116
      %v9119 = vshrl.u32 %v8964, 16
      %v9121 = vrot.slane %v9119, 1
      %v9122 = vshll.u32 %v8964, 16
      %v9124 = vrot.slane %v9122, 2
      %v9125 = vor.u32 %v9121, %v9124
      %v9126 = vsel %vm1816, %v9116, %v9125
      %v9128 = vshrl.u32 %v8965, 16
      %v9130 = vrot.slane %v9128, 1
      %v9131 = vshll.u32 %v8965, 16
      %v9133 = vrot.slane %v9131, 2
      %v9134 = vor.u32 %v9130, %v9133
      %v9135 = vsel %vm1816, %v9125, %v9134
      %v9138 = vunpack.c.l.b16 %v8871
      %v9139 = vunpack.c.l.b16 %v8872
      %v9140 = vpack.c.b16 %v9139, %v9138
      %v9143 = vsel %vm597, %v8982, 0
      %v9146 = vsel %vm597, %v8991, 0
      %v9149 = vsel %vm597, %v9000, 0
      %v9152 = vsel %vm597, %v9009, 0
      %v9155 = vsel %vm597, %v9018, 0
      %v9158 = vsel %vm597, %v9027, 0
      %v9161 = vsel %vm597, %v9036, 0
      %v9164 = vsel %vm597, %v9045, 0
      %v9167 = vsel %vm597, %v9054, 0
      %v9170 = vsel %vm597, %v9063, 0
      %v9173 = vsel %vm597, %v9072, 0
      %v9176 = vsel %vm597, %v9081, 0
      %v9179 = vsel %vm597, %v9090, 0
      %v9182 = vsel %vm597, %v9099, 0
      %v9185 = vsel %vm597, %v9108, 0
      %v9188 = vsel %vm597, %v9117, 0
      %v9191 = vsel %vm597, %v9126, 0
      %v9194 = vsel %vm597, %v9135, 0
      %9196 = vmatprep.subr.bf16.mxu0 0
      %9197 = vmatpush1.bf16.msra.mxu0 %v9140
      %9198 = vmatprep.subr.bf16.mxu0 0
      %9199 = vmatpush1.bf16.msra.mxu0 0
      %9200 = vmatprep.subr.bf16.mxu0 0
      %9201 = vmatpush1.bf16.msra.mxu0 0
      %9202 = vmatprep.subr.bf16.mxu0 0
      %9203 = vmatpush1.bf16.msra.mxu0 0
      %9204 = vmatprep.subr.bf16.mxu0 0
      %9205 = vmatpush1.bf16.msra.mxu0 0
      %9206 = vmatprep.subr.bf16.mxu0 0
      %9207 = vmatpush1.bf16.msra.mxu0 0
      %9208 = vmatprep.subr.bf16.mxu0 0
      %9209 = vmatpush1.bf16.msra.mxu0 0
      %9210 = vmatprep.subr.bf16.mxu0 0
      %9211 = vmatpush1.bf16.msra.mxu0 0
      %9212 = vmatprep.subr.bf16.mxu0 0
      %9213 = vmatpush1.bf16.msra.mxu0 0
      %9214 = vmatprep.subr.bf16.mxu0 0
      %9215 = vmatpush1.bf16.msra.mxu0 0
      %9216 = vmatprep.subr.bf16.mxu0 0
      %9217 = vmatpush1.bf16.msra.mxu0 0
      %9218 = vmatprep.subr.bf16.mxu0 0
      %9219 = vmatpush1.bf16.msra.mxu0 0
      %9220 = vmatprep.subr.bf16.mxu0 0
      %9221 = vmatpush1.bf16.msra.mxu0 0
      %9222 = vmatprep.subr.bf16.mxu0 0
      %9223 = vmatpush1.bf16.msra.mxu0 0
      %9224 = vmatprep.subr.bf16.mxu0 0
      %9225 = vmatpush1.bf16.msra.mxu0 0
      %9226 = vmatprep.subr.bf16.mxu0 0
      %9227 = vmatpush1.bf16.msra.mxu0 0
      %9228 = vmatprep.mubr.bf16.mxu0 0
      %9229 = vmatmul.mubr.bf16.gmra.mrb[0].mxu0 %v9143
      %v9230 = vpop.f32.mrb[0].mxu0
      %v9231 = vadd.f32 0.0, %v9230
      %v9232 = vpop.f32.mrb[0].mxu0
      %v9233 = vpop.f32.mrb[0].mxu0
      %v9234 = vadd.f32 0.0, %v9233
      %v9235 = vpop.f32.mrb[0].mxu0
      %9236 = vmatprep.mubr.bf16.mxu0 0
      %9237 = vmatmul.mubr.bf16.gmra.mrb[0].mxu0 %v9146
      %v9238 = vpop.f32.mrb[0].mxu0
      %v9239 = vadd.f32 0.0, %v9238
      %v9240 = vpop.f32.mrb[0].mxu0
      %v9241 = vpop.f32.mrb[0].mxu0
      %v9242 = vadd.f32 0.0, %v9241
      %v9243 = vpop.f32.mrb[0].mxu0
      %9244 = vmatprep.mubr.bf16.mxu0 0
      %9245 = vmatmul.mubr.bf16.gmra.mrb[0].mxu0 %v9149
      %v9246 = vpop.f32.mrb[0].mxu0
      %v9247 = vadd.f32 0.0, %v9246
      %v9248 = vpop.f32.mrb[0].mxu0
      %v9249 = vpop.f32.mrb[0].mxu0
      %v9250 = vadd.f32 0.0, %v9249
      %v9251 = vpop.f32.mrb[0].mxu0
      %9252 = vmatprep.mubr.bf16.mxu0 0
      %9253 = vmatmul.mubr.bf16.gmra.mrb[0].mxu0 %v9152
      %v9254 = vpop.f32.mrb[0].mxu0
      %v9255 = vadd.f32 0.0, %v9254
      %v9256 = vpop.f32.mrb[0].mxu0
      %v9257 = vpop.f32.mrb[0].mxu0
      %v9258 = vadd.f32 0.0, %v9257
      %v9259 = vpop.f32.mrb[0].mxu0
      %9260 = vmatprep.mubr.bf16.mxu0 0
      %9261 = vmatmul.mubr.bf16.gmra.mrb[0].mxu0 %v9155
      %v9262 = vpop.f32.mrb[0].mxu0
      %v9263 = vadd.f32 0.0, %v9262
      %v9264 = vpop.f32.mrb[0].mxu0
      %v9265 = vpop.f32.mrb[0].mxu0
      %v9266 = vadd.f32 0.0, %v9265
      %v9267 = vpop.f32.mrb[0].mxu0
      %9268 = vmatprep.mubr.bf16.mxu0 0
      %9269 = vmatmul.mubr.bf16.gmra.mrb[0].mxu0 %v9158
      %v9270 = vpop.f32.mrb[0].mxu0
      %v9271 = vadd.f32 0.0, %v9270
      %v9272 = vpop.f32.mrb[0].mxu0
      %v9273 = vpop.f32.mrb[0].mxu0
      %v9274 = vadd.f32 0.0, %v9273
      %v9275 = vpop.f32.mrb[0].mxu0
      %9276 = vmatprep.mubr.bf16.mxu0 0
      %9277 = vmatmul.mubr.bf16.gmra.mrb[0].mxu0 %v9161
      %v9278 = vpop.f32.mrb[0].mxu0
      %v9279 = vadd.f32 0.0, %v9278
      %v9280 = vpop.f32.mrb[0].mxu0
      %v9281 = vpop.f32.mrb[0].mxu0
      %v9282 = vadd.f32 0.0, %v9281
      %v9283 = vpop.f32.mrb[0].mxu0
      %9284 = vmatprep.mubr.bf16.mxu0 0
      %9285 = vmatmul.mubr.bf16.gmra.mrb[0].mxu0 %v9164
      %v9286 = vpop.f32.mrb[0].mxu0
      %v9287 = vadd.f32 0.0, %v9286
      %v9288 = vpop.f32.mrb[0].mxu0
      %v9289 = vpop.f32.mrb[0].mxu0
      %v9290 = vadd.f32 0.0, %v9289
      %v9291 = vpop.f32.mrb[0].mxu0
      %9292 = vmatprep.mubr.bf16.mxu0 0
      %9293 = vmatmul.mubr.bf16.gmra.mrb[0].mxu0 %v9167
      %v9294 = vpop.f32.mrb[0].mxu0
      %v9295 = vadd.f32 0.0, %v9294
      %v9296 = vpop.f32.mrb[0].mxu0
      %v9297 = vpop.f32.mrb[0].mxu0
      %v9298 = vadd.f32 0.0, %v9297
      %v9299 = vpop.f32.mrb[0].mxu0
      %9300 = vmatprep.mubr.bf16.mxu0 0
      %9301 = vmatmul.mubr.bf16.gmra.mrb[0].mxu0 %v9170
      %v9302 = vpop.f32.mrb[0].mxu0
      %v9303 = vadd.f32 0.0, %v9302
      %v9304 = vpop.f32.mrb[0].mxu0
      %v9305 = vpop.f32.mrb[0].mxu0
      %v9306 = vadd.f32 0.0, %v9305
      %v9307 = vpop.f32.mrb[0].mxu0
      %9308 = vmatprep.mubr.bf16.mxu0 0
      %9309 = vmatmul.mubr.bf16.gmra.mrb[0].mxu0 %v9173
      %v9310 = vpop.f32.mrb[0].mxu0
      %v9311 = vadd.f32 0.0, %v9310
      %v9312 = vpop.f32.mrb[0].mxu0
      %v9313 = vpop.f32.mrb[0].mxu0
      %v9314 = vadd.f32 0.0, %v9313
      %v9315 = vpop.f32.mrb[0].mxu0
      %9316 = vmatprep.mubr.bf16.mxu0 0
      %9317 = vmatmul.mubr.bf16.gmra.mrb[0].mxu0 %v9176
      %v9318 = vpop.f32.mrb[0].mxu0
      %v9319 = vadd.f32 0.0, %v9318
      %v9320 = vpop.f32.mrb[0].mxu0
      %v9321 = vpop.f32.mrb[0].mxu0
      %v9322 = vadd.f32 0.0, %v9321
      %v9323 = vpop.f32.mrb[0].mxu0
      %9324 = vmatprep.mubr.bf16.mxu0 0
      %9325 = vmatmul.mubr.bf16.gmra.mrb[0].mxu0 %v9179
      %v9326 = vpop.f32.mrb[0].mxu0
      %v9327 = vadd.f32 0.0, %v9326
      %v9328 = vpop.f32.mrb[0].mxu0
      %v9329 = vpop.f32.mrb[0].mxu0
      %v9330 = vadd.f32 0.0, %v9329
      %v9331 = vpop.f32.mrb[0].mxu0
      %9332 = vmatprep.mubr.bf16.mxu0 0
      %9333 = vmatmul.mubr.bf16.gmra.mrb[0].mxu0 %v9182
      %v9334 = vpop.f32.mrb[0].mxu0
      %v9335 = vadd.f32 0.0, %v9334
      %v9336 = vpop.f32.mrb[0].mxu0
      %v9337 = vpop.f32.mrb[0].mxu0
      %v9338 = vadd.f32 0.0, %v9337
      %v9339 = vpop.f32.mrb[0].mxu0
      %9340 = vmatprep.mubr.bf16.mxu0 0
      %9341 = vmatmul.mubr.bf16.gmra.mrb[0].mxu0 %v9185
      %v9342 = vpop.f32.mrb[0].mxu0
      %v9343 = vadd.f32 0.0, %v9342
      %v9344 = vpop.f32.mrb[0].mxu0
      %v9345 = vpop.f32.mrb[0].mxu0
      %v9346 = vadd.f32 0.0, %v9345
      %v9347 = vpop.f32.mrb[0].mxu0
      %9348 = vmatprep.mubr.bf16.mxu0 0
      %9349 = vmatmul.mubr.bf16.gmra.mrb[0].mxu0 %v9188
      %v9350 = vpop.f32.mrb[0].mxu0
      %v9351 = vadd.f32 0.0, %v9350
      %v9352 = vpop.f32.mrb[0].mxu0
      %v9353 = vpop.f32.mrb[0].mxu0
      %v9354 = vadd.f32 0.0, %v9353
      %v9355 = vpop.f32.mrb[0].mxu0
      %9356 = vmatprep.mubr.bf16.mxu0 0
      %9357 = vmatmul.mubr.bf16.gmra.mrb[0].mxu0 %v9191
      %v9358 = vpop.f32.mrb[0].mxu0
      %v9359 = vadd.f32 0.0, %v9358
      %v9360 = vpop.f32.mrb[0].mxu0
      %v9361 = vpop.f32.mrb[0].mxu0
      %v9362 = vadd.f32 0.0, %v9361
      %v9363 = vpop.f32.mrb[0].mxu0
      %9364 = vmatprep.mubr.bf16.mxu0 0
      %9365 = vmatmul.mubr.bf16.gmra.mrb[0].mxu0 %v9194
      %v9366 = vpop.f32.mrb[0].mxu0
      %v9367 = vadd.f32 0.0, %v9366
      %v9368 = vpop.f32.mrb[0].mxu0
      %v9369 = vpop.f32.mrb[0].mxu0
      %v9370 = vadd.f32 0.0, %v9369
      %v9371 = vpop.f32.mrb[0].mxu0
      %9372 = vdwg.mxu0
      %v9373 = vadd.f32 %v8798, %v9231
      %v9374 = vadd.f32 %v8799, %v9234
      %v9375 = vadd.f32 %v8800, %v9239
      %v9376 = vadd.f32 %v8801, %v9242
      %v9377 = vadd.f32 %v8802, %v9247
      %v9378 = vadd.f32 %v8803, %v9250
      %v9379 = vadd.f32 %v8804, %v9255
      %v9380 = vadd.f32 %v8805, %v9258
      %v9381 = vadd.f32 %v8806, %v9263
      %v9382 = vadd.f32 %v8807, %v9266
      %v9383 = vadd.f32 %v8808, %v9271
      %v9384 = vadd.f32 %v8809, %v9274
      %v9385 = vadd.f32 %v8810, %v9279
      %v9386 = vadd.f32 %v8811, %v9282
      %v9387 = vadd.f32 %v8812, %v9287
      %v9388 = vadd.f32 %v8813, %v9290
      %v9389 = vadd.f32 %v8814, %v9295
      %v9390 = vadd.f32 %v8815, %v9298
      %v9391 = vadd.f32 %v8816, %v9303
      %v9392 = vadd.f32 %v8817, %v9306
      %v9393 = vadd.f32 %v8818, %v9311
      %v9394 = vadd.f32 %v8819, %v9314
      %v9395 = vadd.f32 %v8820, %v9319
      %v9396 = vadd.f32 %v8821, %v9322
      %v9397 = vadd.f32 %v8822, %v9327
      %v9398 = vadd.f32 %v8823, %v9330
      %v9399 = vadd.f32 %v8824, %v9335
      %v9400 = vadd.f32 %v8825, %v9338
      %v9401 = vadd.f32 %v8826, %v9343
      %v9402 = vadd.f32 %v8827, %v9346
      %v9403 = vadd.f32 %v8828, %v9351
      %v9404 = vadd.f32 %v8829, %v9354
      %v9405 = vadd.f32 %v8830, %v9359
      %v9406 = vadd.f32 %v8831, %v9362
      %v9407 = vadd.f32 %v8832, %v9367
      %v9408 = vadd.f32 %v8833, %v9370
      %v9409 = vmax.f32 %v9373, 0.0
      %v9410 = vmax.f32 %v9374, 0.0
      %v9411 = vmax.f32 %v9375, 0.0
      %v9412 = vmax.f32 %v9376, 0.0
      %v9413 = vmax.f32 %v9377, 0.0
      %v9414 = vmax.f32 %v9378, 0.0
      %v9415 = vmax.f32 %v9379, 0.0
      %v9416 = vmax.f32 %v9380, 0.0
      %v9417 = vmax.f32 %v9381, 0.0
      %v9418 = vmax.f32 %v9382, 0.0
      %v9419 = vmax.f32 %v9383, 0.0
      %v9420 = vmax.f32 %v9384, 0.0
      %v9421 = vmax.f32 %v9385, 0.0
      %v9422 = vmax.f32 %v9386, 0.0
      %v9423 = vmax.f32 %v9387, 0.0
      %v9424 = vmax.f32 %v9388, 0.0
      %v9425 = vmax.f32 %v9389, 0.0
      %v9426 = vmax.f32 %v9390, 0.0
      %v9427 = vmax.f32 %v9391, 0.0
      %v9428 = vmax.f32 %v9392, 0.0
      %v9429 = vmax.f32 %v9393, 0.0
      %v9430 = vmax.f32 %v9394, 0.0
      %v9431 = vmax.f32 %v9395, 0.0
      %v9432 = vmax.f32 %v9396, 0.0
      %v9433 = vmax.f32 %v9397, 0.0
      %v9434 = vmax.f32 %v9398, 0.0
      %v9435 = vmax.f32 %v9399, 0.0
      %v9436 = vmax.f32 %v9400, 0.0
      %v9437 = vmax.f32 %v9401, 0.0
      %v9438 = vmax.f32 %v9402, 0.0
      %v9439 = vmax.f32 %v9403, 0.0
      %v9440 = vmax.f32 %v9404, 0.0
      %v9441 = vmax.f32 %v9405, 0.0
      %v9442 = vmax.f32 %v9406, 0.0
      %v9443 = vmax.f32 %v9407, 0.0
      %v9444 = vmax.f32 %v9408, 0.0
      %vm9445 = vcmask 261120
      %9446 = vst.msk [vmem:[%s305] sm:$0xff] %vm9445, %v9409
      %9447 = vst.msk [vmem:[%s305 + $0x8] sm:$0xff] %vm9445, %v9410
      %9448 = vst.msk [vmem:[%s305 + $0x10] sm:$0xff] %vm9445, %v9411
      %9449 = vst.msk [vmem:[%s305 + $0x18] sm:$0xff] %vm9445, %v9412
      %9450 = vst.msk [vmem:[%s305 + $0x20] sm:$0xff] %vm9445, %v9413
      %9451 = vst.msk [vmem:[%s305 + $0x28] sm:$0xff] %vm9445, %v9414
      %9452 = vst.msk [vmem:[%s305 + $0x30] sm:$0xff] %vm9445, %v9415
      %9453 = vst.msk [vmem:[%s305 + $0x38] sm:$0xff] %vm9445, %v9416
      %9454 = vst.msk [vmem:[%s305 + $0x40] sm:$0xff] %vm9445, %v9417
      %9455 = vst.msk [vmem:[%s305 + $0x48] sm:$0xff] %vm9445, %v9418
      %9456 = vst.msk [vmem:[%s305 + $0x50] sm:$0xff] %vm9445, %v9419
      %9457 = vst.msk [vmem:[%s305 + $0x58] sm:$0xff] %vm9445, %v9420
      %9458 = vst.msk [vmem:[%s305 + $0x60] sm:$0xff] %vm9445, %v9421
      %9459 = vst.msk [vmem:[%s305 + $0x68] sm:$0xff] %vm9445, %v9422
      %9460 = vst.msk [vmem:[%s305 + $0x70] sm:$0xff] %vm9445, %v9423
      %9461 = vst.msk [vmem:[%s305 + $0x78] sm:$0xff] %vm9445, %v9424
      %9462 = vst.msk [vmem:[%s305 + $0x80] sm:$0xff] %vm9445, %v9425
      %9463 = vst.msk [vmem:[%s305 + $0x88] sm:$0xff] %vm9445, %v9426
      %9464 = vst.msk [vmem:[%s305 + $0x90] sm:$0xff] %vm9445, %v9427
      %9465 = vst.msk [vmem:[%s305 + $0x98] sm:$0xff] %vm9445, %v9428
      %9466 = vst.msk [vmem:[%s305 + $0xa0] sm:$0xff] %vm9445, %v9429
      %9467 = vst.msk [vmem:[%s305 + $0xa8] sm:$0xff] %vm9445, %v9430
      %9468 = vst.msk [vmem:[%s305 + $0xb0] sm:$0xff] %vm9445, %v9431
      %9469 = vst.msk [vmem:[%s305 + $0xb8] sm:$0xff] %vm9445, %v9432
      %9470 = vst.msk [vmem:[%s305 + $0xc0] sm:$0xff] %vm9445, %v9433
      %9471 = vst.msk [vmem:[%s305 + $0xc8] sm:$0xff] %vm9445, %v9434
      %9472 = vst.msk [vmem:[%s305 + $0xd0] sm:$0xff] %vm9445, %v9435
      %9473 = vst.msk [vmem:[%s305 + $0xd8] sm:$0xff] %vm9445, %v9436
      %9474 = vst.msk [vmem:[%s305 + $0xe0] sm:$0xff] %vm9445, %v9437
      %9475 = vst.msk [vmem:[%s305 + $0xe8] sm:$0xff] %vm9445, %v9438
      %9476 = vst.msk [vmem:[%s305 + $0xf0] sm:$0xff] %vm9445, %v9439
      %9477 = vst.msk [vmem:[%s305 + $0xf8] sm:$0xff] %vm9445, %v9440
      %9478 = vst.msk [vmem:[%s305 + $0x100] sm:$0xff] %vm9445, %v9441
      %9479 = vst.msk [vmem:[%s305 + $0x108] sm:$0xff] %vm9445, %v9442
      %9480 = vst.msk [vmem:[%s305 + $0x110] sm:$0xff] %vm9445, %v9443
      %9481 = vst.msk [vmem:[%s305 + $0x118] sm:$0xff] %vm9445, %v9444
      %p9482 = scmp.lt.s32.totalorder %s19, 1
      %s9483 = scalar_select %p9482, %s19, 1
      %s9484 = smul.addr %s9483, 36
      %s9485 = smul.addr %s9484, 8
      %s9486 = scalar_lea.vmem %s8, %s9485
      // Predicated region
      $region53: #{tpu_custom_call.1} parent=51 // pred_check
        %p9487 = pneg %p210
      $region54: #{tpu_custom_call.1} parent=51 // pred_check_branch
        %9489 = sbr.rel (%p9487) target = $region56
      $region55: #{tpu_custom_call.1} parent=51 // pred_region
        _
      $region56: #{tpu_custom_call.1} parent=51 // pred_fallthru
        _
    $region52: #{tpu_custom_call.1} parent=5 // pred_fallthru
      _
    %p9490 = scmp.le.s32.totalorder 2, %s14
    // Predicated region
    $region57: #{tpu_custom_call.1} parent=5 // pred_check
      %p9491 = pneg %p9490
    $region58: #{tpu_custom_call.1} parent=5 // pred_check_branch
      %9493 = sbr.rel (%p9491) target = $region60
    $region59: #{tpu_custom_call.1} parent=5 // pred_region
      %s9494 = ssub.s32 %s14, 2
      // Predicated region
      $region61: #{tpu_custom_call.1} parent=59 // pred_check
        %p9495 = pneg %p216
      $region62: #{tpu_custom_call.1} parent=59 // pred_check_branch
        %9497 = sbr.rel (%p9495) target = $region64
      $region63: #{tpu_custom_call.1} parent=59 // pred_region
        %p9498 = scmp.lt.s32.totalorder %s20, 1
        %s9499 = scalar_select %p9498, %s20, 1
        %s9500 = smul.addr %s9499, 36
        %s9501 = smul.addr %s9500, 8
        %s9502 = scalar_lea.vmem %s8, %s9501
      $region64: #{tpu_custom_call.1} parent=59 // pred_fallthru
        _
    $region60: #{tpu_custom_call.1} parent=5 // pred_fallthru
      _
  $region6: #{tpu_custom_call.1} parent=0 // loop_footer
    %s18 = sadd.s32 1, %s14
  $region7: #{tpu_custom_call.1} parent=0 // loop_footer_branch
    %13 = sbr.rel target = $region3
  $region8: #{tpu_custom_call.1} parent=0 // loop_exit
    _

</llo_original>
